<compile_context>
chip_gen: v6e
topology: v6e:2x2x1
jax: 0.10.0
libtpu: 0.0.40
codegen_flags: <defaults>
</compile_context>

<pallas_src>
import jax
import jax.numpy as jnp
from jax.experimental import pallas as pl
from jax.experimental.pallas import tpu as pltpu

_LANES = 128  # batch tile width (lane dimension)


# ------------------------------ fused kernel --------------------------------

def _lenet_fused_kernel(x_ref, wc1_ref, b1_ref, w5_ref, b2_ref,
                        wf1_ref, bf1_ref, wf2_ref, bf2_ref, wf3_ref, bf3_ref,
                        o_ref, p1_ref, p2_ref):
    """One batch tile (TB images on the lane dim) of the full LeNet forward.

    x_ref  : (896, TB)    input images, rows stored with stride 32 (28 data + 4 zero pad),
                          batch on lanes
    wc1_ref: (144, 160)   conv1 widened-K weights [dx*72 + c*12 + j, ky*32 + w]
    w5_ref : (128, 360)   conv2 widened-K weights [dx*64 + j*16 + co, ky*72 + ci*12 + w]
    wf1_ref: (120, 256)   fc1 weights with columns regrouped as (i*4 + j)*16 + co
    p1_ref : (864, TB)    scratch: pool1 output, row = y*72 + ci*12 + w
    p2_ref : (256, TB)    scratch: pool2 output, row = (i*4 + j)*16 + co
    o_ref  : (10, TB)     log-probabilities (classes on sublanes)
    """
    f32 = jnp.float32

    # ---- stage 1: conv1 (MXU, K=160) + bias + relu + 2x2 maxpool -> p1 scratch
    wc1 = wc1_ref[...]                                    # (144, 160)
    b1 = b1_ref[...]                                      # (72, 1)
    for i in range(12):                                   # pooled output row
        rows = []
        for dy in range(2):
            r = 2 * i + dy
            xwin = x_ref[pl.ds(r * 32, 160), :]           # image rows r..r+4 (stride 32)
            rows.append(jnp.dot(wc1, xwin, preferred_element_type=f32))   # (144, TB)
        # rows[dy][dx*72 + c*12 + j] == conv1_pre[c, 2i+dy, 2j+dx]
        pooled = jnp.maximum(jnp.maximum(rows[0][0:72, :], rows[0][72:144, :]),
                             jnp.maximum(rows[1][0:72, :], rows[1][72:144, :]))
        p1_ref[pl.ds(i * 72, 72), :] = jnp.maximum(pooled + b1, 0.0)

    # ---- stage 2: conv2 (MXU, K=360) + bias + relu + 2x2 maxpool -> p2 scratch
    w5 = w5_ref[...]                                      # (128, 360)
    b2 = b2_ref[...]                                      # (16, 1)
    for i in range(4):                                    # pooled output row
        a = []
        for dy in range(2):
            r = 2 * i + dy
            win = p1_ref[pl.ds(r * 72, 360), :]           # pool1 rows r..r+4
            a.append(jnp.dot(w5, win, preferred_element_type=f32))        # (128, TB)
        # a[dy][dx*64 + j*16 + co] == conv2_pre[co, 2i+dy, 2j+dx]
        for j in range(4):
            cand = [a[dy][dx * 64 + j * 16: dx * 64 + j * 16 + 16, :]
                    for dy in range(2) for dx in range(2)]
            m = jnp.maximum(jnp.maximum(cand[0], cand[1]),
                            jnp.maximum(cand[2], cand[3]))
            p2_ref[pl.ds((i * 4 + j) * 16, 16), :] = jnp.maximum(m + b2, 0.0)

    # ---- stage 3: fc1 -> relu -> fc2 -> relu -> fc3 -> log_softmax
    h1 = jnp.maximum(jnp.dot(wf1_ref[...], p2_ref[...], preferred_element_type=f32)
                     + bf1_ref[...], 0.0)                 # (120, TB)
    h2 = jnp.maximum(jnp.dot(wf2_ref[...], h1, preferred_element_type=f32)
                     + bf2_ref[...], 0.0)                 # (84, TB)
    logits = jnp.dot(wf3_ref[...], h2, preferred_element_type=f32) + bf3_ref[...]

    mx = jnp.max(logits, axis=0, keepdims=True)           # classes on sublanes
    z = logits - mx
    lse = jnp.log(jnp.sum(jnp.exp(z), axis=0, keepdims=True))
    o_ref[...] = (z - lse).astype(o_ref.dtype)


# ------------------------------ host-side prep -------------------------------

def _prep_weights(params):
    """Repack PyTorch-layout weights into the kernel's matmul-friendly layouts."""
    f32 = jnp.float32

    # conv1: wc1[dx*72 + c*12 + j, ky*32 + w] = w1[c, 0, ky, w - (2j+dx)]   (0 outside)
    w1 = params["conv1_w"].astype(f32)[:, 0]              # (c, ky, kx) = (6, 5, 5)
    wc1 = jnp.zeros((2, 6, 12, 5, 32), f32)
    for dx in range(2):
        for j in range(12):
            x0 = 2 * j + dx
            wc1 = wc1.at[dx, :, j, :, x0:x0 + 5].set(w1)
    wc1 = wc1.reshape(144, 160)
    b1r = jnp.repeat(params["conv1_b"].astype(f32), 12).reshape(72, 1)

    # conv2: w5[dx*64 + j*16 + co, ky*72 + ci*12 + w] = w2[co, ci, ky, w - (2j+dx)]
    w2p = jnp.transpose(params["conv2_w"].astype(f32), (0, 2, 1, 3))   # (co, ky, ci, kx)
    w5 = jnp.zeros((2, 4, 16, 5, 6, 12), f32)
    for dx in range(2):
        for j in range(4):
            x0 = 2 * j + dx
            w5 = w5.at[dx, j, :, :, :, x0:x0 + 5].set(w2p)
    w5 = w5.reshape(128, 360)
    b2c = params["conv2_b"].astype(f32).reshape(16, 1)

    # fc1 columns regrouped to match the p2 scratch layout (i*4 + j)*16 + co
    wf1 = jnp.transpose(params["fc1_w"].astype(f32).reshape(120, 16, 4, 4),
                        (0, 2, 3, 1)).reshape(120, 256)
    bf1 = params["fc1_b"].astype(f32).reshape(120, 1)
    wf2 = params["fc2_w"].astype(f32)
    bf2 = params["fc2_b"].astype(f32).reshape(84, 1)
    wf3 = params["fc3_w"].astype(f32)
    bf3 = params["fc3_b"].astype(f32).reshape(10, 1)
    return wc1, b1r, w5, b2c, wf1, bf1, wf2, bf2, wf3, bf3


def _zero_index_map(ndim):
    return lambda b: (0,) * ndim


@jax.jit
def img2num_forward(params, img):
    """img: (B, 1, 28, 28) float32 NCHW -> (B, 10) log-probabilities."""
    B = img.shape[0]
    TB = _LANES
    Bp = ((B + TB - 1) // TB) * TB

    # Pad batch to a multiple of TB and pad image rows 28 -> 32 (aligned window slices).
    x = img.astype(jnp.float32).reshape(B, 28, 28)
    x = jnp.pad(x, ((0, Bp - B), (0, 0), (0, 4)))          # (Bp, 28, 32)
    xT = jnp.transpose(x.reshape(Bp, 896), (1, 0))         # (896, Bp): batch on lanes

    weights = _prep_weights(params)
    wspecs = [pl.BlockSpec(w.shape, _zero_index_map(w.ndim)) for w in weights]

    out = pl.pallas_call(
        _lenet_fused_kernel,
        out_shape=jax.ShapeDtypeStruct((10, Bp), jnp.float32),
        grid=(Bp // TB,),
        in_specs=[pl.BlockSpec((896, TB), lambda b: (0, b))] + wspecs,
        out_specs=pl.BlockSpec((10, TB), lambda b: (0, b)),
        scratch_shapes=[pltpu.VMEM((864, TB), jnp.float32),   # pool1 activations
                        pltpu.VMEM((256, TB), jnp.float32)],  # pool2 activations
        compiler_params=pltpu.CompilerParams(dimension_semantics=("parallel",)),
    )(xT, *weights)

    return out[:, :B].T                                    # (B, 10)


# ------------------------------- parameters ----------------------------------

def init_params(key):
    """Deterministic init mimicking PyTorch's default U(-1/sqrt(fan_in), 1/sqrt(fan_in))."""
    def uniform(k, shape, fan_in):
        bound = 1.0 / (fan_in ** 0.5)
        return jax.random.uniform(k, shape, jnp.float32, -bound, bound)

    ks = jax.random.split(key, 10)
    return {
        "conv1_w": uniform(ks[0], (6, 1, 5, 5), 1 * 5 * 5),
        "conv1_b": uniform(ks[1], (6,), 1 * 5 * 5),
        "conv2_w": uniform(ks[2], (16, 6, 5, 5), 6 * 5 * 5),
        "conv2_b": uniform(ks[3], (16,), 6 * 5 * 5),
        "fc1_w": uniform(ks[4], (120, 16 * 4 * 4), 16 * 4 * 4),
        "fc1_b": uniform(ks[5], (120,), 16 * 4 * 4),
        "fc2_w": uniform(ks[6], (84, 120), 120),
        "fc2_b": uniform(ks[7], (84,), 120),
        "fc3_w": uniform(ks[8], (10, 84), 84),
        "fc3_b": uniform(ks[9], (10,), 84),
    }


# ------------------------------ pure-JAX reference ---------------------------

def _reference_forward(params, img):
    """XLA reference of the canonical LeNet forward (for correctness checking)."""
    hp = jax.lax.Precision.HIGHEST
    x = img.astype(jnp.float32)
    x = jax.lax.conv_general_dilated(
        x, params["conv1_w"], (1, 1), "VALID",
        dimension_numbers=("NCHW", "OIHW", "NCHW"), precision=hp)
    x = jnp.maximum(x + params["conv1_b"].reshape(1, 6, 1, 1), 0.0)
    x = jax.lax.reduce_window(x, -jnp.inf, jax.lax.max, (1, 1, 2, 2), (1, 1, 2, 2), "VALID")
    x = jax.lax.conv_general_dilated(
        x, params["conv2_w"], (1, 1), "VALID",
        dimension_numbers=("NCHW", "OIHW", "NCHW"), precision=hp)
    x = jnp.maximum(x + params["conv2_b"].reshape(1, 16, 1, 1), 0.0)
    x = jax.lax.reduce_window(x, -jnp.inf, jax.lax.max, (1, 1, 2, 2), (1, 1, 2, 2), "VALID")
    x = x.reshape(x.shape[0], 256)
    x = jnp.maximum(jnp.dot(x, params["fc1_w"].T, precision=hp) + params["fc1_b"], 0.0)
    x = jnp.maximum(jnp.dot(x, params["fc2_w"].T, precision=hp) + params["fc2_b"], 0.0)
    logits = jnp.dot(x, params["fc3_w"].T, precision=hp) + params["fc3_b"]
    return jax.nn.log_softmax(logits, axis=-1)


# ---------------------------------- demo --------------------------------------

if __name__ == "__main__":
    key = jax.random.PRNGKey(0)
    pkey, xkey = jax.random.split(key)
    params = init_params(pkey)
    img = jax.random.normal(xkey, (2, 1, 28, 28), jnp.float32)   # batch=2, MNIST geometry

    out = img2num_forward(params, img)
    out = jax.block_until_ready(out)
    assert out.shape == (2, 10) and out.dtype == jnp.float32

    ref = _reference_forward(params, img)
    err = float(jnp.max(jnp.abs(out - ref)))
    assert jnp.allclose(out, ref, atol=5e-3, rtol=5e-3), f"mismatch vs reference, max abs err {err}"

    print("KERNEL_OK")
</pallas_src>

<mosaic_0001>
module attributes {stable_mosaic.version = 11 : i64} {
  func.func @_lenet_fused_kernel(%arg0: i32, %arg1: memref<896x128xf32, #tpu.memory_space<vmem>>, %arg2: memref<144x160xf32, #tpu.memory_space<vmem>>, %arg3: memref<72x1xf32, #tpu.memory_space<vmem>>, %arg4: memref<128x360xf32, #tpu.memory_space<vmem>>, %arg5: memref<16x1xf32, #tpu.memory_space<vmem>>, %arg6: memref<120x256xf32, #tpu.memory_space<vmem>>, %arg7: memref<120x1xf32, #tpu.memory_space<vmem>>, %arg8: memref<84x120xf32, #tpu.memory_space<vmem>>, %arg9: memref<84x1xf32, #tpu.memory_space<vmem>>, %arg10: memref<10x84xf32, #tpu.memory_space<vmem>>, %arg11: memref<10x1xf32, #tpu.memory_space<vmem>>, %arg12: memref<10x128xf32, #tpu.memory_space<vmem>>, %arg13: memref<864x128xf32, #tpu.memory_space<vmem>>, %arg14: memref<256x128xf32, #tpu.memory_space<vmem>>) attributes {dimension_semantics = [#tpu.dimension_semantics<parallel>], iteration_bounds = array<i64: 1>, scalar_prefetch = 0 : i64, scratch_operands = 2 : i64, tpu.core_type = #tpu.core_type<tc>, window_params = [{transform_indices = @transform_0, window_bounds = array<i64: 896, 128>}, {pipeline_mode = #tpu.pipeline_mode<synchronous>, transform_indices = @transform_1, window_bounds = array<i64: 144, 160>}, {pipeline_mode = #tpu.pipeline_mode<synchronous>, transform_indices = @transform_2, window_bounds = array<i64: 72, 1>}, {pipeline_mode = #tpu.pipeline_mode<synchronous>, transform_indices = @transform_3, window_bounds = array<i64: 128, 360>}, {pipeline_mode = #tpu.pipeline_mode<synchronous>, transform_indices = @transform_4, window_bounds = array<i64: 16, 1>}, {pipeline_mode = #tpu.pipeline_mode<synchronous>, transform_indices = @transform_5, window_bounds = array<i64: 120, 256>}, {pipeline_mode = #tpu.pipeline_mode<synchronous>, transform_indices = @transform_6, window_bounds = array<i64: 120, 1>}, {pipeline_mode = #tpu.pipeline_mode<synchronous>, transform_indices = @transform_7, window_bounds = array<i64: 84, 120>}, {pipeline_mode = #tpu.pipeline_mode<synchronous>, transform_indices = @transform_8, window_bounds = array<i64: 84, 1>}, {pipeline_mode = #tpu.pipeline_mode<synchronous>, transform_indices = @transform_9, window_bounds = array<i64: 10, 84>}, {pipeline_mode = #tpu.pipeline_mode<synchronous>, transform_indices = @transform_10, window_bounds = array<i64: 10, 1>}, {transform_indices = @transform_11, window_bounds = array<i64: 10, 128>}]} {
    %c0 = arith.constant 0 : index
    %c0_0 = arith.constant 0 : index
    %0 = vector.load %arg2[%c0, %c0_0] : memref<144x160xf32, #tpu.memory_space<vmem>>, vector<144x160xf32>
    %c0_1 = arith.constant 0 : index
    %c0_2 = arith.constant 0 : index
    %1 = vector.load %arg3[%c0_1, %c0_2] : memref<72x1xf32, #tpu.memory_space<vmem>>, vector<72x1xf32>
    %c0_3 = arith.constant 0 : index
    %c0_4 = arith.constant 0 : index
    %2 = vector.load %arg1[%c0_3, %c0_4] : memref<896x128xf32, #tpu.memory_space<vmem>>, vector<160x128xf32>
    %cst = arith.constant dense<0.000000e+00> : vector<144x128xf32>
    %3 = tpu.matmul %0, %2, %cst {dimension_numbers = #tpu.dot_dimension_numbers<[1], [0], [0], [1], [0, 0, 1, 1], [], []>} : vector<144x160xf32>, vector<160x128xf32>, vector<144x128xf32> -> vector<144x128xf32>
    %c32 = arith.constant 32 : index
    %c0_5 = arith.constant 0 : index
    %4 = vector.load %arg1[%c32, %c0_5] : memref<896x128xf32, #tpu.memory_space<vmem>>, vector<160x128xf32>
    %cst_6 = arith.constant dense<0.000000e+00> : vector<144x128xf32>
    %5 = tpu.matmul %0, %4, %cst_6 {dimension_numbers = #tpu.dot_dimension_numbers<[1], [0], [0], [1], [0, 0, 1, 1], [], []>} : vector<144x160xf32>, vector<160x128xf32>, vector<144x128xf32> -> vector<144x128xf32>
    %6 = vector.extract_strided_slice %3 {offsets = [0, 0], sizes = [72, 128], strides = [1, 1]} : vector<144x128xf32> to vector<72x128xf32>
    %7 = vector.extract_strided_slice %3 {offsets = [72, 0], sizes = [72, 128], strides = [1, 1]} : vector<144x128xf32> to vector<72x128xf32>
    %8 = arith.maximumf %6, %7 : vector<72x128xf32>
    %9 = vector.extract_strided_slice %5 {offsets = [0, 0], sizes = [72, 128], strides = [1, 1]} : vector<144x128xf32> to vector<72x128xf32>
    %10 = vector.extract_strided_slice %5 {offsets = [72, 0], sizes = [72, 128], strides = [1, 1]} : vector<144x128xf32> to vector<72x128xf32>
    %11 = arith.maximumf %9, %10 : vector<72x128xf32>
    %12 = arith.maximumf %8, %11 : vector<72x128xf32>
    %13 = vector.broadcast %1 : vector<72x1xf32> to vector<72x128xf32>
    %14 = arith.addf %12, %13 : vector<72x128xf32>
    %cst_7 = arith.constant 0.000000e+00 : f32
    %15 = vector.broadcast %cst_7 : f32 to vector<72x128xf32>
    %16 = arith.maximumf %14, %15 : vector<72x128xf32>
    %c0_8 = arith.constant 0 : index
    %c0_9 = arith.constant 0 : index
    %17 = vector.load %arg13[%c0_8, %c0_9] : memref<864x128xf32, #tpu.memory_space<vmem>>, vector<72x128xf32>
    tpu.vector_store %arg13[%c0_8, %c0_9], %16 {strides = array<i32>} : memref<864x128xf32, #tpu.memory_space<vmem>>, vector<72x128xf32>,
    %c64 = arith.constant 64 : index
    %c0_10 = arith.constant 0 : index
    %18 = vector.load %arg1[%c64, %c0_10] : memref<896x128xf32, #tpu.memory_space<vmem>>, vector<160x128xf32>
    %cst_11 = arith.constant dense<0.000000e+00> : vector<144x128xf32>
    %19 = tpu.matmul %0, %18, %cst_11 {dimension_numbers = #tpu.dot_dimension_numbers<[1], [0], [0], [1], [0, 0, 1, 1], [], []>} : vector<144x160xf32>, vector<160x128xf32>, vector<144x128xf32> -> vector<144x128xf32>
    %c96 = arith.constant 96 : index
    %c0_12 = arith.constant 0 : index
    %20 = vector.load %arg1[%c96, %c0_12] : memref<896x128xf32, #tpu.memory_space<vmem>>, vector<160x128xf32>
    %cst_13 = arith.constant dense<0.000000e+00> : vector<144x128xf32>
    %21 = tpu.matmul %0, %20, %cst_13 {dimension_numbers = #tpu.dot_dimension_numbers<[1], [0], [0], [1], [0, 0, 1, 1], [], []>} : vector<144x160xf32>, vector<160x128xf32>, vector<144x128xf32> -> vector<144x128xf32>
    %22 = vector.extract_strided_slice %19 {offsets = [0, 0], sizes = [72, 128], strides = [1, 1]} : vector<144x128xf32> to vector<72x128xf32>
    %23 = vector.extract_strided_slice %19 {offsets = [72, 0], sizes = [72, 128], strides = [1, 1]} : vector<144x128xf32> to vector<72x128xf32>
    %24 = arith.maximumf %22, %23 : vector<72x128xf32>
    %25 = vector.extract_strided_slice %21 {offsets = [0, 0], sizes = [72, 128], strides = [1, 1]} : vector<144x128xf32> to vector<72x128xf32>
    %26 = vector.extract_strided_slice %21 {offsets = [72, 0], sizes = [72, 128], strides = [1, 1]} : vector<144x128xf32> to vector<72x128xf32>
    %27 = arith.maximumf %25, %26 : vector<72x128xf32>
    %28 = arith.maximumf %24, %27 : vector<72x128xf32>
    %29 = vector.broadcast %1 : vector<72x1xf32> to vector<72x128xf32>
    %30 = arith.addf %28, %29 : vector<72x128xf32>
    %cst_14 = arith.constant 0.000000e+00 : f32
    %31 = vector.broadcast %cst_14 : f32 to vector<72x128xf32>
    %32 = arith.maximumf %30, %31 : vector<72x128xf32>
    %c72 = arith.constant 72 : index
    %c0_15 = arith.constant 0 : index
    %33 = vector.load %arg13[%c72, %c0_15] : memref<864x128xf32, #tpu.memory_space<vmem>>, vector<72x128xf32>
    tpu.vector_store %arg13[%c72, %c0_15], %32 {strides = array<i32>} : memref<864x128xf32, #tpu.memory_space<vmem>>, vector<72x128xf32>,
    %c128 = arith.constant 128 : index
    %c0_16 = arith.constant 0 : index
    %34 = vector.load %arg1[%c128, %c0_16] : memref<896x128xf32, #tpu.memory_space<vmem>>, vector<160x128xf32>
    %cst_17 = arith.constant dense<0.000000e+00> : vector<144x128xf32>
    %35 = tpu.matmul %0, %34, %cst_17 {dimension_numbers = #tpu.dot_dimension_numbers<[1], [0], [0], [1], [0, 0, 1, 1], [], []>} : vector<144x160xf32>, vector<160x128xf32>, vector<144x128xf32> -> vector<144x128xf32>
    %c160 = arith.constant 160 : index
    %c0_18 = arith.constant 0 : index
    %36 = vector.load %arg1[%c160, %c0_18] : memref<896x128xf32, #tpu.memory_space<vmem>>, vector<160x128xf32>
    %cst_19 = arith.constant dense<0.000000e+00> : vector<144x128xf32>
    %37 = tpu.matmul %0, %36, %cst_19 {dimension_numbers = #tpu.dot_dimension_numbers<[1], [0], [0], [1], [0, 0, 1, 1], [], []>} : vector<144x160xf32>, vector<160x128xf32>, vector<144x128xf32> -> vector<144x128xf32>
    %38 = vector.extract_strided_slice %35 {offsets = [0, 0], sizes = [72, 128], strides = [1, 1]} : vector<144x128xf32> to vector<72x128xf32>
    %39 = vector.extract_strided_slice %35 {offsets = [72, 0], sizes = [72, 128], strides = [1, 1]} : vector<144x128xf32> to vector<72x128xf32>
    %40 = arith.maximumf %38, %39 : vector<72x128xf32>
    %41 = vector.extract_strided_slice %37 {offsets = [0, 0], sizes = [72, 128], strides = [1, 1]} : vector<144x128xf32> to vector<72x128xf32>
    %42 = vector.extract_strided_slice %37 {offsets = [72, 0], sizes = [72, 128], strides = [1, 1]} : vector<144x128xf32> to vector<72x128xf32>
    %43 = arith.maximumf %41, %42 : vector<72x128xf32>
    %44 = arith.maximumf %40, %43 : vector<72x128xf32>
    %45 = vector.broadcast %1 : vector<72x1xf32> to vector<72x128xf32>
    %46 = arith.addf %44, %45 : vector<72x128xf32>
    %cst_20 = arith.constant 0.000000e+00 : f32
    %47 = vector.broadcast %cst_20 : f32 to vector<72x128xf32>
    %48 = arith.maximumf %46, %47 : vector<72x128xf32>
    %c144 = arith.constant 144 : index
    %c0_21 = arith.constant 0 : index
    %49 = vector.load %arg13[%c144, %c0_21] : memref<864x128xf32, #tpu.memory_space<vmem>>, vector<72x128xf32>
    tpu.vector_store %arg13[%c144, %c0_21], %48 {strides = array<i32>} : memref<864x128xf32, #tpu.memory_space<vmem>>, vector<72x128xf32>,
    %c192 = arith.constant 192 : index
    %c0_22 = arith.constant 0 : index
    %50 = vector.load %arg1[%c192, %c0_22] : memref<896x128xf32, #tpu.memory_space<vmem>>, vector<160x128xf32>
    %cst_23 = arith.constant dense<0.000000e+00> : vector<144x128xf32>
    %51 = tpu.matmul %0, %50, %cst_23 {dimension_numbers = #tpu.dot_dimension_numbers<[1], [0], [0], [1], [0, 0, 1, 1], [], []>} : vector<144x160xf32>, vector<160x128xf32>, vector<144x128xf32> -> vector<144x128xf32>
    %c224 = arith.constant 224 : index
    %c0_24 = arith.constant 0 : index
    %52 = vector.load %arg1[%c224, %c0_24] : memref<896x128xf32, #tpu.memory_space<vmem>>, vector<160x128xf32>
    %cst_25 = arith.constant dense<0.000000e+00> : vector<144x128xf32>
    %53 = tpu.matmul %0, %52, %cst_25 {dimension_numbers = #tpu.dot_dimension_numbers<[1], [0], [0], [1], [0, 0, 1, 1], [], []>} : vector<144x160xf32>, vector<160x128xf32>, vector<144x128xf32> -> vector<144x128xf32>
    %54 = vector.extract_strided_slice %51 {offsets = [0, 0], sizes = [72, 128], strides = [1, 1]} : vector<144x128xf32> to vector<72x128xf32>
    %55 = vector.extract_strided_slice %51 {offsets = [72, 0], sizes = [72, 128], strides = [1, 1]} : vector<144x128xf32> to vector<72x128xf32>
    %56 = arith.maximumf %54, %55 : vector<72x128xf32>
    %57 = vector.extract_strided_slice %53 {offsets = [0, 0], sizes = [72, 128], strides = [1, 1]} : vector<144x128xf32> to vector<72x128xf32>
    %58 = vector.extract_strided_slice %53 {offsets = [72, 0], sizes = [72, 128], strides = [1, 1]} : vector<144x128xf32> to vector<72x128xf32>
    %59 = arith.maximumf %57, %58 : vector<72x128xf32>
    %60 = arith.maximumf %56, %59 : vector<72x128xf32>
    %61 = vector.broadcast %1 : vector<72x1xf32> to vector<72x128xf32>
    %62 = arith.addf %60, %61 : vector<72x128xf32>
    %cst_26 = arith.constant 0.000000e+00 : f32
    %63 = vector.broadcast %cst_26 : f32 to vector<72x128xf32>
    %64 = arith.maximumf %62, %63 : vector<72x128xf32>
    %c216 = arith.constant 216 : index
    %c0_27 = arith.constant 0 : index
    %65 = vector.load %arg13[%c216, %c0_27] : memref<864x128xf32, #tpu.memory_space<vmem>>, vector<72x128xf32>
    tpu.vector_store %arg13[%c216, %c0_27], %64 {strides = array<i32>} : memref<864x128xf32, #tpu.memory_space<vmem>>, vector<72x128xf32>,
    %c256 = arith.constant 256 : index
    %c0_28 = arith.constant 0 : index
    %66 = vector.load %arg1[%c256, %c0_28] : memref<896x128xf32, #tpu.memory_space<vmem>>, vector<160x128xf32>
    %cst_29 = arith.constant dense<0.000000e+00> : vector<144x128xf32>
    %67 = tpu.matmul %0, %66, %cst_29 {dimension_numbers = #tpu.dot_dimension_numbers<[1], [0], [0], [1], [0, 0, 1, 1], [], []>} : vector<144x160xf32>, vector<160x128xf32>, vector<144x128xf32> -> vector<144x128xf32>
    %c288 = arith.constant 288 : index
    %c0_30 = arith.constant 0 : index
    %68 = vector.load %arg1[%c288, %c0_30] : memref<896x128xf32, #tpu.memory_space<vmem>>, vector<160x128xf32>
    %cst_31 = arith.constant dense<0.000000e+00> : vector<144x128xf32>
    %69 = tpu.matmul %0, %68, %cst_31 {dimension_numbers = #tpu.dot_dimension_numbers<[1], [0], [0], [1], [0, 0, 1, 1], [], []>} : vector<144x160xf32>, vector<160x128xf32>, vector<144x128xf32> -> vector<144x128xf32>
    %70 = vector.extract_strided_slice %67 {offsets = [0, 0], sizes = [72, 128], strides = [1, 1]} : vector<144x128xf32> to vector<72x128xf32>
    %71 = vector.extract_strided_slice %67 {offsets = [72, 0], sizes = [72, 128], strides = [1, 1]} : vector<144x128xf32> to vector<72x128xf32>
    %72 = arith.maximumf %70, %71 : vector<72x128xf32>
    %73 = vector.extract_strided_slice %69 {offsets = [0, 0], sizes = [72, 128], strides = [1, 1]} : vector<144x128xf32> to vector<72x128xf32>
    %74 = vector.extract_strided_slice %69 {offsets = [72, 0], sizes = [72, 128], strides = [1, 1]} : vector<144x128xf32> to vector<72x128xf32>
    %75 = arith.maximumf %73, %74 : vector<72x128xf32>
    %76 = arith.maximumf %72, %75 : vector<72x128xf32>
    %77 = vector.broadcast %1 : vector<72x1xf32> to vector<72x128xf32>
    %78 = arith.addf %76, %77 : vector<72x128xf32>
    %cst_32 = arith.constant 0.000000e+00 : f32
    %79 = vector.broadcast %cst_32 : f32 to vector<72x128xf32>
    %80 = arith.maximumf %78, %79 : vector<72x128xf32>
    %c288_33 = arith.constant 288 : index
    %c0_34 = arith.constant 0 : index
    %81 = vector.load %arg13[%c288_33, %c0_34] : memref<864x128xf32, #tpu.memory_space<vmem>>, vector<72x128xf32>
    tpu.vector_store %arg13[%c288_33, %c0_34], %80 {strides = array<i32>} : memref<864x128xf32, #tpu.memory_space<vmem>>, vector<72x128xf32>,
    %c320 = arith.constant 320 : index
    %c0_35 = arith.constant 0 : index
    %82 = vector.load %arg1[%c320, %c0_35] : memref<896x128xf32, #tpu.memory_space<vmem>>, vector<160x128xf32>
    %cst_36 = arith.constant dense<0.000000e+00> : vector<144x128xf32>
    %83 = tpu.matmul %0, %82, %cst_36 {dimension_numbers = #tpu.dot_dimension_numbers<[1], [0], [0], [1], [0, 0, 1, 1], [], []>} : vector<144x160xf32>, vector<160x128xf32>, vector<144x128xf32> -> vector<144x128xf32>
    %c352 = arith.constant 352 : index
    %c0_37 = arith.constant 0 : index
    %84 = vector.load %arg1[%c352, %c0_37] : memref<896x128xf32, #tpu.memory_space<vmem>>, vector<160x128xf32>
    %cst_38 = arith.constant dense<0.000000e+00> : vector<144x128xf32>
    %85 = tpu.matmul %0, %84, %cst_38 {dimension_numbers = #tpu.dot_dimension_numbers<[1], [0], [0], [1], [0, 0, 1, 1], [], []>} : vector<144x160xf32>, vector<160x128xf32>, vector<144x128xf32> -> vector<144x128xf32>
    %86 = vector.extract_strided_slice %83 {offsets = [0, 0], sizes = [72, 128], strides = [1, 1]} : vector<144x128xf32> to vector<72x128xf32>
    %87 = vector.extract_strided_slice %83 {offsets = [72, 0], sizes = [72, 128], strides = [1, 1]} : vector<144x128xf32> to vector<72x128xf32>
    %88 = arith.maximumf %86, %87 : vector<72x128xf32>
    %89 = vector.extract_strided_slice %85 {offsets = [0, 0], sizes = [72, 128], strides = [1, 1]} : vector<144x128xf32> to vector<72x128xf32>
    %90 = vector.extract_strided_slice %85 {offsets = [72, 0], sizes = [72, 128], strides = [1, 1]} : vector<144x128xf32> to vector<72x128xf32>
    %91 = arith.maximumf %89, %90 : vector<72x128xf32>
    %92 = arith.maximumf %88, %91 : vector<72x128xf32>
    %93 = vector.broadcast %1 : vector<72x1xf32> to vector<72x128xf32>
    %94 = arith.addf %92, %93 : vector<72x128xf32>
    %cst_39 = arith.constant 0.000000e+00 : f32
    %95 = vector.broadcast %cst_39 : f32 to vector<72x128xf32>
    %96 = arith.maximumf %94, %95 : vector<72x128xf32>
    %c360 = arith.constant 360 : index
    %c0_40 = arith.constant 0 : index
    %97 = vector.load %arg13[%c360, %c0_40] : memref<864x128xf32, #tpu.memory_space<vmem>>, vector<72x128xf32>
    tpu.vector_store %arg13[%c360, %c0_40], %96 {strides = array<i32>} : memref<864x128xf32, #tpu.memory_space<vmem>>, vector<72x128xf32>,
    %c384 = arith.constant 384 : index
    %c0_41 = arith.constant 0 : index
    %98 = vector.load %arg1[%c384, %c0_41] : memref<896x128xf32, #tpu.memory_space<vmem>>, vector<160x128xf32>
    %cst_42 = arith.constant dense<0.000000e+00> : vector<144x128xf32>
    %99 = tpu.matmul %0, %98, %cst_42 {dimension_numbers = #tpu.dot_dimension_numbers<[1], [0], [0], [1], [0, 0, 1, 1], [], []>} : vector<144x160xf32>, vector<160x128xf32>, vector<144x128xf32> -> vector<144x128xf32>
    %c416 = arith.constant 416 : index
    %c0_43 = arith.constant 0 : index
    %100 = vector.load %arg1[%c416, %c0_43] : memref<896x128xf32, #tpu.memory_space<vmem>>, vector<160x128xf32>
    %cst_44 = arith.constant dense<0.000000e+00> : vector<144x128xf32>
    %101 = tpu.matmul %0, %100, %cst_44 {dimension_numbers = #tpu.dot_dimension_numbers<[1], [0], [0], [1], [0, 0, 1, 1], [], []>} : vector<144x160xf32>, vector<160x128xf32>, vector<144x128xf32> -> vector<144x128xf32>
    %102 = vector.extract_strided_slice %99 {offsets = [0, 0], sizes = [72, 128], strides = [1, 1]} : vector<144x128xf32> to vector<72x128xf32>
    %103 = vector.extract_strided_slice %99 {offsets = [72, 0], sizes = [72, 128], strides = [1, 1]} : vector<144x128xf32> to vector<72x128xf32>
    %104 = arith.maximumf %102, %103 : vector<72x128xf32>
    %105 = vector.extract_strided_slice %101 {offsets = [0, 0], sizes = [72, 128], strides = [1, 1]} : vector<144x128xf32> to vector<72x128xf32>
    %106 = vector.extract_strided_slice %101 {offsets = [72, 0], sizes = [72, 128], strides = [1, 1]} : vector<144x128xf32> to vector<72x128xf32>
    %107 = arith.maximumf %105, %106 : vector<72x128xf32>
    %108 = arith.maximumf %104, %107 : vector<72x128xf32>
    %109 = vector.broadcast %1 : vector<72x1xf32> to vector<72x128xf32>
    %110 = arith.addf %108, %109 : vector<72x128xf32>
    %cst_45 = arith.constant 0.000000e+00 : f32
    %111 = vector.broadcast %cst_45 : f32 to vector<72x128xf32>
    %112 = arith.maximumf %110, %111 : vector<72x128xf32>
    %c432 = arith.constant 432 : index
    %c0_46 = arith.constant 0 : index
    %113 = vector.load %arg13[%c432, %c0_46] : memref<864x128xf32, #tpu.memory_space<vmem>>, vector<72x128xf32>
    tpu.vector_store %arg13[%c432, %c0_46], %112 {strides = array<i32>} : memref<864x128xf32, #tpu.memory_space<vmem>>, vector<72x128xf32>,
    %c448 = arith.constant 448 : index
    %c0_47 = arith.constant 0 : index
    %114 = vector.load %arg1[%c448, %c0_47] : memref<896x128xf32, #tpu.memory_space<vmem>>, vector<160x128xf32>
    %cst_48 = arith.constant dense<0.000000e+00> : vector<144x128xf32>
    %115 = tpu.matmul %0, %114, %cst_48 {dimension_numbers = #tpu.dot_dimension_numbers<[1], [0], [0], [1], [0, 0, 1, 1], [], []>} : vector<144x160xf32>, vector<160x128xf32>, vector<144x128xf32> -> vector<144x128xf32>
    %c480 = arith.constant 480 : index
    %c0_49 = arith.constant 0 : index
    %116 = vector.load %arg1[%c480, %c0_49] : memref<896x128xf32, #tpu.memory_space<vmem>>, vector<160x128xf32>
    %cst_50 = arith.constant dense<0.000000e+00> : vector<144x128xf32>
    %117 = tpu.matmul %0, %116, %cst_50 {dimension_numbers = #tpu.dot_dimension_numbers<[1], [0], [0], [1], [0, 0, 1, 1], [], []>} : vector<144x160xf32>, vector<160x128xf32>, vector<144x128xf32> -> vector<144x128xf32>
    %118 = vector.extract_strided_slice %115 {offsets = [0, 0], sizes = [72, 128], strides = [1, 1]} : vector<144x128xf32> to vector<72x128xf32>
    %119 = vector.extract_strided_slice %115 {offsets = [72, 0], sizes = [72, 128], strides = [1, 1]} : vector<144x128xf32> to vector<72x128xf32>
    %120 = arith.maximumf %118, %119 : vector<72x128xf32>
    %121 = vector.extract_strided_slice %117 {offsets = [0, 0], sizes = [72, 128], strides = [1, 1]} : vector<144x128xf32> to vector<72x128xf32>
    %122 = vector.extract_strided_slice %117 {offsets = [72, 0], sizes = [72, 128], strides = [1, 1]} : vector<144x128xf32> to vector<72x128xf32>
    %123 = arith.maximumf %121, %122 : vector<72x128xf32>
    %124 = arith.maximumf %120, %123 : vector<72x128xf32>
    %125 = vector.broadcast %1 : vector<72x1xf32> to vector<72x128xf32>
    %126 = arith.addf %124, %125 : vector<72x128xf32>
    %cst_51 = arith.constant 0.000000e+00 : f32
    %127 = vector.broadcast %cst_51 : f32 to vector<72x128xf32>
    %128 = arith.maximumf %126, %127 : vector<72x128xf32>
    %c504 = arith.constant 504 : index
    %c0_52 = arith.constant 0 : index
    %129 = vector.load %arg13[%c504, %c0_52] : memref<864x128xf32, #tpu.memory_space<vmem>>, vector<72x128xf32>
    tpu.vector_store %arg13[%c504, %c0_52], %128 {strides = array<i32>} : memref<864x128xf32, #tpu.memory_space<vmem>>, vector<72x128xf32>,
    %c512 = arith.constant 512 : index
    %c0_53 = arith.constant 0 : index
    %130 = vector.load %arg1[%c512, %c0_53] : memref<896x128xf32, #tpu.memory_space<vmem>>, vector<160x128xf32>
    %cst_54 = arith.constant dense<0.000000e+00> : vector<144x128xf32>
    %131 = tpu.matmul %0, %130, %cst_54 {dimension_numbers = #tpu.dot_dimension_numbers<[1], [0], [0], [1], [0, 0, 1, 1], [], []>} : vector<144x160xf32>, vector<160x128xf32>, vector<144x128xf32> -> vector<144x128xf32>
    %c544 = arith.constant 544 : index
    %c0_55 = arith.constant 0 : index
    %132 = vector.load %arg1[%c544, %c0_55] : memref<896x128xf32, #tpu.memory_space<vmem>>, vector<160x128xf32>
    %cst_56 = arith.constant dense<0.000000e+00> : vector<144x128xf32>
    %133 = tpu.matmul %0, %132, %cst_56 {dimension_numbers = #tpu.dot_dimension_numbers<[1], [0], [0], [1], [0, 0, 1, 1], [], []>} : vector<144x160xf32>, vector<160x128xf32>, vector<144x128xf32> -> vector<144x128xf32>
    %134 = vector.extract_strided_slice %131 {offsets = [0, 0], sizes = [72, 128], strides = [1, 1]} : vector<144x128xf32> to vector<72x128xf32>
    %135 = vector.extract_strided_slice %131 {offsets = [72, 0], sizes = [72, 128], strides = [1, 1]} : vector<144x128xf32> to vector<72x128xf32>
    %136 = arith.maximumf %134, %135 : vector<72x128xf32>
    %137 = vector.extract_strided_slice %133 {offsets = [0, 0], sizes = [72, 128], strides = [1, 1]} : vector<144x128xf32> to vector<72x128xf32>
    %138 = vector.extract_strided_slice %133 {offsets = [72, 0], sizes = [72, 128], strides = [1, 1]} : vector<144x128xf32> to vector<72x128xf32>
    %139 = arith.maximumf %137, %138 : vector<72x128xf32>
    %140 = arith.maximumf %136, %139 : vector<72x128xf32>
    %141 = vector.broadcast %1 : vector<72x1xf32> to vector<72x128xf32>
    %142 = arith.addf %140, %141 : vector<72x128xf32>
    %cst_57 = arith.constant 0.000000e+00 : f32
    %143 = vector.broadcast %cst_57 : f32 to vector<72x128xf32>
    %144 = arith.maximumf %142, %143 : vector<72x128xf32>
    %c576 = arith.constant 576 : index
    %c0_58 = arith.constant 0 : index
    %145 = vector.load %arg13[%c576, %c0_58] : memref<864x128xf32, #tpu.memory_space<vmem>>, vector<72x128xf32>
    tpu.vector_store %arg13[%c576, %c0_58], %144 {strides = array<i32>} : memref<864x128xf32, #tpu.memory_space<vmem>>, vector<72x128xf32>,
    %c576_59 = arith.constant 576 : index
    %c0_60 = arith.constant 0 : index
    %146 = vector.load %arg1[%c576_59, %c0_60] : memref<896x128xf32, #tpu.memory_space<vmem>>, vector<160x128xf32>
    %cst_61 = arith.constant dense<0.000000e+00> : vector<144x128xf32>
    %147 = tpu.matmul %0, %146, %cst_61 {dimension_numbers = #tpu.dot_dimension_numbers<[1], [0], [0], [1], [0, 0, 1, 1], [], []>} : vector<144x160xf32>, vector<160x128xf32>, vector<144x128xf32> -> vector<144x128xf32>
    %c608 = arith.constant 608 : index
    %c0_62 = arith.constant 0 : index
    %148 = vector.load %arg1[%c608, %c0_62] : memref<896x128xf32, #tpu.memory_space<vmem>>, vector<160x128xf32>
    %cst_63 = arith.constant dense<0.000000e+00> : vector<144x128xf32>
    %149 = tpu.matmul %0, %148, %cst_63 {dimension_numbers = #tpu.dot_dimension_numbers<[1], [0], [0], [1], [0, 0, 1, 1], [], []>} : vector<144x160xf32>, vector<160x128xf32>, vector<144x128xf32> -> vector<144x128xf32>
    %150 = vector.extract_strided_slice %147 {offsets = [0, 0], sizes = [72, 128], strides = [1, 1]} : vector<144x128xf32> to vector<72x128xf32>
    %151 = vector.extract_strided_slice %147 {offsets = [72, 0], sizes = [72, 128], strides = [1, 1]} : vector<144x128xf32> to vector<72x128xf32>
    %152 = arith.maximumf %150, %151 : vector<72x128xf32>
    %153 = vector.extract_strided_slice %149 {offsets = [0, 0], sizes = [72, 128], strides = [1, 1]} : vector<144x128xf32> to vector<72x128xf32>
    %154 = vector.extract_strided_slice %149 {offsets = [72, 0], sizes = [72, 128], strides = [1, 1]} : vector<144x128xf32> to vector<72x128xf32>
    %155 = arith.maximumf %153, %154 : vector<72x128xf32>
    %156 = arith.maximumf %152, %155 : vector<72x128xf32>
    %157 = vector.broadcast %1 : vector<72x1xf32> to vector<72x128xf32>
    %158 = arith.addf %156, %157 : vector<72x128xf32>
    %cst_64 = arith.constant 0.000000e+00 : f32
    %159 = vector.broadcast %cst_64 : f32 to vector<72x128xf32>
    %160 = arith.maximumf %158, %159 : vector<72x128xf32>
    %c648 = arith.constant 648 : index
    %c0_65 = arith.constant 0 : index
    %161 = vector.load %arg13[%c648, %c0_65] : memref<864x128xf32, #tpu.memory_space<vmem>>, vector<72x128xf32>
    tpu.vector_store %arg13[%c648, %c0_65], %160 {strides = array<i32>} : memref<864x128xf32, #tpu.memory_space<vmem>>, vector<72x128xf32>,
    %c640 = arith.constant 640 : index
    %c0_66 = arith.constant 0 : index
    %162 = vector.load %arg1[%c640, %c0_66] : memref<896x128xf32, #tpu.memory_space<vmem>>, vector<160x128xf32>
    %cst_67 = arith.constant dense<0.000000e+00> : vector<144x128xf32>
    %163 = tpu.matmul %0, %162, %cst_67 {dimension_numbers = #tpu.dot_dimension_numbers<[1], [0], [0], [1], [0, 0, 1, 1], [], []>} : vector<144x160xf32>, vector<160x128xf32>, vector<144x128xf32> -> vector<144x128xf32>
    %c672 = arith.constant 672 : index
    %c0_68 = arith.constant 0 : index
    %164 = vector.load %arg1[%c672, %c0_68] : memref<896x128xf32, #tpu.memory_space<vmem>>, vector<160x128xf32>
    %cst_69 = arith.constant dense<0.000000e+00> : vector<144x128xf32>
    %165 = tpu.matmul %0, %164, %cst_69 {dimension_numbers = #tpu.dot_dimension_numbers<[1], [0], [0], [1], [0, 0, 1, 1], [], []>} : vector<144x160xf32>, vector<160x128xf32>, vector<144x128xf32> -> vector<144x128xf32>
    %166 = vector.extract_strided_slice %163 {offsets = [0, 0], sizes = [72, 128], strides = [1, 1]} : vector<144x128xf32> to vector<72x128xf32>
    %167 = vector.extract_strided_slice %163 {offsets = [72, 0], sizes = [72, 128], strides = [1, 1]} : vector<144x128xf32> to vector<72x128xf32>
    %168 = arith.maximumf %166, %167 : vector<72x128xf32>
    %169 = vector.extract_strided_slice %165 {offsets = [0, 0], sizes = [72, 128], strides = [1, 1]} : vector<144x128xf32> to vector<72x128xf32>
    %170 = vector.extract_strided_slice %165 {offsets = [72, 0], sizes = [72, 128], strides = [1, 1]} : vector<144x128xf32> to vector<72x128xf32>
    %171 = arith.maximumf %169, %170 : vector<72x128xf32>
    %172 = arith.maximumf %168, %171 : vector<72x128xf32>
    %173 = vector.broadcast %1 : vector<72x1xf32> to vector<72x128xf32>
    %174 = arith.addf %172, %173 : vector<72x128xf32>
    %cst_70 = arith.constant 0.000000e+00 : f32
    %175 = vector.broadcast %cst_70 : f32 to vector<72x128xf32>
    %176 = arith.maximumf %174, %175 : vector<72x128xf32>
    %c720 = arith.constant 720 : index
    %c0_71 = arith.constant 0 : index
    %177 = vector.load %arg13[%c720, %c0_71] : memref<864x128xf32, #tpu.memory_space<vmem>>, vector<72x128xf32>
    tpu.vector_store %arg13[%c720, %c0_71], %176 {strides = array<i32>} : memref<864x128xf32, #tpu.memory_space<vmem>>, vector<72x128xf32>,
    %c704 = arith.constant 704 : index
    %c0_72 = arith.constant 0 : index
    %178 = vector.load %arg1[%c704, %c0_72] : memref<896x128xf32, #tpu.memory_space<vmem>>, vector<160x128xf32>
    %cst_73 = arith.constant dense<0.000000e+00> : vector<144x128xf32>
    %179 = tpu.matmul %0, %178, %cst_73 {dimension_numbers = #tpu.dot_dimension_numbers<[1], [0], [0], [1], [0, 0, 1, 1], [], []>} : vector<144x160xf32>, vector<160x128xf32>, vector<144x128xf32> -> vector<144x128xf32>
    %c736 = arith.constant 736 : index
    %c0_74 = arith.constant 0 : index
    %180 = vector.load %arg1[%c736, %c0_74] : memref<896x128xf32, #tpu.memory_space<vmem>>, vector<160x128xf32>
    %cst_75 = arith.constant dense<0.000000e+00> : vector<144x128xf32>
    %181 = tpu.matmul %0, %180, %cst_75 {dimension_numbers = #tpu.dot_dimension_numbers<[1], [0], [0], [1], [0, 0, 1, 1], [], []>} : vector<144x160xf32>, vector<160x128xf32>, vector<144x128xf32> -> vector<144x128xf32>
    %182 = vector.extract_strided_slice %179 {offsets = [0, 0], sizes = [72, 128], strides = [1, 1]} : vector<144x128xf32> to vector<72x128xf32>
    %183 = vector.extract_strided_slice %179 {offsets = [72, 0], sizes = [72, 128], strides = [1, 1]} : vector<144x128xf32> to vector<72x128xf32>
    %184 = arith.maximumf %182, %183 : vector<72x128xf32>
    %185 = vector.extract_strided_slice %181 {offsets = [0, 0], sizes = [72, 128], strides = [1, 1]} : vector<144x128xf32> to vector<72x128xf32>
    %186 = vector.extract_strided_slice %181 {offsets = [72, 0], sizes = [72, 128], strides = [1, 1]} : vector<144x128xf32> to vector<72x128xf32>
    %187 = arith.maximumf %185, %186 : vector<72x128xf32>
    %188 = arith.maximumf %184, %187 : vector<72x128xf32>
    %189 = vector.broadcast %1 : vector<72x1xf32> to vector<72x128xf32>
    %190 = arith.addf %188, %189 : vector<72x128xf32>
    %cst_76 = arith.constant 0.000000e+00 : f32
    %191 = vector.broadcast %cst_76 : f32 to vector<72x128xf32>
    %192 = arith.maximumf %190, %191 : vector<72x128xf32>
    %c792 = arith.constant 792 : index
    %c0_77 = arith.constant 0 : index
    %193 = vector.load %arg13[%c792, %c0_77] : memref<864x128xf32, #tpu.memory_space<vmem>>, vector<72x128xf32>
    tpu.vector_store %arg13[%c792, %c0_77], %192 {strides = array<i32>} : memref<864x128xf32, #tpu.memory_space<vmem>>, vector<72x128xf32>,
    %c0_78 = arith.constant 0 : index
    %c0_79 = arith.constant 0 : index
    %194 = vector.load %arg4[%c0_78, %c0_79] : memref<128x360xf32, #tpu.memory_space<vmem>>, vector<128x360xf32>
    %c0_80 = arith.constant 0 : index
    %c0_81 = arith.constant 0 : index
    %195 = vector.load %arg5[%c0_80, %c0_81] : memref<16x1xf32, #tpu.memory_space<vmem>>, vector<16x1xf32>
    %c0_82 = arith.constant 0 : index
    %c0_83 = arith.constant 0 : index
    %196 = vector.load %arg13[%c0_82, %c0_83] : memref<864x128xf32, #tpu.memory_space<vmem>>, vector<360x128xf32>
    %cst_84 = arith.constant dense<0.000000e+00> : vector<128x128xf32>
    %197 = tpu.matmul %194, %196, %cst_84 {dimension_numbers = #tpu.dot_dimension_numbers<[1], [0], [0], [1], [0, 0, 1, 1], [], []>} : vector<128x360xf32>, vector<360x128xf32>, vector<128x128xf32> -> vector<128x128xf32>
    %c72_85 = arith.constant 72 : index
    %c0_86 = arith.constant 0 : index
    %198 = vector.load %arg13[%c72_85, %c0_86] : memref<864x128xf32, #tpu.memory_space<vmem>>, vector<360x128xf32>
    %cst_87 = arith.constant dense<0.000000e+00> : vector<128x128xf32>
    %199 = tpu.matmul %194, %198, %cst_87 {dimension_numbers = #tpu.dot_dimension_numbers<[1], [0], [0], [1], [0, 0, 1, 1], [], []>} : vector<128x360xf32>, vector<360x128xf32>, vector<128x128xf32> -> vector<128x128xf32>
    %200 = vector.extract_strided_slice %197 {offsets = [0, 0], sizes = [16, 128], strides = [1, 1]} : vector<128x128xf32> to vector<16x128xf32>
    %201 = vector.extract_strided_slice %197 {offsets = [64, 0], sizes = [16, 128], strides = [1, 1]} : vector<128x128xf32> to vector<16x128xf32>
    %202 = vector.extract_strided_slice %199 {offsets = [0, 0], sizes = [16, 128], strides = [1, 1]} : vector<128x128xf32> to vector<16x128xf32>
    %203 = vector.extract_strided_slice %199 {offsets = [64, 0], sizes = [16, 128], strides = [1, 1]} : vector<128x128xf32> to vector<16x128xf32>
    %204 = arith.maximumf %200, %201 : vector<16x128xf32>
    %205 = arith.maximumf %202, %203 : vector<16x128xf32>
    %206 = arith.maximumf %204, %205 : vector<16x128xf32>
    %207 = vector.broadcast %195 : vector<16x1xf32> to vector<16x128xf32>
    %208 = arith.addf %206, %207 : vector<16x128xf32>
    %cst_88 = arith.constant 0.000000e+00 : f32
    %209 = vector.broadcast %cst_88 : f32 to vector<16x128xf32>
    %210 = arith.maximumf %208, %209 : vector<16x128xf32>
    %c0_89 = arith.constant 0 : index
    %c0_90 = arith.constant 0 : index
    %211 = vector.load %arg14[%c0_89, %c0_90] : memref<256x128xf32, #tpu.memory_space<vmem>>, vector<16x128xf32>
    tpu.vector_store %arg14[%c0_89, %c0_90], %210 {strides = array<i32>} : memref<256x128xf32, #tpu.memory_space<vmem>>, vector<16x128xf32>,
    %212 = vector.extract_strided_slice %197 {offsets = [16, 0], sizes = [16, 128], strides = [1, 1]} : vector<128x128xf32> to vector<16x128xf32>
    %213 = vector.extract_strided_slice %197 {offsets = [80, 0], sizes = [16, 128], strides = [1, 1]} : vector<128x128xf32> to vector<16x128xf32>
    %214 = vector.extract_strided_slice %199 {offsets = [16, 0], sizes = [16, 128], strides = [1, 1]} : vector<128x128xf32> to vector<16x128xf32>
    %215 = vector.extract_strided_slice %199 {offsets = [80, 0], sizes = [16, 128], strides = [1, 1]} : vector<128x128xf32> to vector<16x128xf32>
    %216 = arith.maximumf %212, %213 : vector<16x128xf32>
    %217 = arith.maximumf %214, %215 : vector<16x128xf32>
    %218 = arith.maximumf %216, %217 : vector<16x128xf32>
    %219 = vector.broadcast %195 : vector<16x1xf32> to vector<16x128xf32>
    %220 = arith.addf %218, %219 : vector<16x128xf32>
    %cst_91 = arith.constant 0.000000e+00 : f32
    %221 = vector.broadcast %cst_91 : f32 to vector<16x128xf32>
    %222 = arith.maximumf %220, %221 : vector<16x128xf32>
    %c16 = arith.constant 16 : index
    %c0_92 = arith.constant 0 : index
    %223 = vector.load %arg14[%c16, %c0_92] : memref<256x128xf32, #tpu.memory_space<vmem>>, vector<16x128xf32>
    tpu.vector_store %arg14[%c16, %c0_92], %222 {strides = array<i32>} : memref<256x128xf32, #tpu.memory_space<vmem>>, vector<16x128xf32>,
    %224 = vector.extract_strided_slice %197 {offsets = [32, 0], sizes = [16, 128], strides = [1, 1]} : vector<128x128xf32> to vector<16x128xf32>
    %225 = vector.extract_strided_slice %197 {offsets = [96, 0], sizes = [16, 128], strides = [1, 1]} : vector<128x128xf32> to vector<16x128xf32>
    %226 = vector.extract_strided_slice %199 {offsets = [32, 0], sizes = [16, 128], strides = [1, 1]} : vector<128x128xf32> to vector<16x128xf32>
    %227 = vector.extract_strided_slice %199 {offsets = [96, 0], sizes = [16, 128], strides = [1, 1]} : vector<128x128xf32> to vector<16x128xf32>
    %228 = arith.maximumf %224, %225 : vector<16x128xf32>
    %229 = arith.maximumf %226, %227 : vector<16x128xf32>
    %230 = arith.maximumf %228, %229 : vector<16x128xf32>
    %231 = vector.broadcast %195 : vector<16x1xf32> to vector<16x128xf32>
    %232 = arith.addf %230, %231 : vector<16x128xf32>
    %cst_93 = arith.constant 0.000000e+00 : f32
    %233 = vector.broadcast %cst_93 : f32 to vector<16x128xf32>
    %234 = arith.maximumf %232, %233 : vector<16x128xf32>
    %c32_94 = arith.constant 32 : index
    %c0_95 = arith.constant 0 : index
    %235 = vector.load %arg14[%c32_94, %c0_95] : memref<256x128xf32, #tpu.memory_space<vmem>>, vector<16x128xf32>
    tpu.vector_store %arg14[%c32_94, %c0_95], %234 {strides = array<i32>} : memref<256x128xf32, #tpu.memory_space<vmem>>, vector<16x128xf32>,
    %236 = vector.extract_strided_slice %197 {offsets = [48, 0], sizes = [16, 128], strides = [1, 1]} : vector<128x128xf32> to vector<16x128xf32>
    %237 = vector.extract_strided_slice %197 {offsets = [112, 0], sizes = [16, 128], strides = [1, 1]} : vector<128x128xf32> to vector<16x128xf32>
    %238 = vector.extract_strided_slice %199 {offsets = [48, 0], sizes = [16, 128], strides = [1, 1]} : vector<128x128xf32> to vector<16x128xf32>
    %239 = vector.extract_strided_slice %199 {offsets = [112, 0], sizes = [16, 128], strides = [1, 1]} : vector<128x128xf32> to vector<16x128xf32>
    %240 = arith.maximumf %236, %237 : vector<16x128xf32>
    %241 = arith.maximumf %238, %239 : vector<16x128xf32>
    %242 = arith.maximumf %240, %241 : vector<16x128xf32>
    %243 = vector.broadcast %195 : vector<16x1xf32> to vector<16x128xf32>
    %244 = arith.addf %242, %243 : vector<16x128xf32>
    %cst_96 = arith.constant 0.000000e+00 : f32
    %245 = vector.broadcast %cst_96 : f32 to vector<16x128xf32>
    %246 = arith.maximumf %244, %245 : vector<16x128xf32>
    %c48 = arith.constant 48 : index
    %c0_97 = arith.constant 0 : index
    %247 = vector.load %arg14[%c48, %c0_97] : memref<256x128xf32, #tpu.memory_space<vmem>>, vector<16x128xf32>
    tpu.vector_store %arg14[%c48, %c0_97], %246 {strides = array<i32>} : memref<256x128xf32, #tpu.memory_space<vmem>>, vector<16x128xf32>,
    %c144_98 = arith.constant 144 : index
    %c0_99 = arith.constant 0 : index
    %248 = vector.load %arg13[%c144_98, %c0_99] : memref<864x128xf32, #tpu.memory_space<vmem>>, vector<360x128xf32>
    %cst_100 = arith.constant dense<0.000000e+00> : vector<128x128xf32>
    %249 = tpu.matmul %194, %248, %cst_100 {dimension_numbers = #tpu.dot_dimension_numbers<[1], [0], [0], [1], [0, 0, 1, 1], [], []>} : vector<128x360xf32>, vector<360x128xf32>, vector<128x128xf32> -> vector<128x128xf32>
    %c216_101 = arith.constant 216 : index
    %c0_102 = arith.constant 0 : index
    %250 = vector.load %arg13[%c216_101, %c0_102] : memref<864x128xf32, #tpu.memory_space<vmem>>, vector<360x128xf32>
    %cst_103 = arith.constant dense<0.000000e+00> : vector<128x128xf32>
    %251 = tpu.matmul %194, %250, %cst_103 {dimension_numbers = #tpu.dot_dimension_numbers<[1], [0], [0], [1], [0, 0, 1, 1], [], []>} : vector<128x360xf32>, vector<360x128xf32>, vector<128x128xf32> -> vector<128x128xf32>
    %252 = vector.extract_strided_slice %249 {offsets = [0, 0], sizes = [16, 128], strides = [1, 1]} : vector<128x128xf32> to vector<16x128xf32>
    %253 = vector.extract_strided_slice %249 {offsets = [64, 0], sizes = [16, 128], strides = [1, 1]} : vector<128x128xf32> to vector<16x128xf32>
    %254 = vector.extract_strided_slice %251 {offsets = [0, 0], sizes = [16, 128], strides = [1, 1]} : vector<128x128xf32> to vector<16x128xf32>
    %255 = vector.extract_strided_slice %251 {offsets = [64, 0], sizes = [16, 128], strides = [1, 1]} : vector<128x128xf32> to vector<16x128xf32>
    %256 = arith.maximumf %252, %253 : vector<16x128xf32>
    %257 = arith.maximumf %254, %255 : vector<16x128xf32>
    %258 = arith.maximumf %256, %257 : vector<16x128xf32>
    %259 = vector.broadcast %195 : vector<16x1xf32> to vector<16x128xf32>
    %260 = arith.addf %258, %259 : vector<16x128xf32>
    %cst_104 = arith.constant 0.000000e+00 : f32
    %261 = vector.broadcast %cst_104 : f32 to vector<16x128xf32>
    %262 = arith.maximumf %260, %261 : vector<16x128xf32>
    %c64_105 = arith.constant 64 : index
    %c0_106 = arith.constant 0 : index
    %263 = vector.load %arg14[%c64_105, %c0_106] : memref<256x128xf32, #tpu.memory_space<vmem>>, vector<16x128xf32>
    tpu.vector_store %arg14[%c64_105, %c0_106], %262 {strides = array<i32>} : memref<256x128xf32, #tpu.memory_space<vmem>>, vector<16x128xf32>,
    %264 = vector.extract_strided_slice %249 {offsets = [16, 0], sizes = [16, 128], strides = [1, 1]} : vector<128x128xf32> to vector<16x128xf32>
    %265 = vector.extract_strided_slice %249 {offsets = [80, 0], sizes = [16, 128], strides = [1, 1]} : vector<128x128xf32> to vector<16x128xf32>
    %266 = vector.extract_strided_slice %251 {offsets = [16, 0], sizes = [16, 128], strides = [1, 1]} : vector<128x128xf32> to vector<16x128xf32>
    %267 = vector.extract_strided_slice %251 {offsets = [80, 0], sizes = [16, 128], strides = [1, 1]} : vector<128x128xf32> to vector<16x128xf32>
    %268 = arith.maximumf %264, %265 : vector<16x128xf32>
    %269 = arith.maximumf %266, %267 : vector<16x128xf32>
    %270 = arith.maximumf %268, %269 : vector<16x128xf32>
    %271 = vector.broadcast %195 : vector<16x1xf32> to vector<16x128xf32>
    %272 = arith.addf %270, %271 : vector<16x128xf32>
    %cst_107 = arith.constant 0.000000e+00 : f32
    %273 = vector.broadcast %cst_107 : f32 to vector<16x128xf32>
    %274 = arith.maximumf %272, %273 : vector<16x128xf32>
    %c80 = arith.constant 80 : index
    %c0_108 = arith.constant 0 : index
    %275 = vector.load %arg14[%c80, %c0_108] : memref<256x128xf32, #tpu.memory_space<vmem>>, vector<16x128xf32>
    tpu.vector_store %arg14[%c80, %c0_108], %274 {strides = array<i32>} : memref<256x128xf32, #tpu.memory_space<vmem>>, vector<16x128xf32>,
    %276 = vector.extract_strided_slice %249 {offsets = [32, 0], sizes = [16, 128], strides = [1, 1]} : vector<128x128xf32> to vector<16x128xf32>
    %277 = vector.extract_strided_slice %249 {offsets = [96, 0], sizes = [16, 128], strides = [1, 1]} : vector<128x128xf32> to vector<16x128xf32>
    %278 = vector.extract_strided_slice %251 {offsets = [32, 0], sizes = [16, 128], strides = [1, 1]} : vector<128x128xf32> to vector<16x128xf32>
    %279 = vector.extract_strided_slice %251 {offsets = [96, 0], sizes = [16, 128], strides = [1, 1]} : vector<128x128xf32> to vector<16x128xf32>
    %280 = arith.maximumf %276, %277 : vector<16x128xf32>
    %281 = arith.maximumf %278, %279 : vector<16x128xf32>
    %282 = arith.maximumf %280, %281 : vector<16x128xf32>
    %283 = vector.broadcast %195 : vector<16x1xf32> to vector<16x128xf32>
    %284 = arith.addf %282, %283 : vector<16x128xf32>
    %cst_109 = arith.constant 0.000000e+00 : f32
    %285 = vector.broadcast %cst_109 : f32 to vector<16x128xf32>
    %286 = arith.maximumf %284, %285 : vector<16x128xf32>
    %c96_110 = arith.constant 96 : index
    %c0_111 = arith.constant 0 : index
    %287 = vector.load %arg14[%c96_110, %c0_111] : memref<256x128xf32, #tpu.memory_space<vmem>>, vector<16x128xf32>
    tpu.vector_store %arg14[%c96_110, %c0_111], %286 {strides = array<i32>} : memref<256x128xf32, #tpu.memory_space<vmem>>, vector<16x128xf32>,
    %288 = vector.extract_strided_slice %249 {offsets = [48, 0], sizes = [16, 128], strides = [1, 1]} : vector<128x128xf32> to vector<16x128xf32>
    %289 = vector.extract_strided_slice %249 {offsets = [112, 0], sizes = [16, 128], strides = [1, 1]} : vector<128x128xf32> to vector<16x128xf32>
    %290 = vector.extract_strided_slice %251 {offsets = [48, 0], sizes = [16, 128], strides = [1, 1]} : vector<128x128xf32> to vector<16x128xf32>
    %291 = vector.extract_strided_slice %251 {offsets = [112, 0], sizes = [16, 128], strides = [1, 1]} : vector<128x128xf32> to vector<16x128xf32>
    %292 = arith.maximumf %288, %289 : vector<16x128xf32>
    %293 = arith.maximumf %290, %291 : vector<16x128xf32>
    %294 = arith.maximumf %292, %293 : vector<16x128xf32>
    %295 = vector.broadcast %195 : vector<16x1xf32> to vector<16x128xf32>
    %296 = arith.addf %294, %295 : vector<16x128xf32>
    %cst_112 = arith.constant 0.000000e+00 : f32
    %297 = vector.broadcast %cst_112 : f32 to vector<16x128xf32>
    %298 = arith.maximumf %296, %297 : vector<16x128xf32>
    %c112 = arith.constant 112 : index
    %c0_113 = arith.constant 0 : index
    %299 = vector.load %arg14[%c112, %c0_113] : memref<256x128xf32, #tpu.memory_space<vmem>>, vector<16x128xf32>
    tpu.vector_store %arg14[%c112, %c0_113], %298 {strides = array<i32>} : memref<256x128xf32, #tpu.memory_space<vmem>>, vector<16x128xf32>,
    %c288_114 = arith.constant 288 : index
    %c0_115 = arith.constant 0 : index
    %300 = vector.load %arg13[%c288_114, %c0_115] : memref<864x128xf32, #tpu.memory_space<vmem>>, vector<360x128xf32>
    %cst_116 = arith.constant dense<0.000000e+00> : vector<128x128xf32>
    %301 = tpu.matmul %194, %300, %cst_116 {dimension_numbers = #tpu.dot_dimension_numbers<[1], [0], [0], [1], [0, 0, 1, 1], [], []>} : vector<128x360xf32>, vector<360x128xf32>, vector<128x128xf32> -> vector<128x128xf32>
    %c360_117 = arith.constant 360 : index
    %c0_118 = arith.constant 0 : index
    %302 = vector.load %arg13[%c360_117, %c0_118] : memref<864x128xf32, #tpu.memory_space<vmem>>, vector<360x128xf32>
    %cst_119 = arith.constant dense<0.000000e+00> : vector<128x128xf32>
    %303 = tpu.matmul %194, %302, %cst_119 {dimension_numbers = #tpu.dot_dimension_numbers<[1], [0], [0], [1], [0, 0, 1, 1], [], []>} : vector<128x360xf32>, vector<360x128xf32>, vector<128x128xf32> -> vector<128x128xf32>
    %304 = vector.extract_strided_slice %301 {offsets = [0, 0], sizes = [16, 128], strides = [1, 1]} : vector<128x128xf32> to vector<16x128xf32>
    %305 = vector.extract_strided_slice %301 {offsets = [64, 0], sizes = [16, 128], strides = [1, 1]} : vector<128x128xf32> to vector<16x128xf32>
    %306 = vector.extract_strided_slice %303 {offsets = [0, 0], sizes = [16, 128], strides = [1, 1]} : vector<128x128xf32> to vector<16x128xf32>
    %307 = vector.extract_strided_slice %303 {offsets = [64, 0], sizes = [16, 128], strides = [1, 1]} : vector<128x128xf32> to vector<16x128xf32>
    %308 = arith.maximumf %304, %305 : vector<16x128xf32>
    %309 = arith.maximumf %306, %307 : vector<16x128xf32>
    %310 = arith.maximumf %308, %309 : vector<16x128xf32>
    %311 = vector.broadcast %195 : vector<16x1xf32> to vector<16x128xf32>
    %312 = arith.addf %310, %311 : vector<16x128xf32>
    %cst_120 = arith.constant 0.000000e+00 : f32
    %313 = vector.broadcast %cst_120 : f32 to vector<16x128xf32>
    %314 = arith.maximumf %312, %313 : vector<16x128xf32>
    %c128_121 = arith.constant 128 : index
    %c0_122 = arith.constant 0 : index
    %315 = vector.load %arg14[%c128_121, %c0_122] : memref<256x128xf32, #tpu.memory_space<vmem>>, vector<16x128xf32>
    tpu.vector_store %arg14[%c128_121, %c0_122], %314 {strides = array<i32>} : memref<256x128xf32, #tpu.memory_space<vmem>>, vector<16x128xf32>,
    %316 = vector.extract_strided_slice %301 {offsets = [16, 0], sizes = [16, 128], strides = [1, 1]} : vector<128x128xf32> to vector<16x128xf32>
    %317 = vector.extract_strided_slice %301 {offsets = [80, 0], sizes = [16, 128], strides = [1, 1]} : vector<128x128xf32> to vector<16x128xf32>
    %318 = vector.extract_strided_slice %303 {offsets = [16, 0], sizes = [16, 128], strides = [1, 1]} : vector<128x128xf32> to vector<16x128xf32>
    %319 = vector.extract_strided_slice %303 {offsets = [80, 0], sizes = [16, 128], strides = [1, 1]} : vector<128x128xf32> to vector<16x128xf32>
    %320 = arith.maximumf %316, %317 : vector<16x128xf32>
    %321 = arith.maximumf %318, %319 : vector<16x128xf32>
    %322 = arith.maximumf %320, %321 : vector<16x128xf32>
    %323 = vector.broadcast %195 : vector<16x1xf32> to vector<16x128xf32>
    %324 = arith.addf %322, %323 : vector<16x128xf32>
    %cst_123 = arith.constant 0.000000e+00 : f32
    %325 = vector.broadcast %cst_123 : f32 to vector<16x128xf32>
    %326 = arith.maximumf %324, %325 : vector<16x128xf32>
    %c144_124 = arith.constant 144 : index
    %c0_125 = arith.constant 0 : index
    %327 = vector.load %arg14[%c144_124, %c0_125] : memref<256x128xf32, #tpu.memory_space<vmem>>, vector<16x128xf32>
    tpu.vector_store %arg14[%c144_124, %c0_125], %326 {strides = array<i32>} : memref<256x128xf32, #tpu.memory_space<vmem>>, vector<16x128xf32>,
    %328 = vector.extract_strided_slice %301 {offsets = [32, 0], sizes = [16, 128], strides = [1, 1]} : vector<128x128xf32> to vector<16x128xf32>
    %329 = vector.extract_strided_slice %301 {offsets = [96, 0], sizes = [16, 128], strides = [1, 1]} : vector<128x128xf32> to vector<16x128xf32>
    %330 = vector.extract_strided_slice %303 {offsets = [32, 0], sizes = [16, 128], strides = [1, 1]} : vector<128x128xf32> to vector<16x128xf32>
    %331 = vector.extract_strided_slice %303 {offsets = [96, 0], sizes = [16, 128], strides = [1, 1]} : vector<128x128xf32> to vector<16x128xf32>
    %332 = arith.maximumf %328, %329 : vector<16x128xf32>
    %333 = arith.maximumf %330, %331 : vector<16x128xf32>
    %334 = arith.maximumf %332, %333 : vector<16x128xf32>
    %335 = vector.broadcast %195 : vector<16x1xf32> to vector<16x128xf32>
    %336 = arith.addf %334, %335 : vector<16x128xf32>
    %cst_126 = arith.constant 0.000000e+00 : f32
    %337 = vector.broadcast %cst_126 : f32 to vector<16x128xf32>
    %338 = arith.maximumf %336, %337 : vector<16x128xf32>
    %c160_127 = arith.constant 160 : index
    %c0_128 = arith.constant 0 : index
    %339 = vector.load %arg14[%c160_127, %c0_128] : memref<256x128xf32, #tpu.memory_space<vmem>>, vector<16x128xf32>
    tpu.vector_store %arg14[%c160_127, %c0_128], %338 {strides = array<i32>} : memref<256x128xf32, #tpu.memory_space<vmem>>, vector<16x128xf32>,
    %340 = vector.extract_strided_slice %301 {offsets = [48, 0], sizes = [16, 128], strides = [1, 1]} : vector<128x128xf32> to vector<16x128xf32>
    %341 = vector.extract_strided_slice %301 {offsets = [112, 0], sizes = [16, 128], strides = [1, 1]} : vector<128x128xf32> to vector<16x128xf32>
    %342 = vector.extract_strided_slice %303 {offsets = [48, 0], sizes = [16, 128], strides = [1, 1]} : vector<128x128xf32> to vector<16x128xf32>
    %343 = vector.extract_strided_slice %303 {offsets = [112, 0], sizes = [16, 128], strides = [1, 1]} : vector<128x128xf32> to vector<16x128xf32>
    %344 = arith.maximumf %340, %341 : vector<16x128xf32>
    %345 = arith.maximumf %342, %343 : vector<16x128xf32>
    %346 = arith.maximumf %344, %345 : vector<16x128xf32>
    %347 = vector.broadcast %195 : vector<16x1xf32> to vector<16x128xf32>
    %348 = arith.addf %346, %347 : vector<16x128xf32>
    %cst_129 = arith.constant 0.000000e+00 : f32
    %349 = vector.broadcast %cst_129 : f32 to vector<16x128xf32>
    %350 = arith.maximumf %348, %349 : vector<16x128xf32>
    %c176 = arith.constant 176 : index
    %c0_130 = arith.constant 0 : index
    %351 = vector.load %arg14[%c176, %c0_130] : memref<256x128xf32, #tpu.memory_space<vmem>>, vector<16x128xf32>
    tpu.vector_store %arg14[%c176, %c0_130], %350 {strides = array<i32>} : memref<256x128xf32, #tpu.memory_space<vmem>>, vector<16x128xf32>,
    %c432_131 = arith.constant 432 : index
    %c0_132 = arith.constant 0 : index
    %352 = vector.load %arg13[%c432_131, %c0_132] : memref<864x128xf32, #tpu.memory_space<vmem>>, vector<360x128xf32>
    %cst_133 = arith.constant dense<0.000000e+00> : vector<128x128xf32>
    %353 = tpu.matmul %194, %352, %cst_133 {dimension_numbers = #tpu.dot_dimension_numbers<[1], [0], [0], [1], [0, 0, 1, 1], [], []>} : vector<128x360xf32>, vector<360x128xf32>, vector<128x128xf32> -> vector<128x128xf32>
    %c504_134 = arith.constant 504 : index
    %c0_135 = arith.constant 0 : index
    %354 = vector.load %arg13[%c504_134, %c0_135] : memref<864x128xf32, #tpu.memory_space<vmem>>, vector<360x128xf32>
    %cst_136 = arith.constant dense<0.000000e+00> : vector<128x128xf32>
    %355 = tpu.matmul %194, %354, %cst_136 {dimension_numbers = #tpu.dot_dimension_numbers<[1], [0], [0], [1], [0, 0, 1, 1], [], []>} : vector<128x360xf32>, vector<360x128xf32>, vector<128x128xf32> -> vector<128x128xf32>
    %356 = vector.extract_strided_slice %353 {offsets = [0, 0], sizes = [16, 128], strides = [1, 1]} : vector<128x128xf32> to vector<16x128xf32>
    %357 = vector.extract_strided_slice %353 {offsets = [64, 0], sizes = [16, 128], strides = [1, 1]} : vector<128x128xf32> to vector<16x128xf32>
    %358 = vector.extract_strided_slice %355 {offsets = [0, 0], sizes = [16, 128], strides = [1, 1]} : vector<128x128xf32> to vector<16x128xf32>
    %359 = vector.extract_strided_slice %355 {offsets = [64, 0], sizes = [16, 128], strides = [1, 1]} : vector<128x128xf32> to vector<16x128xf32>
    %360 = arith.maximumf %356, %357 : vector<16x128xf32>
    %361 = arith.maximumf %358, %359 : vector<16x128xf32>
    %362 = arith.maximumf %360, %361 : vector<16x128xf32>
    %363 = vector.broadcast %195 : vector<16x1xf32> to vector<16x128xf32>
    %364 = arith.addf %362, %363 : vector<16x128xf32>
    %cst_137 = arith.constant 0.000000e+00 : f32
    %365 = vector.broadcast %cst_137 : f32 to vector<16x128xf32>
    %366 = arith.maximumf %364, %365 : vector<16x128xf32>
    %c192_138 = arith.constant 192 : index
    %c0_139 = arith.constant 0 : index
    %367 = vector.load %arg14[%c192_138, %c0_139] : memref<256x128xf32, #tpu.memory_space<vmem>>, vector<16x128xf32>
    tpu.vector_store %arg14[%c192_138, %c0_139], %366 {strides = array<i32>} : memref<256x128xf32, #tpu.memory_space<vmem>>, vector<16x128xf32>,
    %368 = vector.extract_strided_slice %353 {offsets = [16, 0], sizes = [16, 128], strides = [1, 1]} : vector<128x128xf32> to vector<16x128xf32>
    %369 = vector.extract_strided_slice %353 {offsets = [80, 0], sizes = [16, 128], strides = [1, 1]} : vector<128x128xf32> to vector<16x128xf32>
    %370 = vector.extract_strided_slice %355 {offsets = [16, 0], sizes = [16, 128], strides = [1, 1]} : vector<128x128xf32> to vector<16x128xf32>
    %371 = vector.extract_strided_slice %355 {offsets = [80, 0], sizes = [16, 128], strides = [1, 1]} : vector<128x128xf32> to vector<16x128xf32>
    %372 = arith.maximumf %368, %369 : vector<16x128xf32>
    %373 = arith.maximumf %370, %371 : vector<16x128xf32>
    %374 = arith.maximumf %372, %373 : vector<16x128xf32>
    %375 = vector.broadcast %195 : vector<16x1xf32> to vector<16x128xf32>
    %376 = arith.addf %374, %375 : vector<16x128xf32>
    %cst_140 = arith.constant 0.000000e+00 : f32
    %377 = vector.broadcast %cst_140 : f32 to vector<16x128xf32>
    %378 = arith.maximumf %376, %377 : vector<16x128xf32>
    %c208 = arith.constant 208 : index
    %c0_141 = arith.constant 0 : index
    %379 = vector.load %arg14[%c208, %c0_141] : memref<256x128xf32, #tpu.memory_space<vmem>>, vector<16x128xf32>
    tpu.vector_store %arg14[%c208, %c0_141], %378 {strides = array<i32>} : memref<256x128xf32, #tpu.memory_space<vmem>>, vector<16x128xf32>,
    %380 = vector.extract_strided_slice %353 {offsets = [32, 0], sizes = [16, 128], strides = [1, 1]} : vector<128x128xf32> to vector<16x128xf32>
    %381 = vector.extract_strided_slice %353 {offsets = [96, 0], sizes = [16, 128], strides = [1, 1]} : vector<128x128xf32> to vector<16x128xf32>
    %382 = vector.extract_strided_slice %355 {offsets = [32, 0], sizes = [16, 128], strides = [1, 1]} : vector<128x128xf32> to vector<16x128xf32>
    %383 = vector.extract_strided_slice %355 {offsets = [96, 0], sizes = [16, 128], strides = [1, 1]} : vector<128x128xf32> to vector<16x128xf32>
    %384 = arith.maximumf %380, %381 : vector<16x128xf32>
    %385 = arith.maximumf %382, %383 : vector<16x128xf32>
    %386 = arith.maximumf %384, %385 : vector<16x128xf32>
    %387 = vector.broadcast %195 : vector<16x1xf32> to vector<16x128xf32>
    %388 = arith.addf %386, %387 : vector<16x128xf32>
    %cst_142 = arith.constant 0.000000e+00 : f32
    %389 = vector.broadcast %cst_142 : f32 to vector<16x128xf32>
    %390 = arith.maximumf %388, %389 : vector<16x128xf32>
    %c224_143 = arith.constant 224 : index
    %c0_144 = arith.constant 0 : index
    %391 = vector.load %arg14[%c224_143, %c0_144] : memref<256x128xf32, #tpu.memory_space<vmem>>, vector<16x128xf32>
    tpu.vector_store %arg14[%c224_143, %c0_144], %390 {strides = array<i32>} : memref<256x128xf32, #tpu.memory_space<vmem>>, vector<16x128xf32>,
    %392 = vector.extract_strided_slice %353 {offsets = [48, 0], sizes = [16, 128], strides = [1, 1]} : vector<128x128xf32> to vector<16x128xf32>
    %393 = vector.extract_strided_slice %353 {offsets = [112, 0], sizes = [16, 128], strides = [1, 1]} : vector<128x128xf32> to vector<16x128xf32>
    %394 = vector.extract_strided_slice %355 {offsets = [48, 0], sizes = [16, 128], strides = [1, 1]} : vector<128x128xf32> to vector<16x128xf32>
    %395 = vector.extract_strided_slice %355 {offsets = [112, 0], sizes = [16, 128], strides = [1, 1]} : vector<128x128xf32> to vector<16x128xf32>
    %396 = arith.maximumf %392, %393 : vector<16x128xf32>
    %397 = arith.maximumf %394, %395 : vector<16x128xf32>
    %398 = arith.maximumf %396, %397 : vector<16x128xf32>
    %399 = vector.broadcast %195 : vector<16x1xf32> to vector<16x128xf32>
    %400 = arith.addf %398, %399 : vector<16x128xf32>
    %cst_145 = arith.constant 0.000000e+00 : f32
    %401 = vector.broadcast %cst_145 : f32 to vector<16x128xf32>
    %402 = arith.maximumf %400, %401 : vector<16x128xf32>
    %c240 = arith.constant 240 : index
    %c0_146 = arith.constant 0 : index
    %403 = vector.load %arg14[%c240, %c0_146] : memref<256x128xf32, #tpu.memory_space<vmem>>, vector<16x128xf32>
    tpu.vector_store %arg14[%c240, %c0_146], %402 {strides = array<i32>} : memref<256x128xf32, #tpu.memory_space<vmem>>, vector<16x128xf32>,
    %c0_147 = arith.constant 0 : index
    %c0_148 = arith.constant 0 : index
    %404 = vector.load %arg6[%c0_147, %c0_148] : memref<120x256xf32, #tpu.memory_space<vmem>>, vector<120x256xf32>
    %c0_149 = arith.constant 0 : index
    %c0_150 = arith.constant 0 : index
    %405 = vector.load %arg14[%c0_149, %c0_150] : memref<256x128xf32, #tpu.memory_space<vmem>>, vector<256x128xf32>
    %cst_151 = arith.constant dense<0.000000e+00> : vector<120x128xf32>
    %406 = tpu.matmul %404, %405, %cst_151 {dimension_numbers = #tpu.dot_dimension_numbers<[1], [0], [0], [1], [0, 0, 1, 1], [], []>} : vector<120x256xf32>, vector<256x128xf32>, vector<120x128xf32> -> vector<120x128xf32>
    %c0_152 = arith.constant 0 : index
    %c0_153 = arith.constant 0 : index
    %407 = vector.load %arg7[%c0_152, %c0_153] : memref<120x1xf32, #tpu.memory_space<vmem>>, vector<120x1xf32>
    %408 = vector.broadcast %407 : vector<120x1xf32> to vector<120x128xf32>
    %409 = arith.addf %406, %408 : vector<120x128xf32>
    %cst_154 = arith.constant 0.000000e+00 : f32
    %410 = vector.broadcast %cst_154 : f32 to vector<120x128xf32>
    %411 = arith.maximumf %409, %410 : vector<120x128xf32>
    %c0_155 = arith.constant 0 : index
    %c0_156 = arith.constant 0 : index
    %412 = vector.load %arg8[%c0_155, %c0_156] : memref<84x120xf32, #tpu.memory_space<vmem>>, vector<84x120xf32>
    %cst_157 = arith.constant dense<0.000000e+00> : vector<84x128xf32>
    %413 = tpu.matmul %412, %411, %cst_157 {dimension_numbers = #tpu.dot_dimension_numbers<[1], [0], [0], [1], [0, 0, 1, 1], [], []>} : vector<84x120xf32>, vector<120x128xf32>, vector<84x128xf32> -> vector<84x128xf32>
    %c0_158 = arith.constant 0 : index
    %c0_159 = arith.constant 0 : index
    %414 = vector.load %arg9[%c0_158, %c0_159] : memref<84x1xf32, #tpu.memory_space<vmem>>, vector<84x1xf32>
    %415 = vector.broadcast %414 : vector<84x1xf32> to vector<84x128xf32>
    %416 = arith.addf %413, %415 : vector<84x128xf32>
    %cst_160 = arith.constant 0.000000e+00 : f32
    %417 = vector.broadcast %cst_160 : f32 to vector<84x128xf32>
    %418 = arith.maximumf %416, %417 : vector<84x128xf32>
    %c0_161 = arith.constant 0 : index
    %c0_162 = arith.constant 0 : index
    %419 = vector.load %arg10[%c0_161, %c0_162] : memref<10x84xf32, #tpu.memory_space<vmem>>, vector<10x84xf32>
    %cst_163 = arith.constant dense<0.000000e+00> : vector<10x128xf32>
    %420 = tpu.matmul %419, %418, %cst_163 {dimension_numbers = #tpu.dot_dimension_numbers<[1], [0], [0], [1], [0, 0, 1, 1], [], []>} : vector<10x84xf32>, vector<84x128xf32>, vector<10x128xf32> -> vector<10x128xf32>
    %c0_164 = arith.constant 0 : index
    %c0_165 = arith.constant 0 : index
    %421 = vector.load %arg11[%c0_164, %c0_165] : memref<10x1xf32, #tpu.memory_space<vmem>>, vector<10x1xf32>
    %422 = vector.broadcast %421 : vector<10x1xf32> to vector<10x128xf32>
    %423 = arith.addf %420, %422 : vector<10x128xf32>
    %cst_166 = arith.constant dense<0xFF800000> : vector<128xf32>
    %424 = vector.multi_reduction <maximumf>, %423, %cst_166 [0] : vector<10x128xf32> to vector<128xf32>
    %425 = vector.shape_cast %424 : vector<128xf32> to vector<1x128xf32>
    %426 = vector.broadcast %425 : vector<1x128xf32> to vector<10x128xf32>
    %427 = arith.subf %423, %426 : vector<10x128xf32>
    %428 = math.exp %427 : vector<10x128xf32>
    %cst_167 = arith.constant dense<0.000000e+00> : vector<128xf32>
    %429 = vector.multi_reduction <add>, %428, %cst_167 [0] : vector<10x128xf32> to vector<128xf32>
    %430 = vector.shape_cast %429 : vector<128xf32> to vector<1x128xf32>
    %431 = math.log %430 : vector<1x128xf32>
    %432 = vector.broadcast %431 : vector<1x128xf32> to vector<10x128xf32>
    %433 = arith.subf %427, %432 : vector<10x128xf32>
    %c0_168 = arith.constant 0 : index
    %c0_169 = arith.constant 0 : index
    %434 = vector.load %arg12[%c0_168, %c0_169] : memref<10x128xf32, #tpu.memory_space<vmem>>, vector<10x128xf32>
    tpu.vector_store %arg12[%c0_168, %c0_169], %433 {strides = array<i32>} : memref<10x128xf32, #tpu.memory_space<vmem>>, vector<10x128xf32>,
    return
  }
  func.func @transform_0(%arg0: i32) -> (i32, i32) {
    %c0_i32 = arith.constant 0 : i32
    %c0_i32_0 = arith.constant 0 : i32
    return %c0_i32, %arg0 : i32, i32
  }
  func.func @transform_1(%arg0: i32) -> (i32, i32) {
    %c0_i32 = arith.constant 0 : i32
    %c0_i32_0 = arith.constant 0 : i32
    %c0_i32_1 = arith.constant 0 : i32
    return %c0_i32, %c0_i32_0 : i32, i32
  }
  func.func @transform_2(%arg0: i32) -> (i32, i32) {
    %c0_i32 = arith.constant 0 : i32
    %c0_i32_0 = arith.constant 0 : i32
    %c0_i32_1 = arith.constant 0 : i32
    return %c0_i32, %c0_i32_0 : i32, i32
  }
  func.func @transform_3(%arg0: i32) -> (i32, i32) {
    %c0_i32 = arith.constant 0 : i32
    %c0_i32_0 = arith.constant 0 : i32
    %c0_i32_1 = arith.constant 0 : i32
    return %c0_i32, %c0_i32_0 : i32, i32
  }
  func.func @transform_4(%arg0: i32) -> (i32, i32) {
    %c0_i32 = arith.constant 0 : i32
    %c0_i32_0 = arith.constant 0 : i32
    %c0_i32_1 = arith.constant 0 : i32
    return %c0_i32, %c0_i32_0 : i32, i32
  }
  func.func @transform_5(%arg0: i32) -> (i32, i32) {
    %c0_i32 = arith.constant 0 : i32
    %c0_i32_0 = arith.constant 0 : i32
    %c0_i32_1 = arith.constant 0 : i32
    return %c0_i32, %c0_i32_0 : i32, i32
  }
  func.func @transform_6(%arg0: i32) -> (i32, i32) {
    %c0_i32 = arith.constant 0 : i32
    %c0_i32_0 = arith.constant 0 : i32
    %c0_i32_1 = arith.constant 0 : i32
    return %c0_i32, %c0_i32_0 : i32, i32
  }
  func.func @transform_7(%arg0: i32) -> (i32, i32) {
    %c0_i32 = arith.constant 0 : i32
    %c0_i32_0 = arith.constant 0 : i32
    %c0_i32_1 = arith.constant 0 : i32
    return %c0_i32, %c0_i32_0 : i32, i32
  }
  func.func @transform_8(%arg0: i32) -> (i32, i32) {
    %c0_i32 = arith.constant 0 : i32
    %c0_i32_0 = arith.constant 0 : i32
    %c0_i32_1 = arith.constant 0 : i32
    return %c0_i32, %c0_i32_0 : i32, i32
  }
  func.func @transform_9(%arg0: i32) -> (i32, i32) {
    %c0_i32 = arith.constant 0 : i32
    %c0_i32_0 = arith.constant 0 : i32
    %c0_i32_1 = arith.constant 0 : i32
    return %c0_i32, %c0_i32_0 : i32, i32
  }
  func.func @transform_10(%arg0: i32) -> (i32, i32) {
    %c0_i32 = arith.constant 0 : i32
    %c0_i32_0 = arith.constant 0 : i32
    %c0_i32_1 = arith.constant 0 : i32
    return %c0_i32, %c0_i32_0 : i32, i32
  }
  func.func @transform_11(%arg0: i32) -> (i32, i32) {
    %c0_i32 = arith.constant 0 : i32
    %c0_i32_0 = arith.constant 0 : i32
    return %c0_i32, %arg0 : i32, i32
  }
}

</mosaic_0001>

<llo_original>
// kernel: img2num_forward.1
$region0: #{img2num_forward.1}
  #allocation0 [shape = 'u32[]', space=smem, size = 0x4, offset = 0x4, fixed_abs, tag = 'smem constant byte address 0x4 - core index']
  #allocation1 [shape = 'u32[144,128]{1,0:T(1,128)}', space=vmem, size = 0x12000, scoped, tag = 'internal scratch']
  #allocation2 [shape = 'f32[864,128]{1,0:T(8,128)}', space=vmem, size = 0x6c000, scoped, tag = 'scratch operand']
  #allocation3 [shape = 'f32[256,128]{1,0:T(8,128)}', space=vmem, size = 0x20000, scoped, tag = 'scratch operand']
  %s0 = inlined_call_operand.vmem [shape: f32[896,128], index: 0, kind: input, shape index: {}]
  %s1 = inlined_call_operand.vmem [shape: f32[144,160], index: 1, kind: input, shape index: {}]
  %s2 = inlined_call_operand.vmem [shape: f32[72,1], index: 2, kind: input, shape index: {}]
  %s3 = inlined_call_operand.vmem [shape: f32[128,360], index: 3, kind: input, shape index: {}]
  %s4 = inlined_call_operand.vmem [shape: f32[16,1], index: 4, kind: input, shape index: {}]
  %s5 = inlined_call_operand.vmem [shape: f32[120,256], index: 5, kind: input, shape index: {}]
  %s6 = inlined_call_operand.vmem [shape: f32[120,1], index: 6, kind: input, shape index: {}]
  %s7 = inlined_call_operand.vmem [shape: f32[84,120], index: 7, kind: input, shape index: {}]
  %s8 = inlined_call_operand.vmem [shape: f32[84,1], index: 8, kind: input, shape index: {}]
  %s9 = inlined_call_operand.vmem [shape: f32[10,84], index: 9, kind: input, shape index: {}]
  %s10 = inlined_call_operand.vmem [shape: f32[10,1], index: 10, kind: input, shape index: {}]
  %s11 = inlined_call_operand.vmem [shape: f32[10,128], index: 11, kind: output, shape index: {}]
  %s12 = sld [smem:[#allocation0]]
  $region54: #{img2num_forward.1} parent=0
    _
  %s14 = ssub.s32 1, %s12
  %s15 = scalar_select 0, %s14, %s12
  // Predicated region
  $region2: #{img2num_forward.1} parent=0 // pred_check
    _
  $region3: #{img2num_forward.1} parent=0 // pred_check_branch
    %17 = sbr.rel (0) target = $region5
  $region4: #{img2num_forward.1} parent=0 // pred_region
    _
  $region5: #{img2num_forward.1} parent=0 // pred_fallthru
    _
  // Predicated region
  $region6: #{img2num_forward.1} parent=0 // pred_check
    _
  $region7: #{img2num_forward.1} parent=0 // pred_check_branch
    %19 = sbr.rel (0) target = $region9
  $region8: #{img2num_forward.1} parent=0 // pred_region
    _
  $region9: #{img2num_forward.1} parent=0 // pred_fallthru
    _
  // Predicated region
  $region10: #{img2num_forward.1} parent=0 // pred_check
    _
  $region11: #{img2num_forward.1} parent=0 // pred_check_branch
    %21 = sbr.rel (0) target = $region13
  $region12: #{img2num_forward.1} parent=0 // pred_region
    _
  $region13: #{img2num_forward.1} parent=0 // pred_fallthru
    _
  // Predicated region
  $region14: #{img2num_forward.1} parent=0 // pred_check
    _
  $region15: #{img2num_forward.1} parent=0 // pred_check_branch
    %23 = sbr.rel (0) target = $region17
  $region16: #{img2num_forward.1} parent=0 // pred_region
    _
  $region17: #{img2num_forward.1} parent=0 // pred_fallthru
    _
  // Predicated region
  $region18: #{img2num_forward.1} parent=0 // pred_check
    _
  $region19: #{img2num_forward.1} parent=0 // pred_check_branch
    %25 = sbr.rel (0) target = $region21
  $region20: #{img2num_forward.1} parent=0 // pred_region
    _
  $region21: #{img2num_forward.1} parent=0 // pred_fallthru
    _
  // Predicated region
  $region22: #{img2num_forward.1} parent=0 // pred_check
    _
  $region23: #{img2num_forward.1} parent=0 // pred_check_branch
    %27 = sbr.rel (0) target = $region25
  $region24: #{img2num_forward.1} parent=0 // pred_region
    _
  $region25: #{img2num_forward.1} parent=0 // pred_fallthru
    _
  // Predicated region
  $region26: #{img2num_forward.1} parent=0 // pred_check
    _
  $region27: #{img2num_forward.1} parent=0 // pred_check_branch
    %29 = sbr.rel (0) target = $region29
  $region28: #{img2num_forward.1} parent=0 // pred_region
    _
  $region29: #{img2num_forward.1} parent=0 // pred_fallthru
    _
  // Predicated region
  $region30: #{img2num_forward.1} parent=0 // pred_check
    _
  $region31: #{img2num_forward.1} parent=0 // pred_check_branch
    %31 = sbr.rel (0) target = $region33
  $region32: #{img2num_forward.1} parent=0 // pred_region
    _
  $region33: #{img2num_forward.1} parent=0 // pred_fallthru
    _
  // Predicated region
  $region34: #{img2num_forward.1} parent=0 // pred_check
    _
  $region35: #{img2num_forward.1} parent=0 // pred_check_branch
    %33 = sbr.rel (0) target = $region37
  $region36: #{img2num_forward.1} parent=0 // pred_region
    _
  $region37: #{img2num_forward.1} parent=0 // pred_fallthru
    _
  // Predicated region
  $region38: #{img2num_forward.1} parent=0 // pred_check
    _
  $region39: #{img2num_forward.1} parent=0 // pred_check_branch
    %35 = sbr.rel (0) target = $region41
  $region40: #{img2num_forward.1} parent=0 // pred_region
    _
  $region41: #{img2num_forward.1} parent=0 // pred_fallthru
    _
  // Predicated region
  $region42: #{img2num_forward.1} parent=0 // pred_check
    _
  $region43: #{img2num_forward.1} parent=0 // pred_check_branch
    %37 = sbr.rel (0) target = $region45
  $region44: #{img2num_forward.1} parent=0 // pred_region
    _
  $region45: #{img2num_forward.1} parent=0 // pred_fallthru
    _
  %v38 = vld [vmem:[%s1] sm:$0xff]
  %v39 = vld [vmem:[%s1 + $0x8] sm:$0xff]
  %v40 = vld [vmem:[%s1 + $0x10] sm:$0xff]
  %v41 = vld [vmem:[%s1 + $0x18] sm:$0xff]
  %v42 = vld [vmem:[%s1 + $0x20] sm:$0xff]
  %v43 = vld [vmem:[%s1 + $0x28] sm:$0xff]
  %v44 = vld [vmem:[%s1 + $0x30] sm:$0xff]
  %v45 = vld [vmem:[%s1 + $0x38] sm:$0xff]
  %v46 = vld [vmem:[%s1 + $0x40] sm:$0xff]
  %v47 = vld [vmem:[%s1 + $0x48] sm:$0xff]
  %v48 = vld [vmem:[%s1 + $0x50] sm:$0xff]
  %v49 = vld [vmem:[%s1 + $0x58] sm:$0xff]
  %v50 = vld [vmem:[%s1 + $0x60] sm:$0xff]
  %v51 = vld [vmem:[%s1 + $0x68] sm:$0xff]
  %v52 = vld [vmem:[%s1 + $0x70] sm:$0xff]
  %v53 = vld [vmem:[%s1 + $0x78] sm:$0xff]
  %v54 = vld [vmem:[%s1 + $0x80] sm:$0xff]
  %v55 = vld [vmem:[%s1 + $0x88] sm:$0xff]
  %v56 = vld [vmem:[%s1 + $0x90] sm:$0xff]
  %v57 = vld [vmem:[%s1 + $0x98] sm:$0xff]
  %v58 = vld [vmem:[%s1 + $0xa0] sm:$0xff]
  %v59 = vld [vmem:[%s1 + $0xa8] sm:$0xff]
  %v60 = vld [vmem:[%s1 + $0xb0] sm:$0xff]
  %v61 = vld [vmem:[%s1 + $0xb8] sm:$0xff]
  %v62 = vld [vmem:[%s1 + $0xc0] sm:$0xff]
  %v63 = vld [vmem:[%s1 + $0xc8] sm:$0xff]
  %v64 = vld [vmem:[%s1 + $0xd0] sm:$0xff]
  %v65 = vld [vmem:[%s1 + $0xd8] sm:$0xff]
  %v66 = vld [vmem:[%s1 + $0xe0] sm:$0xff]
  %v67 = vld [vmem:[%s1 + $0xe8] sm:$0xff]
  %v68 = vld [vmem:[%s1 + $0xf0] sm:$0xff]
  %v69 = vld [vmem:[%s1 + $0xf8] sm:$0xff]
  %v70 = vld [vmem:[%s1 + $0x100] sm:$0xff]
  %v71 = vld [vmem:[%s1 + $0x108] sm:$0xff]
  %v72 = vld [vmem:[%s1 + $0x110] sm:$0xff]
  %v73 = vld [vmem:[%s1 + $0x118] sm:$0xff]
  %v74 = vld [vmem:[%s2] sm:$0xff]
  %v75 = vld [vmem:[%s2 + $0x8] sm:$0xff]
  %v76 = vld [vmem:[%s2 + $0x10] sm:$0xff]
  %v77 = vld [vmem:[%s2 + $0x18] sm:$0xff]
  %v78 = vld [vmem:[%s2 + $0x20] sm:$0xff]
  %v79 = vld [vmem:[%s2 + $0x28] sm:$0xff]
  %v80 = vld [vmem:[%s2 + $0x30] sm:$0xff]
  %v81 = vld [vmem:[%s2 + $0x38] sm:$0xff]
  %v82 = vld [vmem:[%s2 + $0x40] sm:$0xff]
  %v83 = vld [vmem:[%s0] sm:$0xff]
  %v84 = vld [vmem:[%s0 + $0x8] sm:$0xff]
  %v85 = vld [vmem:[%s0 + $0x10] sm:$0xff]
  %v86 = vld [vmem:[%s0 + $0x18] sm:$0xff]
  %v87 = vld [vmem:[%s0 + $0x20] sm:$0xff]
  %v88 = vld [vmem:[%s0 + $0x28] sm:$0xff]
  %v89 = vld [vmem:[%s0 + $0x30] sm:$0xff]
  %v90 = vld [vmem:[%s0 + $0x38] sm:$0xff]
  %v91 = vld [vmem:[%s0 + $0x40] sm:$0xff]
  %v92 = vld [vmem:[%s0 + $0x48] sm:$0xff]
  %v93 = vld [vmem:[%s0 + $0x50] sm:$0xff]
  %v94 = vld [vmem:[%s0 + $0x58] sm:$0xff]
  %v95 = vld [vmem:[%s0 + $0x60] sm:$0xff]
  %v96 = vld [vmem:[%s0 + $0x68] sm:$0xff]
  %v97 = vld [vmem:[%s0 + $0x70] sm:$0xff]
  %v98 = vld [vmem:[%s0 + $0x78] sm:$0xff]
  %v99 = vld [vmem:[%s0 + $0x80] sm:$0xff]
  %v100 = vld [vmem:[%s0 + $0x88] sm:$0xff]
  %v101 = vld [vmem:[%s0 + $0x90] sm:$0xff]
  %v102 = vld [vmem:[%s0 + $0x98] sm:$0xff]
  %vm103 = vcmask 261120
  %v105 = vsel %vm103, %v39, 0
  %v108 = vsel %vm103, %v41, 0
  %v111 = vsel %vm103, %v43, 0
  %v114 = vsel %vm103, %v45, 0
  %v117 = vsel %vm103, %v47, 0
  %v120 = vsel %vm103, %v49, 0
  %v123 = vsel %vm103, %v51, 0
  %v126 = vsel %vm103, %v53, 0
  %v129 = vsel %vm103, %v55, 0
  %v132 = vsel %vm103, %v57, 0
  %v135 = vsel %vm103, %v59, 0
  %v138 = vsel %vm103, %v61, 0
  %v141 = vsel %vm103, %v63, 0
  %v144 = vsel %vm103, %v65, 0
  %v147 = vsel %vm103, %v67, 0
  %v150 = vsel %vm103, %v69, 0
  %v153 = vsel %vm103, %v71, 0
  %v156 = vsel %vm103, %v73, 0
  %158 = vmatprep.subr.mxu0 0.0
  %159 = vmatpush1.msra.mxu0 %v98
  %160 = vmatprep.subr.mxu0 0.0
  %161 = vmatpush1.msra.mxu0 %v97
  %162 = vmatprep.subr.mxu0 0.0
  %163 = vmatpush1.msra.mxu0 %v96
  %164 = vmatprep.subr.mxu0 0.0
  %165 = vmatpush1.msra.mxu0 %v95
  %166 = vmatprep.subr.mxu0 0.0
  %167 = vmatpush1.msra.mxu0 %v94
  %168 = vmatprep.subr.mxu0 0.0
  %169 = vmatpush1.msra.mxu0 %v93
  %170 = vmatprep.subr.mxu0 0.0
  %171 = vmatpush1.msra.mxu0 %v92
  %172 = vmatprep.subr.mxu0 0.0
  %173 = vmatpush1.msra.mxu0 %v91
  %174 = vmatprep.subr.mxu0 0.0
  %175 = vmatpush1.msra.mxu0 %v90
  %176 = vmatprep.subr.mxu0 0.0
  %177 = vmatpush1.msra.mxu0 %v89
  %178 = vmatprep.subr.mxu0 0.0
  %179 = vmatpush1.msra.mxu0 %v88
  %180 = vmatprep.subr.mxu0 0.0
  %181 = vmatpush1.msra.mxu0 %v87
  %182 = vmatprep.subr.mxu0 0.0
  %183 = vmatpush1.msra.mxu0 %v86
  %184 = vmatprep.subr.mxu0 0.0
  %185 = vmatpush1.msra.mxu0 %v85
  %186 = vmatprep.subr.mxu0 0.0
  %187 = vmatpush1.msra.mxu0 %v84
  %188 = vmatprep.subr.mxu0 0.0
  %189 = vmatpush1.msra.mxu0 %v83
  %190 = vmatprep.subr.mxu0 0.0
  %191 = vmatpush2.msra.mxu0 0.0
  %192 = vmatprep.subr.mxu0 0.0
  %193 = vmatpush2.msra.mxu0 0.0
  %194 = vmatprep.subr.mxu0 0.0
  %195 = vmatpush2.msra.mxu0 0.0
  %196 = vmatprep.subr.mxu0 0.0
  %197 = vmatpush2.msra.mxu0 0.0
  %198 = vmatprep.subr.mxu0 0.0
  %199 = vmatpush2.msra.mxu0 0.0
  %200 = vmatprep.subr.mxu0 0.0
  %201 = vmatpush2.msra.mxu0 0.0
  %202 = vmatprep.subr.mxu0 0.0
  %203 = vmatpush2.msra.mxu0 0.0
  %204 = vmatprep.subr.mxu0 0.0
  %205 = vmatpush2.msra.mxu0 0.0
  %206 = vmatprep.subr.mxu0 0.0
  %207 = vmatpush2.msra.mxu0 0.0
  %208 = vmatprep.subr.mxu0 0.0
  %209 = vmatpush2.msra.mxu0 0.0
  %210 = vmatprep.subr.mxu0 0.0
  %211 = vmatpush2.msra.mxu0 0.0
  %212 = vmatprep.subr.mxu0 0.0
  %213 = vmatpush2.msra.mxu0 0.0
  %214 = vmatprep.subr.mxu0 0.0
  %215 = vmatpush2.msra.mxu0 %v102
  %216 = vmatprep.subr.mxu0 0.0
  %217 = vmatpush2.msra.mxu0 %v101
  %218 = vmatprep.subr.mxu0 0.0
  %219 = vmatpush2.msra.mxu0 %v100
  %220 = vmatprep.subr.mxu0 0.0
  %221 = vmatpush2.msra.mxu0 %v99
  %222 = vmatprep.mubr.f32.mxu0 %v105
  %223 = vmatmul.mubr.f32.gmra.mxu0 %v38
  %v224 = vpop.f32.mrf.mxu0
  %v225 = vadd.f32 0.0, %v224
  %v226 = vpop.f32.mrf.mxu0
  %227 = vmatprep.mubr.f32.mxu0 %v108
  %228 = vmatmul.mubr.f32.gmra.mxu0 %v40
  %v229 = vpop.f32.mrf.mxu0
  %v230 = vadd.f32 0.0, %v229
  %v231 = vpop.f32.mrf.mxu0
  %232 = vmatprep.mubr.f32.mxu0 %v111
  %233 = vmatmul.mubr.f32.gmra.mxu0 %v42
  %v234 = vpop.f32.mrf.mxu0
  %v235 = vadd.f32 0.0, %v234
  %v236 = vpop.f32.mrf.mxu0
  %237 = vmatprep.mubr.f32.mxu0 %v114
  %238 = vmatmul.mubr.f32.gmra.mxu0 %v44
  %v239 = vpop.f32.mrf.mxu0
  %v240 = vadd.f32 0.0, %v239
  %v241 = vpop.f32.mrf.mxu0
  %242 = vmatprep.mubr.f32.mxu0 %v117
  %243 = vmatmul.mubr.f32.gmra.mxu0 %v46
  %v244 = vpop.f32.mrf.mxu0
  %v245 = vadd.f32 0.0, %v244
  %v246 = vpop.f32.mrf.mxu0
  %247 = vmatprep.mubr.f32.mxu0 %v120
  %248 = vmatmul.mubr.f32.gmra.mxu0 %v48
  %v249 = vpop.f32.mrf.mxu0
  %v250 = vadd.f32 0.0, %v249
  %v251 = vpop.f32.mrf.mxu0
  %252 = vmatprep.mubr.f32.mxu0 %v123
  %253 = vmatmul.mubr.f32.gmra.mxu0 %v50
  %v254 = vpop.f32.mrf.mxu0
  %v255 = vadd.f32 0.0, %v254
  %v256 = vpop.f32.mrf.mxu0
  %257 = vmatprep.mubr.f32.mxu0 %v126
  %258 = vmatmul.mubr.f32.gmra.mxu0 %v52
  %v259 = vpop.f32.mrf.mxu0
  %v260 = vadd.f32 0.0, %v259
  %v261 = vpop.f32.mrf.mxu0
  %262 = vmatprep.mubr.f32.mxu0 %v129
  %263 = vmatmul.mubr.f32.gmra.mxu0 %v54
  %v264 = vpop.f32.mrf.mxu0
  %v265 = vadd.f32 0.0, %v264
  %v266 = vpop.f32.mrf.mxu0
  %267 = vmatprep.mubr.f32.mxu0 %v132
  %268 = vmatmul.mubr.f32.gmra.mxu0 %v56
  %v269 = vpop.f32.mrf.mxu0
  %v270 = vadd.f32 0.0, %v269
  %v271 = vpop.f32.mrf.mxu0
  %272 = vmatprep.mubr.f32.mxu0 %v135
  %273 = vmatmul.mubr.f32.gmra.mxu0 %v58
  %v274 = vpop.f32.mrf.mxu0
  %v275 = vadd.f32 0.0, %v274
  %v276 = vpop.f32.mrf.mxu0
  %277 = vmatprep.mubr.f32.mxu0 %v138
  %278 = vmatmul.mubr.f32.gmra.mxu0 %v60
  %v279 = vpop.f32.mrf.mxu0
  %v280 = vadd.f32 0.0, %v279
  %v281 = vpop.f32.mrf.mxu0
  %282 = vmatprep.mubr.f32.mxu0 %v141
  %283 = vmatmul.mubr.f32.gmra.mxu0 %v62
  %v284 = vpop.f32.mrf.mxu0
  %v285 = vadd.f32 0.0, %v284
  %v286 = vpop.f32.mrf.mxu0
  %287 = vmatprep.mubr.f32.mxu0 %v144
  %288 = vmatmul.mubr.f32.gmra.mxu0 %v64
  %v289 = vpop.f32.mrf.mxu0
  %v290 = vadd.f32 0.0, %v289
  %v291 = vpop.f32.mrf.mxu0
  %292 = vmatprep.mubr.f32.mxu0 %v147
  %293 = vmatmul.mubr.f32.gmra.mxu0 %v66
  %v294 = vpop.f32.mrf.mxu0
  %v295 = vadd.f32 0.0, %v294
  %v296 = vpop.f32.mrf.mxu0
  %297 = vmatprep.mubr.f32.mxu0 %v150
  %298 = vmatmul.mubr.f32.gmra.mxu0 %v68
  %v299 = vpop.f32.mrf.mxu0
  %v300 = vadd.f32 0.0, %v299
  %v301 = vpop.f32.mrf.mxu0
  %302 = vmatprep.mubr.f32.mxu0 %v153
  %303 = vmatmul.mubr.f32.gmra.mxu0 %v70
  %v304 = vpop.f32.mrf.mxu0
  %v305 = vadd.f32 0.0, %v304
  %v306 = vpop.f32.mrf.mxu0
  %307 = vmatprep.mubr.f32.mxu0 %v156
  %308 = vmatmul.mubr.f32.gmra.mxu0 %v72
  %v309 = vpop.f32.mrf.mxu0
  %v310 = vadd.f32 0.0, %v309
  %v311 = vpop.f32.mrf.mxu0
  %312 = vdwg.mxu0
  %v313 = vld [vmem:[%s0 + $0x20] sm:$0xff]
  %v314 = vld [vmem:[%s0 + $0x28] sm:$0xff]
  %v315 = vld [vmem:[%s0 + $0x30] sm:$0xff]
  %v316 = vld [vmem:[%s0 + $0x38] sm:$0xff]
  %v317 = vld [vmem:[%s0 + $0x40] sm:$0xff]
  %v318 = vld [vmem:[%s0 + $0x48] sm:$0xff]
  %v319 = vld [vmem:[%s0 + $0x50] sm:$0xff]
  %v320 = vld [vmem:[%s0 + $0x58] sm:$0xff]
  %v321 = vld [vmem:[%s0 + $0x60] sm:$0xff]
  %v322 = vld [vmem:[%s0 + $0x68] sm:$0xff]
  %v323 = vld [vmem:[%s0 + $0x70] sm:$0xff]
  %v324 = vld [vmem:[%s0 + $0x78] sm:$0xff]
  %v325 = vld [vmem:[%s0 + $0x80] sm:$0xff]
  %v326 = vld [vmem:[%s0 + $0x88] sm:$0xff]
  %v327 = vld [vmem:[%s0 + $0x90] sm:$0xff]
  %v328 = vld [vmem:[%s0 + $0x98] sm:$0xff]
  %v329 = vld [vmem:[%s0 + $0xa0] sm:$0xff]
  %v330 = vld [vmem:[%s0 + $0xa8] sm:$0xff]
  %v331 = vld [vmem:[%s0 + $0xb0] sm:$0xff]
  %v332 = vld [vmem:[%s0 + $0xb8] sm:$0xff]
  %333 = vmatprep.subr.mxu0 0.0
  %334 = vmatpush1.msra.mxu0 %v328
  %335 = vmatprep.subr.mxu0 0.0
  %336 = vmatpush1.msra.mxu0 %v327
  %337 = vmatprep.subr.mxu0 0.0
  %338 = vmatpush1.msra.mxu0 %v326
  %339 = vmatprep.subr.mxu0 0.0
  %340 = vmatpush1.msra.mxu0 %v325
  %341 = vmatprep.subr.mxu0 0.0
  %342 = vmatpush1.msra.mxu0 %v324
  %343 = vmatprep.subr.mxu0 0.0
  %344 = vmatpush1.msra.mxu0 %v323
  %345 = vmatprep.subr.mxu0 0.0
  %346 = vmatpush1.msra.mxu0 %v322
  %347 = vmatprep.subr.mxu0 0.0
  %348 = vmatpush1.msra.mxu0 %v321
  %349 = vmatprep.subr.mxu0 0.0
  %350 = vmatpush1.msra.mxu0 %v320
  %351 = vmatprep.subr.mxu0 0.0
  %352 = vmatpush1.msra.mxu0 %v319
  %353 = vmatprep.subr.mxu0 0.0
  %354 = vmatpush1.msra.mxu0 %v318
  %355 = vmatprep.subr.mxu0 0.0
  %356 = vmatpush1.msra.mxu0 %v317
  %357 = vmatprep.subr.mxu0 0.0
  %358 = vmatpush1.msra.mxu0 %v316
  %359 = vmatprep.subr.mxu0 0.0
  %360 = vmatpush1.msra.mxu0 %v315
  %361 = vmatprep.subr.mxu0 0.0
  %362 = vmatpush1.msra.mxu0 %v314
  %363 = vmatprep.subr.mxu0 0.0
  %364 = vmatpush1.msra.mxu0 %v313
  %365 = vmatprep.subr.mxu0 0.0
  %366 = vmatpush2.msra.mxu0 0.0
  %367 = vmatprep.subr.mxu0 0.0
  %368 = vmatpush2.msra.mxu0 0.0
  %369 = vmatprep.subr.mxu0 0.0
  %370 = vmatpush2.msra.mxu0 0.0
  %371 = vmatprep.subr.mxu0 0.0
  %372 = vmatpush2.msra.mxu0 0.0
  %373 = vmatprep.subr.mxu0 0.0
  %374 = vmatpush2.msra.mxu0 0.0
  %375 = vmatprep.subr.mxu0 0.0
  %376 = vmatpush2.msra.mxu0 0.0
  %377 = vmatprep.subr.mxu0 0.0
  %378 = vmatpush2.msra.mxu0 0.0
  %379 = vmatprep.subr.mxu0 0.0
  %380 = vmatpush2.msra.mxu0 0.0
  %381 = vmatprep.subr.mxu0 0.0
  %382 = vmatpush2.msra.mxu0 0.0
  %383 = vmatprep.subr.mxu0 0.0
  %384 = vmatpush2.msra.mxu0 0.0
  %385 = vmatprep.subr.mxu0 0.0
  %386 = vmatpush2.msra.mxu0 0.0
  %387 = vmatprep.subr.mxu0 0.0
  %388 = vmatpush2.msra.mxu0 0.0
  %389 = vmatprep.subr.mxu0 0.0
  %390 = vmatpush2.msra.mxu0 %v332
  %391 = vmatprep.subr.mxu0 0.0
  %392 = vmatpush2.msra.mxu0 %v331
  %393 = vmatprep.subr.mxu0 0.0
  %394 = vmatpush2.msra.mxu0 %v330
  %395 = vmatprep.subr.mxu0 0.0
  %396 = vmatpush2.msra.mxu0 %v329
  %397 = vmatprep.mubr.f32.mxu0 %v105
  %398 = vmatmul.mubr.f32.gmra.mxu0 %v38
  %v399 = vpop.f32.mrf.mxu0
  %v400 = vadd.f32 0.0, %v399
  %v401 = vpop.f32.mrf.mxu0
  %402 = vmatprep.mubr.f32.mxu0 %v108
  %403 = vmatmul.mubr.f32.gmra.mxu0 %v40
  %v404 = vpop.f32.mrf.mxu0
  %v405 = vadd.f32 0.0, %v404
  %v406 = vpop.f32.mrf.mxu0
  %407 = vmatprep.mubr.f32.mxu0 %v111
  %408 = vmatmul.mubr.f32.gmra.mxu0 %v42
  %v409 = vpop.f32.mrf.mxu0
  %v410 = vadd.f32 0.0, %v409
  %v411 = vpop.f32.mrf.mxu0
  %412 = vmatprep.mubr.f32.mxu0 %v114
  %413 = vmatmul.mubr.f32.gmra.mxu0 %v44
  %v414 = vpop.f32.mrf.mxu0
  %v415 = vadd.f32 0.0, %v414
  %v416 = vpop.f32.mrf.mxu0
  %417 = vmatprep.mubr.f32.mxu0 %v117
  %418 = vmatmul.mubr.f32.gmra.mxu0 %v46
  %v419 = vpop.f32.mrf.mxu0
  %v420 = vadd.f32 0.0, %v419
  %v421 = vpop.f32.mrf.mxu0
  %422 = vmatprep.mubr.f32.mxu0 %v120
  %423 = vmatmul.mubr.f32.gmra.mxu0 %v48
  %v424 = vpop.f32.mrf.mxu0
  %v425 = vadd.f32 0.0, %v424
  %v426 = vpop.f32.mrf.mxu0
  %427 = vmatprep.mubr.f32.mxu0 %v123
  %428 = vmatmul.mubr.f32.gmra.mxu0 %v50
  %v429 = vpop.f32.mrf.mxu0
  %v430 = vadd.f32 0.0, %v429
  %v431 = vpop.f32.mrf.mxu0
  %432 = vmatprep.mubr.f32.mxu0 %v126
  %433 = vmatmul.mubr.f32.gmra.mxu0 %v52
  %v434 = vpop.f32.mrf.mxu0
  %v435 = vadd.f32 0.0, %v434
  %v436 = vpop.f32.mrf.mxu0
  %437 = vmatprep.mubr.f32.mxu0 %v129
  %438 = vmatmul.mubr.f32.gmra.mxu0 %v54
  %v439 = vpop.f32.mrf.mxu0
  %v440 = vadd.f32 0.0, %v439
  %v441 = vpop.f32.mrf.mxu0
  %442 = vmatprep.mubr.f32.mxu0 %v132
  %443 = vmatmul.mubr.f32.gmra.mxu0 %v56
  %v444 = vpop.f32.mrf.mxu0
  %v445 = vadd.f32 0.0, %v444
  %v446 = vpop.f32.mrf.mxu0
  %447 = vmatprep.mubr.f32.mxu0 %v135
  %448 = vmatmul.mubr.f32.gmra.mxu0 %v58
  %v449 = vpop.f32.mrf.mxu0
  %v450 = vadd.f32 0.0, %v449
  %v451 = vpop.f32.mrf.mxu0
  %452 = vmatprep.mubr.f32.mxu0 %v138
  %453 = vmatmul.mubr.f32.gmra.mxu0 %v60
  %v454 = vpop.f32.mrf.mxu0
  %v455 = vadd.f32 0.0, %v454
  %v456 = vpop.f32.mrf.mxu0
  %457 = vmatprep.mubr.f32.mxu0 %v141
  %458 = vmatmul.mubr.f32.gmra.mxu0 %v62
  %v459 = vpop.f32.mrf.mxu0
  %v460 = vadd.f32 0.0, %v459
  %v461 = vpop.f32.mrf.mxu0
  %462 = vmatprep.mubr.f32.mxu0 %v144
  %463 = vmatmul.mubr.f32.gmra.mxu0 %v64
  %v464 = vpop.f32.mrf.mxu0
  %v465 = vadd.f32 0.0, %v464
  %v466 = vpop.f32.mrf.mxu0
  %467 = vmatprep.mubr.f32.mxu0 %v147
  %468 = vmatmul.mubr.f32.gmra.mxu0 %v66
  %v469 = vpop.f32.mrf.mxu0
  %v470 = vadd.f32 0.0, %v469
  %v471 = vpop.f32.mrf.mxu0
  %472 = vmatprep.mubr.f32.mxu0 %v150
  %473 = vmatmul.mubr.f32.gmra.mxu0 %v68
  %v474 = vpop.f32.mrf.mxu0
  %v475 = vadd.f32 0.0, %v474
  %v476 = vpop.f32.mrf.mxu0
  %477 = vmatprep.mubr.f32.mxu0 %v153
  %478 = vmatmul.mubr.f32.gmra.mxu0 %v70
  %v479 = vpop.f32.mrf.mxu0
  %v480 = vadd.f32 0.0, %v479
  %v481 = vpop.f32.mrf.mxu0
  %482 = vmatprep.mubr.f32.mxu0 %v156
  %483 = vmatmul.mubr.f32.gmra.mxu0 %v72
  %v484 = vpop.f32.mrf.mxu0
  %v485 = vadd.f32 0.0, %v484
  %v486 = vpop.f32.mrf.mxu0
  %487 = vdwg.mxu0
  %v488 = vmax.f32 %v225, %v270
  %v489 = vmax.f32 %v230, %v275
  %v490 = vmax.f32 %v235, %v280
  %v491 = vmax.f32 %v240, %v285
  %v492 = vmax.f32 %v245, %v290
  %v493 = vmax.f32 %v250, %v295
  %v494 = vmax.f32 %v255, %v300
  %v495 = vmax.f32 %v260, %v305
  %v496 = vmax.f32 %v265, %v310
  %v497 = vmax.f32 %v400, %v445
  %v498 = vmax.f32 %v405, %v450
  %v499 = vmax.f32 %v410, %v455
  %v500 = vmax.f32 %v415, %v460
  %v501 = vmax.f32 %v420, %v465
  %v502 = vmax.f32 %v425, %v470
  %v503 = vmax.f32 %v430, %v475
  %v504 = vmax.f32 %v435, %v480
  %v505 = vmax.f32 %v440, %v485
  %v506 = vmax.f32 %v488, %v497
  %v507 = vmax.f32 %v489, %v498
  %v508 = vmax.f32 %v490, %v499
  %v509 = vmax.f32 %v491, %v500
  %v510 = vmax.f32 %v492, %v501
  %v511 = vmax.f32 %v493, %v502
  %v512 = vmax.f32 %v494, %v503
  %v513 = vmax.f32 %v495, %v504
  %v514 = vmax.f32 %v496, %v505
  %516 = vset.pattern.permute.xlu0 0
  %517 = vperm.xlu0 %516, %v74
  %v518 = vpop.permute.xlu0 %517
  %521 = vset.pattern.permute.xlu0 0
  %522 = vperm.xlu0 %521, %v75
  %v523 = vpop.permute.xlu0 %522
  %526 = vset.pattern.permute.xlu0 0
  %527 = vperm.xlu0 %526, %v76
  %v528 = vpop.permute.xlu0 %527
  %531 = vset.pattern.permute.xlu0 0
  %532 = vperm.xlu0 %531, %v77
  %v533 = vpop.permute.xlu0 %532
  %536 = vset.pattern.permute.xlu0 0
  %537 = vperm.xlu0 %536, %v78
  %v538 = vpop.permute.xlu0 %537
  %541 = vset.pattern.permute.xlu0 0
  %542 = vperm.xlu0 %541, %v79
  %v543 = vpop.permute.xlu0 %542
  %546 = vset.pattern.permute.xlu0 0
  %547 = vperm.xlu0 %546, %v80
  %v548 = vpop.permute.xlu0 %547
  %551 = vset.pattern.permute.xlu0 0
  %552 = vperm.xlu0 %551, %v81
  %v553 = vpop.permute.xlu0 %552
  %556 = vset.pattern.permute.xlu0 0
  %557 = vperm.xlu0 %556, %v82
  %v558 = vpop.permute.xlu0 %557
  %v560 = vadd.f32 %v506, %v518
  %v561 = vadd.f32 %v507, %v523
  %v562 = vadd.f32 %v508, %v528
  %v563 = vadd.f32 %v509, %v533
  %v564 = vadd.f32 %v510, %v538
  %v565 = vadd.f32 %v511, %v543
  %v566 = vadd.f32 %v512, %v548
  %v567 = vadd.f32 %v513, %v553
  %v568 = vadd.f32 %v514, %v558
  %v569 = vmax.f32 %v560, 0.0
  %v570 = vmax.f32 %v561, 0.0
  %v571 = vmax.f32 %v562, 0.0
  %v572 = vmax.f32 %v563, 0.0
  %v573 = vmax.f32 %v564, 0.0
  %v574 = vmax.f32 %v565, 0.0
  %v575 = vmax.f32 %v566, 0.0
  %v576 = vmax.f32 %v567, 0.0
  %v577 = vmax.f32 %v568, 0.0
  %578 = vst [vmem:[#allocation2] sm:$0xff] %v569
  %579 = vst [vmem:[#allocation2 + $0x8] sm:$0xff] %v570
  %580 = vst [vmem:[#allocation2 + $0x10] sm:$0xff] %v571
  %581 = vst [vmem:[#allocation2 + $0x18] sm:$0xff] %v572
  %582 = vst [vmem:[#allocation2 + $0x20] sm:$0xff] %v573
  %583 = vst [vmem:[#allocation2 + $0x28] sm:$0xff] %v574
  %584 = vst [vmem:[#allocation2 + $0x30] sm:$0xff] %v575
  %585 = vst [vmem:[#allocation2 + $0x38] sm:$0xff] %v576
  %586 = vst [vmem:[#allocation2 + $0x40] sm:$0xff] %v577
  %v587 = vld [vmem:[%s0 + $0x40] sm:$0xff]
  %v588 = vld [vmem:[%s0 + $0x48] sm:$0xff]
  %v589 = vld [vmem:[%s0 + $0x50] sm:$0xff]
  %v590 = vld [vmem:[%s0 + $0x58] sm:$0xff]
  %v591 = vld [vmem:[%s0 + $0x60] sm:$0xff]
  %v592 = vld [vmem:[%s0 + $0x68] sm:$0xff]
  %v593 = vld [vmem:[%s0 + $0x70] sm:$0xff]
  %v594 = vld [vmem:[%s0 + $0x78] sm:$0xff]
  %v595 = vld [vmem:[%s0 + $0x80] sm:$0xff]
  %v596 = vld [vmem:[%s0 + $0x88] sm:$0xff]
  %v597 = vld [vmem:[%s0 + $0x90] sm:$0xff]
  %v598 = vld [vmem:[%s0 + $0x98] sm:$0xff]
  %v599 = vld [vmem:[%s0 + $0xa0] sm:$0xff]
  %v600 = vld [vmem:[%s0 + $0xa8] sm:$0xff]
  %v601 = vld [vmem:[%s0 + $0xb0] sm:$0xff]
  %v602 = vld [vmem:[%s0 + $0xb8] sm:$0xff]
  %v603 = vld [vmem:[%s0 + $0xc0] sm:$0xff]
  %v604 = vld [vmem:[%s0 + $0xc8] sm:$0xff]
  %v605 = vld [vmem:[%s0 + $0xd0] sm:$0xff]
  %v606 = vld [vmem:[%s0 + $0xd8] sm:$0xff]
  %607 = vmatprep.subr.mxu0 0.0
  %608 = vmatpush1.msra.mxu0 %v602
  %609 = vmatprep.subr.mxu0 0.0
  %610 = vmatpush1.msra.mxu0 %v601
  %611 = vmatprep.subr.mxu0 0.0
  %612 = vmatpush1.msra.mxu0 %v600
  %613 = vmatprep.subr.mxu0 0.0
  %614 = vmatpush1.msra.mxu0 %v599
  %615 = vmatprep.subr.mxu0 0.0
  %616 = vmatpush1.msra.mxu0 %v598
  %617 = vmatprep.subr.mxu0 0.0
  %618 = vmatpush1.msra.mxu0 %v597
  %619 = vmatprep.subr.mxu0 0.0
  %620 = vmatpush1.msra.mxu0 %v596
  %621 = vmatprep.subr.mxu0 0.0
  %622 = vmatpush1.msra.mxu0 %v595
  %623 = vmatprep.subr.mxu0 0.0
  %624 = vmatpush1.msra.mxu0 %v594
  %625 = vmatprep.subr.mxu0 0.0
  %626 = vmatpush1.msra.mxu0 %v593
  %627 = vmatprep.subr.mxu0 0.0
  %628 = vmatpush1.msra.mxu0 %v592
  %629 = vmatprep.subr.mxu0 0.0
  %630 = vmatpush1.msra.mxu0 %v591
  %631 = vmatprep.subr.mxu0 0.0
  %632 = vmatpush1.msra.mxu0 %v590
  %633 = vmatprep.subr.mxu0 0.0
  %634 = vmatpush1.msra.mxu0 %v589
  %635 = vmatprep.subr.mxu0 0.0
  %636 = vmatpush1.msra.mxu0 %v588
  %637 = vmatprep.subr.mxu0 0.0
  %638 = vmatpush1.msra.mxu0 %v587
  %639 = vmatprep.subr.mxu0 0.0
  %640 = vmatpush2.msra.mxu0 0.0
  %641 = vmatprep.subr.mxu0 0.0
  %642 = vmatpush2.msra.mxu0 0.0
  %643 = vmatprep.subr.mxu0 0.0
  %644 = vmatpush2.msra.mxu0 0.0
  %645 = vmatprep.subr.mxu0 0.0
  %646 = vmatpush2.msra.mxu0 0.0
  %647 = vmatprep.subr.mxu0 0.0
  %648 = vmatpush2.msra.mxu0 0.0
  %649 = vmatprep.subr.mxu0 0.0
  %650 = vmatpush2.msra.mxu0 0.0
  %651 = vmatprep.subr.mxu0 0.0
  %652 = vmatpush2.msra.mxu0 0.0
  %653 = vmatprep.subr.mxu0 0.0
  %654 = vmatpush2.msra.mxu0 0.0
  %655 = vmatprep.subr.mxu0 0.0
  %656 = vmatpush2.msra.mxu0 0.0
  %657 = vmatprep.subr.mxu0 0.0
  %658 = vmatpush2.msra.mxu0 0.0
  %659 = vmatprep.subr.mxu0 0.0
  %660 = vmatpush2.msra.mxu0 0.0
  %661 = vmatprep.subr.mxu0 0.0
  %662 = vmatpush2.msra.mxu0 0.0
  %663 = vmatprep.subr.mxu0 0.0
  %664 = vmatpush2.msra.mxu0 %v606
  %665 = vmatprep.subr.mxu0 0.0
  %666 = vmatpush2.msra.mxu0 %v605
  %667 = vmatprep.subr.mxu0 0.0
  %668 = vmatpush2.msra.mxu0 %v604
  %669 = vmatprep.subr.mxu0 0.0
  %670 = vmatpush2.msra.mxu0 %v603
  %671 = vmatprep.mubr.f32.mxu0 %v105
  %672 = vmatmul.mubr.f32.gmra.mxu0 %v38
  %v673 = vpop.f32.mrf.mxu0
  %v674 = vadd.f32 0.0, %v673
  %v675 = vpop.f32.mrf.mxu0
  %676 = vmatprep.mubr.f32.mxu0 %v108
  %677 = vmatmul.mubr.f32.gmra.mxu0 %v40
  %v678 = vpop.f32.mrf.mxu0
  %v679 = vadd.f32 0.0, %v678
  %v680 = vpop.f32.mrf.mxu0
  %681 = vmatprep.mubr.f32.mxu0 %v111
  %682 = vmatmul.mubr.f32.gmra.mxu0 %v42
  %v683 = vpop.f32.mrf.mxu0
  %v684 = vadd.f32 0.0, %v683
  %v685 = vpop.f32.mrf.mxu0
  %686 = vmatprep.mubr.f32.mxu0 %v114
  %687 = vmatmul.mubr.f32.gmra.mxu0 %v44
  %v688 = vpop.f32.mrf.mxu0
  %v689 = vadd.f32 0.0, %v688
  %v690 = vpop.f32.mrf.mxu0
  %691 = vmatprep.mubr.f32.mxu0 %v117
  %692 = vmatmul.mubr.f32.gmra.mxu0 %v46
  %v693 = vpop.f32.mrf.mxu0
  %v694 = vadd.f32 0.0, %v693
  %v695 = vpop.f32.mrf.mxu0
  %696 = vmatprep.mubr.f32.mxu0 %v120
  %697 = vmatmul.mubr.f32.gmra.mxu0 %v48
  %v698 = vpop.f32.mrf.mxu0
  %v699 = vadd.f32 0.0, %v698
  %v700 = vpop.f32.mrf.mxu0
  %701 = vmatprep.mubr.f32.mxu0 %v123
  %702 = vmatmul.mubr.f32.gmra.mxu0 %v50
  %v703 = vpop.f32.mrf.mxu0
  %v704 = vadd.f32 0.0, %v703
  %v705 = vpop.f32.mrf.mxu0
  %706 = vmatprep.mubr.f32.mxu0 %v126
  %707 = vmatmul.mubr.f32.gmra.mxu0 %v52
  %v708 = vpop.f32.mrf.mxu0
  %v709 = vadd.f32 0.0, %v708
  %v710 = vpop.f32.mrf.mxu0
  %711 = vmatprep.mubr.f32.mxu0 %v129
  %712 = vmatmul.mubr.f32.gmra.mxu0 %v54
  %v713 = vpop.f32.mrf.mxu0
  %v714 = vadd.f32 0.0, %v713
  %v715 = vpop.f32.mrf.mxu0
  %716 = vmatprep.mubr.f32.mxu0 %v132
  %717 = vmatmul.mubr.f32.gmra.mxu0 %v56
  %v718 = vpop.f32.mrf.mxu0
  %v719 = vadd.f32 0.0, %v718
  %v720 = vpop.f32.mrf.mxu0
  %721 = vmatprep.mubr.f32.mxu0 %v135
  %722 = vmatmul.mubr.f32.gmra.mxu0 %v58
  %v723 = vpop.f32.mrf.mxu0
  %v724 = vadd.f32 0.0, %v723
  %v725 = vpop.f32.mrf.mxu0
  %726 = vmatprep.mubr.f32.mxu0 %v138
  %727 = vmatmul.mubr.f32.gmra.mxu0 %v60
  %v728 = vpop.f32.mrf.mxu0
  %v729 = vadd.f32 0.0, %v728
  %v730 = vpop.f32.mrf.mxu0
  %731 = vmatprep.mubr.f32.mxu0 %v141
  %732 = vmatmul.mubr.f32.gmra.mxu0 %v62
  %v733 = vpop.f32.mrf.mxu0
  %v734 = vadd.f32 0.0, %v733
  %v735 = vpop.f32.mrf.mxu0
  %736 = vmatprep.mubr.f32.mxu0 %v144
  %737 = vmatmul.mubr.f32.gmra.mxu0 %v64
  %v738 = vpop.f32.mrf.mxu0
  %v739 = vadd.f32 0.0, %v738
  %v740 = vpop.f32.mrf.mxu0
  %741 = vmatprep.mubr.f32.mxu0 %v147
  %742 = vmatmul.mubr.f32.gmra.mxu0 %v66
  %v743 = vpop.f32.mrf.mxu0
  %v744 = vadd.f32 0.0, %v743
  %v745 = vpop.f32.mrf.mxu0
  %746 = vmatprep.mubr.f32.mxu0 %v150
  %747 = vmatmul.mubr.f32.gmra.mxu0 %v68
  %v748 = vpop.f32.mrf.mxu0
  %v749 = vadd.f32 0.0, %v748
  %v750 = vpop.f32.mrf.mxu0
  %751 = vmatprep.mubr.f32.mxu0 %v153
  %752 = vmatmul.mubr.f32.gmra.mxu0 %v70
  %v753 = vpop.f32.mrf.mxu0
  %v754 = vadd.f32 0.0, %v753
  %v755 = vpop.f32.mrf.mxu0
  %756 = vmatprep.mubr.f32.mxu0 %v156
  %757 = vmatmul.mubr.f32.gmra.mxu0 %v72
  %v758 = vpop.f32.mrf.mxu0
  %v759 = vadd.f32 0.0, %v758
  %v760 = vpop.f32.mrf.mxu0
  %761 = vdwg.mxu0
  %v762 = vld [vmem:[%s0 + $0x60] sm:$0xff]
  %v763 = vld [vmem:[%s0 + $0x68] sm:$0xff]
  %v764 = vld [vmem:[%s0 + $0x70] sm:$0xff]
  %v765 = vld [vmem:[%s0 + $0x78] sm:$0xff]
  %v766 = vld [vmem:[%s0 + $0x80] sm:$0xff]
  %v767 = vld [vmem:[%s0 + $0x88] sm:$0xff]
  %v768 = vld [vmem:[%s0 + $0x90] sm:$0xff]
  %v769 = vld [vmem:[%s0 + $0x98] sm:$0xff]
  %v770 = vld [vmem:[%s0 + $0xa0] sm:$0xff]
  %v771 = vld [vmem:[%s0 + $0xa8] sm:$0xff]
  %v772 = vld [vmem:[%s0 + $0xb0] sm:$0xff]
  %v773 = vld [vmem:[%s0 + $0xb8] sm:$0xff]
  %v774 = vld [vmem:[%s0 + $0xc0] sm:$0xff]
  %v775 = vld [vmem:[%s0 + $0xc8] sm:$0xff]
  %v776 = vld [vmem:[%s0 + $0xd0] sm:$0xff]
  %v777 = vld [vmem:[%s0 + $0xd8] sm:$0xff]
  %v778 = vld [vmem:[%s0 + $0xe0] sm:$0xff]
  %v779 = vld [vmem:[%s0 + $0xe8] sm:$0xff]
  %v780 = vld [vmem:[%s0 + $0xf0] sm:$0xff]
  %v781 = vld [vmem:[%s0 + $0xf8] sm:$0xff]
  %782 = vmatprep.subr.mxu0 0.0
  %783 = vmatpush1.msra.mxu0 %v777
  %784 = vmatprep.subr.mxu0 0.0
  %785 = vmatpush1.msra.mxu0 %v776
  %786 = vmatprep.subr.mxu0 0.0
  %787 = vmatpush1.msra.mxu0 %v775
  %788 = vmatprep.subr.mxu0 0.0
  %789 = vmatpush1.msra.mxu0 %v774
  %790 = vmatprep.subr.mxu0 0.0
  %791 = vmatpush1.msra.mxu0 %v773
  %792 = vmatprep.subr.mxu0 0.0
  %793 = vmatpush1.msra.mxu0 %v772
  %794 = vmatprep.subr.mxu0 0.0
  %795 = vmatpush1.msra.mxu0 %v771
  %796 = vmatprep.subr.mxu0 0.0
  %797 = vmatpush1.msra.mxu0 %v770
  %798 = vmatprep.subr.mxu0 0.0
  %799 = vmatpush1.msra.mxu0 %v769
  %800 = vmatprep.subr.mxu0 0.0
  %801 = vmatpush1.msra.mxu0 %v768
  %802 = vmatprep.subr.mxu0 0.0
  %803 = vmatpush1.msra.mxu0 %v767
  %804 = vmatprep.subr.mxu0 0.0
  %805 = vmatpush1.msra.mxu0 %v766
  %806 = vmatprep.subr.mxu0 0.0
  %807 = vmatpush1.msra.mxu0 %v765
  %808 = vmatprep.subr.mxu0 0.0
  %809 = vmatpush1.msra.mxu0 %v764
  %810 = vmatprep.subr.mxu0 0.0
  %811 = vmatpush1.msra.mxu0 %v763
  %812 = vmatprep.subr.mxu0 0.0
  %813 = vmatpush1.msra.mxu0 %v762
  %814 = vmatprep.subr.mxu0 0.0
  %815 = vmatpush2.msra.mxu0 0.0
  %816 = vmatprep.subr.mxu0 0.0
  %817 = vmatpush2.msra.mxu0 0.0
  %818 = vmatprep.subr.mxu0 0.0
  %819 = vmatpush2.msra.mxu0 0.0
  %820 = vmatprep.subr.mxu0 0.0
  %821 = vmatpush2.msra.mxu0 0.0
  %822 = vmatprep.subr.mxu0 0.0
  %823 = vmatpush2.msra.mxu0 0.0
  %824 = vmatprep.subr.mxu0 0.0
  %825 = vmatpush2.msra.mxu0 0.0
  %826 = vmatprep.subr.mxu0 0.0
  %827 = vmatpush2.msra.mxu0 0.0
  %828 = vmatprep.subr.mxu0 0.0
  %829 = vmatpush2.msra.mxu0 0.0
  %830 = vmatprep.subr.mxu0 0.0
  %831 = vmatpush2.msra.mxu0 0.0
  %832 = vmatprep.subr.mxu0 0.0
  %833 = vmatpush2.msra.mxu0 0.0
  %834 = vmatprep.subr.mxu0 0.0
  %835 = vmatpush2.msra.mxu0 0.0
  %836 = vmatprep.subr.mxu0 0.0
  %837 = vmatpush2.msra.mxu0 0.0
  %838 = vmatprep.subr.mxu0 0.0
  %839 = vmatpush2.msra.mxu0 %v781
  %840 = vmatprep.subr.mxu0 0.0
  %841 = vmatpush2.msra.mxu0 %v780
  %842 = vmatprep.subr.mxu0 0.0
  %843 = vmatpush2.msra.mxu0 %v779
  %844 = vmatprep.subr.mxu0 0.0
  %845 = vmatpush2.msra.mxu0 %v778
  %846 = vmatprep.mubr.f32.mxu0 %v105
  %847 = vmatmul.mubr.f32.gmra.mxu0 %v38
  %v848 = vpop.f32.mrf.mxu0
  %v849 = vadd.f32 0.0, %v848
  %v850 = vpop.f32.mrf.mxu0
  %851 = vmatprep.mubr.f32.mxu0 %v108
  %852 = vmatmul.mubr.f32.gmra.mxu0 %v40
  %v853 = vpop.f32.mrf.mxu0
  %v854 = vadd.f32 0.0, %v853
  %v855 = vpop.f32.mrf.mxu0
  %856 = vmatprep.mubr.f32.mxu0 %v111
  %857 = vmatmul.mubr.f32.gmra.mxu0 %v42
  %v858 = vpop.f32.mrf.mxu0
  %v859 = vadd.f32 0.0, %v858
  %v860 = vpop.f32.mrf.mxu0
  %861 = vmatprep.mubr.f32.mxu0 %v114
  %862 = vmatmul.mubr.f32.gmra.mxu0 %v44
  %v863 = vpop.f32.mrf.mxu0
  %v864 = vadd.f32 0.0, %v863
  %v865 = vpop.f32.mrf.mxu0
  %866 = vmatprep.mubr.f32.mxu0 %v117
  %867 = vmatmul.mubr.f32.gmra.mxu0 %v46
  %v868 = vpop.f32.mrf.mxu0
  %v869 = vadd.f32 0.0, %v868
  %v870 = vpop.f32.mrf.mxu0
  %871 = vmatprep.mubr.f32.mxu0 %v120
  %872 = vmatmul.mubr.f32.gmra.mxu0 %v48
  %v873 = vpop.f32.mrf.mxu0
  %v874 = vadd.f32 0.0, %v873
  %v875 = vpop.f32.mrf.mxu0
  %876 = vmatprep.mubr.f32.mxu0 %v123
  %877 = vmatmul.mubr.f32.gmra.mxu0 %v50
  %v878 = vpop.f32.mrf.mxu0
  %v879 = vadd.f32 0.0, %v878
  %v880 = vpop.f32.mrf.mxu0
  %881 = vmatprep.mubr.f32.mxu0 %v126
  %882 = vmatmul.mubr.f32.gmra.mxu0 %v52
  %v883 = vpop.f32.mrf.mxu0
  %v884 = vadd.f32 0.0, %v883
  %v885 = vpop.f32.mrf.mxu0
  %886 = vmatprep.mubr.f32.mxu0 %v129
  %887 = vmatmul.mubr.f32.gmra.mxu0 %v54
  %v888 = vpop.f32.mrf.mxu0
  %v889 = vadd.f32 0.0, %v888
  %v890 = vpop.f32.mrf.mxu0
  %891 = vmatprep.mubr.f32.mxu0 %v132
  %892 = vmatmul.mubr.f32.gmra.mxu0 %v56
  %v893 = vpop.f32.mrf.mxu0
  %v894 = vadd.f32 0.0, %v893
  %v895 = vpop.f32.mrf.mxu0
  %896 = vmatprep.mubr.f32.mxu0 %v135
  %897 = vmatmul.mubr.f32.gmra.mxu0 %v58
  %v898 = vpop.f32.mrf.mxu0
  %v899 = vadd.f32 0.0, %v898
  %v900 = vpop.f32.mrf.mxu0
  %901 = vmatprep.mubr.f32.mxu0 %v138
  %902 = vmatmul.mubr.f32.gmra.mxu0 %v60
  %v903 = vpop.f32.mrf.mxu0
  %v904 = vadd.f32 0.0, %v903
  %v905 = vpop.f32.mrf.mxu0
  %906 = vmatprep.mubr.f32.mxu0 %v141
  %907 = vmatmul.mubr.f32.gmra.mxu0 %v62
  %v908 = vpop.f32.mrf.mxu0
  %v909 = vadd.f32 0.0, %v908
  %v910 = vpop.f32.mrf.mxu0
  %911 = vmatprep.mubr.f32.mxu0 %v144
  %912 = vmatmul.mubr.f32.gmra.mxu0 %v64
  %v913 = vpop.f32.mrf.mxu0
  %v914 = vadd.f32 0.0, %v913
  %v915 = vpop.f32.mrf.mxu0
  %916 = vmatprep.mubr.f32.mxu0 %v147
  %917 = vmatmul.mubr.f32.gmra.mxu0 %v66
  %v918 = vpop.f32.mrf.mxu0
  %v919 = vadd.f32 0.0, %v918
  %v920 = vpop.f32.mrf.mxu0
  %921 = vmatprep.mubr.f32.mxu0 %v150
  %922 = vmatmul.mubr.f32.gmra.mxu0 %v68
  %v923 = vpop.f32.mrf.mxu0
  %v924 = vadd.f32 0.0, %v923
  %v925 = vpop.f32.mrf.mxu0
  %926 = vmatprep.mubr.f32.mxu0 %v153
  %927 = vmatmul.mubr.f32.gmra.mxu0 %v70
  %v928 = vpop.f32.mrf.mxu0
  %v929 = vadd.f32 0.0, %v928
  %v930 = vpop.f32.mrf.mxu0
  %931 = vmatprep.mubr.f32.mxu0 %v156
  %932 = vmatmul.mubr.f32.gmra.mxu0 %v72
  %v933 = vpop.f32.mrf.mxu0
  %v934 = vadd.f32 0.0, %v933
  %v935 = vpop.f32.mrf.mxu0
  %936 = vdwg.mxu0
  %v937 = vmax.f32 %v674, %v719
  %v938 = vmax.f32 %v679, %v724
  %v939 = vmax.f32 %v684, %v729
  %v940 = vmax.f32 %v689, %v734
  %v941 = vmax.f32 %v694, %v739
  %v942 = vmax.f32 %v699, %v744
  %v943 = vmax.f32 %v704, %v749
  %v944 = vmax.f32 %v709, %v754
  %v945 = vmax.f32 %v714, %v759
  %v946 = vmax.f32 %v849, %v894
  %v947 = vmax.f32 %v854, %v899
  %v948 = vmax.f32 %v859, %v904
  %v949 = vmax.f32 %v864, %v909
  %v950 = vmax.f32 %v869, %v914
  %v951 = vmax.f32 %v874, %v919
  %v952 = vmax.f32 %v879, %v924
  %v953 = vmax.f32 %v884, %v929
  %v954 = vmax.f32 %v889, %v934
  %v955 = vmax.f32 %v937, %v946
  %v956 = vmax.f32 %v938, %v947
  %v957 = vmax.f32 %v939, %v948
  %v958 = vmax.f32 %v940, %v949
  %v959 = vmax.f32 %v941, %v950
  %v960 = vmax.f32 %v942, %v951
  %v961 = vmax.f32 %v943, %v952
  %v962 = vmax.f32 %v944, %v953
  %v963 = vmax.f32 %v945, %v954
  %v964 = vadd.f32 %v955, %v518
  %v965 = vadd.f32 %v956, %v523
  %v966 = vadd.f32 %v957, %v528
  %v967 = vadd.f32 %v958, %v533
  %v968 = vadd.f32 %v959, %v538
  %v969 = vadd.f32 %v960, %v543
  %v970 = vadd.f32 %v961, %v548
  %v971 = vadd.f32 %v962, %v553
  %v972 = vadd.f32 %v963, %v558
  %v973 = vmax.f32 %v964, 0.0
  %v974 = vmax.f32 %v965, 0.0
  %v975 = vmax.f32 %v966, 0.0
  %v976 = vmax.f32 %v967, 0.0
  %v977 = vmax.f32 %v968, 0.0
  %v978 = vmax.f32 %v969, 0.0
  %v979 = vmax.f32 %v970, 0.0
  %v980 = vmax.f32 %v971, 0.0
  %v981 = vmax.f32 %v972, 0.0
  %982 = vst [vmem:[#allocation2 + $0x48] sm:$0xff] %v973
  %983 = vst [vmem:[#allocation2 + $0x50] sm:$0xff] %v974
  %984 = vst [vmem:[#allocation2 + $0x58] sm:$0xff] %v975
  %985 = vst [vmem:[#allocation2 + $0x60] sm:$0xff] %v976
  %986 = vst [vmem:[#allocation2 + $0x68] sm:$0xff] %v977
  %987 = vst [vmem:[#allocation2 + $0x70] sm:$0xff] %v978
  %988 = vst [vmem:[#allocation2 + $0x78] sm:$0xff] %v979
  %989 = vst [vmem:[#allocation2 + $0x80] sm:$0xff] %v980
  %990 = vst [vmem:[#allocation2 + $0x88] sm:$0xff] %v981
  %v991 = vld [vmem:[%s0 + $0x80] sm:$0xff]
  %v992 = vld [vmem:[%s0 + $0x88] sm:$0xff]
  %v993 = vld [vmem:[%s0 + $0x90] sm:$0xff]
  %v994 = vld [vmem:[%s0 + $0x98] sm:$0xff]
  %v995 = vld [vmem:[%s0 + $0xa0] sm:$0xff]
  %v996 = vld [vmem:[%s0 + $0xa8] sm:$0xff]
  %v997 = vld [vmem:[%s0 + $0xb0] sm:$0xff]
  %v998 = vld [vmem:[%s0 + $0xb8] sm:$0xff]
  %v999 = vld [vmem:[%s0 + $0xc0] sm:$0xff]
  %v1000 = vld [vmem:[%s0 + $0xc8] sm:$0xff]
  %v1001 = vld [vmem:[%s0 + $0xd0] sm:$0xff]
  %v1002 = vld [vmem:[%s0 + $0xd8] sm:$0xff]
  %v1003 = vld [vmem:[%s0 + $0xe0] sm:$0xff]
  %v1004 = vld [vmem:[%s0 + $0xe8] sm:$0xff]
  %v1005 = vld [vmem:[%s0 + $0xf0] sm:$0xff]
  %v1006 = vld [vmem:[%s0 + $0xf8] sm:$0xff]
  %v1007 = vld [vmem:[%s0 + $0x100] sm:$0xff]
  %v1008 = vld [vmem:[%s0 + $0x108] sm:$0xff]
  %v1009 = vld [vmem:[%s0 + $0x110] sm:$0xff]
  %v1010 = vld [vmem:[%s0 + $0x118] sm:$0xff]
  %1011 = vmatprep.subr.mxu0 0.0
  %1012 = vmatpush1.msra.mxu0 %v1006
  %1013 = vmatprep.subr.mxu0 0.0
  %1014 = vmatpush1.msra.mxu0 %v1005
  %1015 = vmatprep.subr.mxu0 0.0
  %1016 = vmatpush1.msra.mxu0 %v1004
  %1017 = vmatprep.subr.mxu0 0.0
  %1018 = vmatpush1.msra.mxu0 %v1003
  %1019 = vmatprep.subr.mxu0 0.0
  %1020 = vmatpush1.msra.mxu0 %v1002
  %1021 = vmatprep.subr.mxu0 0.0
  %1022 = vmatpush1.msra.mxu0 %v1001
  %1023 = vmatprep.subr.mxu0 0.0
  %1024 = vmatpush1.msra.mxu0 %v1000
  %1025 = vmatprep.subr.mxu0 0.0
  %1026 = vmatpush1.msra.mxu0 %v999
  %1027 = vmatprep.subr.mxu0 0.0
  %1028 = vmatpush1.msra.mxu0 %v998
  %1029 = vmatprep.subr.mxu0 0.0
  %1030 = vmatpush1.msra.mxu0 %v997
  %1031 = vmatprep.subr.mxu0 0.0
  %1032 = vmatpush1.msra.mxu0 %v996
  %1033 = vmatprep.subr.mxu0 0.0
  %1034 = vmatpush1.msra.mxu0 %v995
  %1035 = vmatprep.subr.mxu0 0.0
  %1036 = vmatpush1.msra.mxu0 %v994
  %1037 = vmatprep.subr.mxu0 0.0
  %1038 = vmatpush1.msra.mxu0 %v993
  %1039 = vmatprep.subr.mxu0 0.0
  %1040 = vmatpush1.msra.mxu0 %v992
  %1041 = vmatprep.subr.mxu0 0.0
  %1042 = vmatpush1.msra.mxu0 %v991
  %1043 = vmatprep.subr.mxu0 0.0
  %1044 = vmatpush2.msra.mxu0 0.0
  %1045 = vmatprep.subr.mxu0 0.0
  %1046 = vmatpush2.msra.mxu0 0.0
  %1047 = vmatprep.subr.mxu0 0.0
  %1048 = vmatpush2.msra.mxu0 0.0
  %1049 = vmatprep.subr.mxu0 0.0
  %1050 = vmatpush2.msra.mxu0 0.0
  %1051 = vmatprep.subr.mxu0 0.0
  %1052 = vmatpush2.msra.mxu0 0.0
  %1053 = vmatprep.subr.mxu0 0.0
  %1054 = vmatpush2.msra.mxu0 0.0
  %1055 = vmatprep.subr.mxu0 0.0
  %1056 = vmatpush2.msra.mxu0 0.0
  %1057 = vmatprep.subr.mxu0 0.0
  %1058 = vmatpush2.msra.mxu0 0.0
  %1059 = vmatprep.subr.mxu0 0.0
  %1060 = vmatpush2.msra.mxu0 0.0
  %1061 = vmatprep.subr.mxu0 0.0
  %1062 = vmatpush2.msra.mxu0 0.0
  %1063 = vmatprep.subr.mxu0 0.0
  %1064 = vmatpush2.msra.mxu0 0.0
  %1065 = vmatprep.subr.mxu0 0.0
  %1066 = vmatpush2.msra.mxu0 0.0
  %1067 = vmatprep.subr.mxu0 0.0
  %1068 = vmatpush2.msra.mxu0 %v1010
  %1069 = vmatprep.subr.mxu0 0.0
  %1070 = vmatpush2.msra.mxu0 %v1009
  %1071 = vmatprep.subr.mxu0 0.0
  %1072 = vmatpush2.msra.mxu0 %v1008
  %1073 = vmatprep.subr.mxu0 0.0
  %1074 = vmatpush2.msra.mxu0 %v1007
  %1075 = vmatprep.mubr.f32.mxu0 %v105
  %1076 = vmatmul.mubr.f32.gmra.mxu0 %v38
  %v1077 = vpop.f32.mrf.mxu0
  %v1078 = vadd.f32 0.0, %v1077
  %v1079 = vpop.f32.mrf.mxu0
  %1080 = vmatprep.mubr.f32.mxu0 %v108
  %1081 = vmatmul.mubr.f32.gmra.mxu0 %v40
  %v1082 = vpop.f32.mrf.mxu0
  %v1083 = vadd.f32 0.0, %v1082
  %v1084 = vpop.f32.mrf.mxu0
  %1085 = vmatprep.mubr.f32.mxu0 %v111
  %1086 = vmatmul.mubr.f32.gmra.mxu0 %v42
  %v1087 = vpop.f32.mrf.mxu0
  %v1088 = vadd.f32 0.0, %v1087
  %v1089 = vpop.f32.mrf.mxu0
  %1090 = vmatprep.mubr.f32.mxu0 %v114
  %1091 = vmatmul.mubr.f32.gmra.mxu0 %v44
  %v1092 = vpop.f32.mrf.mxu0
  %v1093 = vadd.f32 0.0, %v1092
  %v1094 = vpop.f32.mrf.mxu0
  %1095 = vmatprep.mubr.f32.mxu0 %v117
  %1096 = vmatmul.mubr.f32.gmra.mxu0 %v46
  %v1097 = vpop.f32.mrf.mxu0
  %v1098 = vadd.f32 0.0, %v1097
  %v1099 = vpop.f32.mrf.mxu0
  %1100 = vmatprep.mubr.f32.mxu0 %v120
  %1101 = vmatmul.mubr.f32.gmra.mxu0 %v48
  %v1102 = vpop.f32.mrf.mxu0
  %v1103 = vadd.f32 0.0, %v1102
  %v1104 = vpop.f32.mrf.mxu0
  %1105 = vmatprep.mubr.f32.mxu0 %v123
  %1106 = vmatmul.mubr.f32.gmra.mxu0 %v50
  %v1107 = vpop.f32.mrf.mxu0
  %v1108 = vadd.f32 0.0, %v1107
  %v1109 = vpop.f32.mrf.mxu0
  %1110 = vmatprep.mubr.f32.mxu0 %v126
  %1111 = vmatmul.mubr.f32.gmra.mxu0 %v52
  %v1112 = vpop.f32.mrf.mxu0
  %v1113 = vadd.f32 0.0, %v1112
  %v1114 = vpop.f32.mrf.mxu0
  %1115 = vmatprep.mubr.f32.mxu0 %v129
  %1116 = vmatmul.mubr.f32.gmra.mxu0 %v54
  %v1117 = vpop.f32.mrf.mxu0
  %v1118 = vadd.f32 0.0, %v1117
  %v1119 = vpop.f32.mrf.mxu0
  %1120 = vmatprep.mubr.f32.mxu0 %v132
  %1121 = vmatmul.mubr.f32.gmra.mxu0 %v56
  %v1122 = vpop.f32.mrf.mxu0
  %v1123 = vadd.f32 0.0, %v1122
  %v1124 = vpop.f32.mrf.mxu0
  %1125 = vmatprep.mubr.f32.mxu0 %v135
  %1126 = vmatmul.mubr.f32.gmra.mxu0 %v58
  %v1127 = vpop.f32.mrf.mxu0
  %v1128 = vadd.f32 0.0, %v1127
  %v1129 = vpop.f32.mrf.mxu0
  %1130 = vmatprep.mubr.f32.mxu0 %v138
  %1131 = vmatmul.mubr.f32.gmra.mxu0 %v60
  %v1132 = vpop.f32.mrf.mxu0
  %v1133 = vadd.f32 0.0, %v1132
  %v1134 = vpop.f32.mrf.mxu0
  %1135 = vmatprep.mubr.f32.mxu0 %v141
  %1136 = vmatmul.mubr.f32.gmra.mxu0 %v62
  %v1137 = vpop.f32.mrf.mxu0
  %v1138 = vadd.f32 0.0, %v1137
  %v1139 = vpop.f32.mrf.mxu0
  %1140 = vmatprep.mubr.f32.mxu0 %v144
  %1141 = vmatmul.mubr.f32.gmra.mxu0 %v64
  %v1142 = vpop.f32.mrf.mxu0
  %v1143 = vadd.f32 0.0, %v1142
  %v1144 = vpop.f32.mrf.mxu0
  %1145 = vmatprep.mubr.f32.mxu0 %v147
  %1146 = vmatmul.mubr.f32.gmra.mxu0 %v66
  %v1147 = vpop.f32.mrf.mxu0
  %v1148 = vadd.f32 0.0, %v1147
  %v1149 = vpop.f32.mrf.mxu0
  %1150 = vmatprep.mubr.f32.mxu0 %v150
  %1151 = vmatmul.mubr.f32.gmra.mxu0 %v68
  %v1152 = vpop.f32.mrf.mxu0
  %v1153 = vadd.f32 0.0, %v1152
  %v1154 = vpop.f32.mrf.mxu0
  %1155 = vmatprep.mubr.f32.mxu0 %v153
  %1156 = vmatmul.mubr.f32.gmra.mxu0 %v70
  %v1157 = vpop.f32.mrf.mxu0
  %v1158 = vadd.f32 0.0, %v1157
  %v1159 = vpop.f32.mrf.mxu0
  %1160 = vmatprep.mubr.f32.mxu0 %v156
  %1161 = vmatmul.mubr.f32.gmra.mxu0 %v72
  %v1162 = vpop.f32.mrf.mxu0
  %v1163 = vadd.f32 0.0, %v1162
  %v1164 = vpop.f32.mrf.mxu0
  %1165 = vdwg.mxu0
  %v1166 = vld [vmem:[%s0 + $0xa0] sm:$0xff]
  %v1167 = vld [vmem:[%s0 + $0xa8] sm:$0xff]
  %v1168 = vld [vmem:[%s0 + $0xb0] sm:$0xff]
  %v1169 = vld [vmem:[%s0 + $0xb8] sm:$0xff]
  %v1170 = vld [vmem:[%s0 + $0xc0] sm:$0xff]
  %v1171 = vld [vmem:[%s0 + $0xc8] sm:$0xff]
  %v1172 = vld [vmem:[%s0 + $0xd0] sm:$0xff]
  %v1173 = vld [vmem:[%s0 + $0xd8] sm:$0xff]
  %v1174 = vld [vmem:[%s0 + $0xe0] sm:$0xff]
  %v1175 = vld [vmem:[%s0 + $0xe8] sm:$0xff]
  %v1176 = vld [vmem:[%s0 + $0xf0] sm:$0xff]
  %v1177 = vld [vmem:[%s0 + $0xf8] sm:$0xff]
  %v1178 = vld [vmem:[%s0 + $0x100] sm:$0xff]
  %v1179 = vld [vmem:[%s0 + $0x108] sm:$0xff]
  %v1180 = vld [vmem:[%s0 + $0x110] sm:$0xff]
  %v1181 = vld [vmem:[%s0 + $0x118] sm:$0xff]
  %v1182 = vld [vmem:[%s0 + $0x120] sm:$0xff]
  %v1183 = vld [vmem:[%s0 + $0x128] sm:$0xff]
  %v1184 = vld [vmem:[%s0 + $0x130] sm:$0xff]
  %v1185 = vld [vmem:[%s0 + $0x138] sm:$0xff]
  %1186 = vmatprep.subr.mxu0 0.0
  %1187 = vmatpush1.msra.mxu0 %v1181
  %1188 = vmatprep.subr.mxu0 0.0
  %1189 = vmatpush1.msra.mxu0 %v1180
  %1190 = vmatprep.subr.mxu0 0.0
  %1191 = vmatpush1.msra.mxu0 %v1179
  %1192 = vmatprep.subr.mxu0 0.0
  %1193 = vmatpush1.msra.mxu0 %v1178
  %1194 = vmatprep.subr.mxu0 0.0
  %1195 = vmatpush1.msra.mxu0 %v1177
  %1196 = vmatprep.subr.mxu0 0.0
  %1197 = vmatpush1.msra.mxu0 %v1176
  %1198 = vmatprep.subr.mxu0 0.0
  %1199 = vmatpush1.msra.mxu0 %v1175
  %1200 = vmatprep.subr.mxu0 0.0
  %1201 = vmatpush1.msra.mxu0 %v1174
  %1202 = vmatprep.subr.mxu0 0.0
  %1203 = vmatpush1.msra.mxu0 %v1173
  %1204 = vmatprep.subr.mxu0 0.0
  %1205 = vmatpush1.msra.mxu0 %v1172
  %1206 = vmatprep.subr.mxu0 0.0
  %1207 = vmatpush1.msra.mxu0 %v1171
  %1208 = vmatprep.subr.mxu0 0.0
  %1209 = vmatpush1.msra.mxu0 %v1170
  %1210 = vmatprep.subr.mxu0 0.0
  %1211 = vmatpush1.msra.mxu0 %v1169
  %1212 = vmatprep.subr.mxu0 0.0
  %1213 = vmatpush1.msra.mxu0 %v1168
  %1214 = vmatprep.subr.mxu0 0.0
  %1215 = vmatpush1.msra.mxu0 %v1167
  %1216 = vmatprep.subr.mxu0 0.0
  %1217 = vmatpush1.msra.mxu0 %v1166
  %1218 = vmatprep.subr.mxu0 0.0
  %1219 = vmatpush2.msra.mxu0 0.0
  %1220 = vmatprep.subr.mxu0 0.0
  %1221 = vmatpush2.msra.mxu0 0.0
  %1222 = vmatprep.subr.mxu0 0.0
  %1223 = vmatpush2.msra.mxu0 0.0
  %1224 = vmatprep.subr.mxu0 0.0
  %1225 = vmatpush2.msra.mxu0 0.0
  %1226 = vmatprep.subr.mxu0 0.0
  %1227 = vmatpush2.msra.mxu0 0.0
  %1228 = vmatprep.subr.mxu0 0.0
  %1229 = vmatpush2.msra.mxu0 0.0
  %1230 = vmatprep.subr.mxu0 0.0
  %1231 = vmatpush2.msra.mxu0 0.0
  %1232 = vmatprep.subr.mxu0 0.0
  %1233 = vmatpush2.msra.mxu0 0.0
  %1234 = vmatprep.subr.mxu0 0.0
  %1235 = vmatpush2.msra.mxu0 0.0
  %1236 = vmatprep.subr.mxu0 0.0
  %1237 = vmatpush2.msra.mxu0 0.0
  %1238 = vmatprep.subr.mxu0 0.0
  %1239 = vmatpush2.msra.mxu0 0.0
  %1240 = vmatprep.subr.mxu0 0.0
  %1241 = vmatpush2.msra.mxu0 0.0
  %1242 = vmatprep.subr.mxu0 0.0
  %1243 = vmatpush2.msra.mxu0 %v1185
  %1244 = vmatprep.subr.mxu0 0.0
  %1245 = vmatpush2.msra.mxu0 %v1184
  %1246 = vmatprep.subr.mxu0 0.0
  %1247 = vmatpush2.msra.mxu0 %v1183
  %1248 = vmatprep.subr.mxu0 0.0
  %1249 = vmatpush2.msra.mxu0 %v1182
  %1250 = vmatprep.mubr.f32.mxu0 %v105
  %1251 = vmatmul.mubr.f32.gmra.mxu0 %v38
  %v1252 = vpop.f32.mrf.mxu0
  %v1253 = vadd.f32 0.0, %v1252
  %v1254 = vpop.f32.mrf.mxu0
  %1255 = vmatprep.mubr.f32.mxu0 %v108
  %1256 = vmatmul.mubr.f32.gmra.mxu0 %v40
  %v1257 = vpop.f32.mrf.mxu0
  %v1258 = vadd.f32 0.0, %v1257
  %v1259 = vpop.f32.mrf.mxu0
  %1260 = vmatprep.mubr.f32.mxu0 %v111
  %1261 = vmatmul.mubr.f32.gmra.mxu0 %v42
  %v1262 = vpop.f32.mrf.mxu0
  %v1263 = vadd.f32 0.0, %v1262
  %v1264 = vpop.f32.mrf.mxu0
  %1265 = vmatprep.mubr.f32.mxu0 %v114
  %1266 = vmatmul.mubr.f32.gmra.mxu0 %v44
  %v1267 = vpop.f32.mrf.mxu0
  %v1268 = vadd.f32 0.0, %v1267
  %v1269 = vpop.f32.mrf.mxu0
  %1270 = vmatprep.mubr.f32.mxu0 %v117
  %1271 = vmatmul.mubr.f32.gmra.mxu0 %v46
  %v1272 = vpop.f32.mrf.mxu0
  %v1273 = vadd.f32 0.0, %v1272
  %v1274 = vpop.f32.mrf.mxu0
  %1275 = vmatprep.mubr.f32.mxu0 %v120
  %1276 = vmatmul.mubr.f32.gmra.mxu0 %v48
  %v1277 = vpop.f32.mrf.mxu0
  %v1278 = vadd.f32 0.0, %v1277
  %v1279 = vpop.f32.mrf.mxu0
  %1280 = vmatprep.mubr.f32.mxu0 %v123
  %1281 = vmatmul.mubr.f32.gmra.mxu0 %v50
  %v1282 = vpop.f32.mrf.mxu0
  %v1283 = vadd.f32 0.0, %v1282
  %v1284 = vpop.f32.mrf.mxu0
  %1285 = vmatprep.mubr.f32.mxu0 %v126
  %1286 = vmatmul.mubr.f32.gmra.mxu0 %v52
  %v1287 = vpop.f32.mrf.mxu0
  %v1288 = vadd.f32 0.0, %v1287
  %v1289 = vpop.f32.mrf.mxu0
  %1290 = vmatprep.mubr.f32.mxu0 %v129
  %1291 = vmatmul.mubr.f32.gmra.mxu0 %v54
  %v1292 = vpop.f32.mrf.mxu0
  %v1293 = vadd.f32 0.0, %v1292
  %v1294 = vpop.f32.mrf.mxu0
  %1295 = vmatprep.mubr.f32.mxu0 %v132
  %1296 = vmatmul.mubr.f32.gmra.mxu0 %v56
  %v1297 = vpop.f32.mrf.mxu0
  %v1298 = vadd.f32 0.0, %v1297
  %v1299 = vpop.f32.mrf.mxu0
  %1300 = vmatprep.mubr.f32.mxu0 %v135
  %1301 = vmatmul.mubr.f32.gmra.mxu0 %v58
  %v1302 = vpop.f32.mrf.mxu0
  %v1303 = vadd.f32 0.0, %v1302
  %v1304 = vpop.f32.mrf.mxu0
  %1305 = vmatprep.mubr.f32.mxu0 %v138
  %1306 = vmatmul.mubr.f32.gmra.mxu0 %v60
  %v1307 = vpop.f32.mrf.mxu0
  %v1308 = vadd.f32 0.0, %v1307
  %v1309 = vpop.f32.mrf.mxu0
  %1310 = vmatprep.mubr.f32.mxu0 %v141
  %1311 = vmatmul.mubr.f32.gmra.mxu0 %v62
  %v1312 = vpop.f32.mrf.mxu0
  %v1313 = vadd.f32 0.0, %v1312
  %v1314 = vpop.f32.mrf.mxu0
  %1315 = vmatprep.mubr.f32.mxu0 %v144
  %1316 = vmatmul.mubr.f32.gmra.mxu0 %v64
  %v1317 = vpop.f32.mrf.mxu0
  %v1318 = vadd.f32 0.0, %v1317
  %v1319 = vpop.f32.mrf.mxu0
  %1320 = vmatprep.mubr.f32.mxu0 %v147
  %1321 = vmatmul.mubr.f32.gmra.mxu0 %v66
  %v1322 = vpop.f32.mrf.mxu0
  %v1323 = vadd.f32 0.0, %v1322
  %v1324 = vpop.f32.mrf.mxu0
  %1325 = vmatprep.mubr.f32.mxu0 %v150
  %1326 = vmatmul.mubr.f32.gmra.mxu0 %v68
  %v1327 = vpop.f32.mrf.mxu0
  %v1328 = vadd.f32 0.0, %v1327
  %v1329 = vpop.f32.mrf.mxu0
  %1330 = vmatprep.mubr.f32.mxu0 %v153
  %1331 = vmatmul.mubr.f32.gmra.mxu0 %v70
  %v1332 = vpop.f32.mrf.mxu0
  %v1333 = vadd.f32 0.0, %v1332
  %v1334 = vpop.f32.mrf.mxu0
  %1335 = vmatprep.mubr.f32.mxu0 %v156
  %1336 = vmatmul.mubr.f32.gmra.mxu0 %v72
  %v1337 = vpop.f32.mrf.mxu0
  %v1338 = vadd.f32 0.0, %v1337
  %v1339 = vpop.f32.mrf.mxu0
  %1340 = vdwg.mxu0
  %v1341 = vmax.f32 %v1078, %v1123
  %v1342 = vmax.f32 %v1083, %v1128
  %v1343 = vmax.f32 %v1088, %v1133
  %v1344 = vmax.f32 %v1093, %v1138
  %v1345 = vmax.f32 %v1098, %v1143
  %v1346 = vmax.f32 %v1103, %v1148
  %v1347 = vmax.f32 %v1108, %v1153
  %v1348 = vmax.f32 %v1113, %v1158
  %v1349 = vmax.f32 %v1118, %v1163
  %v1350 = vmax.f32 %v1253, %v1298
  %v1351 = vmax.f32 %v1258, %v1303
  %v1352 = vmax.f32 %v1263, %v1308
  %v1353 = vmax.f32 %v1268, %v1313
  %v1354 = vmax.f32 %v1273, %v1318
  %v1355 = vmax.f32 %v1278, %v1323
  %v1356 = vmax.f32 %v1283, %v1328
  %v1357 = vmax.f32 %v1288, %v1333
  %v1358 = vmax.f32 %v1293, %v1338
  %v1359 = vmax.f32 %v1341, %v1350
  %v1360 = vmax.f32 %v1342, %v1351
  %v1361 = vmax.f32 %v1343, %v1352
  %v1362 = vmax.f32 %v1344, %v1353
  %v1363 = vmax.f32 %v1345, %v1354
  %v1364 = vmax.f32 %v1346, %v1355
  %v1365 = vmax.f32 %v1347, %v1356
  %v1366 = vmax.f32 %v1348, %v1357
  %v1367 = vmax.f32 %v1349, %v1358
  %v1368 = vadd.f32 %v1359, %v518
  %v1369 = vadd.f32 %v1360, %v523
  %v1370 = vadd.f32 %v1361, %v528
  %v1371 = vadd.f32 %v1362, %v533
  %v1372 = vadd.f32 %v1363, %v538
  %v1373 = vadd.f32 %v1364, %v543
  %v1374 = vadd.f32 %v1365, %v548
  %v1375 = vadd.f32 %v1366, %v553
  %v1376 = vadd.f32 %v1367, %v558
  %v1377 = vmax.f32 %v1368, 0.0
  %v1378 = vmax.f32 %v1369, 0.0
  %v1379 = vmax.f32 %v1370, 0.0
  %v1380 = vmax.f32 %v1371, 0.0
  %v1381 = vmax.f32 %v1372, 0.0
  %v1382 = vmax.f32 %v1373, 0.0
  %v1383 = vmax.f32 %v1374, 0.0
  %v1384 = vmax.f32 %v1375, 0.0
  %v1385 = vmax.f32 %v1376, 0.0
  %1386 = vst [vmem:[#allocation2 + $0x90] sm:$0xff] %v1377
  %1387 = vst [vmem:[#allocation2 + $0x98] sm:$0xff] %v1378
  %1388 = vst [vmem:[#allocation2 + $0xa0] sm:$0xff] %v1379
  %1389 = vst [vmem:[#allocation2 + $0xa8] sm:$0xff] %v1380
  %1390 = vst [vmem:[#allocation2 + $0xb0] sm:$0xff] %v1381
  %1391 = vst [vmem:[#allocation2 + $0xb8] sm:$0xff] %v1382
  %1392 = vst [vmem:[#allocation2 + $0xc0] sm:$0xff] %v1383
  %1393 = vst [vmem:[#allocation2 + $0xc8] sm:$0xff] %v1384
  %1394 = vst [vmem:[#allocation2 + $0xd0] sm:$0xff] %v1385
  %v1395 = vld [vmem:[%s0 + $0xc0] sm:$0xff]
  %v1396 = vld [vmem:[%s0 + $0xc8] sm:$0xff]
  %v1397 = vld [vmem:[%s0 + $0xd0] sm:$0xff]
  %v1398 = vld [vmem:[%s0 + $0xd8] sm:$0xff]
  %v1399 = vld [vmem:[%s0 + $0xe0] sm:$0xff]
  %v1400 = vld [vmem:[%s0 + $0xe8] sm:$0xff]
  %v1401 = vld [vmem:[%s0 + $0xf0] sm:$0xff]
  %v1402 = vld [vmem:[%s0 + $0xf8] sm:$0xff]
  %v1403 = vld [vmem:[%s0 + $0x100] sm:$0xff]
  %v1404 = vld [vmem:[%s0 + $0x108] sm:$0xff]
  %v1405 = vld [vmem:[%s0 + $0x110] sm:$0xff]
  %v1406 = vld [vmem:[%s0 + $0x118] sm:$0xff]
  %v1407 = vld [vmem:[%s0 + $0x120] sm:$0xff]
  %v1408 = vld [vmem:[%s0 + $0x128] sm:$0xff]
  %v1409 = vld [vmem:[%s0 + $0x130] sm:$0xff]
  %v1410 = vld [vmem:[%s0 + $0x138] sm:$0xff]
  %v1411 = vld [vmem:[%s0 + $0x140] sm:$0xff]
  %v1412 = vld [vmem:[%s0 + $0x148] sm:$0xff]
  %v1413 = vld [vmem:[%s0 + $0x150] sm:$0xff]
  %v1414 = vld [vmem:[%s0 + $0x158] sm:$0xff]
  %1415 = vmatprep.subr.mxu0 0.0
  %1416 = vmatpush1.msra.mxu0 %v1410
  %1417 = vmatprep.subr.mxu0 0.0
  %1418 = vmatpush1.msra.mxu0 %v1409
  %1419 = vmatprep.subr.mxu0 0.0
  %1420 = vmatpush1.msra.mxu0 %v1408
  %1421 = vmatprep.subr.mxu0 0.0
  %1422 = vmatpush1.msra.mxu0 %v1407
  %1423 = vmatprep.subr.mxu0 0.0
  %1424 = vmatpush1.msra.mxu0 %v1406
  %1425 = vmatprep.subr.mxu0 0.0
  %1426 = vmatpush1.msra.mxu0 %v1405
  %1427 = vmatprep.subr.mxu0 0.0
  %1428 = vmatpush1.msra.mxu0 %v1404
  %1429 = vmatprep.subr.mxu0 0.0
  %1430 = vmatpush1.msra.mxu0 %v1403
  %1431 = vmatprep.subr.mxu0 0.0
  %1432 = vmatpush1.msra.mxu0 %v1402
  %1433 = vmatprep.subr.mxu0 0.0
  %1434 = vmatpush1.msra.mxu0 %v1401
  %1435 = vmatprep.subr.mxu0 0.0
  %1436 = vmatpush1.msra.mxu0 %v1400
  %1437 = vmatprep.subr.mxu0 0.0
  %1438 = vmatpush1.msra.mxu0 %v1399
  %1439 = vmatprep.subr.mxu0 0.0
  %1440 = vmatpush1.msra.mxu0 %v1398
  %1441 = vmatprep.subr.mxu0 0.0
  %1442 = vmatpush1.msra.mxu0 %v1397
  %1443 = vmatprep.subr.mxu0 0.0
  %1444 = vmatpush1.msra.mxu0 %v1396
  %1445 = vmatprep.subr.mxu0 0.0
  %1446 = vmatpush1.msra.mxu0 %v1395
  %1447 = vmatprep.subr.mxu0 0.0
  %1448 = vmatpush2.msra.mxu0 0.0
  %1449 = vmatprep.subr.mxu0 0.0
  %1450 = vmatpush2.msra.mxu0 0.0
  %1451 = vmatprep.subr.mxu0 0.0
  %1452 = vmatpush2.msra.mxu0 0.0
  %1453 = vmatprep.subr.mxu0 0.0
  %1454 = vmatpush2.msra.mxu0 0.0
  %1455 = vmatprep.subr.mxu0 0.0
  %1456 = vmatpush2.msra.mxu0 0.0
  %1457 = vmatprep.subr.mxu0 0.0
  %1458 = vmatpush2.msra.mxu0 0.0
  %1459 = vmatprep.subr.mxu0 0.0
  %1460 = vmatpush2.msra.mxu0 0.0
  %1461 = vmatprep.subr.mxu0 0.0
  %1462 = vmatpush2.msra.mxu0 0.0
  %1463 = vmatprep.subr.mxu0 0.0
  %1464 = vmatpush2.msra.mxu0 0.0
  %1465 = vmatprep.subr.mxu0 0.0
  %1466 = vmatpush2.msra.mxu0 0.0
  %1467 = vmatprep.subr.mxu0 0.0
  %1468 = vmatpush2.msra.mxu0 0.0
  %1469 = vmatprep.subr.mxu0 0.0
  %1470 = vmatpush2.msra.mxu0 0.0
  %1471 = vmatprep.subr.mxu0 0.0
  %1472 = vmatpush2.msra.mxu0 %v1414
  %1473 = vmatprep.subr.mxu0 0.0
  %1474 = vmatpush2.msra.mxu0 %v1413
  %1475 = vmatprep.subr.mxu0 0.0
  %1476 = vmatpush2.msra.mxu0 %v1412
  %1477 = vmatprep.subr.mxu0 0.0
  %1478 = vmatpush2.msra.mxu0 %v1411
  %1479 = vmatprep.mubr.f32.mxu0 %v105
  %1480 = vmatmul.mubr.f32.gmra.mxu0 %v38
  %v1481 = vpop.f32.mrf.mxu0
  %v1482 = vadd.f32 0.0, %v1481
  %v1483 = vpop.f32.mrf.mxu0
  %1484 = vmatprep.mubr.f32.mxu0 %v108
  %1485 = vmatmul.mubr.f32.gmra.mxu0 %v40
  %v1486 = vpop.f32.mrf.mxu0
  %v1487 = vadd.f32 0.0, %v1486
  %v1488 = vpop.f32.mrf.mxu0
  %1489 = vmatprep.mubr.f32.mxu0 %v111
  %1490 = vmatmul.mubr.f32.gmra.mxu0 %v42
  %v1491 = vpop.f32.mrf.mxu0
  %v1492 = vadd.f32 0.0, %v1491
  %v1493 = vpop.f32.mrf.mxu0
  %1494 = vmatprep.mubr.f32.mxu0 %v114
  %1495 = vmatmul.mubr.f32.gmra.mxu0 %v44
  %v1496 = vpop.f32.mrf.mxu0
  %v1497 = vadd.f32 0.0, %v1496
  %v1498 = vpop.f32.mrf.mxu0
  %1499 = vmatprep.mubr.f32.mxu0 %v117
  %1500 = vmatmul.mubr.f32.gmra.mxu0 %v46
  %v1501 = vpop.f32.mrf.mxu0
  %v1502 = vadd.f32 0.0, %v1501
  %v1503 = vpop.f32.mrf.mxu0
  %1504 = vmatprep.mubr.f32.mxu0 %v120
  %1505 = vmatmul.mubr.f32.gmra.mxu0 %v48
  %v1506 = vpop.f32.mrf.mxu0
  %v1507 = vadd.f32 0.0, %v1506
  %v1508 = vpop.f32.mrf.mxu0
  %1509 = vmatprep.mubr.f32.mxu0 %v123
  %1510 = vmatmul.mubr.f32.gmra.mxu0 %v50
  %v1511 = vpop.f32.mrf.mxu0
  %v1512 = vadd.f32 0.0, %v1511
  %v1513 = vpop.f32.mrf.mxu0
  %1514 = vmatprep.mubr.f32.mxu0 %v126
  %1515 = vmatmul.mubr.f32.gmra.mxu0 %v52
  %v1516 = vpop.f32.mrf.mxu0
  %v1517 = vadd.f32 0.0, %v1516
  %v1518 = vpop.f32.mrf.mxu0
  %1519 = vmatprep.mubr.f32.mxu0 %v129
  %1520 = vmatmul.mubr.f32.gmra.mxu0 %v54
  %v1521 = vpop.f32.mrf.mxu0
  %v1522 = vadd.f32 0.0, %v1521
  %v1523 = vpop.f32.mrf.mxu0
  %1524 = vmatprep.mubr.f32.mxu0 %v132
  %1525 = vmatmul.mubr.f32.gmra.mxu0 %v56
  %v1526 = vpop.f32.mrf.mxu0
  %v1527 = vadd.f32 0.0, %v1526
  %v1528 = vpop.f32.mrf.mxu0
  %1529 = vmatprep.mubr.f32.mxu0 %v135
  %1530 = vmatmul.mubr.f32.gmra.mxu0 %v58
  %v1531 = vpop.f32.mrf.mxu0
  %v1532 = vadd.f32 0.0, %v1531
  %v1533 = vpop.f32.mrf.mxu0
  %1534 = vmatprep.mubr.f32.mxu0 %v138
  %1535 = vmatmul.mubr.f32.gmra.mxu0 %v60
  %v1536 = vpop.f32.mrf.mxu0
  %v1537 = vadd.f32 0.0, %v1536
  %v1538 = vpop.f32.mrf.mxu0
  %1539 = vmatprep.mubr.f32.mxu0 %v141
  %1540 = vmatmul.mubr.f32.gmra.mxu0 %v62
  %v1541 = vpop.f32.mrf.mxu0
  %v1542 = vadd.f32 0.0, %v1541
  %v1543 = vpop.f32.mrf.mxu0
  %1544 = vmatprep.mubr.f32.mxu0 %v144
  %1545 = vmatmul.mubr.f32.gmra.mxu0 %v64
  %v1546 = vpop.f32.mrf.mxu0
  %v1547 = vadd.f32 0.0, %v1546
  %v1548 = vpop.f32.mrf.mxu0
  %1549 = vmatprep.mubr.f32.mxu0 %v147
  %1550 = vmatmul.mubr.f32.gmra.mxu0 %v66
  %v1551 = vpop.f32.mrf.mxu0
  %v1552 = vadd.f32 0.0, %v1551
  %v1553 = vpop.f32.mrf.mxu0
  %1554 = vmatprep.mubr.f32.mxu0 %v150
  %1555 = vmatmul.mubr.f32.gmra.mxu0 %v68
  %v1556 = vpop.f32.mrf.mxu0
  %v1557 = vadd.f32 0.0, %v1556
  %v1558 = vpop.f32.mrf.mxu0
  %1559 = vmatprep.mubr.f32.mxu0 %v153
  %1560 = vmatmul.mubr.f32.gmra.mxu0 %v70
  %v1561 = vpop.f32.mrf.mxu0
  %v1562 = vadd.f32 0.0, %v1561
  %v1563 = vpop.f32.mrf.mxu0
  %1564 = vmatprep.mubr.f32.mxu0 %v156
  %1565 = vmatmul.mubr.f32.gmra.mxu0 %v72
  %v1566 = vpop.f32.mrf.mxu0
  %v1567 = vadd.f32 0.0, %v1566
  %v1568 = vpop.f32.mrf.mxu0
  %1569 = vdwg.mxu0
  %v1570 = vld [vmem:[%s0 + $0xe0] sm:$0xff]
  %v1571 = vld [vmem:[%s0 + $0xe8] sm:$0xff]
  %v1572 = vld [vmem:[%s0 + $0xf0] sm:$0xff]
  %v1573 = vld [vmem:[%s0 + $0xf8] sm:$0xff]
  %v1574 = vld [vmem:[%s0 + $0x100] sm:$0xff]
  %v1575 = vld [vmem:[%s0 + $0x108] sm:$0xff]
  %v1576 = vld [vmem:[%s0 + $0x110] sm:$0xff]
  %v1577 = vld [vmem:[%s0 + $0x118] sm:$0xff]
  %v1578 = vld [vmem:[%s0 + $0x120] sm:$0xff]
  %v1579 = vld [vmem:[%s0 + $0x128] sm:$0xff]
  %v1580 = vld [vmem:[%s0 + $0x130] sm:$0xff]
  %v1581 = vld [vmem:[%s0 + $0x138] sm:$0xff]
  %v1582 = vld [vmem:[%s0 + $0x140] sm:$0xff]
  %v1583 = vld [vmem:[%s0 + $0x148] sm:$0xff]
  %v1584 = vld [vmem:[%s0 + $0x150] sm:$0xff]
  %v1585 = vld [vmem:[%s0 + $0x158] sm:$0xff]
  %v1586 = vld [vmem:[%s0 + $0x160] sm:$0xff]
  %v1587 = vld [vmem:[%s0 + $0x168] sm:$0xff]
  %v1588 = vld [vmem:[%s0 + $0x170] sm:$0xff]
  %v1589 = vld [vmem:[%s0 + $0x178] sm:$0xff]
  %1590 = vmatprep.subr.mxu0 0.0
  %1591 = vmatpush1.msra.mxu0 %v1585
  %1592 = vmatprep.subr.mxu0 0.0
  %1593 = vmatpush1.msra.mxu0 %v1584
  %1594 = vmatprep.subr.mxu0 0.0
  %1595 = vmatpush1.msra.mxu0 %v1583
  %1596 = vmatprep.subr.mxu0 0.0
  %1597 = vmatpush1.msra.mxu0 %v1582
  %1598 = vmatprep.subr.mxu0 0.0
  %1599 = vmatpush1.msra.mxu0 %v1581
  %1600 = vmatprep.subr.mxu0 0.0
  %1601 = vmatpush1.msra.mxu0 %v1580
  %1602 = vmatprep.subr.mxu0 0.0
  %1603 = vmatpush1.msra.mxu0 %v1579
  %1604 = vmatprep.subr.mxu0 0.0
  %1605 = vmatpush1.msra.mxu0 %v1578
  %1606 = vmatprep.subr.mxu0 0.0
  %1607 = vmatpush1.msra.mxu0 %v1577
  %1608 = vmatprep.subr.mxu0 0.0
  %1609 = vmatpush1.msra.mxu0 %v1576
  %1610 = vmatprep.subr.mxu0 0.0
  %1611 = vmatpush1.msra.mxu0 %v1575
  %1612 = vmatprep.subr.mxu0 0.0
  %1613 = vmatpush1.msra.mxu0 %v1574
  %1614 = vmatprep.subr.mxu0 0.0
  %1615 = vmatpush1.msra.mxu0 %v1573
  %1616 = vmatprep.subr.mxu0 0.0
  %1617 = vmatpush1.msra.mxu0 %v1572
  %1618 = vmatprep.subr.mxu0 0.0
  %1619 = vmatpush1.msra.mxu0 %v1571
  %1620 = vmatprep.subr.mxu0 0.0
  %1621 = vmatpush1.msra.mxu0 %v1570
  %1622 = vmatprep.subr.mxu0 0.0
  %1623 = vmatpush2.msra.mxu0 0.0
  %1624 = vmatprep.subr.mxu0 0.0
  %1625 = vmatpush2.msra.mxu0 0.0
  %1626 = vmatprep.subr.mxu0 0.0
  %1627 = vmatpush2.msra.mxu0 0.0
  %1628 = vmatprep.subr.mxu0 0.0
  %1629 = vmatpush2.msra.mxu0 0.0
  %1630 = vmatprep.subr.mxu0 0.0
  %1631 = vmatpush2.msra.mxu0 0.0
  %1632 = vmatprep.subr.mxu0 0.0
  %1633 = vmatpush2.msra.mxu0 0.0
  %1634 = vmatprep.subr.mxu0 0.0
  %1635 = vmatpush2.msra.mxu0 0.0
  %1636 = vmatprep.subr.mxu0 0.0
  %1637 = vmatpush2.msra.mxu0 0.0
  %1638 = vmatprep.subr.mxu0 0.0
  %1639 = vmatpush2.msra.mxu0 0.0
  %1640 = vmatprep.subr.mxu0 0.0
  %1641 = vmatpush2.msra.mxu0 0.0
  %1642 = vmatprep.subr.mxu0 0.0
  %1643 = vmatpush2.msra.mxu0 0.0
  %1644 = vmatprep.subr.mxu0 0.0
  %1645 = vmatpush2.msra.mxu0 0.0
  %1646 = vmatprep.subr.mxu0 0.0
  %1647 = vmatpush2.msra.mxu0 %v1589
  %1648 = vmatprep.subr.mxu0 0.0
  %1649 = vmatpush2.msra.mxu0 %v1588
  %1650 = vmatprep.subr.mxu0 0.0
  %1651 = vmatpush2.msra.mxu0 %v1587
  %1652 = vmatprep.subr.mxu0 0.0
  %1653 = vmatpush2.msra.mxu0 %v1586
  %1654 = vmatprep.mubr.f32.mxu0 %v105
  %1655 = vmatmul.mubr.f32.gmra.mxu0 %v38
  %v1656 = vpop.f32.mrf.mxu0
  %v1657 = vadd.f32 0.0, %v1656
  %v1658 = vpop.f32.mrf.mxu0
  %1659 = vmatprep.mubr.f32.mxu0 %v108
  %1660 = vmatmul.mubr.f32.gmra.mxu0 %v40
  %v1661 = vpop.f32.mrf.mxu0
  %v1662 = vadd.f32 0.0, %v1661
  %v1663 = vpop.f32.mrf.mxu0
  %1664 = vmatprep.mubr.f32.mxu0 %v111
  %1665 = vmatmul.mubr.f32.gmra.mxu0 %v42
  %v1666 = vpop.f32.mrf.mxu0
  %v1667 = vadd.f32 0.0, %v1666
  %v1668 = vpop.f32.mrf.mxu0
  %1669 = vmatprep.mubr.f32.mxu0 %v114
  %1670 = vmatmul.mubr.f32.gmra.mxu0 %v44
  %v1671 = vpop.f32.mrf.mxu0
  %v1672 = vadd.f32 0.0, %v1671
  %v1673 = vpop.f32.mrf.mxu0
  %1674 = vmatprep.mubr.f32.mxu0 %v117
  %1675 = vmatmul.mubr.f32.gmra.mxu0 %v46
  %v1676 = vpop.f32.mrf.mxu0
  %v1677 = vadd.f32 0.0, %v1676
  %v1678 = vpop.f32.mrf.mxu0
  %1679 = vmatprep.mubr.f32.mxu0 %v120
  %1680 = vmatmul.mubr.f32.gmra.mxu0 %v48
  %v1681 = vpop.f32.mrf.mxu0
  %v1682 = vadd.f32 0.0, %v1681
  %v1683 = vpop.f32.mrf.mxu0
  %1684 = vmatprep.mubr.f32.mxu0 %v123
  %1685 = vmatmul.mubr.f32.gmra.mxu0 %v50
  %v1686 = vpop.f32.mrf.mxu0
  %v1687 = vadd.f32 0.0, %v1686
  %v1688 = vpop.f32.mrf.mxu0
  %1689 = vmatprep.mubr.f32.mxu0 %v126
  %1690 = vmatmul.mubr.f32.gmra.mxu0 %v52
  %v1691 = vpop.f32.mrf.mxu0
  %v1692 = vadd.f32 0.0, %v1691
  %v1693 = vpop.f32.mrf.mxu0
  %1694 = vmatprep.mubr.f32.mxu0 %v129
  %1695 = vmatmul.mubr.f32.gmra.mxu0 %v54
  %v1696 = vpop.f32.mrf.mxu0
  %v1697 = vadd.f32 0.0, %v1696
  %v1698 = vpop.f32.mrf.mxu0
  %1699 = vmatprep.mubr.f32.mxu0 %v132
  %1700 = vmatmul.mubr.f32.gmra.mxu0 %v56
  %v1701 = vpop.f32.mrf.mxu0
  %v1702 = vadd.f32 0.0, %v1701
  %v1703 = vpop.f32.mrf.mxu0
  %1704 = vmatprep.mubr.f32.mxu0 %v135
  %1705 = vmatmul.mubr.f32.gmra.mxu0 %v58
  %v1706 = vpop.f32.mrf.mxu0
  %v1707 = vadd.f32 0.0, %v1706
  %v1708 = vpop.f32.mrf.mxu0
  %1709 = vmatprep.mubr.f32.mxu0 %v138
  %1710 = vmatmul.mubr.f32.gmra.mxu0 %v60
  %v1711 = vpop.f32.mrf.mxu0
  %v1712 = vadd.f32 0.0, %v1711
  %v1713 = vpop.f32.mrf.mxu0
  %1714 = vmatprep.mubr.f32.mxu0 %v141
  %1715 = vmatmul.mubr.f32.gmra.mxu0 %v62
  %v1716 = vpop.f32.mrf.mxu0
  %v1717 = vadd.f32 0.0, %v1716
  %v1718 = vpop.f32.mrf.mxu0
  %1719 = vmatprep.mubr.f32.mxu0 %v144
  %1720 = vmatmul.mubr.f32.gmra.mxu0 %v64
  %v1721 = vpop.f32.mrf.mxu0
  %v1722 = vadd.f32 0.0, %v1721
  %v1723 = vpop.f32.mrf.mxu0
  %1724 = vmatprep.mubr.f32.mxu0 %v147
  %1725 = vmatmul.mubr.f32.gmra.mxu0 %v66
  %v1726 = vpop.f32.mrf.mxu0
  %v1727 = vadd.f32 0.0, %v1726
  %v1728 = vpop.f32.mrf.mxu0
  %1729 = vmatprep.mubr.f32.mxu0 %v150
  %1730 = vmatmul.mubr.f32.gmra.mxu0 %v68
  %v1731 = vpop.f32.mrf.mxu0
  %v1732 = vadd.f32 0.0, %v1731
  %v1733 = vpop.f32.mrf.mxu0
  %1734 = vmatprep.mubr.f32.mxu0 %v153
  %1735 = vmatmul.mubr.f32.gmra.mxu0 %v70
  %v1736 = vpop.f32.mrf.mxu0
  %v1737 = vadd.f32 0.0, %v1736
  %v1738 = vpop.f32.mrf.mxu0
  %1739 = vmatprep.mubr.f32.mxu0 %v156
  %1740 = vmatmul.mubr.f32.gmra.mxu0 %v72
  %v1741 = vpop.f32.mrf.mxu0
  %v1742 = vadd.f32 0.0, %v1741
  %v1743 = vpop.f32.mrf.mxu0
  %1744 = vdwg.mxu0
  %v1745 = vmax.f32 %v1482, %v1527
  %v1746 = vmax.f32 %v1487, %v1532
  %v1747 = vmax.f32 %v1492, %v1537
  %v1748 = vmax.f32 %v1497, %v1542
  %v1749 = vmax.f32 %v1502, %v1547
  %v1750 = vmax.f32 %v1507, %v1552
  %v1751 = vmax.f32 %v1512, %v1557
  %v1752 = vmax.f32 %v1517, %v1562
  %v1753 = vmax.f32 %v1522, %v1567
  %v1754 = vmax.f32 %v1657, %v1702
  %v1755 = vmax.f32 %v1662, %v1707
  %v1756 = vmax.f32 %v1667, %v1712
  %v1757 = vmax.f32 %v1672, %v1717
  %v1758 = vmax.f32 %v1677, %v1722
  %v1759 = vmax.f32 %v1682, %v1727
  %v1760 = vmax.f32 %v1687, %v1732
  %v1761 = vmax.f32 %v1692, %v1737
  %v1762 = vmax.f32 %v1697, %v1742
  %v1763 = vmax.f32 %v1745, %v1754
  %v1764 = vmax.f32 %v1746, %v1755
  %v1765 = vmax.f32 %v1747, %v1756
  %v1766 = vmax.f32 %v1748, %v1757
  %v1767 = vmax.f32 %v1749, %v1758
  %v1768 = vmax.f32 %v1750, %v1759
  %v1769 = vmax.f32 %v1751, %v1760
  %v1770 = vmax.f32 %v1752, %v1761
  %v1771 = vmax.f32 %v1753, %v1762
  %v1772 = vadd.f32 %v1763, %v518
  %v1773 = vadd.f32 %v1764, %v523
  %v1774 = vadd.f32 %v1765, %v528
  %v1775 = vadd.f32 %v1766, %v533
  %v1776 = vadd.f32 %v1767, %v538
  %v1777 = vadd.f32 %v1768, %v543
  %v1778 = vadd.f32 %v1769, %v548
  %v1779 = vadd.f32 %v1770, %v553
  %v1780 = vadd.f32 %v1771, %v558
  %v1781 = vmax.f32 %v1772, 0.0
  %v1782 = vmax.f32 %v1773, 0.0
  %v1783 = vmax.f32 %v1774, 0.0
  %v1784 = vmax.f32 %v1775, 0.0
  %v1785 = vmax.f32 %v1776, 0.0
  %v1786 = vmax.f32 %v1777, 0.0
  %v1787 = vmax.f32 %v1778, 0.0
  %v1788 = vmax.f32 %v1779, 0.0
  %v1789 = vmax.f32 %v1780, 0.0
  %1790 = vst [vmem:[#allocation2 + $0xd8] sm:$0xff] %v1781
  %1791 = vst [vmem:[#allocation2 + $0xe0] sm:$0xff] %v1782
  %1792 = vst [vmem:[#allocation2 + $0xe8] sm:$0xff] %v1783
  %1793 = vst [vmem:[#allocation2 + $0xf0] sm:$0xff] %v1784
  %1794 = vst [vmem:[#allocation2 + $0xf8] sm:$0xff] %v1785
  %1795 = vst [vmem:[#allocation2 + $0x100] sm:$0xff] %v1786
  %1796 = vst [vmem:[#allocation2 + $0x108] sm:$0xff] %v1787
  %1797 = vst [vmem:[#allocation2 + $0x110] sm:$0xff] %v1788
  %1798 = vst [vmem:[#allocation2 + $0x118] sm:$0xff] %v1789
  %v1799 = vld [vmem:[%s0 + $0x100] sm:$0xff]
  %v1800 = vld [vmem:[%s0 + $0x108] sm:$0xff]
  %v1801 = vld [vmem:[%s0 + $0x110] sm:$0xff]
  %v1802 = vld [vmem:[%s0 + $0x118] sm:$0xff]
  %v1803 = vld [vmem:[%s0 + $0x120] sm:$0xff]
  %v1804 = vld [vmem:[%s0 + $0x128] sm:$0xff]
  %v1805 = vld [vmem:[%s0 + $0x130] sm:$0xff]
  %v1806 = vld [vmem:[%s0 + $0x138] sm:$0xff]
  %v1807 = vld [vmem:[%s0 + $0x140] sm:$0xff]
  %v1808 = vld [vmem:[%s0 + $0x148] sm:$0xff]
  %v1809 = vld [vmem:[%s0 + $0x150] sm:$0xff]
  %v1810 = vld [vmem:[%s0 + $0x158] sm:$0xff]
  %v1811 = vld [vmem:[%s0 + $0x160] sm:$0xff]
  %v1812 = vld [vmem:[%s0 + $0x168] sm:$0xff]
  %v1813 = vld [vmem:[%s0 + $0x170] sm:$0xff]
  %v1814 = vld [vmem:[%s0 + $0x178] sm:$0xff]
  %v1815 = vld [vmem:[%s0 + $0x180] sm:$0xff]
  %v1816 = vld [vmem:[%s0 + $0x188] sm:$0xff]
  %v1817 = vld [vmem:[%s0 + $0x190] sm:$0xff]
  %v1818 = vld [vmem:[%s0 + $0x198] sm:$0xff]
  %1819 = vmatprep.subr.mxu0 0.0
  %1820 = vmatpush1.msra.mxu0 %v1814
  %1821 = vmatprep.subr.mxu0 0.0
  %1822 = vmatpush1.msra.mxu0 %v1813
  %1823 = vmatprep.subr.mxu0 0.0
  %1824 = vmatpush1.msra.mxu0 %v1812
  %1825 = vmatprep.subr.mxu0 0.0
  %1826 = vmatpush1.msra.mxu0 %v1811
  %1827 = vmatprep.subr.mxu0 0.0
  %1828 = vmatpush1.msra.mxu0 %v1810
  %1829 = vmatprep.subr.mxu0 0.0
  %1830 = vmatpush1.msra.mxu0 %v1809
  %1831 = vmatprep.subr.mxu0 0.0
  %1832 = vmatpush1.msra.mxu0 %v1808
  %1833 = vmatprep.subr.mxu0 0.0
  %1834 = vmatpush1.msra.mxu0 %v1807
  %1835 = vmatprep.subr.mxu0 0.0
  %1836 = vmatpush1.msra.mxu0 %v1806
  %1837 = vmatprep.subr.mxu0 0.0
  %1838 = vmatpush1.msra.mxu0 %v1805
  %1839 = vmatprep.subr.mxu0 0.0
  %1840 = vmatpush1.msra.mxu0 %v1804
  %1841 = vmatprep.subr.mxu0 0.0
  %1842 = vmatpush1.msra.mxu0 %v1803
  %1843 = vmatprep.subr.mxu0 0.0
  %1844 = vmatpush1.msra.mxu0 %v1802
  %1845 = vmatprep.subr.mxu0 0.0
  %1846 = vmatpush1.msra.mxu0 %v1801
  %1847 = vmatprep.subr.mxu0 0.0
  %1848 = vmatpush1.msra.mxu0 %v1800
  %1849 = vmatprep.subr.mxu0 0.0
  %1850 = vmatpush1.msra.mxu0 %v1799
  %1851 = vmatprep.subr.mxu0 0.0
  %1852 = vmatpush2.msra.mxu0 0.0
  %1853 = vmatprep.subr.mxu0 0.0
  %1854 = vmatpush2.msra.mxu0 0.0
  %1855 = vmatprep.subr.mxu0 0.0
  %1856 = vmatpush2.msra.mxu0 0.0
  %1857 = vmatprep.subr.mxu0 0.0
  %1858 = vmatpush2.msra.mxu0 0.0
  %1859 = vmatprep.subr.mxu0 0.0
  %1860 = vmatpush2.msra.mxu0 0.0
  %1861 = vmatprep.subr.mxu0 0.0
  %1862 = vmatpush2.msra.mxu0 0.0
  %1863 = vmatprep.subr.mxu0 0.0
  %1864 = vmatpush2.msra.mxu0 0.0
  %1865 = vmatprep.subr.mxu0 0.0
  %1866 = vmatpush2.msra.mxu0 0.0
  %1867 = vmatprep.subr.mxu0 0.0
  %1868 = vmatpush2.msra.mxu0 0.0
  %1869 = vmatprep.subr.mxu0 0.0
  %1870 = vmatpush2.msra.mxu0 0.0
  %1871 = vmatprep.subr.mxu0 0.0
  %1872 = vmatpush2.msra.mxu0 0.0
  %1873 = vmatprep.subr.mxu0 0.0
  %1874 = vmatpush2.msra.mxu0 0.0
  %1875 = vmatprep.subr.mxu0 0.0
  %1876 = vmatpush2.msra.mxu0 %v1818
  %1877 = vmatprep.subr.mxu0 0.0
  %1878 = vmatpush2.msra.mxu0 %v1817
  %1879 = vmatprep.subr.mxu0 0.0
  %1880 = vmatpush2.msra.mxu0 %v1816
  %1881 = vmatprep.subr.mxu0 0.0
  %1882 = vmatpush2.msra.mxu0 %v1815
  %1883 = vmatprep.mubr.f32.mxu0 %v105
  %1884 = vmatmul.mubr.f32.gmra.mxu0 %v38
  %v1885 = vpop.f32.mrf.mxu0
  %v1886 = vadd.f32 0.0, %v1885
  %v1887 = vpop.f32.mrf.mxu0
  %1888 = vmatprep.mubr.f32.mxu0 %v108
  %1889 = vmatmul.mubr.f32.gmra.mxu0 %v40
  %v1890 = vpop.f32.mrf.mxu0
  %v1891 = vadd.f32 0.0, %v1890
  %v1892 = vpop.f32.mrf.mxu0
  %1893 = vmatprep.mubr.f32.mxu0 %v111
  %1894 = vmatmul.mubr.f32.gmra.mxu0 %v42
  %v1895 = vpop.f32.mrf.mxu0
  %v1896 = vadd.f32 0.0, %v1895
  %v1897 = vpop.f32.mrf.mxu0
  %1898 = vmatprep.mubr.f32.mxu0 %v114
  %1899 = vmatmul.mubr.f32.gmra.mxu0 %v44
  %v1900 = vpop.f32.mrf.mxu0
  %v1901 = vadd.f32 0.0, %v1900
  %v1902 = vpop.f32.mrf.mxu0
  %1903 = vmatprep.mubr.f32.mxu0 %v117
  %1904 = vmatmul.mubr.f32.gmra.mxu0 %v46
  %v1905 = vpop.f32.mrf.mxu0
  %v1906 = vadd.f32 0.0, %v1905
  %v1907 = vpop.f32.mrf.mxu0
  %1908 = vmatprep.mubr.f32.mxu0 %v120
  %1909 = vmatmul.mubr.f32.gmra.mxu0 %v48
  %v1910 = vpop.f32.mrf.mxu0
  %v1911 = vadd.f32 0.0, %v1910
  %v1912 = vpop.f32.mrf.mxu0
  %1913 = vmatprep.mubr.f32.mxu0 %v123
  %1914 = vmatmul.mubr.f32.gmra.mxu0 %v50
  %v1915 = vpop.f32.mrf.mxu0
  %v1916 = vadd.f32 0.0, %v1915
  %v1917 = vpop.f32.mrf.mxu0
  %1918 = vmatprep.mubr.f32.mxu0 %v126
  %1919 = vmatmul.mubr.f32.gmra.mxu0 %v52
  %v1920 = vpop.f32.mrf.mxu0
  %v1921 = vadd.f32 0.0, %v1920
  %v1922 = vpop.f32.mrf.mxu0
  %1923 = vmatprep.mubr.f32.mxu0 %v129
  %1924 = vmatmul.mubr.f32.gmra.mxu0 %v54
  %v1925 = vpop.f32.mrf.mxu0
  %v1926 = vadd.f32 0.0, %v1925
  %v1927 = vpop.f32.mrf.mxu0
  %1928 = vmatprep.mubr.f32.mxu0 %v132
  %1929 = vmatmul.mubr.f32.gmra.mxu0 %v56
  %v1930 = vpop.f32.mrf.mxu0
  %v1931 = vadd.f32 0.0, %v1930
  %v1932 = vpop.f32.mrf.mxu0
  %1933 = vmatprep.mubr.f32.mxu0 %v135
  %1934 = vmatmul.mubr.f32.gmra.mxu0 %v58
  %v1935 = vpop.f32.mrf.mxu0
  %v1936 = vadd.f32 0.0, %v1935
  %v1937 = vpop.f32.mrf.mxu0
  %1938 = vmatprep.mubr.f32.mxu0 %v138
  %1939 = vmatmul.mubr.f32.gmra.mxu0 %v60
  %v1940 = vpop.f32.mrf.mxu0
  %v1941 = vadd.f32 0.0, %v1940
  %v1942 = vpop.f32.mrf.mxu0
  %1943 = vmatprep.mubr.f32.mxu0 %v141
  %1944 = vmatmul.mubr.f32.gmra.mxu0 %v62
  %v1945 = vpop.f32.mrf.mxu0
  %v1946 = vadd.f32 0.0, %v1945
  %v1947 = vpop.f32.mrf.mxu0
  %1948 = vmatprep.mubr.f32.mxu0 %v144
  %1949 = vmatmul.mubr.f32.gmra.mxu0 %v64
  %v1950 = vpop.f32.mrf.mxu0
  %v1951 = vadd.f32 0.0, %v1950
  %v1952 = vpop.f32.mrf.mxu0
  %1953 = vmatprep.mubr.f32.mxu0 %v147
  %1954 = vmatmul.mubr.f32.gmra.mxu0 %v66
  %v1955 = vpop.f32.mrf.mxu0
  %v1956 = vadd.f32 0.0, %v1955
  %v1957 = vpop.f32.mrf.mxu0
  %1958 = vmatprep.mubr.f32.mxu0 %v150
  %1959 = vmatmul.mubr.f32.gmra.mxu0 %v68
  %v1960 = vpop.f32.mrf.mxu0
  %v1961 = vadd.f32 0.0, %v1960
  %v1962 = vpop.f32.mrf.mxu0
  %1963 = vmatprep.mubr.f32.mxu0 %v153
  %1964 = vmatmul.mubr.f32.gmra.mxu0 %v70
  %v1965 = vpop.f32.mrf.mxu0
  %v1966 = vadd.f32 0.0, %v1965
  %v1967 = vpop.f32.mrf.mxu0
  %1968 = vmatprep.mubr.f32.mxu0 %v156
  %1969 = vmatmul.mubr.f32.gmra.mxu0 %v72
  %v1970 = vpop.f32.mrf.mxu0
  %v1971 = vadd.f32 0.0, %v1970
  %v1972 = vpop.f32.mrf.mxu0
  %1973 = vdwg.mxu0
  %v1974 = vld [vmem:[%s0 + $0x120] sm:$0xff]
  %v1975 = vld [vmem:[%s0 + $0x128] sm:$0xff]
  %v1976 = vld [vmem:[%s0 + $0x130] sm:$0xff]
  %v1977 = vld [vmem:[%s0 + $0x138] sm:$0xff]
  %v1978 = vld [vmem:[%s0 + $0x140] sm:$0xff]
  %v1979 = vld [vmem:[%s0 + $0x148] sm:$0xff]
  %v1980 = vld [vmem:[%s0 + $0x150] sm:$0xff]
  %v1981 = vld [vmem:[%s0 + $0x158] sm:$0xff]
  %v1982 = vld [vmem:[%s0 + $0x160] sm:$0xff]
  %v1983 = vld [vmem:[%s0 + $0x168] sm:$0xff]
  %v1984 = vld [vmem:[%s0 + $0x170] sm:$0xff]
  %v1985 = vld [vmem:[%s0 + $0x178] sm:$0xff]
  %v1986 = vld [vmem:[%s0 + $0x180] sm:$0xff]
  %v1987 = vld [vmem:[%s0 + $0x188] sm:$0xff]
  %v1988 = vld [vmem:[%s0 + $0x190] sm:$0xff]
  %v1989 = vld [vmem:[%s0 + $0x198] sm:$0xff]
  %v1990 = vld [vmem:[%s0 + $0x1a0] sm:$0xff]
  %v1991 = vld [vmem:[%s0 + $0x1a8] sm:$0xff]
  %v1992 = vld [vmem:[%s0 + $0x1b0] sm:$0xff]
  %v1993 = vld [vmem:[%s0 + $0x1b8] sm:$0xff]
  %1994 = vmatprep.subr.mxu0 0.0
  %1995 = vmatpush1.msra.mxu0 %v1989
  %1996 = vmatprep.subr.mxu0 0.0
  %1997 = vmatpush1.msra.mxu0 %v1988
  %1998 = vmatprep.subr.mxu0 0.0
  %1999 = vmatpush1.msra.mxu0 %v1987
  %2000 = vmatprep.subr.mxu0 0.0
  %2001 = vmatpush1.msra.mxu0 %v1986
  %2002 = vmatprep.subr.mxu0 0.0
  %2003 = vmatpush1.msra.mxu0 %v1985
  %2004 = vmatprep.subr.mxu0 0.0
  %2005 = vmatpush1.msra.mxu0 %v1984
  %2006 = vmatprep.subr.mxu0 0.0
  %2007 = vmatpush1.msra.mxu0 %v1983
  %2008 = vmatprep.subr.mxu0 0.0
  %2009 = vmatpush1.msra.mxu0 %v1982
  %2010 = vmatprep.subr.mxu0 0.0
  %2011 = vmatpush1.msra.mxu0 %v1981
  %2012 = vmatprep.subr.mxu0 0.0
  %2013 = vmatpush1.msra.mxu0 %v1980
  %2014 = vmatprep.subr.mxu0 0.0
  %2015 = vmatpush1.msra.mxu0 %v1979
  %2016 = vmatprep.subr.mxu0 0.0
  %2017 = vmatpush1.msra.mxu0 %v1978
  %2018 = vmatprep.subr.mxu0 0.0
  %2019 = vmatpush1.msra.mxu0 %v1977
  %2020 = vmatprep.subr.mxu0 0.0
  %2021 = vmatpush1.msra.mxu0 %v1976
  %2022 = vmatprep.subr.mxu0 0.0
  %2023 = vmatpush1.msra.mxu0 %v1975
  %2024 = vmatprep.subr.mxu0 0.0
  %2025 = vmatpush1.msra.mxu0 %v1974
  %2026 = vmatprep.subr.mxu0 0.0
  %2027 = vmatpush2.msra.mxu0 0.0
  %2028 = vmatprep.subr.mxu0 0.0
  %2029 = vmatpush2.msra.mxu0 0.0
  %2030 = vmatprep.subr.mxu0 0.0
  %2031 = vmatpush2.msra.mxu0 0.0
  %2032 = vmatprep.subr.mxu0 0.0
  %2033 = vmatpush2.msra.mxu0 0.0
  %2034 = vmatprep.subr.mxu0 0.0
  %2035 = vmatpush2.msra.mxu0 0.0
  %2036 = vmatprep.subr.mxu0 0.0
  %2037 = vmatpush2.msra.mxu0 0.0
  %2038 = vmatprep.subr.mxu0 0.0
  %2039 = vmatpush2.msra.mxu0 0.0
  %2040 = vmatprep.subr.mxu0 0.0
  %2041 = vmatpush2.msra.mxu0 0.0
  %2042 = vmatprep.subr.mxu0 0.0
  %2043 = vmatpush2.msra.mxu0 0.0
  %2044 = vmatprep.subr.mxu0 0.0
  %2045 = vmatpush2.msra.mxu0 0.0
  %2046 = vmatprep.subr.mxu0 0.0
  %2047 = vmatpush2.msra.mxu0 0.0
  %2048 = vmatprep.subr.mxu0 0.0
  %2049 = vmatpush2.msra.mxu0 0.0
  %2050 = vmatprep.subr.mxu0 0.0
  %2051 = vmatpush2.msra.mxu0 %v1993
  %2052 = vmatprep.subr.mxu0 0.0
  %2053 = vmatpush2.msra.mxu0 %v1992
  %2054 = vmatprep.subr.mxu0 0.0
  %2055 = vmatpush2.msra.mxu0 %v1991
  %2056 = vmatprep.subr.mxu0 0.0
  %2057 = vmatpush2.msra.mxu0 %v1990
  %2058 = vmatprep.mubr.f32.mxu0 %v105
  %2059 = vmatmul.mubr.f32.gmra.mxu0 %v38
  %v2060 = vpop.f32.mrf.mxu0
  %v2061 = vadd.f32 0.0, %v2060
  %v2062 = vpop.f32.mrf.mxu0
  %2063 = vmatprep.mubr.f32.mxu0 %v108
  %2064 = vmatmul.mubr.f32.gmra.mxu0 %v40
  %v2065 = vpop.f32.mrf.mxu0
  %v2066 = vadd.f32 0.0, %v2065
  %v2067 = vpop.f32.mrf.mxu0
  %2068 = vmatprep.mubr.f32.mxu0 %v111
  %2069 = vmatmul.mubr.f32.gmra.mxu0 %v42
  %v2070 = vpop.f32.mrf.mxu0
  %v2071 = vadd.f32 0.0, %v2070
  %v2072 = vpop.f32.mrf.mxu0
  %2073 = vmatprep.mubr.f32.mxu0 %v114
  %2074 = vmatmul.mubr.f32.gmra.mxu0 %v44
  %v2075 = vpop.f32.mrf.mxu0
  %v2076 = vadd.f32 0.0, %v2075
  %v2077 = vpop.f32.mrf.mxu0
  %2078 = vmatprep.mubr.f32.mxu0 %v117
  %2079 = vmatmul.mubr.f32.gmra.mxu0 %v46
  %v2080 = vpop.f32.mrf.mxu0
  %v2081 = vadd.f32 0.0, %v2080
  %v2082 = vpop.f32.mrf.mxu0
  %2083 = vmatprep.mubr.f32.mxu0 %v120
  %2084 = vmatmul.mubr.f32.gmra.mxu0 %v48
  %v2085 = vpop.f32.mrf.mxu0
  %v2086 = vadd.f32 0.0, %v2085
  %v2087 = vpop.f32.mrf.mxu0
  %2088 = vmatprep.mubr.f32.mxu0 %v123
  %2089 = vmatmul.mubr.f32.gmra.mxu0 %v50
  %v2090 = vpop.f32.mrf.mxu0
  %v2091 = vadd.f32 0.0, %v2090
  %v2092 = vpop.f32.mrf.mxu0
  %2093 = vmatprep.mubr.f32.mxu0 %v126
  %2094 = vmatmul.mubr.f32.gmra.mxu0 %v52
  %v2095 = vpop.f32.mrf.mxu0
  %v2096 = vadd.f32 0.0, %v2095
  %v2097 = vpop.f32.mrf.mxu0
  %2098 = vmatprep.mubr.f32.mxu0 %v129
  %2099 = vmatmul.mubr.f32.gmra.mxu0 %v54
  %v2100 = vpop.f32.mrf.mxu0
  %v2101 = vadd.f32 0.0, %v2100
  %v2102 = vpop.f32.mrf.mxu0
  %2103 = vmatprep.mubr.f32.mxu0 %v132
  %2104 = vmatmul.mubr.f32.gmra.mxu0 %v56
  %v2105 = vpop.f32.mrf.mxu0
  %v2106 = vadd.f32 0.0, %v2105
  %v2107 = vpop.f32.mrf.mxu0
  %2108 = vmatprep.mubr.f32.mxu0 %v135
  %2109 = vmatmul.mubr.f32.gmra.mxu0 %v58
  %v2110 = vpop.f32.mrf.mxu0
  %v2111 = vadd.f32 0.0, %v2110
  %v2112 = vpop.f32.mrf.mxu0
  %2113 = vmatprep.mubr.f32.mxu0 %v138
  %2114 = vmatmul.mubr.f32.gmra.mxu0 %v60
  %v2115 = vpop.f32.mrf.mxu0
  %v2116 = vadd.f32 0.0, %v2115
  %v2117 = vpop.f32.mrf.mxu0
  %2118 = vmatprep.mubr.f32.mxu0 %v141
  %2119 = vmatmul.mubr.f32.gmra.mxu0 %v62
  %v2120 = vpop.f32.mrf.mxu0
  %v2121 = vadd.f32 0.0, %v2120
  %v2122 = vpop.f32.mrf.mxu0
  %2123 = vmatprep.mubr.f32.mxu0 %v144
  %2124 = vmatmul.mubr.f32.gmra.mxu0 %v64
  %v2125 = vpop.f32.mrf.mxu0
  %v2126 = vadd.f32 0.0, %v2125
  %v2127 = vpop.f32.mrf.mxu0
  %2128 = vmatprep.mubr.f32.mxu0 %v147
  %2129 = vmatmul.mubr.f32.gmra.mxu0 %v66
  %v2130 = vpop.f32.mrf.mxu0
  %v2131 = vadd.f32 0.0, %v2130
  %v2132 = vpop.f32.mrf.mxu0
  %2133 = vmatprep.mubr.f32.mxu0 %v150
  %2134 = vmatmul.mubr.f32.gmra.mxu0 %v68
  %v2135 = vpop.f32.mrf.mxu0
  %v2136 = vadd.f32 0.0, %v2135
  %v2137 = vpop.f32.mrf.mxu0
  %2138 = vmatprep.mubr.f32.mxu0 %v153
  %2139 = vmatmul.mubr.f32.gmra.mxu0 %v70
  %v2140 = vpop.f32.mrf.mxu0
  %v2141 = vadd.f32 0.0, %v2140
  %v2142 = vpop.f32.mrf.mxu0
  %2143 = vmatprep.mubr.f32.mxu0 %v156
  %2144 = vmatmul.mubr.f32.gmra.mxu0 %v72
  %v2145 = vpop.f32.mrf.mxu0
  %v2146 = vadd.f32 0.0, %v2145
  %v2147 = vpop.f32.mrf.mxu0
  %2148 = vdwg.mxu0
  %v2149 = vmax.f32 %v1886, %v1931
  %v2150 = vmax.f32 %v1891, %v1936
  %v2151 = vmax.f32 %v1896, %v1941
  %v2152 = vmax.f32 %v1901, %v1946
  %v2153 = vmax.f32 %v1906, %v1951
  %v2154 = vmax.f32 %v1911, %v1956
  %v2155 = vmax.f32 %v1916, %v1961
  %v2156 = vmax.f32 %v1921, %v1966
  %v2157 = vmax.f32 %v1926, %v1971
  %v2158 = vmax.f32 %v2061, %v2106
  %v2159 = vmax.f32 %v2066, %v2111
  %v2160 = vmax.f32 %v2071, %v2116
  %v2161 = vmax.f32 %v2076, %v2121
  %v2162 = vmax.f32 %v2081, %v2126
  %v2163 = vmax.f32 %v2086, %v2131
  %v2164 = vmax.f32 %v2091, %v2136
  %v2165 = vmax.f32 %v2096, %v2141
  %v2166 = vmax.f32 %v2101, %v2146
  %v2167 = vmax.f32 %v2149, %v2158
  %v2168 = vmax.f32 %v2150, %v2159
  %v2169 = vmax.f32 %v2151, %v2160
  %v2170 = vmax.f32 %v2152, %v2161
  %v2171 = vmax.f32 %v2153, %v2162
  %v2172 = vmax.f32 %v2154, %v2163
  %v2173 = vmax.f32 %v2155, %v2164
  %v2174 = vmax.f32 %v2156, %v2165
  %v2175 = vmax.f32 %v2157, %v2166
  %v2176 = vadd.f32 %v2167, %v518
  %v2177 = vadd.f32 %v2168, %v523
  %v2178 = vadd.f32 %v2169, %v528
  %v2179 = vadd.f32 %v2170, %v533
  %v2180 = vadd.f32 %v2171, %v538
  %v2181 = vadd.f32 %v2172, %v543
  %v2182 = vadd.f32 %v2173, %v548
  %v2183 = vadd.f32 %v2174, %v553
  %v2184 = vadd.f32 %v2175, %v558
  %v2185 = vmax.f32 %v2176, 0.0
  %v2186 = vmax.f32 %v2177, 0.0
  %v2187 = vmax.f32 %v2178, 0.0
  %v2188 = vmax.f32 %v2179, 0.0
  %v2189 = vmax.f32 %v2180, 0.0
  %v2190 = vmax.f32 %v2181, 0.0
  %v2191 = vmax.f32 %v2182, 0.0
  %v2192 = vmax.f32 %v2183, 0.0
  %v2193 = vmax.f32 %v2184, 0.0
  %2194 = vst [vmem:[#allocation2 + $0x120] sm:$0xff] %v2185
  %2195 = vst [vmem:[#allocation2 + $0x128] sm:$0xff] %v2186
  %2196 = vst [vmem:[#allocation2 + $0x130] sm:$0xff] %v2187
  %2197 = vst [vmem:[#allocation2 + $0x138] sm:$0xff] %v2188
  %2198 = vst [vmem:[#allocation2 + $0x140] sm:$0xff] %v2189
  %2199 = vst [vmem:[#allocation2 + $0x148] sm:$0xff] %v2190
  %2200 = vst [vmem:[#allocation2 + $0x150] sm:$0xff] %v2191
  %2201 = vst [vmem:[#allocation2 + $0x158] sm:$0xff] %v2192
  %2202 = vst [vmem:[#allocation2 + $0x160] sm:$0xff] %v2193
  %v2203 = vld [vmem:[%s0 + $0x140] sm:$0xff]
  %v2204 = vld [vmem:[%s0 + $0x148] sm:$0xff]
  %v2205 = vld [vmem:[%s0 + $0x150] sm:$0xff]
  %v2206 = vld [vmem:[%s0 + $0x158] sm:$0xff]
  %v2207 = vld [vmem:[%s0 + $0x160] sm:$0xff]
  %v2208 = vld [vmem:[%s0 + $0x168] sm:$0xff]
  %v2209 = vld [vmem:[%s0 + $0x170] sm:$0xff]
  %v2210 = vld [vmem:[%s0 + $0x178] sm:$0xff]
  %v2211 = vld [vmem:[%s0 + $0x180] sm:$0xff]
  %v2212 = vld [vmem:[%s0 + $0x188] sm:$0xff]
  %v2213 = vld [vmem:[%s0 + $0x190] sm:$0xff]
  %v2214 = vld [vmem:[%s0 + $0x198] sm:$0xff]
  %v2215 = vld [vmem:[%s0 + $0x1a0] sm:$0xff]
  %v2216 = vld [vmem:[%s0 + $0x1a8] sm:$0xff]
  %v2217 = vld [vmem:[%s0 + $0x1b0] sm:$0xff]
  %v2218 = vld [vmem:[%s0 + $0x1b8] sm:$0xff]
  %v2219 = vld [vmem:[%s0 + $0x1c0] sm:$0xff]
  %v2220 = vld [vmem:[%s0 + $0x1c8] sm:$0xff]
  %v2221 = vld [vmem:[%s0 + $0x1d0] sm:$0xff]
  %v2222 = vld [vmem:[%s0 + $0x1d8] sm:$0xff]
  %2223 = vmatprep.subr.mxu0 0.0
  %2224 = vmatpush1.msra.mxu0 %v2218
  %2225 = vmatprep.subr.mxu0 0.0
  %2226 = vmatpush1.msra.mxu0 %v2217
  %2227 = vmatprep.subr.mxu0 0.0
  %2228 = vmatpush1.msra.mxu0 %v2216
  %2229 = vmatprep.subr.mxu0 0.0
  %2230 = vmatpush1.msra.mxu0 %v2215
  %2231 = vmatprep.subr.mxu0 0.0
  %2232 = vmatpush1.msra.mxu0 %v2214
  %2233 = vmatprep.subr.mxu0 0.0
  %2234 = vmatpush1.msra.mxu0 %v2213
  %2235 = vmatprep.subr.mxu0 0.0
  %2236 = vmatpush1.msra.mxu0 %v2212
  %2237 = vmatprep.subr.mxu0 0.0
  %2238 = vmatpush1.msra.mxu0 %v2211
  %2239 = vmatprep.subr.mxu0 0.0
  %2240 = vmatpush1.msra.mxu0 %v2210
  %2241 = vmatprep.subr.mxu0 0.0
  %2242 = vmatpush1.msra.mxu0 %v2209
  %2243 = vmatprep.subr.mxu0 0.0
  %2244 = vmatpush1.msra.mxu0 %v2208
  %2245 = vmatprep.subr.mxu0 0.0
  %2246 = vmatpush1.msra.mxu0 %v2207
  %2247 = vmatprep.subr.mxu0 0.0
  %2248 = vmatpush1.msra.mxu0 %v2206
  %2249 = vmatprep.subr.mxu0 0.0
  %2250 = vmatpush1.msra.mxu0 %v2205
  %2251 = vmatprep.subr.mxu0 0.0
  %2252 = vmatpush1.msra.mxu0 %v2204
  %2253 = vmatprep.subr.mxu0 0.0
  %2254 = vmatpush1.msra.mxu0 %v2203
  %2255 = vmatprep.subr.mxu0 0.0
  %2256 = vmatpush2.msra.mxu0 0.0
  %2257 = vmatprep.subr.mxu0 0.0
  %2258 = vmatpush2.msra.mxu0 0.0
  %2259 = vmatprep.subr.mxu0 0.0
  %2260 = vmatpush2.msra.mxu0 0.0
  %2261 = vmatprep.subr.mxu0 0.0
  %2262 = vmatpush2.msra.mxu0 0.0
  %2263 = vmatprep.subr.mxu0 0.0
  %2264 = vmatpush2.msra.mxu0 0.0
  %2265 = vmatprep.subr.mxu0 0.0
  %2266 = vmatpush2.msra.mxu0 0.0
  %2267 = vmatprep.subr.mxu0 0.0
  %2268 = vmatpush2.msra.mxu0 0.0
  %2269 = vmatprep.subr.mxu0 0.0
  %2270 = vmatpush2.msra.mxu0 0.0
  %2271 = vmatprep.subr.mxu0 0.0
  %2272 = vmatpush2.msra.mxu0 0.0
  %2273 = vmatprep.subr.mxu0 0.0
  %2274 = vmatpush2.msra.mxu0 0.0
  %2275 = vmatprep.subr.mxu0 0.0
  %2276 = vmatpush2.msra.mxu0 0.0
  %2277 = vmatprep.subr.mxu0 0.0
  %2278 = vmatpush2.msra.mxu0 0.0
  %2279 = vmatprep.subr.mxu0 0.0
  %2280 = vmatpush2.msra.mxu0 %v2222
  %2281 = vmatprep.subr.mxu0 0.0
  %2282 = vmatpush2.msra.mxu0 %v2221
  %2283 = vmatprep.subr.mxu0 0.0
  %2284 = vmatpush2.msra.mxu0 %v2220
  %2285 = vmatprep.subr.mxu0 0.0
  %2286 = vmatpush2.msra.mxu0 %v2219
  %2287 = vmatprep.mubr.f32.mxu0 %v105
  %2288 = vmatmul.mubr.f32.gmra.mxu0 %v38
  %v2289 = vpop.f32.mrf.mxu0
  %v2290 = vadd.f32 0.0, %v2289
  %v2291 = vpop.f32.mrf.mxu0
  %2292 = vmatprep.mubr.f32.mxu0 %v108
  %2293 = vmatmul.mubr.f32.gmra.mxu0 %v40
  %v2294 = vpop.f32.mrf.mxu0
  %v2295 = vadd.f32 0.0, %v2294
  %v2296 = vpop.f32.mrf.mxu0
  %2297 = vmatprep.mubr.f32.mxu0 %v111
  %2298 = vmatmul.mubr.f32.gmra.mxu0 %v42
  %v2299 = vpop.f32.mrf.mxu0
  %v2300 = vadd.f32 0.0, %v2299
  %v2301 = vpop.f32.mrf.mxu0
  %2302 = vmatprep.mubr.f32.mxu0 %v114
  %2303 = vmatmul.mubr.f32.gmra.mxu0 %v44
  %v2304 = vpop.f32.mrf.mxu0
  %v2305 = vadd.f32 0.0, %v2304
  %v2306 = vpop.f32.mrf.mxu0
  %2307 = vmatprep.mubr.f32.mxu0 %v117
  %2308 = vmatmul.mubr.f32.gmra.mxu0 %v46
  %v2309 = vpop.f32.mrf.mxu0
  %v2310 = vadd.f32 0.0, %v2309
  %v2311 = vpop.f32.mrf.mxu0
  %2312 = vmatprep.mubr.f32.mxu0 %v120
  %2313 = vmatmul.mubr.f32.gmra.mxu0 %v48
  %v2314 = vpop.f32.mrf.mxu0
  %v2315 = vadd.f32 0.0, %v2314
  %v2316 = vpop.f32.mrf.mxu0
  %2317 = vmatprep.mubr.f32.mxu0 %v123
  %2318 = vmatmul.mubr.f32.gmra.mxu0 %v50
  %v2319 = vpop.f32.mrf.mxu0
  %v2320 = vadd.f32 0.0, %v2319
  %v2321 = vpop.f32.mrf.mxu0
  %2322 = vmatprep.mubr.f32.mxu0 %v126
  %2323 = vmatmul.mubr.f32.gmra.mxu0 %v52
  %v2324 = vpop.f32.mrf.mxu0
  %v2325 = vadd.f32 0.0, %v2324
  %v2326 = vpop.f32.mrf.mxu0
  %2327 = vmatprep.mubr.f32.mxu0 %v129
  %2328 = vmatmul.mubr.f32.gmra.mxu0 %v54
  %v2329 = vpop.f32.mrf.mxu0
  %v2330 = vadd.f32 0.0, %v2329
  %v2331 = vpop.f32.mrf.mxu0
  %2332 = vmatprep.mubr.f32.mxu0 %v132
  %2333 = vmatmul.mubr.f32.gmra.mxu0 %v56
  %v2334 = vpop.f32.mrf.mxu0
  %v2335 = vadd.f32 0.0, %v2334
  %v2336 = vpop.f32.mrf.mxu0
  %2337 = vmatprep.mubr.f32.mxu0 %v135
  %2338 = vmatmul.mubr.f32.gmra.mxu0 %v58
  %v2339 = vpop.f32.mrf.mxu0
  %v2340 = vadd.f32 0.0, %v2339
  %v2341 = vpop.f32.mrf.mxu0
  %2342 = vmatprep.mubr.f32.mxu0 %v138
  %2343 = vmatmul.mubr.f32.gmra.mxu0 %v60
  %v2344 = vpop.f32.mrf.mxu0
  %v2345 = vadd.f32 0.0, %v2344
  %v2346 = vpop.f32.mrf.mxu0
  %2347 = vmatprep.mubr.f32.mxu0 %v141
  %2348 = vmatmul.mubr.f32.gmra.mxu0 %v62
  %v2349 = vpop.f32.mrf.mxu0
  %v2350 = vadd.f32 0.0, %v2349
  %v2351 = vpop.f32.mrf.mxu0
  %2352 = vmatprep.mubr.f32.mxu0 %v144
  %2353 = vmatmul.mubr.f32.gmra.mxu0 %v64
  %v2354 = vpop.f32.mrf.mxu0
  %v2355 = vadd.f32 0.0, %v2354
  %v2356 = vpop.f32.mrf.mxu0
  %2357 = vmatprep.mubr.f32.mxu0 %v147
  %2358 = vmatmul.mubr.f32.gmra.mxu0 %v66
  %v2359 = vpop.f32.mrf.mxu0
  %v2360 = vadd.f32 0.0, %v2359
  %v2361 = vpop.f32.mrf.mxu0
  %2362 = vmatprep.mubr.f32.mxu0 %v150
  %2363 = vmatmul.mubr.f32.gmra.mxu0 %v68
  %v2364 = vpop.f32.mrf.mxu0
  %v2365 = vadd.f32 0.0, %v2364
  %v2366 = vpop.f32.mrf.mxu0
  %2367 = vmatprep.mubr.f32.mxu0 %v153
  %2368 = vmatmul.mubr.f32.gmra.mxu0 %v70
  %v2369 = vpop.f32.mrf.mxu0
  %v2370 = vadd.f32 0.0, %v2369
  %v2371 = vpop.f32.mrf.mxu0
  %2372 = vmatprep.mubr.f32.mxu0 %v156
  %2373 = vmatmul.mubr.f32.gmra.mxu0 %v72
  %v2374 = vpop.f32.mrf.mxu0
  %v2375 = vadd.f32 0.0, %v2374
  %v2376 = vpop.f32.mrf.mxu0
  %2377 = vdwg.mxu0
  %v2378 = vld [vmem:[%s0 + $0x160] sm:$0xff]
  %v2379 = vld [vmem:[%s0 + $0x168] sm:$0xff]
  %v2380 = vld [vmem:[%s0 + $0x170] sm:$0xff]
  %v2381 = vld [vmem:[%s0 + $0x178] sm:$0xff]
  %v2382 = vld [vmem:[%s0 + $0x180] sm:$0xff]
  %v2383 = vld [vmem:[%s0 + $0x188] sm:$0xff]
  %v2384 = vld [vmem:[%s0 + $0x190] sm:$0xff]
  %v2385 = vld [vmem:[%s0 + $0x198] sm:$0xff]
  %v2386 = vld [vmem:[%s0 + $0x1a0] sm:$0xff]
  %v2387 = vld [vmem:[%s0 + $0x1a8] sm:$0xff]
  %v2388 = vld [vmem:[%s0 + $0x1b0] sm:$0xff]
  %v2389 = vld [vmem:[%s0 + $0x1b8] sm:$0xff]
  %v2390 = vld [vmem:[%s0 + $0x1c0] sm:$0xff]
  %v2391 = vld [vmem:[%s0 + $0x1c8] sm:$0xff]
  %v2392 = vld [vmem:[%s0 + $0x1d0] sm:$0xff]
  %v2393 = vld [vmem:[%s0 + $0x1d8] sm:$0xff]
  %v2394 = vld [vmem:[%s0 + $0x1e0] sm:$0xff]
  %v2395 = vld [vmem:[%s0 + $0x1e8] sm:$0xff]
  %v2396 = vld [vmem:[%s0 + $0x1f0] sm:$0xff]
  %v2397 = vld [vmem:[%s0 + $0x1f8] sm:$0xff]
  %2398 = vmatprep.subr.mxu0 0.0
  %2399 = vmatpush1.msra.mxu0 %v2393
  %2400 = vmatprep.subr.mxu0 0.0
  %2401 = vmatpush1.msra.mxu0 %v2392
  %2402 = vmatprep.subr.mxu0 0.0
  %2403 = vmatpush1.msra.mxu0 %v2391
  %2404 = vmatprep.subr.mxu0 0.0
  %2405 = vmatpush1.msra.mxu0 %v2390
  %2406 = vmatprep.subr.mxu0 0.0
  %2407 = vmatpush1.msra.mxu0 %v2389
  %2408 = vmatprep.subr.mxu0 0.0
  %2409 = vmatpush1.msra.mxu0 %v2388
  %2410 = vmatprep.subr.mxu0 0.0
  %2411 = vmatpush1.msra.mxu0 %v2387
  %2412 = vmatprep.subr.mxu0 0.0
  %2413 = vmatpush1.msra.mxu0 %v2386
  %2414 = vmatprep.subr.mxu0 0.0
  %2415 = vmatpush1.msra.mxu0 %v2385
  %2416 = vmatprep.subr.mxu0 0.0
  %2417 = vmatpush1.msra.mxu0 %v2384
  %2418 = vmatprep.subr.mxu0 0.0
  %2419 = vmatpush1.msra.mxu0 %v2383
  %2420 = vmatprep.subr.mxu0 0.0
  %2421 = vmatpush1.msra.mxu0 %v2382
  %2422 = vmatprep.subr.mxu0 0.0
  %2423 = vmatpush1.msra.mxu0 %v2381
  %2424 = vmatprep.subr.mxu0 0.0
  %2425 = vmatpush1.msra.mxu0 %v2380
  %2426 = vmatprep.subr.mxu0 0.0
  %2427 = vmatpush1.msra.mxu0 %v2379
  %2428 = vmatprep.subr.mxu0 0.0
  %2429 = vmatpush1.msra.mxu0 %v2378
  %2430 = vmatprep.subr.mxu0 0.0
  %2431 = vmatpush2.msra.mxu0 0.0
  %2432 = vmatprep.subr.mxu0 0.0
  %2433 = vmatpush2.msra.mxu0 0.0
  %2434 = vmatprep.subr.mxu0 0.0
  %2435 = vmatpush2.msra.mxu0 0.0
  %2436 = vmatprep.subr.mxu0 0.0
  %2437 = vmatpush2.msra.mxu0 0.0
  %2438 = vmatprep.subr.mxu0 0.0
  %2439 = vmatpush2.msra.mxu0 0.0
  %2440 = vmatprep.subr.mxu0 0.0
  %2441 = vmatpush2.msra.mxu0 0.0
  %2442 = vmatprep.subr.mxu0 0.0
  %2443 = vmatpush2.msra.mxu0 0.0
  %2444 = vmatprep.subr.mxu0 0.0
  %2445 = vmatpush2.msra.mxu0 0.0
  %2446 = vmatprep.subr.mxu0 0.0
  %2447 = vmatpush2.msra.mxu0 0.0
  %2448 = vmatprep.subr.mxu0 0.0
  %2449 = vmatpush2.msra.mxu0 0.0
  %2450 = vmatprep.subr.mxu0 0.0
  %2451 = vmatpush2.msra.mxu0 0.0
  %2452 = vmatprep.subr.mxu0 0.0
  %2453 = vmatpush2.msra.mxu0 0.0
  %2454 = vmatprep.subr.mxu0 0.0
  %2455 = vmatpush2.msra.mxu0 %v2397
  %2456 = vmatprep.subr.mxu0 0.0
  %2457 = vmatpush2.msra.mxu0 %v2396
  %2458 = vmatprep.subr.mxu0 0.0
  %2459 = vmatpush2.msra.mxu0 %v2395
  %2460 = vmatprep.subr.mxu0 0.0
  %2461 = vmatpush2.msra.mxu0 %v2394
  %2462 = vmatprep.mubr.f32.mxu0 %v105
  %2463 = vmatmul.mubr.f32.gmra.mxu0 %v38
  %v2464 = vpop.f32.mrf.mxu0
  %v2465 = vadd.f32 0.0, %v2464
  %v2466 = vpop.f32.mrf.mxu0
  %2467 = vmatprep.mubr.f32.mxu0 %v108
  %2468 = vmatmul.mubr.f32.gmra.mxu0 %v40
  %v2469 = vpop.f32.mrf.mxu0
  %v2470 = vadd.f32 0.0, %v2469
  %v2471 = vpop.f32.mrf.mxu0
  %2472 = vmatprep.mubr.f32.mxu0 %v111
  %2473 = vmatmul.mubr.f32.gmra.mxu0 %v42
  %v2474 = vpop.f32.mrf.mxu0
  %v2475 = vadd.f32 0.0, %v2474
  %v2476 = vpop.f32.mrf.mxu0
  %2477 = vmatprep.mubr.f32.mxu0 %v114
  %2478 = vmatmul.mubr.f32.gmra.mxu0 %v44
  %v2479 = vpop.f32.mrf.mxu0
  %v2480 = vadd.f32 0.0, %v2479
  %v2481 = vpop.f32.mrf.mxu0
  %2482 = vmatprep.mubr.f32.mxu0 %v117
  %2483 = vmatmul.mubr.f32.gmra.mxu0 %v46
  %v2484 = vpop.f32.mrf.mxu0
  %v2485 = vadd.f32 0.0, %v2484
  %v2486 = vpop.f32.mrf.mxu0
  %2487 = vmatprep.mubr.f32.mxu0 %v120
  %2488 = vmatmul.mubr.f32.gmra.mxu0 %v48
  %v2489 = vpop.f32.mrf.mxu0
  %v2490 = vadd.f32 0.0, %v2489
  %v2491 = vpop.f32.mrf.mxu0
  %2492 = vmatprep.mubr.f32.mxu0 %v123
  %2493 = vmatmul.mubr.f32.gmra.mxu0 %v50
  %v2494 = vpop.f32.mrf.mxu0
  %v2495 = vadd.f32 0.0, %v2494
  %v2496 = vpop.f32.mrf.mxu0
  %2497 = vmatprep.mubr.f32.mxu0 %v126
  %2498 = vmatmul.mubr.f32.gmra.mxu0 %v52
  %v2499 = vpop.f32.mrf.mxu0
  %v2500 = vadd.f32 0.0, %v2499
  %v2501 = vpop.f32.mrf.mxu0
  %2502 = vmatprep.mubr.f32.mxu0 %v129
  %2503 = vmatmul.mubr.f32.gmra.mxu0 %v54
  %v2504 = vpop.f32.mrf.mxu0
  %v2505 = vadd.f32 0.0, %v2504
  %v2506 = vpop.f32.mrf.mxu0
  %2507 = vmatprep.mubr.f32.mxu0 %v132
  %2508 = vmatmul.mubr.f32.gmra.mxu0 %v56
  %v2509 = vpop.f32.mrf.mxu0
  %v2510 = vadd.f32 0.0, %v2509
  %v2511 = vpop.f32.mrf.mxu0
  %2512 = vmatprep.mubr.f32.mxu0 %v135
  %2513 = vmatmul.mubr.f32.gmra.mxu0 %v58
  %v2514 = vpop.f32.mrf.mxu0
  %v2515 = vadd.f32 0.0, %v2514
  %v2516 = vpop.f32.mrf.mxu0
  %2517 = vmatprep.mubr.f32.mxu0 %v138
  %2518 = vmatmul.mubr.f32.gmra.mxu0 %v60
  %v2519 = vpop.f32.mrf.mxu0
  %v2520 = vadd.f32 0.0, %v2519
  %v2521 = vpop.f32.mrf.mxu0
  %2522 = vmatprep.mubr.f32.mxu0 %v141
  %2523 = vmatmul.mubr.f32.gmra.mxu0 %v62
  %v2524 = vpop.f32.mrf.mxu0
  %v2525 = vadd.f32 0.0, %v2524
  %v2526 = vpop.f32.mrf.mxu0
  %2527 = vmatprep.mubr.f32.mxu0 %v144
  %2528 = vmatmul.mubr.f32.gmra.mxu0 %v64
  %v2529 = vpop.f32.mrf.mxu0
  %v2530 = vadd.f32 0.0, %v2529
  %v2531 = vpop.f32.mrf.mxu0
  %2532 = vmatprep.mubr.f32.mxu0 %v147
  %2533 = vmatmul.mubr.f32.gmra.mxu0 %v66
  %v2534 = vpop.f32.mrf.mxu0
  %v2535 = vadd.f32 0.0, %v2534
  %v2536 = vpop.f32.mrf.mxu0
  %2537 = vmatprep.mubr.f32.mxu0 %v150
  %2538 = vmatmul.mubr.f32.gmra.mxu0 %v68
  %v2539 = vpop.f32.mrf.mxu0
  %v2540 = vadd.f32 0.0, %v2539
  %v2541 = vpop.f32.mrf.mxu0
  %2542 = vmatprep.mubr.f32.mxu0 %v153
  %2543 = vmatmul.mubr.f32.gmra.mxu0 %v70
  %v2544 = vpop.f32.mrf.mxu0
  %v2545 = vadd.f32 0.0, %v2544
  %v2546 = vpop.f32.mrf.mxu0
  %2547 = vmatprep.mubr.f32.mxu0 %v156
  %2548 = vmatmul.mubr.f32.gmra.mxu0 %v72
  %v2549 = vpop.f32.mrf.mxu0
  %v2550 = vadd.f32 0.0, %v2549
  %v2551 = vpop.f32.mrf.mxu0
  %2552 = vdwg.mxu0
  %v2553 = vmax.f32 %v2290, %v2335
  %v2554 = vmax.f32 %v2295, %v2340
  %v2555 = vmax.f32 %v2300, %v2345
  %v2556 = vmax.f32 %v2305, %v2350
  %v2557 = vmax.f32 %v2310, %v2355
  %v2558 = vmax.f32 %v2315, %v2360
  %v2559 = vmax.f32 %v2320, %v2365
  %v2560 = vmax.f32 %v2325, %v2370
  %v2561 = vmax.f32 %v2330, %v2375
  %v2562 = vmax.f32 %v2465, %v2510
  %v2563 = vmax.f32 %v2470, %v2515
  %v2564 = vmax.f32 %v2475, %v2520
  %v2565 = vmax.f32 %v2480, %v2525
  %v2566 = vmax.f32 %v2485, %v2530
  %v2567 = vmax.f32 %v2490, %v2535
  %v2568 = vmax.f32 %v2495, %v2540
  %v2569 = vmax.f32 %v2500, %v2545
  %v2570 = vmax.f32 %v2505, %v2550
  %v2571 = vmax.f32 %v2553, %v2562
  %v2572 = vmax.f32 %v2554, %v2563
  %v2573 = vmax.f32 %v2555, %v2564
  %v2574 = vmax.f32 %v2556, %v2565
  %v2575 = vmax.f32 %v2557, %v2566
  %v2576 = vmax.f32 %v2558, %v2567
  %v2577 = vmax.f32 %v2559, %v2568
  %v2578 = vmax.f32 %v2560, %v2569
  %v2579 = vmax.f32 %v2561, %v2570
  %v2580 = vadd.f32 %v2571, %v518
  %v2581 = vadd.f32 %v2572, %v523
  %v2582 = vadd.f32 %v2573, %v528
  %v2583 = vadd.f32 %v2574, %v533
  %v2584 = vadd.f32 %v2575, %v538
  %v2585 = vadd.f32 %v2576, %v543
  %v2586 = vadd.f32 %v2577, %v548
  %v2587 = vadd.f32 %v2578, %v553
  %v2588 = vadd.f32 %v2579, %v558
  %v2589 = vmax.f32 %v2580, 0.0
  %v2590 = vmax.f32 %v2581, 0.0
  %v2591 = vmax.f32 %v2582, 0.0
  %v2592 = vmax.f32 %v2583, 0.0
  %v2593 = vmax.f32 %v2584, 0.0
  %v2594 = vmax.f32 %v2585, 0.0
  %v2595 = vmax.f32 %v2586, 0.0
  %v2596 = vmax.f32 %v2587, 0.0
  %v2597 = vmax.f32 %v2588, 0.0
  %2598 = vst [vmem:[#allocation2 + $0x168] sm:$0xff] %v2589
  %2599 = vst [vmem:[#allocation2 + $0x170] sm:$0xff] %v2590
  %2600 = vst [vmem:[#allocation2 + $0x178] sm:$0xff] %v2591
  %2601 = vst [vmem:[#allocation2 + $0x180] sm:$0xff] %v2592
  %2602 = vst [vmem:[#allocation2 + $0x188] sm:$0xff] %v2593
  %2603 = vst [vmem:[#allocation2 + $0x190] sm:$0xff] %v2594
  %2604 = vst [vmem:[#allocation2 + $0x198] sm:$0xff] %v2595
  %2605 = vst [vmem:[#allocation2 + $0x1a0] sm:$0xff] %v2596
  %2606 = vst [vmem:[#allocation2 + $0x1a8] sm:$0xff] %v2597
  %v2607 = vld [vmem:[%s0 + $0x180] sm:$0xff]
  %v2608 = vld [vmem:[%s0 + $0x188] sm:$0xff]
  %v2609 = vld [vmem:[%s0 + $0x190] sm:$0xff]
  %v2610 = vld [vmem:[%s0 + $0x198] sm:$0xff]
  %v2611 = vld [vmem:[%s0 + $0x1a0] sm:$0xff]
  %v2612 = vld [vmem:[%s0 + $0x1a8] sm:$0xff]
  %v2613 = vld [vmem:[%s0 + $0x1b0] sm:$0xff]
  %v2614 = vld [vmem:[%s0 + $0x1b8] sm:$0xff]
  %v2615 = vld [vmem:[%s0 + $0x1c0] sm:$0xff]
  %v2616 = vld [vmem:[%s0 + $0x1c8] sm:$0xff]
  %v2617 = vld [vmem:[%s0 + $0x1d0] sm:$0xff]
  %v2618 = vld [vmem:[%s0 + $0x1d8] sm:$0xff]
  %v2619 = vld [vmem:[%s0 + $0x1e0] sm:$0xff]
  %v2620 = vld [vmem:[%s0 + $0x1e8] sm:$0xff]
  %v2621 = vld [vmem:[%s0 + $0x1f0] sm:$0xff]
  %v2622 = vld [vmem:[%s0 + $0x1f8] sm:$0xff]
  %v2623 = vld [vmem:[%s0 + $0x200] sm:$0xff]
  %v2624 = vld [vmem:[%s0 + $0x208] sm:$0xff]
  %v2625 = vld [vmem:[%s0 + $0x210] sm:$0xff]
  %v2626 = vld [vmem:[%s0 + $0x218] sm:$0xff]
  %2627 = vmatprep.subr.mxu0 0.0
  %2628 = vmatpush1.msra.mxu0 %v2622
  %2629 = vmatprep.subr.mxu0 0.0
  %2630 = vmatpush1.msra.mxu0 %v2621
  %2631 = vmatprep.subr.mxu0 0.0
  %2632 = vmatpush1.msra.mxu0 %v2620
  %2633 = vmatprep.subr.mxu0 0.0
  %2634 = vmatpush1.msra.mxu0 %v2619
  %2635 = vmatprep.subr.mxu0 0.0
  %2636 = vmatpush1.msra.mxu0 %v2618
  %2637 = vmatprep.subr.mxu0 0.0
  %2638 = vmatpush1.msra.mxu0 %v2617
  %2639 = vmatprep.subr.mxu0 0.0
  %2640 = vmatpush1.msra.mxu0 %v2616
  %2641 = vmatprep.subr.mxu0 0.0
  %2642 = vmatpush1.msra.mxu0 %v2615
  %2643 = vmatprep.subr.mxu0 0.0
  %2644 = vmatpush1.msra.mxu0 %v2614
  %2645 = vmatprep.subr.mxu0 0.0
  %2646 = vmatpush1.msra.mxu0 %v2613
  %2647 = vmatprep.subr.mxu0 0.0
  %2648 = vmatpush1.msra.mxu0 %v2612
  %2649 = vmatprep.subr.mxu0 0.0
  %2650 = vmatpush1.msra.mxu0 %v2611
  %2651 = vmatprep.subr.mxu0 0.0
  %2652 = vmatpush1.msra.mxu0 %v2610
  %2653 = vmatprep.subr.mxu0 0.0
  %2654 = vmatpush1.msra.mxu0 %v2609
  %2655 = vmatprep.subr.mxu0 0.0
  %2656 = vmatpush1.msra.mxu0 %v2608
  %2657 = vmatprep.subr.mxu0 0.0
  %2658 = vmatpush1.msra.mxu0 %v2607
  %2659 = vmatprep.subr.mxu0 0.0
  %2660 = vmatpush2.msra.mxu0 0.0
  %2661 = vmatprep.subr.mxu0 0.0
  %2662 = vmatpush2.msra.mxu0 0.0
  %2663 = vmatprep.subr.mxu0 0.0
  %2664 = vmatpush2.msra.mxu0 0.0
  %2665 = vmatprep.subr.mxu0 0.0
  %2666 = vmatpush2.msra.mxu0 0.0
  %2667 = vmatprep.subr.mxu0 0.0
  %2668 = vmatpush2.msra.mxu0 0.0
  %2669 = vmatprep.subr.mxu0 0.0
  %2670 = vmatpush2.msra.mxu0 0.0
  %2671 = vmatprep.subr.mxu0 0.0
  %2672 = vmatpush2.msra.mxu0 0.0
  %2673 = vmatprep.subr.mxu0 0.0
  %2674 = vmatpush2.msra.mxu0 0.0
  %2675 = vmatprep.subr.mxu0 0.0
  %2676 = vmatpush2.msra.mxu0 0.0
  %2677 = vmatprep.subr.mxu0 0.0
  %2678 = vmatpush2.msra.mxu0 0.0
  %2679 = vmatprep.subr.mxu0 0.0
  %2680 = vmatpush2.msra.mxu0 0.0
  %2681 = vmatprep.subr.mxu0 0.0
  %2682 = vmatpush2.msra.mxu0 0.0
  %2683 = vmatprep.subr.mxu0 0.0
  %2684 = vmatpush2.msra.mxu0 %v2626
  %2685 = vmatprep.subr.mxu0 0.0
  %2686 = vmatpush2.msra.mxu0 %v2625
  %2687 = vmatprep.subr.mxu0 0.0
  %2688 = vmatpush2.msra.mxu0 %v2624
  %2689 = vmatprep.subr.mxu0 0.0
  %2690 = vmatpush2.msra.mxu0 %v2623
  %2691 = vmatprep.mubr.f32.mxu0 %v105
  %2692 = vmatmul.mubr.f32.gmra.mxu0 %v38
  %v2693 = vpop.f32.mrf.mxu0
  %v2694 = vadd.f32 0.0, %v2693
  %v2695 = vpop.f32.mrf.mxu0
  %2696 = vmatprep.mubr.f32.mxu0 %v108
  %2697 = vmatmul.mubr.f32.gmra.mxu0 %v40
  %v2698 = vpop.f32.mrf.mxu0
  %v2699 = vadd.f32 0.0, %v2698
  %v2700 = vpop.f32.mrf.mxu0
  %2701 = vmatprep.mubr.f32.mxu0 %v111
  %2702 = vmatmul.mubr.f32.gmra.mxu0 %v42
  %v2703 = vpop.f32.mrf.mxu0
  %v2704 = vadd.f32 0.0, %v2703
  %v2705 = vpop.f32.mrf.mxu0
  %2706 = vmatprep.mubr.f32.mxu0 %v114
  %2707 = vmatmul.mubr.f32.gmra.mxu0 %v44
  %v2708 = vpop.f32.mrf.mxu0
  %v2709 = vadd.f32 0.0, %v2708
  %v2710 = vpop.f32.mrf.mxu0
  %2711 = vmatprep.mubr.f32.mxu0 %v117
  %2712 = vmatmul.mubr.f32.gmra.mxu0 %v46
  %v2713 = vpop.f32.mrf.mxu0
  %v2714 = vadd.f32 0.0, %v2713
  %v2715 = vpop.f32.mrf.mxu0
  %2716 = vmatprep.mubr.f32.mxu0 %v120
  %2717 = vmatmul.mubr.f32.gmra.mxu0 %v48
  %v2718 = vpop.f32.mrf.mxu0
  %v2719 = vadd.f32 0.0, %v2718
  %v2720 = vpop.f32.mrf.mxu0
  %2721 = vmatprep.mubr.f32.mxu0 %v123
  %2722 = vmatmul.mubr.f32.gmra.mxu0 %v50
  %v2723 = vpop.f32.mrf.mxu0
  %v2724 = vadd.f32 0.0, %v2723
  %v2725 = vpop.f32.mrf.mxu0
  %2726 = vmatprep.mubr.f32.mxu0 %v126
  %2727 = vmatmul.mubr.f32.gmra.mxu0 %v52
  %v2728 = vpop.f32.mrf.mxu0
  %v2729 = vadd.f32 0.0, %v2728
  %v2730 = vpop.f32.mrf.mxu0
  %2731 = vmatprep.mubr.f32.mxu0 %v129
  %2732 = vmatmul.mubr.f32.gmra.mxu0 %v54
  %v2733 = vpop.f32.mrf.mxu0
  %v2734 = vadd.f32 0.0, %v2733
  %v2735 = vpop.f32.mrf.mxu0
  %2736 = vmatprep.mubr.f32.mxu0 %v132
  %2737 = vmatmul.mubr.f32.gmra.mxu0 %v56
  %v2738 = vpop.f32.mrf.mxu0
  %v2739 = vadd.f32 0.0, %v2738
  %v2740 = vpop.f32.mrf.mxu0
  %2741 = vmatprep.mubr.f32.mxu0 %v135
  %2742 = vmatmul.mubr.f32.gmra.mxu0 %v58
  %v2743 = vpop.f32.mrf.mxu0
  %v2744 = vadd.f32 0.0, %v2743
  %v2745 = vpop.f32.mrf.mxu0
  %2746 = vmatprep.mubr.f32.mxu0 %v138
  %2747 = vmatmul.mubr.f32.gmra.mxu0 %v60
  %v2748 = vpop.f32.mrf.mxu0
  %v2749 = vadd.f32 0.0, %v2748
  %v2750 = vpop.f32.mrf.mxu0
  %2751 = vmatprep.mubr.f32.mxu0 %v141
  %2752 = vmatmul.mubr.f32.gmra.mxu0 %v62
  %v2753 = vpop.f32.mrf.mxu0
  %v2754 = vadd.f32 0.0, %v2753
  %v2755 = vpop.f32.mrf.mxu0
  %2756 = vmatprep.mubr.f32.mxu0 %v144
  %2757 = vmatmul.mubr.f32.gmra.mxu0 %v64
  %v2758 = vpop.f32.mrf.mxu0
  %v2759 = vadd.f32 0.0, %v2758
  %v2760 = vpop.f32.mrf.mxu0
  %2761 = vmatprep.mubr.f32.mxu0 %v147
  %2762 = vmatmul.mubr.f32.gmra.mxu0 %v66
  %v2763 = vpop.f32.mrf.mxu0
  %v2764 = vadd.f32 0.0, %v2763
  %v2765 = vpop.f32.mrf.mxu0
  %2766 = vmatprep.mubr.f32.mxu0 %v150
  %2767 = vmatmul.mubr.f32.gmra.mxu0 %v68
  %v2768 = vpop.f32.mrf.mxu0
  %v2769 = vadd.f32 0.0, %v2768
  %v2770 = vpop.f32.mrf.mxu0
  %2771 = vmatprep.mubr.f32.mxu0 %v153
  %2772 = vmatmul.mubr.f32.gmra.mxu0 %v70
  %v2773 = vpop.f32.mrf.mxu0
  %v2774 = vadd.f32 0.0, %v2773
  %v2775 = vpop.f32.mrf.mxu0
  %2776 = vmatprep.mubr.f32.mxu0 %v156
  %2777 = vmatmul.mubr.f32.gmra.mxu0 %v72
  %v2778 = vpop.f32.mrf.mxu0
  %v2779 = vadd.f32 0.0, %v2778
  %v2780 = vpop.f32.mrf.mxu0
  %2781 = vdwg.mxu0
  %v2782 = vld [vmem:[%s0 + $0x1a0] sm:$0xff]
  %v2783 = vld [vmem:[%s0 + $0x1a8] sm:$0xff]
  %v2784 = vld [vmem:[%s0 + $0x1b0] sm:$0xff]
  %v2785 = vld [vmem:[%s0 + $0x1b8] sm:$0xff]
  %v2786 = vld [vmem:[%s0 + $0x1c0] sm:$0xff]
  %v2787 = vld [vmem:[%s0 + $0x1c8] sm:$0xff]
  %v2788 = vld [vmem:[%s0 + $0x1d0] sm:$0xff]
  %v2789 = vld [vmem:[%s0 + $0x1d8] sm:$0xff]
  %v2790 = vld [vmem:[%s0 + $0x1e0] sm:$0xff]
  %v2791 = vld [vmem:[%s0 + $0x1e8] sm:$0xff]
  %v2792 = vld [vmem:[%s0 + $0x1f0] sm:$0xff]
  %v2793 = vld [vmem:[%s0 + $0x1f8] sm:$0xff]
  %v2794 = vld [vmem:[%s0 + $0x200] sm:$0xff]
  %v2795 = vld [vmem:[%s0 + $0x208] sm:$0xff]
  %v2796 = vld [vmem:[%s0 + $0x210] sm:$0xff]
  %v2797 = vld [vmem:[%s0 + $0x218] sm:$0xff]
  %v2798 = vld [vmem:[%s0 + $0x220] sm:$0xff]
  %v2799 = vld [vmem:[%s0 + $0x228] sm:$0xff]
  %v2800 = vld [vmem:[%s0 + $0x230] sm:$0xff]
  %v2801 = vld [vmem:[%s0 + $0x238] sm:$0xff]
  %2802 = vmatprep.subr.mxu0 0.0
  %2803 = vmatpush1.msra.mxu0 %v2797
  %2804 = vmatprep.subr.mxu0 0.0
  %2805 = vmatpush1.msra.mxu0 %v2796
  %2806 = vmatprep.subr.mxu0 0.0
  %2807 = vmatpush1.msra.mxu0 %v2795
  %2808 = vmatprep.subr.mxu0 0.0
  %2809 = vmatpush1.msra.mxu0 %v2794
  %2810 = vmatprep.subr.mxu0 0.0
  %2811 = vmatpush1.msra.mxu0 %v2793
  %2812 = vmatprep.subr.mxu0 0.0
  %2813 = vmatpush1.msra.mxu0 %v2792
  %2814 = vmatprep.subr.mxu0 0.0
  %2815 = vmatpush1.msra.mxu0 %v2791
  %2816 = vmatprep.subr.mxu0 0.0
  %2817 = vmatpush1.msra.mxu0 %v2790
  %2818 = vmatprep.subr.mxu0 0.0
  %2819 = vmatpush1.msra.mxu0 %v2789
  %2820 = vmatprep.subr.mxu0 0.0
  %2821 = vmatpush1.msra.mxu0 %v2788
  %2822 = vmatprep.subr.mxu0 0.0
  %2823 = vmatpush1.msra.mxu0 %v2787
  %2824 = vmatprep.subr.mxu0 0.0
  %2825 = vmatpush1.msra.mxu0 %v2786
  %2826 = vmatprep.subr.mxu0 0.0
  %2827 = vmatpush1.msra.mxu0 %v2785
  %2828 = vmatprep.subr.mxu0 0.0
  %2829 = vmatpush1.msra.mxu0 %v2784
  %2830 = vmatprep.subr.mxu0 0.0
  %2831 = vmatpush1.msra.mxu0 %v2783
  %2832 = vmatprep.subr.mxu0 0.0
  %2833 = vmatpush1.msra.mxu0 %v2782
  %2834 = vmatprep.subr.mxu0 0.0
  %2835 = vmatpush2.msra.mxu0 0.0
  %2836 = vmatprep.subr.mxu0 0.0
  %2837 = vmatpush2.msra.mxu0 0.0
  %2838 = vmatprep.subr.mxu0 0.0
  %2839 = vmatpush2.msra.mxu0 0.0
  %2840 = vmatprep.subr.mxu0 0.0
  %2841 = vmatpush2.msra.mxu0 0.0
  %2842 = vmatprep.subr.mxu0 0.0
  %2843 = vmatpush2.msra.mxu0 0.0
  %2844 = vmatprep.subr.mxu0 0.0
  %2845 = vmatpush2.msra.mxu0 0.0
  %2846 = vmatprep.subr.mxu0 0.0
  %2847 = vmatpush2.msra.mxu0 0.0
  %2848 = vmatprep.subr.mxu0 0.0
  %2849 = vmatpush2.msra.mxu0 0.0
  %2850 = vmatprep.subr.mxu0 0.0
  %2851 = vmatpush2.msra.mxu0 0.0
  %2852 = vmatprep.subr.mxu0 0.0
  %2853 = vmatpush2.msra.mxu0 0.0
  %2854 = vmatprep.subr.mxu0 0.0
  %2855 = vmatpush2.msra.mxu0 0.0
  %2856 = vmatprep.subr.mxu0 0.0
  %2857 = vmatpush2.msra.mxu0 0.0
  %2858 = vmatprep.subr.mxu0 0.0
  %2859 = vmatpush2.msra.mxu0 %v2801
  %2860 = vmatprep.subr.mxu0 0.0
  %2861 = vmatpush2.msra.mxu0 %v2800
  %2862 = vmatprep.subr.mxu0 0.0
  %2863 = vmatpush2.msra.mxu0 %v2799
  %2864 = vmatprep.subr.mxu0 0.0
  %2865 = vmatpush2.msra.mxu0 %v2798
  %2866 = vmatprep.mubr.f32.mxu0 %v105
  %2867 = vmatmul.mubr.f32.gmra.mxu0 %v38
  %v2868 = vpop.f32.mrf.mxu0
  %v2869 = vadd.f32 0.0, %v2868
  %v2870 = vpop.f32.mrf.mxu0
  %2871 = vmatprep.mubr.f32.mxu0 %v108
  %2872 = vmatmul.mubr.f32.gmra.mxu0 %v40
  %v2873 = vpop.f32.mrf.mxu0
  %v2874 = vadd.f32 0.0, %v2873
  %v2875 = vpop.f32.mrf.mxu0
  %2876 = vmatprep.mubr.f32.mxu0 %v111
  %2877 = vmatmul.mubr.f32.gmra.mxu0 %v42
  %v2878 = vpop.f32.mrf.mxu0
  %v2879 = vadd.f32 0.0, %v2878
  %v2880 = vpop.f32.mrf.mxu0
  %2881 = vmatprep.mubr.f32.mxu0 %v114
  %2882 = vmatmul.mubr.f32.gmra.mxu0 %v44
  %v2883 = vpop.f32.mrf.mxu0
  %v2884 = vadd.f32 0.0, %v2883
  %v2885 = vpop.f32.mrf.mxu0
  %2886 = vmatprep.mubr.f32.mxu0 %v117
  %2887 = vmatmul.mubr.f32.gmra.mxu0 %v46
  %v2888 = vpop.f32.mrf.mxu0
  %v2889 = vadd.f32 0.0, %v2888
  %v2890 = vpop.f32.mrf.mxu0
  %2891 = vmatprep.mubr.f32.mxu0 %v120
  %2892 = vmatmul.mubr.f32.gmra.mxu0 %v48
  %v2893 = vpop.f32.mrf.mxu0
  %v2894 = vadd.f32 0.0, %v2893
  %v2895 = vpop.f32.mrf.mxu0
  %2896 = vmatprep.mubr.f32.mxu0 %v123
  %2897 = vmatmul.mubr.f32.gmra.mxu0 %v50
  %v2898 = vpop.f32.mrf.mxu0
  %v2899 = vadd.f32 0.0, %v2898
  %v2900 = vpop.f32.mrf.mxu0
  %2901 = vmatprep.mubr.f32.mxu0 %v126
  %2902 = vmatmul.mubr.f32.gmra.mxu0 %v52
  %v2903 = vpop.f32.mrf.mxu0
  %v2904 = vadd.f32 0.0, %v2903
  %v2905 = vpop.f32.mrf.mxu0
  %2906 = vmatprep.mubr.f32.mxu0 %v129
  %2907 = vmatmul.mubr.f32.gmra.mxu0 %v54
  %v2908 = vpop.f32.mrf.mxu0
  %v2909 = vadd.f32 0.0, %v2908
  %v2910 = vpop.f32.mrf.mxu0
  %2911 = vmatprep.mubr.f32.mxu0 %v132
  %2912 = vmatmul.mubr.f32.gmra.mxu0 %v56
  %v2913 = vpop.f32.mrf.mxu0
  %v2914 = vadd.f32 0.0, %v2913
  %v2915 = vpop.f32.mrf.mxu0
  %2916 = vmatprep.mubr.f32.mxu0 %v135
  %2917 = vmatmul.mubr.f32.gmra.mxu0 %v58
  %v2918 = vpop.f32.mrf.mxu0
  %v2919 = vadd.f32 0.0, %v2918
  %v2920 = vpop.f32.mrf.mxu0
  %2921 = vmatprep.mubr.f32.mxu0 %v138
  %2922 = vmatmul.mubr.f32.gmra.mxu0 %v60
  %v2923 = vpop.f32.mrf.mxu0
  %v2924 = vadd.f32 0.0, %v2923
  %v2925 = vpop.f32.mrf.mxu0
  %2926 = vmatprep.mubr.f32.mxu0 %v141
  %2927 = vmatmul.mubr.f32.gmra.mxu0 %v62
  %v2928 = vpop.f32.mrf.mxu0
  %v2929 = vadd.f32 0.0, %v2928
  %v2930 = vpop.f32.mrf.mxu0
  %2931 = vmatprep.mubr.f32.mxu0 %v144
  %2932 = vmatmul.mubr.f32.gmra.mxu0 %v64
  %v2933 = vpop.f32.mrf.mxu0
  %v2934 = vadd.f32 0.0, %v2933
  %v2935 = vpop.f32.mrf.mxu0
  %2936 = vmatprep.mubr.f32.mxu0 %v147
  %2937 = vmatmul.mubr.f32.gmra.mxu0 %v66
  %v2938 = vpop.f32.mrf.mxu0
  %v2939 = vadd.f32 0.0, %v2938
  %v2940 = vpop.f32.mrf.mxu0
  %2941 = vmatprep.mubr.f32.mxu0 %v150
  %2942 = vmatmul.mubr.f32.gmra.mxu0 %v68
  %v2943 = vpop.f32.mrf.mxu0
  %v2944 = vadd.f32 0.0, %v2943
  %v2945 = vpop.f32.mrf.mxu0
  %2946 = vmatprep.mubr.f32.mxu0 %v153
  %2947 = vmatmul.mubr.f32.gmra.mxu0 %v70
  %v2948 = vpop.f32.mrf.mxu0
  %v2949 = vadd.f32 0.0, %v2948
  %v2950 = vpop.f32.mrf.mxu0
  %2951 = vmatprep.mubr.f32.mxu0 %v156
  %2952 = vmatmul.mubr.f32.gmra.mxu0 %v72
  %v2953 = vpop.f32.mrf.mxu0
  %v2954 = vadd.f32 0.0, %v2953
  %v2955 = vpop.f32.mrf.mxu0
  %2956 = vdwg.mxu0
  %v2957 = vmax.f32 %v2694, %v2739
  %v2958 = vmax.f32 %v2699, %v2744
  %v2959 = vmax.f32 %v2704, %v2749
  %v2960 = vmax.f32 %v2709, %v2754
  %v2961 = vmax.f32 %v2714, %v2759
  %v2962 = vmax.f32 %v2719, %v2764
  %v2963 = vmax.f32 %v2724, %v2769
  %v2964 = vmax.f32 %v2729, %v2774
  %v2965 = vmax.f32 %v2734, %v2779
  %v2966 = vmax.f32 %v2869, %v2914
  %v2967 = vmax.f32 %v2874, %v2919
  %v2968 = vmax.f32 %v2879, %v2924
  %v2969 = vmax.f32 %v2884, %v2929
  %v2970 = vmax.f32 %v2889, %v2934
  %v2971 = vmax.f32 %v2894, %v2939
  %v2972 = vmax.f32 %v2899, %v2944
  %v2973 = vmax.f32 %v2904, %v2949
  %v2974 = vmax.f32 %v2909, %v2954
  %v2975 = vmax.f32 %v2957, %v2966
  %v2976 = vmax.f32 %v2958, %v2967
  %v2977 = vmax.f32 %v2959, %v2968
  %v2978 = vmax.f32 %v2960, %v2969
  %v2979 = vmax.f32 %v2961, %v2970
  %v2980 = vmax.f32 %v2962, %v2971
  %v2981 = vmax.f32 %v2963, %v2972
  %v2982 = vmax.f32 %v2964, %v2973
  %v2983 = vmax.f32 %v2965, %v2974
  %v2984 = vadd.f32 %v2975, %v518
  %v2985 = vadd.f32 %v2976, %v523
  %v2986 = vadd.f32 %v2977, %v528
  %v2987 = vadd.f32 %v2978, %v533
  %v2988 = vadd.f32 %v2979, %v538
  %v2989 = vadd.f32 %v2980, %v543
  %v2990 = vadd.f32 %v2981, %v548
  %v2991 = vadd.f32 %v2982, %v553
  %v2992 = vadd.f32 %v2983, %v558
  %v2993 = vmax.f32 %v2984, 0.0
  %v2994 = vmax.f32 %v2985, 0.0
  %v2995 = vmax.f32 %v2986, 0.0
  %v2996 = vmax.f32 %v2987, 0.0
  %v2997 = vmax.f32 %v2988, 0.0
  %v2998 = vmax.f32 %v2989, 0.0
  %v2999 = vmax.f32 %v2990, 0.0
  %v3000 = vmax.f32 %v2991, 0.0
  %v3001 = vmax.f32 %v2992, 0.0
  %3002 = vst [vmem:[#allocation2 + $0x1b0] sm:$0xff] %v2993
  %3003 = vst [vmem:[#allocation2 + $0x1b8] sm:$0xff] %v2994
  %3004 = vst [vmem:[#allocation2 + $0x1c0] sm:$0xff] %v2995
  %3005 = vst [vmem:[#allocation2 + $0x1c8] sm:$0xff] %v2996
  %3006 = vst [vmem:[#allocation2 + $0x1d0] sm:$0xff] %v2997
  %3007 = vst [vmem:[#allocation2 + $0x1d8] sm:$0xff] %v2998
  %3008 = vst [vmem:[#allocation2 + $0x1e0] sm:$0xff] %v2999
  %3009 = vst [vmem:[#allocation2 + $0x1e8] sm:$0xff] %v3000
  %3010 = vst [vmem:[#allocation2 + $0x1f0] sm:$0xff] %v3001
  %v3011 = vld [vmem:[%s0 + $0x1c0] sm:$0xff]
  %v3012 = vld [vmem:[%s0 + $0x1c8] sm:$0xff]
  %v3013 = vld [vmem:[%s0 + $0x1d0] sm:$0xff]
  %v3014 = vld [vmem:[%s0 + $0x1d8] sm:$0xff]
  %v3015 = vld [vmem:[%s0 + $0x1e0] sm:$0xff]
  %v3016 = vld [vmem:[%s0 + $0x1e8] sm:$0xff]
  %v3017 = vld [vmem:[%s0 + $0x1f0] sm:$0xff]
  %v3018 = vld [vmem:[%s0 + $0x1f8] sm:$0xff]
  %v3019 = vld [vmem:[%s0 + $0x200] sm:$0xff]
  %v3020 = vld [vmem:[%s0 + $0x208] sm:$0xff]
  %v3021 = vld [vmem:[%s0 + $0x210] sm:$0xff]
  %v3022 = vld [vmem:[%s0 + $0x218] sm:$0xff]
  %v3023 = vld [vmem:[%s0 + $0x220] sm:$0xff]
  %v3024 = vld [vmem:[%s0 + $0x228] sm:$0xff]
  %v3025 = vld [vmem:[%s0 + $0x230] sm:$0xff]
  %v3026 = vld [vmem:[%s0 + $0x238] sm:$0xff]
  %v3027 = vld [vmem:[%s0 + $0x240] sm:$0xff]
  %v3028 = vld [vmem:[%s0 + $0x248] sm:$0xff]
  %v3029 = vld [vmem:[%s0 + $0x250] sm:$0xff]
  %v3030 = vld [vmem:[%s0 + $0x258] sm:$0xff]
  %3031 = vmatprep.subr.mxu0 0.0
  %3032 = vmatpush1.msra.mxu0 %v3026
  %3033 = vmatprep.subr.mxu0 0.0
  %3034 = vmatpush1.msra.mxu0 %v3025
  %3035 = vmatprep.subr.mxu0 0.0
  %3036 = vmatpush1.msra.mxu0 %v3024
  %3037 = vmatprep.subr.mxu0 0.0
  %3038 = vmatpush1.msra.mxu0 %v3023
  %3039 = vmatprep.subr.mxu0 0.0
  %3040 = vmatpush1.msra.mxu0 %v3022
  %3041 = vmatprep.subr.mxu0 0.0
  %3042 = vmatpush1.msra.mxu0 %v3021
  %3043 = vmatprep.subr.mxu0 0.0
  %3044 = vmatpush1.msra.mxu0 %v3020
  %3045 = vmatprep.subr.mxu0 0.0
  %3046 = vmatpush1.msra.mxu0 %v3019
  %3047 = vmatprep.subr.mxu0 0.0
  %3048 = vmatpush1.msra.mxu0 %v3018
  %3049 = vmatprep.subr.mxu0 0.0
  %3050 = vmatpush1.msra.mxu0 %v3017
  %3051 = vmatprep.subr.mxu0 0.0
  %3052 = vmatpush1.msra.mxu0 %v3016
  %3053 = vmatprep.subr.mxu0 0.0
  %3054 = vmatpush1.msra.mxu0 %v3015
  %3055 = vmatprep.subr.mxu0 0.0
  %3056 = vmatpush1.msra.mxu0 %v3014
  %3057 = vmatprep.subr.mxu0 0.0
  %3058 = vmatpush1.msra.mxu0 %v3013
  %3059 = vmatprep.subr.mxu0 0.0
  %3060 = vmatpush1.msra.mxu0 %v3012
  %3061 = vmatprep.subr.mxu0 0.0
  %3062 = vmatpush1.msra.mxu0 %v3011
  %3063 = vmatprep.subr.mxu0 0.0
  %3064 = vmatpush2.msra.mxu0 0.0
  %3065 = vmatprep.subr.mxu0 0.0
  %3066 = vmatpush2.msra.mxu0 0.0
  %3067 = vmatprep.subr.mxu0 0.0
  %3068 = vmatpush2.msra.mxu0 0.0
  %3069 = vmatprep.subr.mxu0 0.0
  %3070 = vmatpush2.msra.mxu0 0.0
  %3071 = vmatprep.subr.mxu0 0.0
  %3072 = vmatpush2.msra.mxu0 0.0
  %3073 = vmatprep.subr.mxu0 0.0
  %3074 = vmatpush2.msra.mxu0 0.0
  %3075 = vmatprep.subr.mxu0 0.0
  %3076 = vmatpush2.msra.mxu0 0.0
  %3077 = vmatprep.subr.mxu0 0.0
  %3078 = vmatpush2.msra.mxu0 0.0
  %3079 = vmatprep.subr.mxu0 0.0
  %3080 = vmatpush2.msra.mxu0 0.0
  %3081 = vmatprep.subr.mxu0 0.0
  %3082 = vmatpush2.msra.mxu0 0.0
  %3083 = vmatprep.subr.mxu0 0.0
  %3084 = vmatpush2.msra.mxu0 0.0
  %3085 = vmatprep.subr.mxu0 0.0
  %3086 = vmatpush2.msra.mxu0 0.0
  %3087 = vmatprep.subr.mxu0 0.0
  %3088 = vmatpush2.msra.mxu0 %v3030
  %3089 = vmatprep.subr.mxu0 0.0
  %3090 = vmatpush2.msra.mxu0 %v3029
  %3091 = vmatprep.subr.mxu0 0.0
  %3092 = vmatpush2.msra.mxu0 %v3028
  %3093 = vmatprep.subr.mxu0 0.0
  %3094 = vmatpush2.msra.mxu0 %v3027
  %3095 = vmatprep.mubr.f32.mxu0 %v105
  %3096 = vmatmul.mubr.f32.gmra.mxu0 %v38
  %v3097 = vpop.f32.mrf.mxu0
  %v3098 = vadd.f32 0.0, %v3097
  %v3099 = vpop.f32.mrf.mxu0
  %3100 = vmatprep.mubr.f32.mxu0 %v108
  %3101 = vmatmul.mubr.f32.gmra.mxu0 %v40
  %v3102 = vpop.f32.mrf.mxu0
  %v3103 = vadd.f32 0.0, %v3102
  %v3104 = vpop.f32.mrf.mxu0
  %3105 = vmatprep.mubr.f32.mxu0 %v111
  %3106 = vmatmul.mubr.f32.gmra.mxu0 %v42
  %v3107 = vpop.f32.mrf.mxu0
  %v3108 = vadd.f32 0.0, %v3107
  %v3109 = vpop.f32.mrf.mxu0
  %3110 = vmatprep.mubr.f32.mxu0 %v114
  %3111 = vmatmul.mubr.f32.gmra.mxu0 %v44
  %v3112 = vpop.f32.mrf.mxu0
  %v3113 = vadd.f32 0.0, %v3112
  %v3114 = vpop.f32.mrf.mxu0
  %3115 = vmatprep.mubr.f32.mxu0 %v117
  %3116 = vmatmul.mubr.f32.gmra.mxu0 %v46
  %v3117 = vpop.f32.mrf.mxu0
  %v3118 = vadd.f32 0.0, %v3117
  %v3119 = vpop.f32.mrf.mxu0
  %3120 = vmatprep.mubr.f32.mxu0 %v120
  %3121 = vmatmul.mubr.f32.gmra.mxu0 %v48
  %v3122 = vpop.f32.mrf.mxu0
  %v3123 = vadd.f32 0.0, %v3122
  %v3124 = vpop.f32.mrf.mxu0
  %3125 = vmatprep.mubr.f32.mxu0 %v123
  %3126 = vmatmul.mubr.f32.gmra.mxu0 %v50
  %v3127 = vpop.f32.mrf.mxu0
  %v3128 = vadd.f32 0.0, %v3127
  %v3129 = vpop.f32.mrf.mxu0
  %3130 = vmatprep.mubr.f32.mxu0 %v126
  %3131 = vmatmul.mubr.f32.gmra.mxu0 %v52
  %v3132 = vpop.f32.mrf.mxu0
  %v3133 = vadd.f32 0.0, %v3132
  %v3134 = vpop.f32.mrf.mxu0
  %3135 = vmatprep.mubr.f32.mxu0 %v129
  %3136 = vmatmul.mubr.f32.gmra.mxu0 %v54
  %v3137 = vpop.f32.mrf.mxu0
  %v3138 = vadd.f32 0.0, %v3137
  %v3139 = vpop.f32.mrf.mxu0
  %3140 = vmatprep.mubr.f32.mxu0 %v132
  %3141 = vmatmul.mubr.f32.gmra.mxu0 %v56
  %v3142 = vpop.f32.mrf.mxu0
  %v3143 = vadd.f32 0.0, %v3142
  %v3144 = vpop.f32.mrf.mxu0
  %3145 = vmatprep.mubr.f32.mxu0 %v135
  %3146 = vmatmul.mubr.f32.gmra.mxu0 %v58
  %v3147 = vpop.f32.mrf.mxu0
  %v3148 = vadd.f32 0.0, %v3147
  %v3149 = vpop.f32.mrf.mxu0
  %3150 = vmatprep.mubr.f32.mxu0 %v138
  %3151 = vmatmul.mubr.f32.gmra.mxu0 %v60
  %v3152 = vpop.f32.mrf.mxu0
  %v3153 = vadd.f32 0.0, %v3152
  %v3154 = vpop.f32.mrf.mxu0
  %3155 = vmatprep.mubr.f32.mxu0 %v141
  %3156 = vmatmul.mubr.f32.gmra.mxu0 %v62
  %v3157 = vpop.f32.mrf.mxu0
  %v3158 = vadd.f32 0.0, %v3157
  %v3159 = vpop.f32.mrf.mxu0
  %3160 = vmatprep.mubr.f32.mxu0 %v144
  %3161 = vmatmul.mubr.f32.gmra.mxu0 %v64
  %v3162 = vpop.f32.mrf.mxu0
  %v3163 = vadd.f32 0.0, %v3162
  %v3164 = vpop.f32.mrf.mxu0
  %3165 = vmatprep.mubr.f32.mxu0 %v147
  %3166 = vmatmul.mubr.f32.gmra.mxu0 %v66
  %v3167 = vpop.f32.mrf.mxu0
  %v3168 = vadd.f32 0.0, %v3167
  %v3169 = vpop.f32.mrf.mxu0
  %3170 = vmatprep.mubr.f32.mxu0 %v150
  %3171 = vmatmul.mubr.f32.gmra.mxu0 %v68
  %v3172 = vpop.f32.mrf.mxu0
  %v3173 = vadd.f32 0.0, %v3172
  %v3174 = vpop.f32.mrf.mxu0
  %3175 = vmatprep.mubr.f32.mxu0 %v153
  %3176 = vmatmul.mubr.f32.gmra.mxu0 %v70
  %v3177 = vpop.f32.mrf.mxu0
  %v3178 = vadd.f32 0.0, %v3177
  %v3179 = vpop.f32.mrf.mxu0
  %3180 = vmatprep.mubr.f32.mxu0 %v156
  %3181 = vmatmul.mubr.f32.gmra.mxu0 %v72
  %v3182 = vpop.f32.mrf.mxu0
  %v3183 = vadd.f32 0.0, %v3182
  %v3184 = vpop.f32.mrf.mxu0
  %3185 = vdwg.mxu0
  %v3186 = vld [vmem:[%s0 + $0x1e0] sm:$0xff]
  %v3187 = vld [vmem:[%s0 + $0x1e8] sm:$0xff]
  %v3188 = vld [vmem:[%s0 + $0x1f0] sm:$0xff]
  %v3189 = vld [vmem:[%s0 + $0x1f8] sm:$0xff]
  %v3190 = vld [vmem:[%s0 + $0x200] sm:$0xff]
  %v3191 = vld [vmem:[%s0 + $0x208] sm:$0xff]
  %v3192 = vld [vmem:[%s0 + $0x210] sm:$0xff]
  %v3193 = vld [vmem:[%s0 + $0x218] sm:$0xff]
  %v3194 = vld [vmem:[%s0 + $0x220] sm:$0xff]
  %v3195 = vld [vmem:[%s0 + $0x228] sm:$0xff]
  %v3196 = vld [vmem:[%s0 + $0x230] sm:$0xff]
  %v3197 = vld [vmem:[%s0 + $0x238] sm:$0xff]
  %v3198 = vld [vmem:[%s0 + $0x240] sm:$0xff]
  %v3199 = vld [vmem:[%s0 + $0x248] sm:$0xff]
  %v3200 = vld [vmem:[%s0 + $0x250] sm:$0xff]
  %v3201 = vld [vmem:[%s0 + $0x258] sm:$0xff]
  %v3202 = vld [vmem:[%s0 + $0x260] sm:$0xff]
  %v3203 = vld [vmem:[%s0 + $0x268] sm:$0xff]
  %v3204 = vld [vmem:[%s0 + $0x270] sm:$0xff]
  %v3205 = vld [vmem:[%s0 + $0x278] sm:$0xff]
  %3206 = vmatprep.subr.mxu0 0.0
  %3207 = vmatpush1.msra.mxu0 %v3201
  %3208 = vmatprep.subr.mxu0 0.0
  %3209 = vmatpush1.msra.mxu0 %v3200
  %3210 = vmatprep.subr.mxu0 0.0
  %3211 = vmatpush1.msra.mxu0 %v3199
  %3212 = vmatprep.subr.mxu0 0.0
  %3213 = vmatpush1.msra.mxu0 %v3198
  %3214 = vmatprep.subr.mxu0 0.0
  %3215 = vmatpush1.msra.mxu0 %v3197
  %3216 = vmatprep.subr.mxu0 0.0
  %3217 = vmatpush1.msra.mxu0 %v3196
  %3218 = vmatprep.subr.mxu0 0.0
  %3219 = vmatpush1.msra.mxu0 %v3195
  %3220 = vmatprep.subr.mxu0 0.0
  %3221 = vmatpush1.msra.mxu0 %v3194
  %3222 = vmatprep.subr.mxu0 0.0
  %3223 = vmatpush1.msra.mxu0 %v3193
  %3224 = vmatprep.subr.mxu0 0.0
  %3225 = vmatpush1.msra.mxu0 %v3192
  %3226 = vmatprep.subr.mxu0 0.0
  %3227 = vmatpush1.msra.mxu0 %v3191
  %3228 = vmatprep.subr.mxu0 0.0
  %3229 = vmatpush1.msra.mxu0 %v3190
  %3230 = vmatprep.subr.mxu0 0.0
  %3231 = vmatpush1.msra.mxu0 %v3189
  %3232 = vmatprep.subr.mxu0 0.0
  %3233 = vmatpush1.msra.mxu0 %v3188
  %3234 = vmatprep.subr.mxu0 0.0
  %3235 = vmatpush1.msra.mxu0 %v3187
  %3236 = vmatprep.subr.mxu0 0.0
  %3237 = vmatpush1.msra.mxu0 %v3186
  %3238 = vmatprep.subr.mxu0 0.0
  %3239 = vmatpush2.msra.mxu0 0.0
  %3240 = vmatprep.subr.mxu0 0.0
  %3241 = vmatpush2.msra.mxu0 0.0
  %3242 = vmatprep.subr.mxu0 0.0
  %3243 = vmatpush2.msra.mxu0 0.0
  %3244 = vmatprep.subr.mxu0 0.0
  %3245 = vmatpush2.msra.mxu0 0.0
  %3246 = vmatprep.subr.mxu0 0.0
  %3247 = vmatpush2.msra.mxu0 0.0
  %3248 = vmatprep.subr.mxu0 0.0
  %3249 = vmatpush2.msra.mxu0 0.0
  %3250 = vmatprep.subr.mxu0 0.0
  %3251 = vmatpush2.msra.mxu0 0.0
  %3252 = vmatprep.subr.mxu0 0.0
  %3253 = vmatpush2.msra.mxu0 0.0
  %3254 = vmatprep.subr.mxu0 0.0
  %3255 = vmatpush2.msra.mxu0 0.0
  %3256 = vmatprep.subr.mxu0 0.0
  %3257 = vmatpush2.msra.mxu0 0.0
  %3258 = vmatprep.subr.mxu0 0.0
  %3259 = vmatpush2.msra.mxu0 0.0
  %3260 = vmatprep.subr.mxu0 0.0
  %3261 = vmatpush2.msra.mxu0 0.0
  %3262 = vmatprep.subr.mxu0 0.0
  %3263 = vmatpush2.msra.mxu0 %v3205
  %3264 = vmatprep.subr.mxu0 0.0
  %3265 = vmatpush2.msra.mxu0 %v3204
  %3266 = vmatprep.subr.mxu0 0.0
  %3267 = vmatpush2.msra.mxu0 %v3203
  %3268 = vmatprep.subr.mxu0 0.0
  %3269 = vmatpush2.msra.mxu0 %v3202
  %3270 = vmatprep.mubr.f32.mxu0 %v105
  %3271 = vmatmul.mubr.f32.gmra.mxu0 %v38
  %v3272 = vpop.f32.mrf.mxu0
  %v3273 = vadd.f32 0.0, %v3272
  %v3274 = vpop.f32.mrf.mxu0
  %3275 = vmatprep.mubr.f32.mxu0 %v108
  %3276 = vmatmul.mubr.f32.gmra.mxu0 %v40
  %v3277 = vpop.f32.mrf.mxu0
  %v3278 = vadd.f32 0.0, %v3277
  %v3279 = vpop.f32.mrf.mxu0
  %3280 = vmatprep.mubr.f32.mxu0 %v111
  %3281 = vmatmul.mubr.f32.gmra.mxu0 %v42
  %v3282 = vpop.f32.mrf.mxu0
  %v3283 = vadd.f32 0.0, %v3282
  %v3284 = vpop.f32.mrf.mxu0
  %3285 = vmatprep.mubr.f32.mxu0 %v114
  %3286 = vmatmul.mubr.f32.gmra.mxu0 %v44
  %v3287 = vpop.f32.mrf.mxu0
  %v3288 = vadd.f32 0.0, %v3287
  %v3289 = vpop.f32.mrf.mxu0
  %3290 = vmatprep.mubr.f32.mxu0 %v117
  %3291 = vmatmul.mubr.f32.gmra.mxu0 %v46
  %v3292 = vpop.f32.mrf.mxu0
  %v3293 = vadd.f32 0.0, %v3292
  %v3294 = vpop.f32.mrf.mxu0
  %3295 = vmatprep.mubr.f32.mxu0 %v120
  %3296 = vmatmul.mubr.f32.gmra.mxu0 %v48
  %v3297 = vpop.f32.mrf.mxu0
  %v3298 = vadd.f32 0.0, %v3297
  %v3299 = vpop.f32.mrf.mxu0
  %3300 = vmatprep.mubr.f32.mxu0 %v123
  %3301 = vmatmul.mubr.f32.gmra.mxu0 %v50
  %v3302 = vpop.f32.mrf.mxu0
  %v3303 = vadd.f32 0.0, %v3302
  %v3304 = vpop.f32.mrf.mxu0
  %3305 = vmatprep.mubr.f32.mxu0 %v126
  %3306 = vmatmul.mubr.f32.gmra.mxu0 %v52
  %v3307 = vpop.f32.mrf.mxu0
  %v3308 = vadd.f32 0.0, %v3307
  %v3309 = vpop.f32.mrf.mxu0
  %3310 = vmatprep.mubr.f32.mxu0 %v129
  %3311 = vmatmul.mubr.f32.gmra.mxu0 %v54
  %v3312 = vpop.f32.mrf.mxu0
  %v3313 = vadd.f32 0.0, %v3312
  %v3314 = vpop.f32.mrf.mxu0
  %3315 = vmatprep.mubr.f32.mxu0 %v132
  %3316 = vmatmul.mubr.f32.gmra.mxu0 %v56
  %v3317 = vpop.f32.mrf.mxu0
  %v3318 = vadd.f32 0.0, %v3317
  %v3319 = vpop.f32.mrf.mxu0
  %3320 = vmatprep.mubr.f32.mxu0 %v135
  %3321 = vmatmul.mubr.f32.gmra.mxu0 %v58
  %v3322 = vpop.f32.mrf.mxu0
  %v3323 = vadd.f32 0.0, %v3322
  %v3324 = vpop.f32.mrf.mxu0
  %3325 = vmatprep.mubr.f32.mxu0 %v138
  %3326 = vmatmul.mubr.f32.gmra.mxu0 %v60
  %v3327 = vpop.f32.mrf.mxu0
  %v3328 = vadd.f32 0.0, %v3327
  %v3329 = vpop.f32.mrf.mxu0
  %3330 = vmatprep.mubr.f32.mxu0 %v141
  %3331 = vmatmul.mubr.f32.gmra.mxu0 %v62
  %v3332 = vpop.f32.mrf.mxu0
  %v3333 = vadd.f32 0.0, %v3332
  %v3334 = vpop.f32.mrf.mxu0
  %3335 = vmatprep.mubr.f32.mxu0 %v144
  %3336 = vmatmul.mubr.f32.gmra.mxu0 %v64
  %v3337 = vpop.f32.mrf.mxu0
  %v3338 = vadd.f32 0.0, %v3337
  %v3339 = vpop.f32.mrf.mxu0
  %3340 = vmatprep.mubr.f32.mxu0 %v147
  %3341 = vmatmul.mubr.f32.gmra.mxu0 %v66
  %v3342 = vpop.f32.mrf.mxu0
  %v3343 = vadd.f32 0.0, %v3342
  %v3344 = vpop.f32.mrf.mxu0
  %3345 = vmatprep.mubr.f32.mxu0 %v150
  %3346 = vmatmul.mubr.f32.gmra.mxu0 %v68
  %v3347 = vpop.f32.mrf.mxu0
  %v3348 = vadd.f32 0.0, %v3347
  %v3349 = vpop.f32.mrf.mxu0
  %3350 = vmatprep.mubr.f32.mxu0 %v153
  %3351 = vmatmul.mubr.f32.gmra.mxu0 %v70
  %v3352 = vpop.f32.mrf.mxu0
  %v3353 = vadd.f32 0.0, %v3352
  %v3354 = vpop.f32.mrf.mxu0
  %3355 = vmatprep.mubr.f32.mxu0 %v156
  %3356 = vmatmul.mubr.f32.gmra.mxu0 %v72
  %v3357 = vpop.f32.mrf.mxu0
  %v3358 = vadd.f32 0.0, %v3357
  %v3359 = vpop.f32.mrf.mxu0
  %3360 = vdwg.mxu0
  %v3361 = vmax.f32 %v3098, %v3143
  %v3362 = vmax.f32 %v3103, %v3148
  %v3363 = vmax.f32 %v3108, %v3153
  %v3364 = vmax.f32 %v3113, %v3158
  %v3365 = vmax.f32 %v3118, %v3163
  %v3366 = vmax.f32 %v3123, %v3168
  %v3367 = vmax.f32 %v3128, %v3173
  %v3368 = vmax.f32 %v3133, %v3178
  %v3369 = vmax.f32 %v3138, %v3183
  %v3370 = vmax.f32 %v3273, %v3318
  %v3371 = vmax.f32 %v3278, %v3323
  %v3372 = vmax.f32 %v3283, %v3328
  %v3373 = vmax.f32 %v3288, %v3333
  %v3374 = vmax.f32 %v3293, %v3338
  %v3375 = vmax.f32 %v3298, %v3343
  %v3376 = vmax.f32 %v3303, %v3348
  %v3377 = vmax.f32 %v3308, %v3353
  %v3378 = vmax.f32 %v3313, %v3358
  %v3379 = vmax.f32 %v3361, %v3370
  %v3380 = vmax.f32 %v3362, %v3371
  %v3381 = vmax.f32 %v3363, %v3372
  %v3382 = vmax.f32 %v3364, %v3373
  %v3383 = vmax.f32 %v3365, %v3374
  %v3384 = vmax.f32 %v3366, %v3375
  %v3385 = vmax.f32 %v3367, %v3376
  %v3386 = vmax.f32 %v3368, %v3377
  %v3387 = vmax.f32 %v3369, %v3378
  %v3388 = vadd.f32 %v3379, %v518
  %v3389 = vadd.f32 %v3380, %v523
  %v3390 = vadd.f32 %v3381, %v528
  %v3391 = vadd.f32 %v3382, %v533
  %v3392 = vadd.f32 %v3383, %v538
  %v3393 = vadd.f32 %v3384, %v543
  %v3394 = vadd.f32 %v3385, %v548
  %v3395 = vadd.f32 %v3386, %v553
  %v3396 = vadd.f32 %v3387, %v558
  %v3397 = vmax.f32 %v3388, 0.0
  %v3398 = vmax.f32 %v3389, 0.0
  %v3399 = vmax.f32 %v3390, 0.0
  %v3400 = vmax.f32 %v3391, 0.0
  %v3401 = vmax.f32 %v3392, 0.0
  %v3402 = vmax.f32 %v3393, 0.0
  %v3403 = vmax.f32 %v3394, 0.0
  %v3404 = vmax.f32 %v3395, 0.0
  %v3405 = vmax.f32 %v3396, 0.0
  %3406 = vst [vmem:[#allocation2 + $0x1f8] sm:$0xff] %v3397
  %3407 = vst [vmem:[#allocation2 + $0x200] sm:$0xff] %v3398
  %3408 = vst [vmem:[#allocation2 + $0x208] sm:$0xff] %v3399
  %3409 = vst [vmem:[#allocation2 + $0x210] sm:$0xff] %v3400
  %3410 = vst [vmem:[#allocation2 + $0x218] sm:$0xff] %v3401
  %3411 = vst [vmem:[#allocation2 + $0x220] sm:$0xff] %v3402
  %3412 = vst [vmem:[#allocation2 + $0x228] sm:$0xff] %v3403
  %3413 = vst [vmem:[#allocation2 + $0x230] sm:$0xff] %v3404
  %3414 = vst [vmem:[#allocation2 + $0x238] sm:$0xff] %v3405
  %v3415 = vld [vmem:[%s0 + $0x200] sm:$0xff]
  %v3416 = vld [vmem:[%s0 + $0x208] sm:$0xff]
  %v3417 = vld [vmem:[%s0 + $0x210] sm:$0xff]
  %v3418 = vld [vmem:[%s0 + $0x218] sm:$0xff]
  %v3419 = vld [vmem:[%s0 + $0x220] sm:$0xff]
  %v3420 = vld [vmem:[%s0 + $0x228] sm:$0xff]
  %v3421 = vld [vmem:[%s0 + $0x230] sm:$0xff]
  %v3422 = vld [vmem:[%s0 + $0x238] sm:$0xff]
  %v3423 = vld [vmem:[%s0 + $0x240] sm:$0xff]
  %v3424 = vld [vmem:[%s0 + $0x248] sm:$0xff]
  %v3425 = vld [vmem:[%s0 + $0x250] sm:$0xff]
  %v3426 = vld [vmem:[%s0 + $0x258] sm:$0xff]
  %v3427 = vld [vmem:[%s0 + $0x260] sm:$0xff]
  %v3428 = vld [vmem:[%s0 + $0x268] sm:$0xff]
  %v3429 = vld [vmem:[%s0 + $0x270] sm:$0xff]
  %v3430 = vld [vmem:[%s0 + $0x278] sm:$0xff]
  %v3431 = vld [vmem:[%s0 + $0x280] sm:$0xff]
  %v3432 = vld [vmem:[%s0 + $0x288] sm:$0xff]
  %v3433 = vld [vmem:[%s0 + $0x290] sm:$0xff]
  %v3434 = vld [vmem:[%s0 + $0x298] sm:$0xff]
  %3435 = vmatprep.subr.mxu0 0.0
  %3436 = vmatpush1.msra.mxu0 %v3430
  %3437 = vmatprep.subr.mxu0 0.0
  %3438 = vmatpush1.msra.mxu0 %v3429
  %3439 = vmatprep.subr.mxu0 0.0
  %3440 = vmatpush1.msra.mxu0 %v3428
  %3441 = vmatprep.subr.mxu0 0.0
  %3442 = vmatpush1.msra.mxu0 %v3427
  %3443 = vmatprep.subr.mxu0 0.0
  %3444 = vmatpush1.msra.mxu0 %v3426
  %3445 = vmatprep.subr.mxu0 0.0
  %3446 = vmatpush1.msra.mxu0 %v3425
  %3447 = vmatprep.subr.mxu0 0.0
  %3448 = vmatpush1.msra.mxu0 %v3424
  %3449 = vmatprep.subr.mxu0 0.0
  %3450 = vmatpush1.msra.mxu0 %v3423
  %3451 = vmatprep.subr.mxu0 0.0
  %3452 = vmatpush1.msra.mxu0 %v3422
  %3453 = vmatprep.subr.mxu0 0.0
  %3454 = vmatpush1.msra.mxu0 %v3421
  %3455 = vmatprep.subr.mxu0 0.0
  %3456 = vmatpush1.msra.mxu0 %v3420
  %3457 = vmatprep.subr.mxu0 0.0
  %3458 = vmatpush1.msra.mxu0 %v3419
  %3459 = vmatprep.subr.mxu0 0.0
  %3460 = vmatpush1.msra.mxu0 %v3418
  %3461 = vmatprep.subr.mxu0 0.0
  %3462 = vmatpush1.msra.mxu0 %v3417
  %3463 = vmatprep.subr.mxu0 0.0
  %3464 = vmatpush1.msra.mxu0 %v3416
  %3465 = vmatprep.subr.mxu0 0.0
  %3466 = vmatpush1.msra.mxu0 %v3415
  %3467 = vmatprep.subr.mxu0 0.0
  %3468 = vmatpush2.msra.mxu0 0.0
  %3469 = vmatprep.subr.mxu0 0.0
  %3470 = vmatpush2.msra.mxu0 0.0
  %3471 = vmatprep.subr.mxu0 0.0
  %3472 = vmatpush2.msra.mxu0 0.0
  %3473 = vmatprep.subr.mxu0 0.0
  %3474 = vmatpush2.msra.mxu0 0.0
  %3475 = vmatprep.subr.mxu0 0.0
  %3476 = vmatpush2.msra.mxu0 0.0
  %3477 = vmatprep.subr.mxu0 0.0
  %3478 = vmatpush2.msra.mxu0 0.0
  %3479 = vmatprep.subr.mxu0 0.0
  %3480 = vmatpush2.msra.mxu0 0.0
  %3481 = vmatprep.subr.mxu0 0.0
  %3482 = vmatpush2.msra.mxu0 0.0
  %3483 = vmatprep.subr.mxu0 0.0
  %3484 = vmatpush2.msra.mxu0 0.0
  %3485 = vmatprep.subr.mxu0 0.0
  %3486 = vmatpush2.msra.mxu0 0.0
  %3487 = vmatprep.subr.mxu0 0.0
  %3488 = vmatpush2.msra.mxu0 0.0
  %3489 = vmatprep.subr.mxu0 0.0
  %3490 = vmatpush2.msra.mxu0 0.0
  %3491 = vmatprep.subr.mxu0 0.0
  %3492 = vmatpush2.msra.mxu0 %v3434
  %3493 = vmatprep.subr.mxu0 0.0
  %3494 = vmatpush2.msra.mxu0 %v3433
  %3495 = vmatprep.subr.mxu0 0.0
  %3496 = vmatpush2.msra.mxu0 %v3432
  %3497 = vmatprep.subr.mxu0 0.0
  %3498 = vmatpush2.msra.mxu0 %v3431
  %3499 = vmatprep.mubr.f32.mxu0 %v105
  %3500 = vmatmul.mubr.f32.gmra.mxu0 %v38
  %v3501 = vpop.f32.mrf.mxu0
  %v3502 = vadd.f32 0.0, %v3501
  %v3503 = vpop.f32.mrf.mxu0
  %3504 = vmatprep.mubr.f32.mxu0 %v108
  %3505 = vmatmul.mubr.f32.gmra.mxu0 %v40
  %v3506 = vpop.f32.mrf.mxu0
  %v3507 = vadd.f32 0.0, %v3506
  %v3508 = vpop.f32.mrf.mxu0
  %3509 = vmatprep.mubr.f32.mxu0 %v111
  %3510 = vmatmul.mubr.f32.gmra.mxu0 %v42
  %v3511 = vpop.f32.mrf.mxu0
  %v3512 = vadd.f32 0.0, %v3511
  %v3513 = vpop.f32.mrf.mxu0
  %3514 = vmatprep.mubr.f32.mxu0 %v114
  %3515 = vmatmul.mubr.f32.gmra.mxu0 %v44
  %v3516 = vpop.f32.mrf.mxu0
  %v3517 = vadd.f32 0.0, %v3516
  %v3518 = vpop.f32.mrf.mxu0
  %3519 = vmatprep.mubr.f32.mxu0 %v117
  %3520 = vmatmul.mubr.f32.gmra.mxu0 %v46
  %v3521 = vpop.f32.mrf.mxu0
  %v3522 = vadd.f32 0.0, %v3521
  %v3523 = vpop.f32.mrf.mxu0
  %3524 = vmatprep.mubr.f32.mxu0 %v120
  %3525 = vmatmul.mubr.f32.gmra.mxu0 %v48
  %v3526 = vpop.f32.mrf.mxu0
  %v3527 = vadd.f32 0.0, %v3526
  %v3528 = vpop.f32.mrf.mxu0
  %3529 = vmatprep.mubr.f32.mxu0 %v123
  %3530 = vmatmul.mubr.f32.gmra.mxu0 %v50
  %v3531 = vpop.f32.mrf.mxu0
  %v3532 = vadd.f32 0.0, %v3531
  %v3533 = vpop.f32.mrf.mxu0
  %3534 = vmatprep.mubr.f32.mxu0 %v126
  %3535 = vmatmul.mubr.f32.gmra.mxu0 %v52
  %v3536 = vpop.f32.mrf.mxu0
  %v3537 = vadd.f32 0.0, %v3536
  %v3538 = vpop.f32.mrf.mxu0
  %3539 = vmatprep.mubr.f32.mxu0 %v129
  %3540 = vmatmul.mubr.f32.gmra.mxu0 %v54
  %v3541 = vpop.f32.mrf.mxu0
  %v3542 = vadd.f32 0.0, %v3541
  %v3543 = vpop.f32.mrf.mxu0
  %3544 = vmatprep.mubr.f32.mxu0 %v132
  %3545 = vmatmul.mubr.f32.gmra.mxu0 %v56
  %v3546 = vpop.f32.mrf.mxu0
  %v3547 = vadd.f32 0.0, %v3546
  %v3548 = vpop.f32.mrf.mxu0
  %3549 = vmatprep.mubr.f32.mxu0 %v135
  %3550 = vmatmul.mubr.f32.gmra.mxu0 %v58
  %v3551 = vpop.f32.mrf.mxu0
  %v3552 = vadd.f32 0.0, %v3551
  %v3553 = vpop.f32.mrf.mxu0
  %3554 = vmatprep.mubr.f32.mxu0 %v138
  %3555 = vmatmul.mubr.f32.gmra.mxu0 %v60
  %v3556 = vpop.f32.mrf.mxu0
  %v3557 = vadd.f32 0.0, %v3556
  %v3558 = vpop.f32.mrf.mxu0
  %3559 = vmatprep.mubr.f32.mxu0 %v141
  %3560 = vmatmul.mubr.f32.gmra.mxu0 %v62
  %v3561 = vpop.f32.mrf.mxu0
  %v3562 = vadd.f32 0.0, %v3561
  %v3563 = vpop.f32.mrf.mxu0
  %3564 = vmatprep.mubr.f32.mxu0 %v144
  %3565 = vmatmul.mubr.f32.gmra.mxu0 %v64
  %v3566 = vpop.f32.mrf.mxu0
  %v3567 = vadd.f32 0.0, %v3566
  %v3568 = vpop.f32.mrf.mxu0
  %3569 = vmatprep.mubr.f32.mxu0 %v147
  %3570 = vmatmul.mubr.f32.gmra.mxu0 %v66
  %v3571 = vpop.f32.mrf.mxu0
  %v3572 = vadd.f32 0.0, %v3571
  %v3573 = vpop.f32.mrf.mxu0
  %3574 = vmatprep.mubr.f32.mxu0 %v150
  %3575 = vmatmul.mubr.f32.gmra.mxu0 %v68
  %v3576 = vpop.f32.mrf.mxu0
  %v3577 = vadd.f32 0.0, %v3576
  %v3578 = vpop.f32.mrf.mxu0
  %3579 = vmatprep.mubr.f32.mxu0 %v153
  %3580 = vmatmul.mubr.f32.gmra.mxu0 %v70
  %v3581 = vpop.f32.mrf.mxu0
  %v3582 = vadd.f32 0.0, %v3581
  %v3583 = vpop.f32.mrf.mxu0
  %3584 = vmatprep.mubr.f32.mxu0 %v156
  %3585 = vmatmul.mubr.f32.gmra.mxu0 %v72
  %v3586 = vpop.f32.mrf.mxu0
  %v3587 = vadd.f32 0.0, %v3586
  %v3588 = vpop.f32.mrf.mxu0
  %3589 = vdwg.mxu0
  %v3590 = vld [vmem:[%s0 + $0x220] sm:$0xff]
  %v3591 = vld [vmem:[%s0 + $0x228] sm:$0xff]
  %v3592 = vld [vmem:[%s0 + $0x230] sm:$0xff]
  %v3593 = vld [vmem:[%s0 + $0x238] sm:$0xff]
  %v3594 = vld [vmem:[%s0 + $0x240] sm:$0xff]
  %v3595 = vld [vmem:[%s0 + $0x248] sm:$0xff]
  %v3596 = vld [vmem:[%s0 + $0x250] sm:$0xff]
  %v3597 = vld [vmem:[%s0 + $0x258] sm:$0xff]
  %v3598 = vld [vmem:[%s0 + $0x260] sm:$0xff]
  %v3599 = vld [vmem:[%s0 + $0x268] sm:$0xff]
  %v3600 = vld [vmem:[%s0 + $0x270] sm:$0xff]
  %v3601 = vld [vmem:[%s0 + $0x278] sm:$0xff]
  %v3602 = vld [vmem:[%s0 + $0x280] sm:$0xff]
  %v3603 = vld [vmem:[%s0 + $0x288] sm:$0xff]
  %v3604 = vld [vmem:[%s0 + $0x290] sm:$0xff]
  %v3605 = vld [vmem:[%s0 + $0x298] sm:$0xff]
  %v3606 = vld [vmem:[%s0 + $0x2a0] sm:$0xff]
  %v3607 = vld [vmem:[%s0 + $0x2a8] sm:$0xff]
  %v3608 = vld [vmem:[%s0 + $0x2b0] sm:$0xff]
  %v3609 = vld [vmem:[%s0 + $0x2b8] sm:$0xff]
  %3610 = vmatprep.subr.mxu0 0.0
  %3611 = vmatpush1.msra.mxu0 %v3605
  %3612 = vmatprep.subr.mxu0 0.0
  %3613 = vmatpush1.msra.mxu0 %v3604
  %3614 = vmatprep.subr.mxu0 0.0
  %3615 = vmatpush1.msra.mxu0 %v3603
  %3616 = vmatprep.subr.mxu0 0.0
  %3617 = vmatpush1.msra.mxu0 %v3602
  %3618 = vmatprep.subr.mxu0 0.0
  %3619 = vmatpush1.msra.mxu0 %v3601
  %3620 = vmatprep.subr.mxu0 0.0
  %3621 = vmatpush1.msra.mxu0 %v3600
  %3622 = vmatprep.subr.mxu0 0.0
  %3623 = vmatpush1.msra.mxu0 %v3599
  %3624 = vmatprep.subr.mxu0 0.0
  %3625 = vmatpush1.msra.mxu0 %v3598
  %3626 = vmatprep.subr.mxu0 0.0
  %3627 = vmatpush1.msra.mxu0 %v3597
  %3628 = vmatprep.subr.mxu0 0.0
  %3629 = vmatpush1.msra.mxu0 %v3596
  %3630 = vmatprep.subr.mxu0 0.0
  %3631 = vmatpush1.msra.mxu0 %v3595
  %3632 = vmatprep.subr.mxu0 0.0
  %3633 = vmatpush1.msra.mxu0 %v3594
  %3634 = vmatprep.subr.mxu0 0.0
  %3635 = vmatpush1.msra.mxu0 %v3593
  %3636 = vmatprep.subr.mxu0 0.0
  %3637 = vmatpush1.msra.mxu0 %v3592
  %3638 = vmatprep.subr.mxu0 0.0
  %3639 = vmatpush1.msra.mxu0 %v3591
  %3640 = vmatprep.subr.mxu0 0.0
  %3641 = vmatpush1.msra.mxu0 %v3590
  %3642 = vmatprep.subr.mxu0 0.0
  %3643 = vmatpush2.msra.mxu0 0.0
  %3644 = vmatprep.subr.mxu0 0.0
  %3645 = vmatpush2.msra.mxu0 0.0
  %3646 = vmatprep.subr.mxu0 0.0
  %3647 = vmatpush2.msra.mxu0 0.0
  %3648 = vmatprep.subr.mxu0 0.0
  %3649 = vmatpush2.msra.mxu0 0.0
  %3650 = vmatprep.subr.mxu0 0.0
  %3651 = vmatpush2.msra.mxu0 0.0
  %3652 = vmatprep.subr.mxu0 0.0
  %3653 = vmatpush2.msra.mxu0 0.0
  %3654 = vmatprep.subr.mxu0 0.0
  %3655 = vmatpush2.msra.mxu0 0.0
  %3656 = vmatprep.subr.mxu0 0.0
  %3657 = vmatpush2.msra.mxu0 0.0
  %3658 = vmatprep.subr.mxu0 0.0
  %3659 = vmatpush2.msra.mxu0 0.0
  %3660 = vmatprep.subr.mxu0 0.0
  %3661 = vmatpush2.msra.mxu0 0.0
  %3662 = vmatprep.subr.mxu0 0.0
  %3663 = vmatpush2.msra.mxu0 0.0
  %3664 = vmatprep.subr.mxu0 0.0
  %3665 = vmatpush2.msra.mxu0 0.0
  %3666 = vmatprep.subr.mxu0 0.0
  %3667 = vmatpush2.msra.mxu0 %v3609
  %3668 = vmatprep.subr.mxu0 0.0
  %3669 = vmatpush2.msra.mxu0 %v3608
  %3670 = vmatprep.subr.mxu0 0.0
  %3671 = vmatpush2.msra.mxu0 %v3607
  %3672 = vmatprep.subr.mxu0 0.0
  %3673 = vmatpush2.msra.mxu0 %v3606
  %3674 = vmatprep.mubr.f32.mxu0 %v105
  %3675 = vmatmul.mubr.f32.gmra.mxu0 %v38
  %v3676 = vpop.f32.mrf.mxu0
  %v3677 = vadd.f32 0.0, %v3676
  %v3678 = vpop.f32.mrf.mxu0
  %3679 = vmatprep.mubr.f32.mxu0 %v108
  %3680 = vmatmul.mubr.f32.gmra.mxu0 %v40
  %v3681 = vpop.f32.mrf.mxu0
  %v3682 = vadd.f32 0.0, %v3681
  %v3683 = vpop.f32.mrf.mxu0
  %3684 = vmatprep.mubr.f32.mxu0 %v111
  %3685 = vmatmul.mubr.f32.gmra.mxu0 %v42
  %v3686 = vpop.f32.mrf.mxu0
  %v3687 = vadd.f32 0.0, %v3686
  %v3688 = vpop.f32.mrf.mxu0
  %3689 = vmatprep.mubr.f32.mxu0 %v114
  %3690 = vmatmul.mubr.f32.gmra.mxu0 %v44
  %v3691 = vpop.f32.mrf.mxu0
  %v3692 = vadd.f32 0.0, %v3691
  %v3693 = vpop.f32.mrf.mxu0
  %3694 = vmatprep.mubr.f32.mxu0 %v117
  %3695 = vmatmul.mubr.f32.gmra.mxu0 %v46
  %v3696 = vpop.f32.mrf.mxu0
  %v3697 = vadd.f32 0.0, %v3696
  %v3698 = vpop.f32.mrf.mxu0
  %3699 = vmatprep.mubr.f32.mxu0 %v120
  %3700 = vmatmul.mubr.f32.gmra.mxu0 %v48
  %v3701 = vpop.f32.mrf.mxu0
  %v3702 = vadd.f32 0.0, %v3701
  %v3703 = vpop.f32.mrf.mxu0
  %3704 = vmatprep.mubr.f32.mxu0 %v123
  %3705 = vmatmul.mubr.f32.gmra.mxu0 %v50
  %v3706 = vpop.f32.mrf.mxu0
  %v3707 = vadd.f32 0.0, %v3706
  %v3708 = vpop.f32.mrf.mxu0
  %3709 = vmatprep.mubr.f32.mxu0 %v126
  %3710 = vmatmul.mubr.f32.gmra.mxu0 %v52
  %v3711 = vpop.f32.mrf.mxu0
  %v3712 = vadd.f32 0.0, %v3711
  %v3713 = vpop.f32.mrf.mxu0
  %3714 = vmatprep.mubr.f32.mxu0 %v129
  %3715 = vmatmul.mubr.f32.gmra.mxu0 %v54
  %v3716 = vpop.f32.mrf.mxu0
  %v3717 = vadd.f32 0.0, %v3716
  %v3718 = vpop.f32.mrf.mxu0
  %3719 = vmatprep.mubr.f32.mxu0 %v132
  %3720 = vmatmul.mubr.f32.gmra.mxu0 %v56
  %v3721 = vpop.f32.mrf.mxu0
  %v3722 = vadd.f32 0.0, %v3721
  %v3723 = vpop.f32.mrf.mxu0
  %3724 = vmatprep.mubr.f32.mxu0 %v135
  %3725 = vmatmul.mubr.f32.gmra.mxu0 %v58
  %v3726 = vpop.f32.mrf.mxu0
  %v3727 = vadd.f32 0.0, %v3726
  %v3728 = vpop.f32.mrf.mxu0
  %3729 = vmatprep.mubr.f32.mxu0 %v138
  %3730 = vmatmul.mubr.f32.gmra.mxu0 %v60
  %v3731 = vpop.f32.mrf.mxu0
  %v3732 = vadd.f32 0.0, %v3731
  %v3733 = vpop.f32.mrf.mxu0
  %3734 = vmatprep.mubr.f32.mxu0 %v141
  %3735 = vmatmul.mubr.f32.gmra.mxu0 %v62
  %v3736 = vpop.f32.mrf.mxu0
  %v3737 = vadd.f32 0.0, %v3736
  %v3738 = vpop.f32.mrf.mxu0
  %3739 = vmatprep.mubr.f32.mxu0 %v144
  %3740 = vmatmul.mubr.f32.gmra.mxu0 %v64
  %v3741 = vpop.f32.mrf.mxu0
  %v3742 = vadd.f32 0.0, %v3741
  %v3743 = vpop.f32.mrf.mxu0
  %3744 = vmatprep.mubr.f32.mxu0 %v147
  %3745 = vmatmul.mubr.f32.gmra.mxu0 %v66
  %v3746 = vpop.f32.mrf.mxu0
  %v3747 = vadd.f32 0.0, %v3746
  %v3748 = vpop.f32.mrf.mxu0
  %3749 = vmatprep.mubr.f32.mxu0 %v150
  %3750 = vmatmul.mubr.f32.gmra.mxu0 %v68
  %v3751 = vpop.f32.mrf.mxu0
  %v3752 = vadd.f32 0.0, %v3751
  %v3753 = vpop.f32.mrf.mxu0
  %3754 = vmatprep.mubr.f32.mxu0 %v153
  %3755 = vmatmul.mubr.f32.gmra.mxu0 %v70
  %v3756 = vpop.f32.mrf.mxu0
  %v3757 = vadd.f32 0.0, %v3756
  %v3758 = vpop.f32.mrf.mxu0
  %3759 = vmatprep.mubr.f32.mxu0 %v156
  %3760 = vmatmul.mubr.f32.gmra.mxu0 %v72
  %v3761 = vpop.f32.mrf.mxu0
  %v3762 = vadd.f32 0.0, %v3761
  %v3763 = vpop.f32.mrf.mxu0
  %3764 = vdwg.mxu0
  %v3765 = vmax.f32 %v3502, %v3547
  %v3766 = vmax.f32 %v3507, %v3552
  %v3767 = vmax.f32 %v3512, %v3557
  %v3768 = vmax.f32 %v3517, %v3562
  %v3769 = vmax.f32 %v3522, %v3567
  %v3770 = vmax.f32 %v3527, %v3572
  %v3771 = vmax.f32 %v3532, %v3577
  %v3772 = vmax.f32 %v3537, %v3582
  %v3773 = vmax.f32 %v3542, %v3587
  %v3774 = vmax.f32 %v3677, %v3722
  %v3775 = vmax.f32 %v3682, %v3727
  %v3776 = vmax.f32 %v3687, %v3732
  %v3777 = vmax.f32 %v3692, %v3737
  %v3778 = vmax.f32 %v3697, %v3742
  %v3779 = vmax.f32 %v3702, %v3747
  %v3780 = vmax.f32 %v3707, %v3752
  %v3781 = vmax.f32 %v3712, %v3757
  %v3782 = vmax.f32 %v3717, %v3762
  %v3783 = vmax.f32 %v3765, %v3774
  %v3784 = vmax.f32 %v3766, %v3775
  %v3785 = vmax.f32 %v3767, %v3776
  %v3786 = vmax.f32 %v3768, %v3777
  %v3787 = vmax.f32 %v3769, %v3778
  %v3788 = vmax.f32 %v3770, %v3779
  %v3789 = vmax.f32 %v3771, %v3780
  %v3790 = vmax.f32 %v3772, %v3781
  %v3791 = vmax.f32 %v3773, %v3782
  %v3792 = vadd.f32 %v3783, %v518
  %v3793 = vadd.f32 %v3784, %v523
  %v3794 = vadd.f32 %v3785, %v528
  %v3795 = vadd.f32 %v3786, %v533
  %v3796 = vadd.f32 %v3787, %v538
  %v3797 = vadd.f32 %v3788, %v543
  %v3798 = vadd.f32 %v3789, %v548
  %v3799 = vadd.f32 %v3790, %v553
  %v3800 = vadd.f32 %v3791, %v558
  %v3801 = vmax.f32 %v3792, 0.0
  %v3802 = vmax.f32 %v3793, 0.0
  %v3803 = vmax.f32 %v3794, 0.0
  %v3804 = vmax.f32 %v3795, 0.0
  %v3805 = vmax.f32 %v3796, 0.0
  %v3806 = vmax.f32 %v3797, 0.0
  %v3807 = vmax.f32 %v3798, 0.0
  %v3808 = vmax.f32 %v3799, 0.0
  %v3809 = vmax.f32 %v3800, 0.0
  %3810 = vst [vmem:[#allocation2 + $0x240] sm:$0xff] %v3801
  %3811 = vst [vmem:[#allocation2 + $0x248] sm:$0xff] %v3802
  %3812 = vst [vmem:[#allocation2 + $0x250] sm:$0xff] %v3803
  %3813 = vst [vmem:[#allocation2 + $0x258] sm:$0xff] %v3804
  %3814 = vst [vmem:[#allocation2 + $0x260] sm:$0xff] %v3805
  %3815 = vst [vmem:[#allocation2 + $0x268] sm:$0xff] %v3806
  %3816 = vst [vmem:[#allocation2 + $0x270] sm:$0xff] %v3807
  %3817 = vst [vmem:[#allocation2 + $0x278] sm:$0xff] %v3808
  %3818 = vst [vmem:[#allocation2 + $0x280] sm:$0xff] %v3809
  %v3819 = vld [vmem:[%s0 + $0x240] sm:$0xff]
  %v3820 = vld [vmem:[%s0 + $0x248] sm:$0xff]
  %v3821 = vld [vmem:[%s0 + $0x250] sm:$0xff]
  %v3822 = vld [vmem:[%s0 + $0x258] sm:$0xff]
  %v3823 = vld [vmem:[%s0 + $0x260] sm:$0xff]
  %v3824 = vld [vmem:[%s0 + $0x268] sm:$0xff]
  %v3825 = vld [vmem:[%s0 + $0x270] sm:$0xff]
  %v3826 = vld [vmem:[%s0 + $0x278] sm:$0xff]
  %v3827 = vld [vmem:[%s0 + $0x280] sm:$0xff]
  %v3828 = vld [vmem:[%s0 + $0x288] sm:$0xff]
  %v3829 = vld [vmem:[%s0 + $0x290] sm:$0xff]
  %v3830 = vld [vmem:[%s0 + $0x298] sm:$0xff]
  %v3831 = vld [vmem:[%s0 + $0x2a0] sm:$0xff]
  %v3832 = vld [vmem:[%s0 + $0x2a8] sm:$0xff]
  %v3833 = vld [vmem:[%s0 + $0x2b0] sm:$0xff]
  %v3834 = vld [vmem:[%s0 + $0x2b8] sm:$0xff]
  %v3835 = vld [vmem:[%s0 + $0x2c0] sm:$0xff]
  %v3836 = vld [vmem:[%s0 + $0x2c8] sm:$0xff]
  %v3837 = vld [vmem:[%s0 + $0x2d0] sm:$0xff]
  %v3838 = vld [vmem:[%s0 + $0x2d8] sm:$0xff]
  %3839 = vmatprep.subr.mxu0 0.0
  %3840 = vmatpush1.msra.mxu0 %v3834
  %3841 = vmatprep.subr.mxu0 0.0
  %3842 = vmatpush1.msra.mxu0 %v3833
  %3843 = vmatprep.subr.mxu0 0.0
  %3844 = vmatpush1.msra.mxu0 %v3832
  %3845 = vmatprep.subr.mxu0 0.0
  %3846 = vmatpush1.msra.mxu0 %v3831
  %3847 = vmatprep.subr.mxu0 0.0
  %3848 = vmatpush1.msra.mxu0 %v3830
  %3849 = vmatprep.subr.mxu0 0.0
  %3850 = vmatpush1.msra.mxu0 %v3829
  %3851 = vmatprep.subr.mxu0 0.0
  %3852 = vmatpush1.msra.mxu0 %v3828
  %3853 = vmatprep.subr.mxu0 0.0
  %3854 = vmatpush1.msra.mxu0 %v3827
  %3855 = vmatprep.subr.mxu0 0.0
  %3856 = vmatpush1.msra.mxu0 %v3826
  %3857 = vmatprep.subr.mxu0 0.0
  %3858 = vmatpush1.msra.mxu0 %v3825
  %3859 = vmatprep.subr.mxu0 0.0
  %3860 = vmatpush1.msra.mxu0 %v3824
  %3861 = vmatprep.subr.mxu0 0.0
  %3862 = vmatpush1.msra.mxu0 %v3823
  %3863 = vmatprep.subr.mxu0 0.0
  %3864 = vmatpush1.msra.mxu0 %v3822
  %3865 = vmatprep.subr.mxu0 0.0
  %3866 = vmatpush1.msra.mxu0 %v3821
  %3867 = vmatprep.subr.mxu0 0.0
  %3868 = vmatpush1.msra.mxu0 %v3820
  %3869 = vmatprep.subr.mxu0 0.0
  %3870 = vmatpush1.msra.mxu0 %v3819
  %3871 = vmatprep.subr.mxu0 0.0
  %3872 = vmatpush2.msra.mxu0 0.0
  %3873 = vmatprep.subr.mxu0 0.0
  %3874 = vmatpush2.msra.mxu0 0.0
  %3875 = vmatprep.subr.mxu0 0.0
  %3876 = vmatpush2.msra.mxu0 0.0
  %3877 = vmatprep.subr.mxu0 0.0
  %3878 = vmatpush2.msra.mxu0 0.0
  %3879 = vmatprep.subr.mxu0 0.0
  %3880 = vmatpush2.msra.mxu0 0.0
  %3881 = vmatprep.subr.mxu0 0.0
  %3882 = vmatpush2.msra.mxu0 0.0
  %3883 = vmatprep.subr.mxu0 0.0
  %3884 = vmatpush2.msra.mxu0 0.0
  %3885 = vmatprep.subr.mxu0 0.0
  %3886 = vmatpush2.msra.mxu0 0.0
  %3887 = vmatprep.subr.mxu0 0.0
  %3888 = vmatpush2.msra.mxu0 0.0
  %3889 = vmatprep.subr.mxu0 0.0
  %3890 = vmatpush2.msra.mxu0 0.0
  %3891 = vmatprep.subr.mxu0 0.0
  %3892 = vmatpush2.msra.mxu0 0.0
  %3893 = vmatprep.subr.mxu0 0.0
  %3894 = vmatpush2.msra.mxu0 0.0
  %3895 = vmatprep.subr.mxu0 0.0
  %3896 = vmatpush2.msra.mxu0 %v3838
  %3897 = vmatprep.subr.mxu0 0.0
  %3898 = vmatpush2.msra.mxu0 %v3837
  %3899 = vmatprep.subr.mxu0 0.0
  %3900 = vmatpush2.msra.mxu0 %v3836
  %3901 = vmatprep.subr.mxu0 0.0
  %3902 = vmatpush2.msra.mxu0 %v3835
  %3903 = vmatprep.mubr.f32.mxu0 %v105
  %3904 = vmatmul.mubr.f32.gmra.mxu0 %v38
  %v3905 = vpop.f32.mrf.mxu0
  %v3906 = vadd.f32 0.0, %v3905
  %v3907 = vpop.f32.mrf.mxu0
  %3908 = vmatprep.mubr.f32.mxu0 %v108
  %3909 = vmatmul.mubr.f32.gmra.mxu0 %v40
  %v3910 = vpop.f32.mrf.mxu0
  %v3911 = vadd.f32 0.0, %v3910
  %v3912 = vpop.f32.mrf.mxu0
  %3913 = vmatprep.mubr.f32.mxu0 %v111
  %3914 = vmatmul.mubr.f32.gmra.mxu0 %v42
  %v3915 = vpop.f32.mrf.mxu0
  %v3916 = vadd.f32 0.0, %v3915
  %v3917 = vpop.f32.mrf.mxu0
  %3918 = vmatprep.mubr.f32.mxu0 %v114
  %3919 = vmatmul.mubr.f32.gmra.mxu0 %v44
  %v3920 = vpop.f32.mrf.mxu0
  %v3921 = vadd.f32 0.0, %v3920
  %v3922 = vpop.f32.mrf.mxu0
  %3923 = vmatprep.mubr.f32.mxu0 %v117
  %3924 = vmatmul.mubr.f32.gmra.mxu0 %v46
  %v3925 = vpop.f32.mrf.mxu0
  %v3926 = vadd.f32 0.0, %v3925
  %v3927 = vpop.f32.mrf.mxu0
  %3928 = vmatprep.mubr.f32.mxu0 %v120
  %3929 = vmatmul.mubr.f32.gmra.mxu0 %v48
  %v3930 = vpop.f32.mrf.mxu0
  %v3931 = vadd.f32 0.0, %v3930
  %v3932 = vpop.f32.mrf.mxu0
  %3933 = vmatprep.mubr.f32.mxu0 %v123
  %3934 = vmatmul.mubr.f32.gmra.mxu0 %v50
  %v3935 = vpop.f32.mrf.mxu0
  %v3936 = vadd.f32 0.0, %v3935
  %v3937 = vpop.f32.mrf.mxu0
  %3938 = vmatprep.mubr.f32.mxu0 %v126
  %3939 = vmatmul.mubr.f32.gmra.mxu0 %v52
  %v3940 = vpop.f32.mrf.mxu0
  %v3941 = vadd.f32 0.0, %v3940
  %v3942 = vpop.f32.mrf.mxu0
  %3943 = vmatprep.mubr.f32.mxu0 %v129
  %3944 = vmatmul.mubr.f32.gmra.mxu0 %v54
  %v3945 = vpop.f32.mrf.mxu0
  %v3946 = vadd.f32 0.0, %v3945
  %v3947 = vpop.f32.mrf.mxu0
  %3948 = vmatprep.mubr.f32.mxu0 %v132
  %3949 = vmatmul.mubr.f32.gmra.mxu0 %v56
  %v3950 = vpop.f32.mrf.mxu0
  %v3951 = vadd.f32 0.0, %v3950
  %v3952 = vpop.f32.mrf.mxu0
  %3953 = vmatprep.mubr.f32.mxu0 %v135
  %3954 = vmatmul.mubr.f32.gmra.mxu0 %v58
  %v3955 = vpop.f32.mrf.mxu0
  %v3956 = vadd.f32 0.0, %v3955
  %v3957 = vpop.f32.mrf.mxu0
  %3958 = vmatprep.mubr.f32.mxu0 %v138
  %3959 = vmatmul.mubr.f32.gmra.mxu0 %v60
  %v3960 = vpop.f32.mrf.mxu0
  %v3961 = vadd.f32 0.0, %v3960
  %v3962 = vpop.f32.mrf.mxu0
  %3963 = vmatprep.mubr.f32.mxu0 %v141
  %3964 = vmatmul.mubr.f32.gmra.mxu0 %v62
  %v3965 = vpop.f32.mrf.mxu0
  %v3966 = vadd.f32 0.0, %v3965
  %v3967 = vpop.f32.mrf.mxu0
  %3968 = vmatprep.mubr.f32.mxu0 %v144
  %3969 = vmatmul.mubr.f32.gmra.mxu0 %v64
  %v3970 = vpop.f32.mrf.mxu0
  %v3971 = vadd.f32 0.0, %v3970
  %v3972 = vpop.f32.mrf.mxu0
  %3973 = vmatprep.mubr.f32.mxu0 %v147
  %3974 = vmatmul.mubr.f32.gmra.mxu0 %v66
  %v3975 = vpop.f32.mrf.mxu0
  %v3976 = vadd.f32 0.0, %v3975
  %v3977 = vpop.f32.mrf.mxu0
  %3978 = vmatprep.mubr.f32.mxu0 %v150
  %3979 = vmatmul.mubr.f32.gmra.mxu0 %v68
  %v3980 = vpop.f32.mrf.mxu0
  %v3981 = vadd.f32 0.0, %v3980
  %v3982 = vpop.f32.mrf.mxu0
  %3983 = vmatprep.mubr.f32.mxu0 %v153
  %3984 = vmatmul.mubr.f32.gmra.mxu0 %v70
  %v3985 = vpop.f32.mrf.mxu0
  %v3986 = vadd.f32 0.0, %v3985
  %v3987 = vpop.f32.mrf.mxu0
  %3988 = vmatprep.mubr.f32.mxu0 %v156
  %3989 = vmatmul.mubr.f32.gmra.mxu0 %v72
  %v3990 = vpop.f32.mrf.mxu0
  %v3991 = vadd.f32 0.0, %v3990
  %v3992 = vpop.f32.mrf.mxu0
  %3993 = vdwg.mxu0
  %v3994 = vld [vmem:[%s0 + $0x260] sm:$0xff]
  %v3995 = vld [vmem:[%s0 + $0x268] sm:$0xff]
  %v3996 = vld [vmem:[%s0 + $0x270] sm:$0xff]
  %v3997 = vld [vmem:[%s0 + $0x278] sm:$0xff]
  %v3998 = vld [vmem:[%s0 + $0x280] sm:$0xff]
  %v3999 = vld [vmem:[%s0 + $0x288] sm:$0xff]
  %v4000 = vld [vmem:[%s0 + $0x290] sm:$0xff]
  %v4001 = vld [vmem:[%s0 + $0x298] sm:$0xff]
  %v4002 = vld [vmem:[%s0 + $0x2a0] sm:$0xff]
  %v4003 = vld [vmem:[%s0 + $0x2a8] sm:$0xff]
  %v4004 = vld [vmem:[%s0 + $0x2b0] sm:$0xff]
  %v4005 = vld [vmem:[%s0 + $0x2b8] sm:$0xff]
  %v4006 = vld [vmem:[%s0 + $0x2c0] sm:$0xff]
  %v4007 = vld [vmem:[%s0 + $0x2c8] sm:$0xff]
  %v4008 = vld [vmem:[%s0 + $0x2d0] sm:$0xff]
  %v4009 = vld [vmem:[%s0 + $0x2d8] sm:$0xff]
  %v4010 = vld [vmem:[%s0 + $0x2e0] sm:$0xff]
  %v4011 = vld [vmem:[%s0 + $0x2e8] sm:$0xff]
  %v4012 = vld [vmem:[%s0 + $0x2f0] sm:$0xff]
  %v4013 = vld [vmem:[%s0 + $0x2f8] sm:$0xff]
  %4014 = vmatprep.subr.mxu0 0.0
  %4015 = vmatpush1.msra.mxu0 %v4009
  %4016 = vmatprep.subr.mxu0 0.0
  %4017 = vmatpush1.msra.mxu0 %v4008
  %4018 = vmatprep.subr.mxu0 0.0
  %4019 = vmatpush1.msra.mxu0 %v4007
  %4020 = vmatprep.subr.mxu0 0.0
  %4021 = vmatpush1.msra.mxu0 %v4006
  %4022 = vmatprep.subr.mxu0 0.0
  %4023 = vmatpush1.msra.mxu0 %v4005
  %4024 = vmatprep.subr.mxu0 0.0
  %4025 = vmatpush1.msra.mxu0 %v4004
  %4026 = vmatprep.subr.mxu0 0.0
  %4027 = vmatpush1.msra.mxu0 %v4003
  %4028 = vmatprep.subr.mxu0 0.0
  %4029 = vmatpush1.msra.mxu0 %v4002
  %4030 = vmatprep.subr.mxu0 0.0
  %4031 = vmatpush1.msra.mxu0 %v4001
  %4032 = vmatprep.subr.mxu0 0.0
  %4033 = vmatpush1.msra.mxu0 %v4000
  %4034 = vmatprep.subr.mxu0 0.0
  %4035 = vmatpush1.msra.mxu0 %v3999
  %4036 = vmatprep.subr.mxu0 0.0
  %4037 = vmatpush1.msra.mxu0 %v3998
  %4038 = vmatprep.subr.mxu0 0.0
  %4039 = vmatpush1.msra.mxu0 %v3997
  %4040 = vmatprep.subr.mxu0 0.0
  %4041 = vmatpush1.msra.mxu0 %v3996
  %4042 = vmatprep.subr.mxu0 0.0
  %4043 = vmatpush1.msra.mxu0 %v3995
  %4044 = vmatprep.subr.mxu0 0.0
  %4045 = vmatpush1.msra.mxu0 %v3994
  %4046 = vmatprep.subr.mxu0 0.0
  %4047 = vmatpush2.msra.mxu0 0.0
  %4048 = vmatprep.subr.mxu0 0.0
  %4049 = vmatpush2.msra.mxu0 0.0
  %4050 = vmatprep.subr.mxu0 0.0
  %4051 = vmatpush2.msra.mxu0 0.0
  %4052 = vmatprep.subr.mxu0 0.0
  %4053 = vmatpush2.msra.mxu0 0.0
  %4054 = vmatprep.subr.mxu0 0.0
  %4055 = vmatpush2.msra.mxu0 0.0
  %4056 = vmatprep.subr.mxu0 0.0
  %4057 = vmatpush2.msra.mxu0 0.0
  %4058 = vmatprep.subr.mxu0 0.0
  %4059 = vmatpush2.msra.mxu0 0.0
  %4060 = vmatprep.subr.mxu0 0.0
  %4061 = vmatpush2.msra.mxu0 0.0
  %4062 = vmatprep.subr.mxu0 0.0
  %4063 = vmatpush2.msra.mxu0 0.0
  %4064 = vmatprep.subr.mxu0 0.0
  %4065 = vmatpush2.msra.mxu0 0.0
  %4066 = vmatprep.subr.mxu0 0.0
  %4067 = vmatpush2.msra.mxu0 0.0
  %4068 = vmatprep.subr.mxu0 0.0
  %4069 = vmatpush2.msra.mxu0 0.0
  %4070 = vmatprep.subr.mxu0 0.0
  %4071 = vmatpush2.msra.mxu0 %v4013
  %4072 = vmatprep.subr.mxu0 0.0
  %4073 = vmatpush2.msra.mxu0 %v4012
  %4074 = vmatprep.subr.mxu0 0.0
  %4075 = vmatpush2.msra.mxu0 %v4011
  %4076 = vmatprep.subr.mxu0 0.0
  %4077 = vmatpush2.msra.mxu0 %v4010
  %4078 = vmatprep.mubr.f32.mxu0 %v105
  %4079 = vmatmul.mubr.f32.gmra.mxu0 %v38
  %v4080 = vpop.f32.mrf.mxu0
  %v4081 = vadd.f32 0.0, %v4080
  %v4082 = vpop.f32.mrf.mxu0
  %4083 = vmatprep.mubr.f32.mxu0 %v108
  %4084 = vmatmul.mubr.f32.gmra.mxu0 %v40
  %v4085 = vpop.f32.mrf.mxu0
  %v4086 = vadd.f32 0.0, %v4085
  %v4087 = vpop.f32.mrf.mxu0
  %4088 = vmatprep.mubr.f32.mxu0 %v111
  %4089 = vmatmul.mubr.f32.gmra.mxu0 %v42
  %v4090 = vpop.f32.mrf.mxu0
  %v4091 = vadd.f32 0.0, %v4090
  %v4092 = vpop.f32.mrf.mxu0
  %4093 = vmatprep.mubr.f32.mxu0 %v114
  %4094 = vmatmul.mubr.f32.gmra.mxu0 %v44
  %v4095 = vpop.f32.mrf.mxu0
  %v4096 = vadd.f32 0.0, %v4095
  %v4097 = vpop.f32.mrf.mxu0
  %4098 = vmatprep.mubr.f32.mxu0 %v117
  %4099 = vmatmul.mubr.f32.gmra.mxu0 %v46
  %v4100 = vpop.f32.mrf.mxu0
  %v4101 = vadd.f32 0.0, %v4100
  %v4102 = vpop.f32.mrf.mxu0
  %4103 = vmatprep.mubr.f32.mxu0 %v120
  %4104 = vmatmul.mubr.f32.gmra.mxu0 %v48
  %v4105 = vpop.f32.mrf.mxu0
  %v4106 = vadd.f32 0.0, %v4105
  %v4107 = vpop.f32.mrf.mxu0
  %4108 = vmatprep.mubr.f32.mxu0 %v123
  %4109 = vmatmul.mubr.f32.gmra.mxu0 %v50
  %v4110 = vpop.f32.mrf.mxu0
  %v4111 = vadd.f32 0.0, %v4110
  %v4112 = vpop.f32.mrf.mxu0
  %4113 = vmatprep.mubr.f32.mxu0 %v126
  %4114 = vmatmul.mubr.f32.gmra.mxu0 %v52
  %v4115 = vpop.f32.mrf.mxu0
  %v4116 = vadd.f32 0.0, %v4115
  %v4117 = vpop.f32.mrf.mxu0
  %4118 = vmatprep.mubr.f32.mxu0 %v129
  %4119 = vmatmul.mubr.f32.gmra.mxu0 %v54
  %v4120 = vpop.f32.mrf.mxu0
  %v4121 = vadd.f32 0.0, %v4120
  %v4122 = vpop.f32.mrf.mxu0
  %4123 = vmatprep.mubr.f32.mxu0 %v132
  %4124 = vmatmul.mubr.f32.gmra.mxu0 %v56
  %v4125 = vpop.f32.mrf.mxu0
  %v4126 = vadd.f32 0.0, %v4125
  %v4127 = vpop.f32.mrf.mxu0
  %4128 = vmatprep.mubr.f32.mxu0 %v135
  %4129 = vmatmul.mubr.f32.gmra.mxu0 %v58
  %v4130 = vpop.f32.mrf.mxu0
  %v4131 = vadd.f32 0.0, %v4130
  %v4132 = vpop.f32.mrf.mxu0
  %4133 = vmatprep.mubr.f32.mxu0 %v138
  %4134 = vmatmul.mubr.f32.gmra.mxu0 %v60
  %v4135 = vpop.f32.mrf.mxu0
  %v4136 = vadd.f32 0.0, %v4135
  %v4137 = vpop.f32.mrf.mxu0
  %4138 = vmatprep.mubr.f32.mxu0 %v141
  %4139 = vmatmul.mubr.f32.gmra.mxu0 %v62
  %v4140 = vpop.f32.mrf.mxu0
  %v4141 = vadd.f32 0.0, %v4140
  %v4142 = vpop.f32.mrf.mxu0
  %4143 = vmatprep.mubr.f32.mxu0 %v144
  %4144 = vmatmul.mubr.f32.gmra.mxu0 %v64
  %v4145 = vpop.f32.mrf.mxu0
  %v4146 = vadd.f32 0.0, %v4145
  %v4147 = vpop.f32.mrf.mxu0
  %4148 = vmatprep.mubr.f32.mxu0 %v147
  %4149 = vmatmul.mubr.f32.gmra.mxu0 %v66
  %v4150 = vpop.f32.mrf.mxu0
  %v4151 = vadd.f32 0.0, %v4150
  %v4152 = vpop.f32.mrf.mxu0
  %4153 = vmatprep.mubr.f32.mxu0 %v150
  %4154 = vmatmul.mubr.f32.gmra.mxu0 %v68
  %v4155 = vpop.f32.mrf.mxu0
  %v4156 = vadd.f32 0.0, %v4155
  %v4157 = vpop.f32.mrf.mxu0
  %4158 = vmatprep.mubr.f32.mxu0 %v153
  %4159 = vmatmul.mubr.f32.gmra.mxu0 %v70
  %v4160 = vpop.f32.mrf.mxu0
  %v4161 = vadd.f32 0.0, %v4160
  %v4162 = vpop.f32.mrf.mxu0
  %4163 = vmatprep.mubr.f32.mxu0 %v156
  %4164 = vmatmul.mubr.f32.gmra.mxu0 %v72
  %v4165 = vpop.f32.mrf.mxu0
  %v4166 = vadd.f32 0.0, %v4165
  %v4167 = vpop.f32.mrf.mxu0
  %4168 = vdwg.mxu0
  %v4169 = vmax.f32 %v3906, %v3951
  %v4170 = vmax.f32 %v3911, %v3956
  %v4171 = vmax.f32 %v3916, %v3961
  %v4172 = vmax.f32 %v3921, %v3966
  %v4173 = vmax.f32 %v3926, %v3971
  %v4174 = vmax.f32 %v3931, %v3976
  %v4175 = vmax.f32 %v3936, %v3981
  %v4176 = vmax.f32 %v3941, %v3986
  %v4177 = vmax.f32 %v3946, %v3991
  %v4178 = vmax.f32 %v4081, %v4126
  %v4179 = vmax.f32 %v4086, %v4131
  %v4180 = vmax.f32 %v4091, %v4136
  %v4181 = vmax.f32 %v4096, %v4141
  %v4182 = vmax.f32 %v4101, %v4146
  %v4183 = vmax.f32 %v4106, %v4151
  %v4184 = vmax.f32 %v4111, %v4156
  %v4185 = vmax.f32 %v4116, %v4161
  %v4186 = vmax.f32 %v4121, %v4166
  %v4187 = vmax.f32 %v4169, %v4178
  %v4188 = vmax.f32 %v4170, %v4179
  %v4189 = vmax.f32 %v4171, %v4180
  %v4190 = vmax.f32 %v4172, %v4181
  %v4191 = vmax.f32 %v4173, %v4182
  %v4192 = vmax.f32 %v4174, %v4183
  %v4193 = vmax.f32 %v4175, %v4184
  %v4194 = vmax.f32 %v4176, %v4185
  %v4195 = vmax.f32 %v4177, %v4186
  %v4196 = vadd.f32 %v4187, %v518
  %v4197 = vadd.f32 %v4188, %v523
  %v4198 = vadd.f32 %v4189, %v528
  %v4199 = vadd.f32 %v4190, %v533
  %v4200 = vadd.f32 %v4191, %v538
  %v4201 = vadd.f32 %v4192, %v543
  %v4202 = vadd.f32 %v4193, %v548
  %v4203 = vadd.f32 %v4194, %v553
  %v4204 = vadd.f32 %v4195, %v558
  %v4205 = vmax.f32 %v4196, 0.0
  %v4206 = vmax.f32 %v4197, 0.0
  %v4207 = vmax.f32 %v4198, 0.0
  %v4208 = vmax.f32 %v4199, 0.0
  %v4209 = vmax.f32 %v4200, 0.0
  %v4210 = vmax.f32 %v4201, 0.0
  %v4211 = vmax.f32 %v4202, 0.0
  %v4212 = vmax.f32 %v4203, 0.0
  %v4213 = vmax.f32 %v4204, 0.0
  %4214 = vst [vmem:[#allocation2 + $0x288] sm:$0xff] %v4205
  %4215 = vst [vmem:[#allocation2 + $0x290] sm:$0xff] %v4206
  %4216 = vst [vmem:[#allocation2 + $0x298] sm:$0xff] %v4207
  %4217 = vst [vmem:[#allocation2 + $0x2a0] sm:$0xff] %v4208
  %4218 = vst [vmem:[#allocation2 + $0x2a8] sm:$0xff] %v4209
  %4219 = vst [vmem:[#allocation2 + $0x2b0] sm:$0xff] %v4210
  %4220 = vst [vmem:[#allocation2 + $0x2b8] sm:$0xff] %v4211
  %4221 = vst [vmem:[#allocation2 + $0x2c0] sm:$0xff] %v4212
  %4222 = vst [vmem:[#allocation2 + $0x2c8] sm:$0xff] %v4213
  %v4223 = vld [vmem:[%s0 + $0x280] sm:$0xff]
  %v4224 = vld [vmem:[%s0 + $0x288] sm:$0xff]
  %v4225 = vld [vmem:[%s0 + $0x290] sm:$0xff]
  %v4226 = vld [vmem:[%s0 + $0x298] sm:$0xff]
  %v4227 = vld [vmem:[%s0 + $0x2a0] sm:$0xff]
  %v4228 = vld [vmem:[%s0 + $0x2a8] sm:$0xff]
  %v4229 = vld [vmem:[%s0 + $0x2b0] sm:$0xff]
  %v4230 = vld [vmem:[%s0 + $0x2b8] sm:$0xff]
  %v4231 = vld [vmem:[%s0 + $0x2c0] sm:$0xff]
  %v4232 = vld [vmem:[%s0 + $0x2c8] sm:$0xff]
  %v4233 = vld [vmem:[%s0 + $0x2d0] sm:$0xff]
  %v4234 = vld [vmem:[%s0 + $0x2d8] sm:$0xff]
  %v4235 = vld [vmem:[%s0 + $0x2e0] sm:$0xff]
  %v4236 = vld [vmem:[%s0 + $0x2e8] sm:$0xff]
  %v4237 = vld [vmem:[%s0 + $0x2f0] sm:$0xff]
  %v4238 = vld [vmem:[%s0 + $0x2f8] sm:$0xff]
  %v4239 = vld [vmem:[%s0 + $0x300] sm:$0xff]
  %v4240 = vld [vmem:[%s0 + $0x308] sm:$0xff]
  %v4241 = vld [vmem:[%s0 + $0x310] sm:$0xff]
  %v4242 = vld [vmem:[%s0 + $0x318] sm:$0xff]
  %4243 = vmatprep.subr.mxu0 0.0
  %4244 = vmatpush1.msra.mxu0 %v4238
  %4245 = vmatprep.subr.mxu0 0.0
  %4246 = vmatpush1.msra.mxu0 %v4237
  %4247 = vmatprep.subr.mxu0 0.0
  %4248 = vmatpush1.msra.mxu0 %v4236
  %4249 = vmatprep.subr.mxu0 0.0
  %4250 = vmatpush1.msra.mxu0 %v4235
  %4251 = vmatprep.subr.mxu0 0.0
  %4252 = vmatpush1.msra.mxu0 %v4234
  %4253 = vmatprep.subr.mxu0 0.0
  %4254 = vmatpush1.msra.mxu0 %v4233
  %4255 = vmatprep.subr.mxu0 0.0
  %4256 = vmatpush1.msra.mxu0 %v4232
  %4257 = vmatprep.subr.mxu0 0.0
  %4258 = vmatpush1.msra.mxu0 %v4231
  %4259 = vmatprep.subr.mxu0 0.0
  %4260 = vmatpush1.msra.mxu0 %v4230
  %4261 = vmatprep.subr.mxu0 0.0
  %4262 = vmatpush1.msra.mxu0 %v4229
  %4263 = vmatprep.subr.mxu0 0.0
  %4264 = vmatpush1.msra.mxu0 %v4228
  %4265 = vmatprep.subr.mxu0 0.0
  %4266 = vmatpush1.msra.mxu0 %v4227
  %4267 = vmatprep.subr.mxu0 0.0
  %4268 = vmatpush1.msra.mxu0 %v4226
  %4269 = vmatprep.subr.mxu0 0.0
  %4270 = vmatpush1.msra.mxu0 %v4225
  %4271 = vmatprep.subr.mxu0 0.0
  %4272 = vmatpush1.msra.mxu0 %v4224
  %4273 = vmatprep.subr.mxu0 0.0
  %4274 = vmatpush1.msra.mxu0 %v4223
  %4275 = vmatprep.subr.mxu0 0.0
  %4276 = vmatpush2.msra.mxu0 0.0
  %4277 = vmatprep.subr.mxu0 0.0
  %4278 = vmatpush2.msra.mxu0 0.0
  %4279 = vmatprep.subr.mxu0 0.0
  %4280 = vmatpush2.msra.mxu0 0.0
  %4281 = vmatprep.subr.mxu0 0.0
  %4282 = vmatpush2.msra.mxu0 0.0
  %4283 = vmatprep.subr.mxu0 0.0
  %4284 = vmatpush2.msra.mxu0 0.0
  %4285 = vmatprep.subr.mxu0 0.0
  %4286 = vmatpush2.msra.mxu0 0.0
  %4287 = vmatprep.subr.mxu0 0.0
  %4288 = vmatpush2.msra.mxu0 0.0
  %4289 = vmatprep.subr.mxu0 0.0
  %4290 = vmatpush2.msra.mxu0 0.0
  %4291 = vmatprep.subr.mxu0 0.0
  %4292 = vmatpush2.msra.mxu0 0.0
  %4293 = vmatprep.subr.mxu0 0.0
  %4294 = vmatpush2.msra.mxu0 0.0
  %4295 = vmatprep.subr.mxu0 0.0
  %4296 = vmatpush2.msra.mxu0 0.0
  %4297 = vmatprep.subr.mxu0 0.0
  %4298 = vmatpush2.msra.mxu0 0.0
  %4299 = vmatprep.subr.mxu0 0.0
  %4300 = vmatpush2.msra.mxu0 %v4242
  %4301 = vmatprep.subr.mxu0 0.0
  %4302 = vmatpush2.msra.mxu0 %v4241
  %4303 = vmatprep.subr.mxu0 0.0
  %4304 = vmatpush2.msra.mxu0 %v4240
  %4305 = vmatprep.subr.mxu0 0.0
  %4306 = vmatpush2.msra.mxu0 %v4239
  %4307 = vmatprep.mubr.f32.mxu0 %v105
  %4308 = vmatmul.mubr.f32.gmra.mxu0 %v38
  %v4309 = vpop.f32.mrf.mxu0
  %v4310 = vadd.f32 0.0, %v4309
  %v4311 = vpop.f32.mrf.mxu0
  %4312 = vmatprep.mubr.f32.mxu0 %v108
  %4313 = vmatmul.mubr.f32.gmra.mxu0 %v40
  %v4314 = vpop.f32.mrf.mxu0
  %v4315 = vadd.f32 0.0, %v4314
  %v4316 = vpop.f32.mrf.mxu0
  %4317 = vmatprep.mubr.f32.mxu0 %v111
  %4318 = vmatmul.mubr.f32.gmra.mxu0 %v42
  %v4319 = vpop.f32.mrf.mxu0
  %v4320 = vadd.f32 0.0, %v4319
  %v4321 = vpop.f32.mrf.mxu0
  %4322 = vmatprep.mubr.f32.mxu0 %v114
  %4323 = vmatmul.mubr.f32.gmra.mxu0 %v44
  %v4324 = vpop.f32.mrf.mxu0
  %v4325 = vadd.f32 0.0, %v4324
  %v4326 = vpop.f32.mrf.mxu0
  %4327 = vmatprep.mubr.f32.mxu0 %v117
  %4328 = vmatmul.mubr.f32.gmra.mxu0 %v46
  %v4329 = vpop.f32.mrf.mxu0
  %v4330 = vadd.f32 0.0, %v4329
  %v4331 = vpop.f32.mrf.mxu0
  %4332 = vmatprep.mubr.f32.mxu0 %v120
  %4333 = vmatmul.mubr.f32.gmra.mxu0 %v48
  %v4334 = vpop.f32.mrf.mxu0
  %v4335 = vadd.f32 0.0, %v4334
  %v4336 = vpop.f32.mrf.mxu0
  %4337 = vmatprep.mubr.f32.mxu0 %v123
  %4338 = vmatmul.mubr.f32.gmra.mxu0 %v50
  %v4339 = vpop.f32.mrf.mxu0
  %v4340 = vadd.f32 0.0, %v4339
  %v4341 = vpop.f32.mrf.mxu0
  %4342 = vmatprep.mubr.f32.mxu0 %v126
  %4343 = vmatmul.mubr.f32.gmra.mxu0 %v52
  %v4344 = vpop.f32.mrf.mxu0
  %v4345 = vadd.f32 0.0, %v4344
  %v4346 = vpop.f32.mrf.mxu0
  %4347 = vmatprep.mubr.f32.mxu0 %v129
  %4348 = vmatmul.mubr.f32.gmra.mxu0 %v54
  %v4349 = vpop.f32.mrf.mxu0
  %v4350 = vadd.f32 0.0, %v4349
  %v4351 = vpop.f32.mrf.mxu0
  %4352 = vmatprep.mubr.f32.mxu0 %v132
  %4353 = vmatmul.mubr.f32.gmra.mxu0 %v56
  %v4354 = vpop.f32.mrf.mxu0
  %v4355 = vadd.f32 0.0, %v4354
  %v4356 = vpop.f32.mrf.mxu0
  %4357 = vmatprep.mubr.f32.mxu0 %v135
  %4358 = vmatmul.mubr.f32.gmra.mxu0 %v58
  %v4359 = vpop.f32.mrf.mxu0
  %v4360 = vadd.f32 0.0, %v4359
  %v4361 = vpop.f32.mrf.mxu0
  %4362 = vmatprep.mubr.f32.mxu0 %v138
  %4363 = vmatmul.mubr.f32.gmra.mxu0 %v60
  %v4364 = vpop.f32.mrf.mxu0
  %v4365 = vadd.f32 0.0, %v4364
  %v4366 = vpop.f32.mrf.mxu0
  %4367 = vmatprep.mubr.f32.mxu0 %v141
  %4368 = vmatmul.mubr.f32.gmra.mxu0 %v62
  %v4369 = vpop.f32.mrf.mxu0
  %v4370 = vadd.f32 0.0, %v4369
  %v4371 = vpop.f32.mrf.mxu0
  %4372 = vmatprep.mubr.f32.mxu0 %v144
  %4373 = vmatmul.mubr.f32.gmra.mxu0 %v64
  %v4374 = vpop.f32.mrf.mxu0
  %v4375 = vadd.f32 0.0, %v4374
  %v4376 = vpop.f32.mrf.mxu0
  %4377 = vmatprep.mubr.f32.mxu0 %v147
  %4378 = vmatmul.mubr.f32.gmra.mxu0 %v66
  %v4379 = vpop.f32.mrf.mxu0
  %v4380 = vadd.f32 0.0, %v4379
  %v4381 = vpop.f32.mrf.mxu0
  %4382 = vmatprep.mubr.f32.mxu0 %v150
  %4383 = vmatmul.mubr.f32.gmra.mxu0 %v68
  %v4384 = vpop.f32.mrf.mxu0
  %v4385 = vadd.f32 0.0, %v4384
  %v4386 = vpop.f32.mrf.mxu0
  %4387 = vmatprep.mubr.f32.mxu0 %v153
  %4388 = vmatmul.mubr.f32.gmra.mxu0 %v70
  %v4389 = vpop.f32.mrf.mxu0
  %v4390 = vadd.f32 0.0, %v4389
  %v4391 = vpop.f32.mrf.mxu0
  %4392 = vmatprep.mubr.f32.mxu0 %v156
  %4393 = vmatmul.mubr.f32.gmra.mxu0 %v72
  %v4394 = vpop.f32.mrf.mxu0
  %v4395 = vadd.f32 0.0, %v4394
  %v4396 = vpop.f32.mrf.mxu0
  %4397 = vdwg.mxu0
  %v4398 = vld [vmem:[%s0 + $0x2a0] sm:$0xff]
  %v4399 = vld [vmem:[%s0 + $0x2a8] sm:$0xff]
  %v4400 = vld [vmem:[%s0 + $0x2b0] sm:$0xff]
  %v4401 = vld [vmem:[%s0 + $0x2b8] sm:$0xff]
  %v4402 = vld [vmem:[%s0 + $0x2c0] sm:$0xff]
  %v4403 = vld [vmem:[%s0 + $0x2c8] sm:$0xff]
  %v4404 = vld [vmem:[%s0 + $0x2d0] sm:$0xff]
  %v4405 = vld [vmem:[%s0 + $0x2d8] sm:$0xff]
  %v4406 = vld [vmem:[%s0 + $0x2e0] sm:$0xff]
  %v4407 = vld [vmem:[%s0 + $0x2e8] sm:$0xff]
  %v4408 = vld [vmem:[%s0 + $0x2f0] sm:$0xff]
  %v4409 = vld [vmem:[%s0 + $0x2f8] sm:$0xff]
  %v4410 = vld [vmem:[%s0 + $0x300] sm:$0xff]
  %v4411 = vld [vmem:[%s0 + $0x308] sm:$0xff]
  %v4412 = vld [vmem:[%s0 + $0x310] sm:$0xff]
  %v4413 = vld [vmem:[%s0 + $0x318] sm:$0xff]
  %v4414 = vld [vmem:[%s0 + $0x320] sm:$0xff]
  %v4415 = vld [vmem:[%s0 + $0x328] sm:$0xff]
  %v4416 = vld [vmem:[%s0 + $0x330] sm:$0xff]
  %v4417 = vld [vmem:[%s0 + $0x338] sm:$0xff]
  %4418 = vmatprep.subr.mxu0 0.0
  %4419 = vmatpush1.msra.mxu0 %v4413
  %4420 = vmatprep.subr.mxu0 0.0
  %4421 = vmatpush1.msra.mxu0 %v4412
  %4422 = vmatprep.subr.mxu0 0.0
  %4423 = vmatpush1.msra.mxu0 %v4411
  %4424 = vmatprep.subr.mxu0 0.0
  %4425 = vmatpush1.msra.mxu0 %v4410
  %4426 = vmatprep.subr.mxu0 0.0
  %4427 = vmatpush1.msra.mxu0 %v4409
  %4428 = vmatprep.subr.mxu0 0.0
  %4429 = vmatpush1.msra.mxu0 %v4408
  %4430 = vmatprep.subr.mxu0 0.0
  %4431 = vmatpush1.msra.mxu0 %v4407
  %4432 = vmatprep.subr.mxu0 0.0
  %4433 = vmatpush1.msra.mxu0 %v4406
  %4434 = vmatprep.subr.mxu0 0.0
  %4435 = vmatpush1.msra.mxu0 %v4405
  %4436 = vmatprep.subr.mxu0 0.0
  %4437 = vmatpush1.msra.mxu0 %v4404
  %4438 = vmatprep.subr.mxu0 0.0
  %4439 = vmatpush1.msra.mxu0 %v4403
  %4440 = vmatprep.subr.mxu0 0.0
  %4441 = vmatpush1.msra.mxu0 %v4402
  %4442 = vmatprep.subr.mxu0 0.0
  %4443 = vmatpush1.msra.mxu0 %v4401
  %4444 = vmatprep.subr.mxu0 0.0
  %4445 = vmatpush1.msra.mxu0 %v4400
  %4446 = vmatprep.subr.mxu0 0.0
  %4447 = vmatpush1.msra.mxu0 %v4399
  %4448 = vmatprep.subr.mxu0 0.0
  %4449 = vmatpush1.msra.mxu0 %v4398
  %4450 = vmatprep.subr.mxu0 0.0
  %4451 = vmatpush2.msra.mxu0 0.0
  %4452 = vmatprep.subr.mxu0 0.0
  %4453 = vmatpush2.msra.mxu0 0.0
  %4454 = vmatprep.subr.mxu0 0.0
  %4455 = vmatpush2.msra.mxu0 0.0
  %4456 = vmatprep.subr.mxu0 0.0
  %4457 = vmatpush2.msra.mxu0 0.0
  %4458 = vmatprep.subr.mxu0 0.0
  %4459 = vmatpush2.msra.mxu0 0.0
  %4460 = vmatprep.subr.mxu0 0.0
  %4461 = vmatpush2.msra.mxu0 0.0
  %4462 = vmatprep.subr.mxu0 0.0
  %4463 = vmatpush2.msra.mxu0 0.0
  %4464 = vmatprep.subr.mxu0 0.0
  %4465 = vmatpush2.msra.mxu0 0.0
  %4466 = vmatprep.subr.mxu0 0.0
  %4467 = vmatpush2.msra.mxu0 0.0
  %4468 = vmatprep.subr.mxu0 0.0
  %4469 = vmatpush2.msra.mxu0 0.0
  %4470 = vmatprep.subr.mxu0 0.0
  %4471 = vmatpush2.msra.mxu0 0.0
  %4472 = vmatprep.subr.mxu0 0.0
  %4473 = vmatpush2.msra.mxu0 0.0
  %4474 = vmatprep.subr.mxu0 0.0
  %4475 = vmatpush2.msra.mxu0 %v4417
  %4476 = vmatprep.subr.mxu0 0.0
  %4477 = vmatpush2.msra.mxu0 %v4416
  %4478 = vmatprep.subr.mxu0 0.0
  %4479 = vmatpush2.msra.mxu0 %v4415
  %4480 = vmatprep.subr.mxu0 0.0
  %4481 = vmatpush2.msra.mxu0 %v4414
  %4482 = vmatprep.mubr.f32.mxu0 %v105
  %4483 = vmatmul.mubr.f32.gmra.mxu0 %v38
  %v4484 = vpop.f32.mrf.mxu0
  %v4485 = vadd.f32 0.0, %v4484
  %v4486 = vpop.f32.mrf.mxu0
  %4487 = vmatprep.mubr.f32.mxu0 %v108
  %4488 = vmatmul.mubr.f32.gmra.mxu0 %v40
  %v4489 = vpop.f32.mrf.mxu0
  %v4490 = vadd.f32 0.0, %v4489
  %v4491 = vpop.f32.mrf.mxu0
  %4492 = vmatprep.mubr.f32.mxu0 %v111
  %4493 = vmatmul.mubr.f32.gmra.mxu0 %v42
  %v4494 = vpop.f32.mrf.mxu0
  %v4495 = vadd.f32 0.0, %v4494
  %v4496 = vpop.f32.mrf.mxu0
  %4497 = vmatprep.mubr.f32.mxu0 %v114
  %4498 = vmatmul.mubr.f32.gmra.mxu0 %v44
  %v4499 = vpop.f32.mrf.mxu0
  %v4500 = vadd.f32 0.0, %v4499
  %v4501 = vpop.f32.mrf.mxu0
  %4502 = vmatprep.mubr.f32.mxu0 %v117
  %4503 = vmatmul.mubr.f32.gmra.mxu0 %v46
  %v4504 = vpop.f32.mrf.mxu0
  %v4505 = vadd.f32 0.0, %v4504
  %v4506 = vpop.f32.mrf.mxu0
  %4507 = vmatprep.mubr.f32.mxu0 %v120
  %4508 = vmatmul.mubr.f32.gmra.mxu0 %v48
  %v4509 = vpop.f32.mrf.mxu0
  %v4510 = vadd.f32 0.0, %v4509
  %v4511 = vpop.f32.mrf.mxu0
  %4512 = vmatprep.mubr.f32.mxu0 %v123
  %4513 = vmatmul.mubr.f32.gmra.mxu0 %v50
  %v4514 = vpop.f32.mrf.mxu0
  %v4515 = vadd.f32 0.0, %v4514
  %v4516 = vpop.f32.mrf.mxu0
  %4517 = vmatprep.mubr.f32.mxu0 %v126
  %4518 = vmatmul.mubr.f32.gmra.mxu0 %v52
  %v4519 = vpop.f32.mrf.mxu0
  %v4520 = vadd.f32 0.0, %v4519
  %v4521 = vpop.f32.mrf.mxu0
  %4522 = vmatprep.mubr.f32.mxu0 %v129
  %4523 = vmatmul.mubr.f32.gmra.mxu0 %v54
  %v4524 = vpop.f32.mrf.mxu0
  %v4525 = vadd.f32 0.0, %v4524
  %v4526 = vpop.f32.mrf.mxu0
  %4527 = vmatprep.mubr.f32.mxu0 %v132
  %4528 = vmatmul.mubr.f32.gmra.mxu0 %v56
  %v4529 = vpop.f32.mrf.mxu0
  %v4530 = vadd.f32 0.0, %v4529
  %v4531 = vpop.f32.mrf.mxu0
  %4532 = vmatprep.mubr.f32.mxu0 %v135
  %4533 = vmatmul.mubr.f32.gmra.mxu0 %v58
  %v4534 = vpop.f32.mrf.mxu0
  %v4535 = vadd.f32 0.0, %v4534
  %v4536 = vpop.f32.mrf.mxu0
  %4537 = vmatprep.mubr.f32.mxu0 %v138
  %4538 = vmatmul.mubr.f32.gmra.mxu0 %v60
  %v4539 = vpop.f32.mrf.mxu0
  %v4540 = vadd.f32 0.0, %v4539
  %v4541 = vpop.f32.mrf.mxu0
  %4542 = vmatprep.mubr.f32.mxu0 %v141
  %4543 = vmatmul.mubr.f32.gmra.mxu0 %v62
  %v4544 = vpop.f32.mrf.mxu0
  %v4545 = vadd.f32 0.0, %v4544
  %v4546 = vpop.f32.mrf.mxu0
  %4547 = vmatprep.mubr.f32.mxu0 %v144
  %4548 = vmatmul.mubr.f32.gmra.mxu0 %v64
  %v4549 = vpop.f32.mrf.mxu0
  %v4550 = vadd.f32 0.0, %v4549
  %v4551 = vpop.f32.mrf.mxu0
  %4552 = vmatprep.mubr.f32.mxu0 %v147
  %4553 = vmatmul.mubr.f32.gmra.mxu0 %v66
  %v4554 = vpop.f32.mrf.mxu0
  %v4555 = vadd.f32 0.0, %v4554
  %v4556 = vpop.f32.mrf.mxu0
  %4557 = vmatprep.mubr.f32.mxu0 %v150
  %4558 = vmatmul.mubr.f32.gmra.mxu0 %v68
  %v4559 = vpop.f32.mrf.mxu0
  %v4560 = vadd.f32 0.0, %v4559
  %v4561 = vpop.f32.mrf.mxu0
  %4562 = vmatprep.mubr.f32.mxu0 %v153
  %4563 = vmatmul.mubr.f32.gmra.mxu0 %v70
  %v4564 = vpop.f32.mrf.mxu0
  %v4565 = vadd.f32 0.0, %v4564
  %v4566 = vpop.f32.mrf.mxu0
  %4567 = vmatprep.mubr.f32.mxu0 %v156
  %4568 = vmatmul.mubr.f32.gmra.mxu0 %v72
  %v4569 = vpop.f32.mrf.mxu0
  %v4570 = vadd.f32 0.0, %v4569
  %v4571 = vpop.f32.mrf.mxu0
  %4572 = vdwg.mxu0
  %v4573 = vmax.f32 %v4310, %v4355
  %v4574 = vmax.f32 %v4315, %v4360
  %v4575 = vmax.f32 %v4320, %v4365
  %v4576 = vmax.f32 %v4325, %v4370
  %v4577 = vmax.f32 %v4330, %v4375
  %v4578 = vmax.f32 %v4335, %v4380
  %v4579 = vmax.f32 %v4340, %v4385
  %v4580 = vmax.f32 %v4345, %v4390
  %v4581 = vmax.f32 %v4350, %v4395
  %v4582 = vmax.f32 %v4485, %v4530
  %v4583 = vmax.f32 %v4490, %v4535
  %v4584 = vmax.f32 %v4495, %v4540
  %v4585 = vmax.f32 %v4500, %v4545
  %v4586 = vmax.f32 %v4505, %v4550
  %v4587 = vmax.f32 %v4510, %v4555
  %v4588 = vmax.f32 %v4515, %v4560
  %v4589 = vmax.f32 %v4520, %v4565
  %v4590 = vmax.f32 %v4525, %v4570
  %v4591 = vmax.f32 %v4573, %v4582
  %v4592 = vmax.f32 %v4574, %v4583
  %v4593 = vmax.f32 %v4575, %v4584
  %v4594 = vmax.f32 %v4576, %v4585
  %v4595 = vmax.f32 %v4577, %v4586
  %v4596 = vmax.f32 %v4578, %v4587
  %v4597 = vmax.f32 %v4579, %v4588
  %v4598 = vmax.f32 %v4580, %v4589
  %v4599 = vmax.f32 %v4581, %v4590
  %v4600 = vadd.f32 %v4591, %v518
  %v4601 = vadd.f32 %v4592, %v523
  %v4602 = vadd.f32 %v4593, %v528
  %v4603 = vadd.f32 %v4594, %v533
  %v4604 = vadd.f32 %v4595, %v538
  %v4605 = vadd.f32 %v4596, %v543
  %v4606 = vadd.f32 %v4597, %v548
  %v4607 = vadd.f32 %v4598, %v553
  %v4608 = vadd.f32 %v4599, %v558
  %v4609 = vmax.f32 %v4600, 0.0
  %v4610 = vmax.f32 %v4601, 0.0
  %v4611 = vmax.f32 %v4602, 0.0
  %v4612 = vmax.f32 %v4603, 0.0
  %v4613 = vmax.f32 %v4604, 0.0
  %v4614 = vmax.f32 %v4605, 0.0
  %v4615 = vmax.f32 %v4606, 0.0
  %v4616 = vmax.f32 %v4607, 0.0
  %v4617 = vmax.f32 %v4608, 0.0
  %4618 = vst [vmem:[#allocation2 + $0x2d0] sm:$0xff] %v4609
  %4619 = vst [vmem:[#allocation2 + $0x2d8] sm:$0xff] %v4610
  %4620 = vst [vmem:[#allocation2 + $0x2e0] sm:$0xff] %v4611
  %4621 = vst [vmem:[#allocation2 + $0x2e8] sm:$0xff] %v4612
  %4622 = vst [vmem:[#allocation2 + $0x2f0] sm:$0xff] %v4613
  %4623 = vst [vmem:[#allocation2 + $0x2f8] sm:$0xff] %v4614
  %4624 = vst [vmem:[#allocation2 + $0x300] sm:$0xff] %v4615
  %4625 = vst [vmem:[#allocation2 + $0x308] sm:$0xff] %v4616
  %4626 = vst [vmem:[#allocation2 + $0x310] sm:$0xff] %v4617
  %v4627 = vld [vmem:[%s0 + $0x2c0] sm:$0xff]
  %v4628 = vld [vmem:[%s0 + $0x2c8] sm:$0xff]
  %v4629 = vld [vmem:[%s0 + $0x2d0] sm:$0xff]
  %v4630 = vld [vmem:[%s0 + $0x2d8] sm:$0xff]
  %v4631 = vld [vmem:[%s0 + $0x2e0] sm:$0xff]
  %v4632 = vld [vmem:[%s0 + $0x2e8] sm:$0xff]
  %v4633 = vld [vmem:[%s0 + $0x2f0] sm:$0xff]
  %v4634 = vld [vmem:[%s0 + $0x2f8] sm:$0xff]
  %v4635 = vld [vmem:[%s0 + $0x300] sm:$0xff]
  %v4636 = vld [vmem:[%s0 + $0x308] sm:$0xff]
  %v4637 = vld [vmem:[%s0 + $0x310] sm:$0xff]
  %v4638 = vld [vmem:[%s0 + $0x318] sm:$0xff]
  %v4639 = vld [vmem:[%s0 + $0x320] sm:$0xff]
  %v4640 = vld [vmem:[%s0 + $0x328] sm:$0xff]
  %v4641 = vld [vmem:[%s0 + $0x330] sm:$0xff]
  %v4642 = vld [vmem:[%s0 + $0x338] sm:$0xff]
  %v4643 = vld [vmem:[%s0 + $0x340] sm:$0xff]
  %v4644 = vld [vmem:[%s0 + $0x348] sm:$0xff]
  %v4645 = vld [vmem:[%s0 + $0x350] sm:$0xff]
  %v4646 = vld [vmem:[%s0 + $0x358] sm:$0xff]
  %4647 = vmatprep.subr.mxu0 0.0
  %4648 = vmatpush1.msra.mxu0 %v4642
  %4649 = vmatprep.subr.mxu0 0.0
  %4650 = vmatpush1.msra.mxu0 %v4641
  %4651 = vmatprep.subr.mxu0 0.0
  %4652 = vmatpush1.msra.mxu0 %v4640
  %4653 = vmatprep.subr.mxu0 0.0
  %4654 = vmatpush1.msra.mxu0 %v4639
  %4655 = vmatprep.subr.mxu0 0.0
  %4656 = vmatpush1.msra.mxu0 %v4638
  %4657 = vmatprep.subr.mxu0 0.0
  %4658 = vmatpush1.msra.mxu0 %v4637
  %4659 = vmatprep.subr.mxu0 0.0
  %4660 = vmatpush1.msra.mxu0 %v4636
  %4661 = vmatprep.subr.mxu0 0.0
  %4662 = vmatpush1.msra.mxu0 %v4635
  %4663 = vmatprep.subr.mxu0 0.0
  %4664 = vmatpush1.msra.mxu0 %v4634
  %4665 = vmatprep.subr.mxu0 0.0
  %4666 = vmatpush1.msra.mxu0 %v4633
  %4667 = vmatprep.subr.mxu0 0.0
  %4668 = vmatpush1.msra.mxu0 %v4632
  %4669 = vmatprep.subr.mxu0 0.0
  %4670 = vmatpush1.msra.mxu0 %v4631
  %4671 = vmatprep.subr.mxu0 0.0
  %4672 = vmatpush1.msra.mxu0 %v4630
  %4673 = vmatprep.subr.mxu0 0.0
  %4674 = vmatpush1.msra.mxu0 %v4629
  %4675 = vmatprep.subr.mxu0 0.0
  %4676 = vmatpush1.msra.mxu0 %v4628
  %4677 = vmatprep.subr.mxu0 0.0
  %4678 = vmatpush1.msra.mxu0 %v4627
  %4679 = vmatprep.subr.mxu0 0.0
  %4680 = vmatpush2.msra.mxu0 0.0
  %4681 = vmatprep.subr.mxu0 0.0
  %4682 = vmatpush2.msra.mxu0 0.0
  %4683 = vmatprep.subr.mxu0 0.0
  %4684 = vmatpush2.msra.mxu0 0.0
  %4685 = vmatprep.subr.mxu0 0.0
  %4686 = vmatpush2.msra.mxu0 0.0
  %4687 = vmatprep.subr.mxu0 0.0
  %4688 = vmatpush2.msra.mxu0 0.0
  %4689 = vmatprep.subr.mxu0 0.0
  %4690 = vmatpush2.msra.mxu0 0.0
  %4691 = vmatprep.subr.mxu0 0.0
  %4692 = vmatpush2.msra.mxu0 0.0
  %4693 = vmatprep.subr.mxu0 0.0
  %4694 = vmatpush2.msra.mxu0 0.0
  %4695 = vmatprep.subr.mxu0 0.0
  %4696 = vmatpush2.msra.mxu0 0.0
  %4697 = vmatprep.subr.mxu0 0.0
  %4698 = vmatpush2.msra.mxu0 0.0
  %4699 = vmatprep.subr.mxu0 0.0
  %4700 = vmatpush2.msra.mxu0 0.0
  %4701 = vmatprep.subr.mxu0 0.0
  %4702 = vmatpush2.msra.mxu0 0.0
  %4703 = vmatprep.subr.mxu0 0.0
  %4704 = vmatpush2.msra.mxu0 %v4646
  %4705 = vmatprep.subr.mxu0 0.0
  %4706 = vmatpush2.msra.mxu0 %v4645
  %4707 = vmatprep.subr.mxu0 0.0
  %4708 = vmatpush2.msra.mxu0 %v4644
  %4709 = vmatprep.subr.mxu0 0.0
  %4710 = vmatpush2.msra.mxu0 %v4643
  %4711 = vmatprep.mubr.f32.mxu0 %v105
  %4712 = vmatmul.mubr.f32.gmra.mxu0 %v38
  %v4713 = vpop.f32.mrf.mxu0
  %v4714 = vadd.f32 0.0, %v4713
  %v4715 = vpop.f32.mrf.mxu0
  %4716 = vmatprep.mubr.f32.mxu0 %v108
  %4717 = vmatmul.mubr.f32.gmra.mxu0 %v40
  %v4718 = vpop.f32.mrf.mxu0
  %v4719 = vadd.f32 0.0, %v4718
  %v4720 = vpop.f32.mrf.mxu0
  %4721 = vmatprep.mubr.f32.mxu0 %v111
  %4722 = vmatmul.mubr.f32.gmra.mxu0 %v42
  %v4723 = vpop.f32.mrf.mxu0
  %v4724 = vadd.f32 0.0, %v4723
  %v4725 = vpop.f32.mrf.mxu0
  %4726 = vmatprep.mubr.f32.mxu0 %v114
  %4727 = vmatmul.mubr.f32.gmra.mxu0 %v44
  %v4728 = vpop.f32.mrf.mxu0
  %v4729 = vadd.f32 0.0, %v4728
  %v4730 = vpop.f32.mrf.mxu0
  %4731 = vmatprep.mubr.f32.mxu0 %v117
  %4732 = vmatmul.mubr.f32.gmra.mxu0 %v46
  %v4733 = vpop.f32.mrf.mxu0
  %v4734 = vadd.f32 0.0, %v4733
  %v4735 = vpop.f32.mrf.mxu0
  %4736 = vmatprep.mubr.f32.mxu0 %v120
  %4737 = vmatmul.mubr.f32.gmra.mxu0 %v48
  %v4738 = vpop.f32.mrf.mxu0
  %v4739 = vadd.f32 0.0, %v4738
  %v4740 = vpop.f32.mrf.mxu0
  %4741 = vmatprep.mubr.f32.mxu0 %v123
  %4742 = vmatmul.mubr.f32.gmra.mxu0 %v50
  %v4743 = vpop.f32.mrf.mxu0
  %v4744 = vadd.f32 0.0, %v4743
  %v4745 = vpop.f32.mrf.mxu0
  %4746 = vmatprep.mubr.f32.mxu0 %v126
  %4747 = vmatmul.mubr.f32.gmra.mxu0 %v52
  %v4748 = vpop.f32.mrf.mxu0
  %v4749 = vadd.f32 0.0, %v4748
  %v4750 = vpop.f32.mrf.mxu0
  %4751 = vmatprep.mubr.f32.mxu0 %v129
  %4752 = vmatmul.mubr.f32.gmra.mxu0 %v54
  %v4753 = vpop.f32.mrf.mxu0
  %v4754 = vadd.f32 0.0, %v4753
  %v4755 = vpop.f32.mrf.mxu0
  %4756 = vmatprep.mubr.f32.mxu0 %v132
  %4757 = vmatmul.mubr.f32.gmra.mxu0 %v56
  %v4758 = vpop.f32.mrf.mxu0
  %v4759 = vadd.f32 0.0, %v4758
  %v4760 = vpop.f32.mrf.mxu0
  %4761 = vmatprep.mubr.f32.mxu0 %v135
  %4762 = vmatmul.mubr.f32.gmra.mxu0 %v58
  %v4763 = vpop.f32.mrf.mxu0
  %v4764 = vadd.f32 0.0, %v4763
  %v4765 = vpop.f32.mrf.mxu0
  %4766 = vmatprep.mubr.f32.mxu0 %v138
  %4767 = vmatmul.mubr.f32.gmra.mxu0 %v60
  %v4768 = vpop.f32.mrf.mxu0
  %v4769 = vadd.f32 0.0, %v4768
  %v4770 = vpop.f32.mrf.mxu0
  %4771 = vmatprep.mubr.f32.mxu0 %v141
  %4772 = vmatmul.mubr.f32.gmra.mxu0 %v62
  %v4773 = vpop.f32.mrf.mxu0
  %v4774 = vadd.f32 0.0, %v4773
  %v4775 = vpop.f32.mrf.mxu0
  %4776 = vmatprep.mubr.f32.mxu0 %v144
  %4777 = vmatmul.mubr.f32.gmra.mxu0 %v64
  %v4778 = vpop.f32.mrf.mxu0
  %v4779 = vadd.f32 0.0, %v4778
  %v4780 = vpop.f32.mrf.mxu0
  %4781 = vmatprep.mubr.f32.mxu0 %v147
  %4782 = vmatmul.mubr.f32.gmra.mxu0 %v66
  %v4783 = vpop.f32.mrf.mxu0
  %v4784 = vadd.f32 0.0, %v4783
  %v4785 = vpop.f32.mrf.mxu0
  %4786 = vmatprep.mubr.f32.mxu0 %v150
  %4787 = vmatmul.mubr.f32.gmra.mxu0 %v68
  %v4788 = vpop.f32.mrf.mxu0
  %v4789 = vadd.f32 0.0, %v4788
  %v4790 = vpop.f32.mrf.mxu0
  %4791 = vmatprep.mubr.f32.mxu0 %v153
  %4792 = vmatmul.mubr.f32.gmra.mxu0 %v70
  %v4793 = vpop.f32.mrf.mxu0
  %v4794 = vadd.f32 0.0, %v4793
  %v4795 = vpop.f32.mrf.mxu0
  %4796 = vmatprep.mubr.f32.mxu0 %v156
  %4797 = vmatmul.mubr.f32.gmra.mxu0 %v72
  %v4798 = vpop.f32.mrf.mxu0
  %v4799 = vadd.f32 0.0, %v4798
  %v4800 = vpop.f32.mrf.mxu0
  %4801 = vdwg.mxu0
  %v4802 = vld [vmem:[%s0 + $0x2e0] sm:$0xff]
  %v4803 = vld [vmem:[%s0 + $0x2e8] sm:$0xff]
  %v4804 = vld [vmem:[%s0 + $0x2f0] sm:$0xff]
  %v4805 = vld [vmem:[%s0 + $0x2f8] sm:$0xff]
  %v4806 = vld [vmem:[%s0 + $0x300] sm:$0xff]
  %v4807 = vld [vmem:[%s0 + $0x308] sm:$0xff]
  %v4808 = vld [vmem:[%s0 + $0x310] sm:$0xff]
  %v4809 = vld [vmem:[%s0 + $0x318] sm:$0xff]
  %v4810 = vld [vmem:[%s0 + $0x320] sm:$0xff]
  %v4811 = vld [vmem:[%s0 + $0x328] sm:$0xff]
  %v4812 = vld [vmem:[%s0 + $0x330] sm:$0xff]
  %v4813 = vld [vmem:[%s0 + $0x338] sm:$0xff]
  %v4814 = vld [vmem:[%s0 + $0x340] sm:$0xff]
  %v4815 = vld [vmem:[%s0 + $0x348] sm:$0xff]
  %v4816 = vld [vmem:[%s0 + $0x350] sm:$0xff]
  %v4817 = vld [vmem:[%s0 + $0x358] sm:$0xff]
  %v4818 = vld [vmem:[%s0 + $0x360] sm:$0xff]
  %v4819 = vld [vmem:[%s0 + $0x368] sm:$0xff]
  %v4820 = vld [vmem:[%s0 + $0x370] sm:$0xff]
  %v4821 = vld [vmem:[%s0 + $0x378] sm:$0xff]
  %4822 = vmatprep.subr.mxu0 0.0
  %4823 = vmatpush1.msra.mxu0 %v4817
  %4824 = vmatprep.subr.mxu0 0.0
  %4825 = vmatpush1.msra.mxu0 %v4816
  %4826 = vmatprep.subr.mxu0 0.0
  %4827 = vmatpush1.msra.mxu0 %v4815
  %4828 = vmatprep.subr.mxu0 0.0
  %4829 = vmatpush1.msra.mxu0 %v4814
  %4830 = vmatprep.subr.mxu0 0.0
  %4831 = vmatpush1.msra.mxu0 %v4813
  %4832 = vmatprep.subr.mxu0 0.0
  %4833 = vmatpush1.msra.mxu0 %v4812
  %4834 = vmatprep.subr.mxu0 0.0
  %4835 = vmatpush1.msra.mxu0 %v4811
  %4836 = vmatprep.subr.mxu0 0.0
  %4837 = vmatpush1.msra.mxu0 %v4810
  %4838 = vmatprep.subr.mxu0 0.0
  %4839 = vmatpush1.msra.mxu0 %v4809
  %4840 = vmatprep.subr.mxu0 0.0
  %4841 = vmatpush1.msra.mxu0 %v4808
  %4842 = vmatprep.subr.mxu0 0.0
  %4843 = vmatpush1.msra.mxu0 %v4807
  %4844 = vmatprep.subr.mxu0 0.0
  %4845 = vmatpush1.msra.mxu0 %v4806
  %4846 = vmatprep.subr.mxu0 0.0
  %4847 = vmatpush1.msra.mxu0 %v4805
  %4848 = vmatprep.subr.mxu0 0.0
  %4849 = vmatpush1.msra.mxu0 %v4804
  %4850 = vmatprep.subr.mxu0 0.0
  %4851 = vmatpush1.msra.mxu0 %v4803
  %4852 = vmatprep.subr.mxu0 0.0
  %4853 = vmatpush1.msra.mxu0 %v4802
  %4854 = vmatprep.subr.mxu0 0.0
  %4855 = vmatpush2.msra.mxu0 0.0
  %4856 = vmatprep.subr.mxu0 0.0
  %4857 = vmatpush2.msra.mxu0 0.0
  %4858 = vmatprep.subr.mxu0 0.0
  %4859 = vmatpush2.msra.mxu0 0.0
  %4860 = vmatprep.subr.mxu0 0.0
  %4861 = vmatpush2.msra.mxu0 0.0
  %4862 = vmatprep.subr.mxu0 0.0
  %4863 = vmatpush2.msra.mxu0 0.0
  %4864 = vmatprep.subr.mxu0 0.0
  %4865 = vmatpush2.msra.mxu0 0.0
  %4866 = vmatprep.subr.mxu0 0.0
  %4867 = vmatpush2.msra.mxu0 0.0
  %4868 = vmatprep.subr.mxu0 0.0
  %4869 = vmatpush2.msra.mxu0 0.0
  %4870 = vmatprep.subr.mxu0 0.0
  %4871 = vmatpush2.msra.mxu0 0.0
  %4872 = vmatprep.subr.mxu0 0.0
  %4873 = vmatpush2.msra.mxu0 0.0
  %4874 = vmatprep.subr.mxu0 0.0
  %4875 = vmatpush2.msra.mxu0 0.0
  %4876 = vmatprep.subr.mxu0 0.0
  %4877 = vmatpush2.msra.mxu0 0.0
  %4878 = vmatprep.subr.mxu0 0.0
  %4879 = vmatpush2.msra.mxu0 %v4821
  %4880 = vmatprep.subr.mxu0 0.0
  %4881 = vmatpush2.msra.mxu0 %v4820
  %4882 = vmatprep.subr.mxu0 0.0
  %4883 = vmatpush2.msra.mxu0 %v4819
  %4884 = vmatprep.subr.mxu0 0.0
  %4885 = vmatpush2.msra.mxu0 %v4818
  %4886 = vmatprep.mubr.f32.mxu0 %v105
  %4887 = vmatmul.mubr.f32.gmra.mxu0 %v38
  %v4888 = vpop.f32.mrf.mxu0
  %v4889 = vadd.f32 0.0, %v4888
  %v4890 = vpop.f32.mrf.mxu0
  %4891 = vmatprep.mubr.f32.mxu0 %v108
  %4892 = vmatmul.mubr.f32.gmra.mxu0 %v40
  %v4893 = vpop.f32.mrf.mxu0
  %v4894 = vadd.f32 0.0, %v4893
  %v4895 = vpop.f32.mrf.mxu0
  %4896 = vmatprep.mubr.f32.mxu0 %v111
  %4897 = vmatmul.mubr.f32.gmra.mxu0 %v42
  %v4898 = vpop.f32.mrf.mxu0
  %v4899 = vadd.f32 0.0, %v4898
  %v4900 = vpop.f32.mrf.mxu0
  %4901 = vmatprep.mubr.f32.mxu0 %v114
  %4902 = vmatmul.mubr.f32.gmra.mxu0 %v44
  %v4903 = vpop.f32.mrf.mxu0
  %v4904 = vadd.f32 0.0, %v4903
  %v4905 = vpop.f32.mrf.mxu0
  %4906 = vmatprep.mubr.f32.mxu0 %v117
  %4907 = vmatmul.mubr.f32.gmra.mxu0 %v46
  %v4908 = vpop.f32.mrf.mxu0
  %v4909 = vadd.f32 0.0, %v4908
  %v4910 = vpop.f32.mrf.mxu0
  %4911 = vmatprep.mubr.f32.mxu0 %v120
  %4912 = vmatmul.mubr.f32.gmra.mxu0 %v48
  %v4913 = vpop.f32.mrf.mxu0
  %v4914 = vadd.f32 0.0, %v4913
  %v4915 = vpop.f32.mrf.mxu0
  %4916 = vmatprep.mubr.f32.mxu0 %v123
  %4917 = vmatmul.mubr.f32.gmra.mxu0 %v50
  %v4918 = vpop.f32.mrf.mxu0
  %v4919 = vadd.f32 0.0, %v4918
  %v4920 = vpop.f32.mrf.mxu0
  %4921 = vmatprep.mubr.f32.mxu0 %v126
  %4922 = vmatmul.mubr.f32.gmra.mxu0 %v52
  %v4923 = vpop.f32.mrf.mxu0
  %v4924 = vadd.f32 0.0, %v4923
  %v4925 = vpop.f32.mrf.mxu0
  %4926 = vmatprep.mubr.f32.mxu0 %v129
  %4927 = vmatmul.mubr.f32.gmra.mxu0 %v54
  %v4928 = vpop.f32.mrf.mxu0
  %v4929 = vadd.f32 0.0, %v4928
  %v4930 = vpop.f32.mrf.mxu0
  %4931 = vmatprep.mubr.f32.mxu0 %v132
  %4932 = vmatmul.mubr.f32.gmra.mxu0 %v56
  %v4933 = vpop.f32.mrf.mxu0
  %v4934 = vadd.f32 0.0, %v4933
  %v4935 = vpop.f32.mrf.mxu0
  %4936 = vmatprep.mubr.f32.mxu0 %v135
  %4937 = vmatmul.mubr.f32.gmra.mxu0 %v58
  %v4938 = vpop.f32.mrf.mxu0
  %v4939 = vadd.f32 0.0, %v4938
  %v4940 = vpop.f32.mrf.mxu0
  %4941 = vmatprep.mubr.f32.mxu0 %v138
  %4942 = vmatmul.mubr.f32.gmra.mxu0 %v60
  %v4943 = vpop.f32.mrf.mxu0
  %v4944 = vadd.f32 0.0, %v4943
  %v4945 = vpop.f32.mrf.mxu0
  %4946 = vmatprep.mubr.f32.mxu0 %v141
  %4947 = vmatmul.mubr.f32.gmra.mxu0 %v62
  %v4948 = vpop.f32.mrf.mxu0
  %v4949 = vadd.f32 0.0, %v4948
  %v4950 = vpop.f32.mrf.mxu0
  %4951 = vmatprep.mubr.f32.mxu0 %v144
  %4952 = vmatmul.mubr.f32.gmra.mxu0 %v64
  %v4953 = vpop.f32.mrf.mxu0
  %v4954 = vadd.f32 0.0, %v4953
  %v4955 = vpop.f32.mrf.mxu0
  %4956 = vmatprep.mubr.f32.mxu0 %v147
  %4957 = vmatmul.mubr.f32.gmra.mxu0 %v66
  %v4958 = vpop.f32.mrf.mxu0
  %v4959 = vadd.f32 0.0, %v4958
  %v4960 = vpop.f32.mrf.mxu0
  %4961 = vmatprep.mubr.f32.mxu0 %v150
  %4962 = vmatmul.mubr.f32.gmra.mxu0 %v68
  %v4963 = vpop.f32.mrf.mxu0
  %v4964 = vadd.f32 0.0, %v4963
  %v4965 = vpop.f32.mrf.mxu0
  %4966 = vmatprep.mubr.f32.mxu0 %v153
  %4967 = vmatmul.mubr.f32.gmra.mxu0 %v70
  %v4968 = vpop.f32.mrf.mxu0
  %v4969 = vadd.f32 0.0, %v4968
  %v4970 = vpop.f32.mrf.mxu0
  %4971 = vmatprep.mubr.f32.mxu0 %v156
  %4972 = vmatmul.mubr.f32.gmra.mxu0 %v72
  %v4973 = vpop.f32.mrf.mxu0
  %v4974 = vadd.f32 0.0, %v4973
  %v4975 = vpop.f32.mrf.mxu0
  %4976 = vdwg.mxu0
  %v4977 = vmax.f32 %v4714, %v4759
  %v4978 = vmax.f32 %v4719, %v4764
  %v4979 = vmax.f32 %v4724, %v4769
  %v4980 = vmax.f32 %v4729, %v4774
  %v4981 = vmax.f32 %v4734, %v4779
  %v4982 = vmax.f32 %v4739, %v4784
  %v4983 = vmax.f32 %v4744, %v4789
  %v4984 = vmax.f32 %v4749, %v4794
  %v4985 = vmax.f32 %v4754, %v4799
  %v4986 = vmax.f32 %v4889, %v4934
  %v4987 = vmax.f32 %v4894, %v4939
  %v4988 = vmax.f32 %v4899, %v4944
  %v4989 = vmax.f32 %v4904, %v4949
  %v4990 = vmax.f32 %v4909, %v4954
  %v4991 = vmax.f32 %v4914, %v4959
  %v4992 = vmax.f32 %v4919, %v4964
  %v4993 = vmax.f32 %v4924, %v4969
  %v4994 = vmax.f32 %v4929, %v4974
  %v4995 = vmax.f32 %v4977, %v4986
  %v4996 = vmax.f32 %v4978, %v4987
  %v4997 = vmax.f32 %v4979, %v4988
  %v4998 = vmax.f32 %v4980, %v4989
  %v4999 = vmax.f32 %v4981, %v4990
  %v5000 = vmax.f32 %v4982, %v4991
  %v5001 = vmax.f32 %v4983, %v4992
  %v5002 = vmax.f32 %v4984, %v4993
  %v5003 = vmax.f32 %v4985, %v4994
  %v5004 = vadd.f32 %v4995, %v518
  %v5005 = vadd.f32 %v4996, %v523
  %v5006 = vadd.f32 %v4997, %v528
  %v5007 = vadd.f32 %v4998, %v533
  %v5008 = vadd.f32 %v4999, %v538
  %v5009 = vadd.f32 %v5000, %v543
  %v5010 = vadd.f32 %v5001, %v548
  %v5011 = vadd.f32 %v5002, %v553
  %v5012 = vadd.f32 %v5003, %v558
  %v5013 = vmax.f32 %v5004, 0.0
  %v5014 = vmax.f32 %v5005, 0.0
  %v5015 = vmax.f32 %v5006, 0.0
  %v5016 = vmax.f32 %v5007, 0.0
  %v5017 = vmax.f32 %v5008, 0.0
  %v5018 = vmax.f32 %v5009, 0.0
  %v5019 = vmax.f32 %v5010, 0.0
  %v5020 = vmax.f32 %v5011, 0.0
  %v5021 = vmax.f32 %v5012, 0.0
  %5022 = vst [vmem:[#allocation2 + $0x318] sm:$0xff] %v5013
  %5023 = vst [vmem:[#allocation2 + $0x320] sm:$0xff] %v5014
  %5024 = vst [vmem:[#allocation2 + $0x328] sm:$0xff] %v5015
  %5025 = vst [vmem:[#allocation2 + $0x330] sm:$0xff] %v5016
  %5026 = vst [vmem:[#allocation2 + $0x338] sm:$0xff] %v5017
  %5027 = vst [vmem:[#allocation2 + $0x340] sm:$0xff] %v5018
  %5028 = vst [vmem:[#allocation2 + $0x348] sm:$0xff] %v5019
  %5029 = vst [vmem:[#allocation2 + $0x350] sm:$0xff] %v5020
  %5030 = vst [vmem:[#allocation2 + $0x358] sm:$0xff] %v5021
  %v5031 = vld [vmem:[%s3] sm:$0xff]
  %v5032 = vld [vmem:[%s3 + $0x8] sm:$0xff]
  %v5033 = vld [vmem:[%s3 + $0x10] sm:$0xff]
  %v5034 = vld [vmem:[%s3 + $0x18] sm:$0xff]
  %v5035 = vld [vmem:[%s3 + $0x20] sm:$0xff]
  %v5036 = vld [vmem:[%s3 + $0x28] sm:$0xff]
  %v5037 = vld [vmem:[%s3 + $0x30] sm:$0xff]
  %v5038 = vld [vmem:[%s3 + $0x38] sm:$0xff]
  %v5039 = vld [vmem:[%s3 + $0x40] sm:$0xff]
  %v5040 = vld [vmem:[%s3 + $0x48] sm:$0xff]
  %v5041 = vld [vmem:[%s3 + $0x50] sm:$0xff]
  %v5042 = vld [vmem:[%s3 + $0x58] sm:$0xff]
  %v5043 = vld [vmem:[%s3 + $0x60] sm:$0xff]
  %v5044 = vld [vmem:[%s3 + $0x68] sm:$0xff]
  %v5045 = vld [vmem:[%s3 + $0x70] sm:$0xff]
  %v5046 = vld [vmem:[%s3 + $0x78] sm:$0xff]
  %v5047 = vld [vmem:[%s3 + $0x80] sm:$0xff]
  %v5048 = vld [vmem:[%s3 + $0x88] sm:$0xff]
  %v5049 = vld [vmem:[%s3 + $0x90] sm:$0xff]
  %v5050 = vld [vmem:[%s3 + $0x98] sm:$0xff]
  %v5051 = vld [vmem:[%s3 + $0xa0] sm:$0xff]
  %v5052 = vld [vmem:[%s3 + $0xa8] sm:$0xff]
  %v5053 = vld [vmem:[%s3 + $0xb0] sm:$0xff]
  %v5054 = vld [vmem:[%s3 + $0xb8] sm:$0xff]
  %v5055 = vld [vmem:[%s3 + $0xc0] sm:$0xff]
  %v5056 = vld [vmem:[%s3 + $0xc8] sm:$0xff]
  %v5057 = vld [vmem:[%s3 + $0xd0] sm:$0xff]
  %v5058 = vld [vmem:[%s3 + $0xd8] sm:$0xff]
  %v5059 = vld [vmem:[%s3 + $0xe0] sm:$0xff]
  %v5060 = vld [vmem:[%s3 + $0xe8] sm:$0xff]
  %v5061 = vld [vmem:[%s3 + $0xf0] sm:$0xff]
  %v5062 = vld [vmem:[%s3 + $0xf8] sm:$0xff]
  %v5063 = vld [vmem:[%s3 + $0x100] sm:$0xff]
  %v5064 = vld [vmem:[%s3 + $0x108] sm:$0xff]
  %v5065 = vld [vmem:[%s3 + $0x110] sm:$0xff]
  %v5066 = vld [vmem:[%s3 + $0x118] sm:$0xff]
  %v5067 = vld [vmem:[%s3 + $0x120] sm:$0xff]
  %v5068 = vld [vmem:[%s3 + $0x128] sm:$0xff]
  %v5069 = vld [vmem:[%s3 + $0x130] sm:$0xff]
  %v5070 = vld [vmem:[%s3 + $0x138] sm:$0xff]
  %v5071 = vld [vmem:[%s3 + $0x140] sm:$0xff]
  %v5072 = vld [vmem:[%s3 + $0x148] sm:$0xff]
  %v5073 = vld [vmem:[%s3 + $0x150] sm:$0xff]
  %v5074 = vld [vmem:[%s3 + $0x158] sm:$0xff]
  %v5075 = vld [vmem:[%s3 + $0x160] sm:$0xff]
  %v5076 = vld [vmem:[%s3 + $0x168] sm:$0xff]
  %v5077 = vld [vmem:[%s3 + $0x170] sm:$0xff]
  %v5078 = vld [vmem:[%s3 + $0x178] sm:$0xff]
  %v5079 = vld [vmem:[%s4] sm:$0xff]
  %v5080 = vld [vmem:[%s4 + $0x8] sm:$0xff]
  %v5081 = vld [vmem:[#allocation2] sm:$0xff]
  %v5082 = vld [vmem:[#allocation2 + $0x8] sm:$0xff]
  %v5083 = vld [vmem:[#allocation2 + $0x10] sm:$0xff]
  %v5084 = vld [vmem:[#allocation2 + $0x18] sm:$0xff]
  %v5085 = vld [vmem:[#allocation2 + $0x20] sm:$0xff]
  %v5086 = vld [vmem:[#allocation2 + $0x28] sm:$0xff]
  %v5087 = vld [vmem:[#allocation2 + $0x30] sm:$0xff]
  %v5088 = vld [vmem:[#allocation2 + $0x38] sm:$0xff]
  %v5089 = vld [vmem:[#allocation2 + $0x40] sm:$0xff]
  %v5090 = vld [vmem:[#allocation2 + $0x48] sm:$0xff]
  %v5091 = vld [vmem:[#allocation2 + $0x50] sm:$0xff]
  %v5092 = vld [vmem:[#allocation2 + $0x58] sm:$0xff]
  %v5093 = vld [vmem:[#allocation2 + $0x60] sm:$0xff]
  %v5094 = vld [vmem:[#allocation2 + $0x68] sm:$0xff]
  %v5095 = vld [vmem:[#allocation2 + $0x70] sm:$0xff]
  %v5096 = vld [vmem:[#allocation2 + $0x78] sm:$0xff]
  %v5097 = vld [vmem:[#allocation2 + $0x80] sm:$0xff]
  %v5098 = vld [vmem:[#allocation2 + $0x88] sm:$0xff]
  %v5099 = vld [vmem:[#allocation2 + $0x90] sm:$0xff]
  %v5100 = vld [vmem:[#allocation2 + $0x98] sm:$0xff]
  %v5101 = vld [vmem:[#allocation2 + $0xa0] sm:$0xff]
  %v5102 = vld [vmem:[#allocation2 + $0xa8] sm:$0xff]
  %v5103 = vld [vmem:[#allocation2 + $0xb0] sm:$0xff]
  %v5104 = vld [vmem:[#allocation2 + $0xb8] sm:$0xff]
  %v5105 = vld [vmem:[#allocation2 + $0xc0] sm:$0xff]
  %v5106 = vld [vmem:[#allocation2 + $0xc8] sm:$0xff]
  %v5107 = vld [vmem:[#allocation2 + $0xd0] sm:$0xff]
  %v5108 = vld [vmem:[#allocation2 + $0xd8] sm:$0xff]
  %v5109 = vld [vmem:[#allocation2 + $0xe0] sm:$0xff]
  %v5110 = vld [vmem:[#allocation2 + $0xe8] sm:$0xff]
  %v5111 = vld [vmem:[#allocation2 + $0xf0] sm:$0xff]
  %v5112 = vld [vmem:[#allocation2 + $0xf8] sm:$0xff]
  %v5113 = vld [vmem:[#allocation2 + $0x100] sm:$0xff]
  %v5114 = vld [vmem:[#allocation2 + $0x108] sm:$0xff]
  %v5115 = vld [vmem:[#allocation2 + $0x110] sm:$0xff]
  %v5116 = vld [vmem:[#allocation2 + $0x118] sm:$0xff]
  %v5117 = vld [vmem:[#allocation2 + $0x120] sm:$0xff]
  %v5118 = vld [vmem:[#allocation2 + $0x128] sm:$0xff]
  %v5119 = vld [vmem:[#allocation2 + $0x130] sm:$0xff]
  %v5120 = vld [vmem:[#allocation2 + $0x138] sm:$0xff]
  %v5121 = vld [vmem:[#allocation2 + $0x140] sm:$0xff]
  %v5122 = vld [vmem:[#allocation2 + $0x148] sm:$0xff]
  %v5123 = vld [vmem:[#allocation2 + $0x150] sm:$0xff]
  %v5124 = vld [vmem:[#allocation2 + $0x158] sm:$0xff]
  %v5125 = vld [vmem:[#allocation2 + $0x160] sm:$0xff]
  %vm5126 = vcmask 850944
  %v5128 = vsel %vm5126, %v5033, 0
  %v5131 = vsel %vm5126, %v5036, 0
  %v5134 = vsel %vm5126, %v5039, 0
  %v5137 = vsel %vm5126, %v5042, 0
  %v5140 = vsel %vm5126, %v5045, 0
  %v5143 = vsel %vm5126, %v5048, 0
  %v5146 = vsel %vm5126, %v5051, 0
  %v5149 = vsel %vm5126, %v5054, 0
  %v5152 = vsel %vm5126, %v5057, 0
  %v5155 = vsel %vm5126, %v5060, 0
  %v5158 = vsel %vm5126, %v5063, 0
  %v5161 = vsel %vm5126, %v5066, 0
  %v5164 = vsel %vm5126, %v5069, 0
  %v5167 = vsel %vm5126, %v5072, 0
  %v5170 = vsel %vm5126, %v5075, 0
  %v5173 = vsel %vm5126, %v5078, 0
  %5175 = vmatprep.subr.mxu0 0.0
  %5176 = vmatpush1.msra.mxu0 %v5096
  %5177 = vmatprep.subr.mxu0 0.0
  %5178 = vmatpush1.msra.mxu0 %v5095
  %5179 = vmatprep.subr.mxu0 0.0
  %5180 = vmatpush1.msra.mxu0 %v5094
  %5181 = vmatprep.subr.mxu0 0.0
  %5182 = vmatpush1.msra.mxu0 %v5093
  %5183 = vmatprep.subr.mxu0 0.0
  %5184 = vmatpush1.msra.mxu0 %v5092
  %5185 = vmatprep.subr.mxu0 0.0
  %5186 = vmatpush1.msra.mxu0 %v5091
  %5187 = vmatprep.subr.mxu0 0.0
  %5188 = vmatpush1.msra.mxu0 %v5090
  %5189 = vmatprep.subr.mxu0 0.0
  %5190 = vmatpush1.msra.mxu0 %v5089
  %5191 = vmatprep.subr.mxu0 0.0
  %5192 = vmatpush1.msra.mxu0 %v5088
  %5193 = vmatprep.subr.mxu0 0.0
  %5194 = vmatpush1.msra.mxu0 %v5087
  %5195 = vmatprep.subr.mxu0 0.0
  %5196 = vmatpush1.msra.mxu0 %v5086
  %5197 = vmatprep.subr.mxu0 0.0
  %5198 = vmatpush1.msra.mxu0 %v5085
  %5199 = vmatprep.subr.mxu0 0.0
  %5200 = vmatpush1.msra.mxu0 %v5084
  %5201 = vmatprep.subr.mxu0 0.0
  %5202 = vmatpush1.msra.mxu0 %v5083
  %5203 = vmatprep.subr.mxu0 0.0
  %5204 = vmatpush1.msra.mxu0 %v5082
  %5205 = vmatprep.subr.mxu0 0.0
  %5206 = vmatpush1.msra.mxu0 %v5081
  %5207 = vmatprep.subr.mxu0 0.0
  %5208 = vmatpush2.msra.mxu0 %v5112
  %5209 = vmatprep.subr.mxu0 0.0
  %5210 = vmatpush2.msra.mxu0 %v5111
  %5211 = vmatprep.subr.mxu0 0.0
  %5212 = vmatpush2.msra.mxu0 %v5110
  %5213 = vmatprep.subr.mxu0 0.0
  %5214 = vmatpush2.msra.mxu0 %v5109
  %5215 = vmatprep.subr.mxu0 0.0
  %5216 = vmatpush2.msra.mxu0 %v5108
  %5217 = vmatprep.subr.mxu0 0.0
  %5218 = vmatpush2.msra.mxu0 %v5107
  %5219 = vmatprep.subr.mxu0 0.0
  %5220 = vmatpush2.msra.mxu0 %v5106
  %5221 = vmatprep.subr.mxu0 0.0
  %5222 = vmatpush2.msra.mxu0 %v5105
  %5223 = vmatprep.subr.mxu0 0.0
  %5224 = vmatpush2.msra.mxu0 %v5104
  %5225 = vmatprep.subr.mxu0 0.0
  %5226 = vmatpush2.msra.mxu0 %v5103
  %5227 = vmatprep.subr.mxu0 0.0
  %5228 = vmatpush2.msra.mxu0 %v5102
  %5229 = vmatprep.subr.mxu0 0.0
  %5230 = vmatpush2.msra.mxu0 %v5101
  %5231 = vmatprep.subr.mxu0 0.0
  %5232 = vmatpush2.msra.mxu0 %v5100
  %5233 = vmatprep.subr.mxu0 0.0
  %5234 = vmatpush2.msra.mxu0 %v5099
  %5235 = vmatprep.subr.mxu0 0.0
  %5236 = vmatpush2.msra.mxu0 %v5098
  %5237 = vmatprep.subr.mxu0 0.0
  %5238 = vmatpush2.msra.mxu0 %v5097
  %5239 = vmatprep.mubr.f32.mxu0 %v5032
  %5240 = vmatmul.mubr.f32.gmra.mxu0 %v5031
  %v5241 = vpop.f32.mrf.mxu0
  %v5242 = vadd.f32 0.0, %v5241
  %v5243 = vpop.f32.mrf.mxu0
  %5244 = vmatprep.mubr.f32.mxu0 %v5035
  %5245 = vmatmul.mubr.f32.gmra.mxu0 %v5034
  %v5246 = vpop.f32.mrf.mxu0
  %v5247 = vadd.f32 0.0, %v5246
  %v5248 = vpop.f32.mrf.mxu0
  %5249 = vmatprep.mubr.f32.mxu0 %v5038
  %5250 = vmatmul.mubr.f32.gmra.mxu0 %v5037
  %v5251 = vpop.f32.mrf.mxu0
  %v5252 = vadd.f32 0.0, %v5251
  %v5253 = vpop.f32.mrf.mxu0
  %5254 = vmatprep.mubr.f32.mxu0 %v5041
  %5255 = vmatmul.mubr.f32.gmra.mxu0 %v5040
  %v5256 = vpop.f32.mrf.mxu0
  %v5257 = vadd.f32 0.0, %v5256
  %v5258 = vpop.f32.mrf.mxu0
  %5259 = vmatprep.mubr.f32.mxu0 %v5044
  %5260 = vmatmul.mubr.f32.gmra.mxu0 %v5043
  %v5261 = vpop.f32.mrf.mxu0
  %v5262 = vadd.f32 0.0, %v5261
  %v5263 = vpop.f32.mrf.mxu0
  %5264 = vmatprep.mubr.f32.mxu0 %v5047
  %5265 = vmatmul.mubr.f32.gmra.mxu0 %v5046
  %v5266 = vpop.f32.mrf.mxu0
  %v5267 = vadd.f32 0.0, %v5266
  %v5268 = vpop.f32.mrf.mxu0
  %5269 = vmatprep.mubr.f32.mxu0 %v5050
  %5270 = vmatmul.mubr.f32.gmra.mxu0 %v5049
  %v5271 = vpop.f32.mrf.mxu0
  %v5272 = vadd.f32 0.0, %v5271
  %v5273 = vpop.f32.mrf.mxu0
  %5274 = vmatprep.mubr.f32.mxu0 %v5053
  %5275 = vmatmul.mubr.f32.gmra.mxu0 %v5052
  %v5276 = vpop.f32.mrf.mxu0
  %v5277 = vadd.f32 0.0, %v5276
  %v5278 = vpop.f32.mrf.mxu0
  %5279 = vmatprep.mubr.f32.mxu0 %v5056
  %5280 = vmatmul.mubr.f32.gmra.mxu0 %v5055
  %v5281 = vpop.f32.mrf.mxu0
  %v5282 = vadd.f32 0.0, %v5281
  %v5283 = vpop.f32.mrf.mxu0
  %5284 = vmatprep.mubr.f32.mxu0 %v5059
  %5285 = vmatmul.mubr.f32.gmra.mxu0 %v5058
  %v5286 = vpop.f32.mrf.mxu0
  %v5287 = vadd.f32 0.0, %v5286
  %v5288 = vpop.f32.mrf.mxu0
  %5289 = vmatprep.mubr.f32.mxu0 %v5062
  %5290 = vmatmul.mubr.f32.gmra.mxu0 %v5061
  %v5291 = vpop.f32.mrf.mxu0
  %v5292 = vadd.f32 0.0, %v5291
  %v5293 = vpop.f32.mrf.mxu0
  %5294 = vmatprep.mubr.f32.mxu0 %v5065
  %5295 = vmatmul.mubr.f32.gmra.mxu0 %v5064
  %v5296 = vpop.f32.mrf.mxu0
  %v5297 = vadd.f32 0.0, %v5296
  %v5298 = vpop.f32.mrf.mxu0
  %5299 = vmatprep.mubr.f32.mxu0 %v5068
  %5300 = vmatmul.mubr.f32.gmra.mxu0 %v5067
  %v5301 = vpop.f32.mrf.mxu0
  %v5302 = vadd.f32 0.0, %v5301
  %v5303 = vpop.f32.mrf.mxu0
  %5304 = vmatprep.mubr.f32.mxu0 %v5071
  %5305 = vmatmul.mubr.f32.gmra.mxu0 %v5070
  %v5306 = vpop.f32.mrf.mxu0
  %v5307 = vadd.f32 0.0, %v5306
  %v5308 = vpop.f32.mrf.mxu0
  %5309 = vmatprep.mubr.f32.mxu0 %v5074
  %5310 = vmatmul.mubr.f32.gmra.mxu0 %v5073
  %v5311 = vpop.f32.mrf.mxu0
  %v5312 = vadd.f32 0.0, %v5311
  %v5313 = vpop.f32.mrf.mxu0
  %5314 = vmatprep.mubr.f32.mxu0 %v5077
  %5315 = vmatmul.mubr.f32.gmra.mxu0 %v5076
  %v5316 = vpop.f32.mrf.mxu0
  %v5317 = vadd.f32 0.0, %v5316
  %v5318 = vpop.f32.mrf.mxu0
  %5319 = vdwg.mxu0
  %5320 = vmatprep.subr.mxu0 0.0
  %5321 = vmatpush1.msra.mxu0 0.0
  %5322 = vmatprep.subr.mxu0 0.0
  %5323 = vmatpush1.msra.mxu0 0.0
  %5324 = vmatprep.subr.mxu0 0.0
  %5325 = vmatpush1.msra.mxu0 0.0
  %5326 = vmatprep.subr.mxu0 0.0
  %5327 = vmatpush1.msra.mxu0 %v5125
  %5328 = vmatprep.subr.mxu0 0.0
  %5329 = vmatpush1.msra.mxu0 %v5124
  %5330 = vmatprep.subr.mxu0 0.0
  %5331 = vmatpush1.msra.mxu0 %v5123
  %5332 = vmatprep.subr.mxu0 0.0
  %5333 = vmatpush1.msra.mxu0 %v5122
  %5334 = vmatprep.subr.mxu0 0.0
  %5335 = vmatpush1.msra.mxu0 %v5121
  %5336 = vmatprep.subr.mxu0 0.0
  %5337 = vmatpush1.msra.mxu0 %v5120
  %5338 = vmatprep.subr.mxu0 0.0
  %5339 = vmatpush1.msra.mxu0 %v5119
  %5340 = vmatprep.subr.mxu0 0.0
  %5341 = vmatpush1.msra.mxu0 %v5118
  %5342 = vmatprep.subr.mxu0 0.0
  %5343 = vmatpush1.msra.mxu0 %v5117
  %5344 = vmatprep.subr.mxu0 0.0
  %5345 = vmatpush1.msra.mxu0 %v5116
  %5346 = vmatprep.subr.mxu0 0.0
  %5347 = vmatpush1.msra.mxu0 %v5115
  %5348 = vmatprep.subr.mxu0 0.0
  %5349 = vmatpush1.msra.mxu0 %v5114
  %5350 = vmatprep.subr.mxu0 0.0
  %5351 = vmatpush1.msra.mxu0 %v5113
  %5352 = vmatprep.subr.mxu0 0.0
  %5353 = vmatpush2.msra.mxu0 0.0
  %5354 = vmatprep.subr.mxu0 0.0
  %5355 = vmatpush2.msra.mxu0 0.0
  %5356 = vmatprep.subr.mxu0 0.0
  %5357 = vmatpush2.msra.mxu0 0.0
  %5358 = vmatprep.subr.mxu0 0.0
  %5359 = vmatpush2.msra.mxu0 0.0
  %5360 = vmatprep.subr.mxu0 0.0
  %5361 = vmatpush2.msra.mxu0 0.0
  %5362 = vmatprep.subr.mxu0 0.0
  %5363 = vmatpush2.msra.mxu0 0.0
  %5364 = vmatprep.subr.mxu0 0.0
  %5365 = vmatpush2.msra.mxu0 0.0
  %5366 = vmatprep.subr.mxu0 0.0
  %5367 = vmatpush2.msra.mxu0 0.0
  %5368 = vmatprep.subr.mxu0 0.0
  %5369 = vmatpush2.msra.mxu0 0.0
  %5370 = vmatprep.subr.mxu0 0.0
  %5371 = vmatpush2.msra.mxu0 0.0
  %5372 = vmatprep.subr.mxu0 0.0
  %5373 = vmatpush2.msra.mxu0 0.0
  %5374 = vmatprep.subr.mxu0 0.0
  %5375 = vmatpush2.msra.mxu0 0.0
  %5376 = vmatprep.subr.mxu0 0.0
  %5377 = vmatpush2.msra.mxu0 0.0
  %5378 = vmatprep.subr.mxu0 0.0
  %5379 = vmatpush2.msra.mxu0 0.0
  %5380 = vmatprep.subr.mxu0 0.0
  %5381 = vmatpush2.msra.mxu0 0.0
  %5382 = vmatprep.subr.mxu0 0.0
  %5383 = vmatpush2.msra.mxu0 0.0
  %5384 = vmatprep.mubr.f32.mxu0 0.0
  %5385 = vmatmul.mubr.f32.gmra.mxu0 %v5128
  %v5386 = vpop.f32.mrf.mxu0
  %v5387 = vadd.f32 %v5242, %v5386
  %v5388 = vpop.f32.mrf.mxu0
  %5389 = vmatprep.mubr.f32.mxu0 0.0
  %5390 = vmatmul.mubr.f32.gmra.mxu0 %v5131
  %v5391 = vpop.f32.mrf.mxu0
  %v5392 = vadd.f32 %v5247, %v5391
  %v5393 = vpop.f32.mrf.mxu0
  %5394 = vmatprep.mubr.f32.mxu0 0.0
  %5395 = vmatmul.mubr.f32.gmra.mxu0 %v5134
  %v5396 = vpop.f32.mrf.mxu0
  %v5397 = vadd.f32 %v5252, %v5396
  %v5398 = vpop.f32.mrf.mxu0
  %5399 = vmatprep.mubr.f32.mxu0 0.0
  %5400 = vmatmul.mubr.f32.gmra.mxu0 %v5137
  %v5401 = vpop.f32.mrf.mxu0
  %v5402 = vadd.f32 %v5257, %v5401
  %v5403 = vpop.f32.mrf.mxu0
  %5404 = vmatprep.mubr.f32.mxu0 0.0
  %5405 = vmatmul.mubr.f32.gmra.mxu0 %v5140
  %v5406 = vpop.f32.mrf.mxu0
  %v5407 = vadd.f32 %v5262, %v5406
  %v5408 = vpop.f32.mrf.mxu0
  %5409 = vmatprep.mubr.f32.mxu0 0.0
  %5410 = vmatmul.mubr.f32.gmra.mxu0 %v5143
  %v5411 = vpop.f32.mrf.mxu0
  %v5412 = vadd.f32 %v5267, %v5411
  %v5413 = vpop.f32.mrf.mxu0
  %5414 = vmatprep.mubr.f32.mxu0 0.0
  %5415 = vmatmul.mubr.f32.gmra.mxu0 %v5146
  %v5416 = vpop.f32.mrf.mxu0
  %v5417 = vadd.f32 %v5272, %v5416
  %v5418 = vpop.f32.mrf.mxu0
  %5419 = vmatprep.mubr.f32.mxu0 0.0
  %5420 = vmatmul.mubr.f32.gmra.mxu0 %v5149
  %v5421 = vpop.f32.mrf.mxu0
  %v5422 = vadd.f32 %v5277, %v5421
  %v5423 = vpop.f32.mrf.mxu0
  %5424 = vmatprep.mubr.f32.mxu0 0.0
  %5425 = vmatmul.mubr.f32.gmra.mxu0 %v5152
  %v5426 = vpop.f32.mrf.mxu0
  %v5427 = vadd.f32 %v5282, %v5426
  %v5428 = vpop.f32.mrf.mxu0
  %5429 = vmatprep.mubr.f32.mxu0 0.0
  %5430 = vmatmul.mubr.f32.gmra.mxu0 %v5155
  %v5431 = vpop.f32.mrf.mxu0
  %v5432 = vadd.f32 %v5287, %v5431
  %v5433 = vpop.f32.mrf.mxu0
  %5434 = vmatprep.mubr.f32.mxu0 0.0
  %5435 = vmatmul.mubr.f32.gmra.mxu0 %v5158
  %v5436 = vpop.f32.mrf.mxu0
  %v5437 = vadd.f32 %v5292, %v5436
  %v5438 = vpop.f32.mrf.mxu0
  %5439 = vmatprep.mubr.f32.mxu0 0.0
  %5440 = vmatmul.mubr.f32.gmra.mxu0 %v5161
  %v5441 = vpop.f32.mrf.mxu0
  %v5442 = vadd.f32 %v5297, %v5441
  %v5443 = vpop.f32.mrf.mxu0
  %5444 = vmatprep.mubr.f32.mxu0 0.0
  %5445 = vmatmul.mubr.f32.gmra.mxu0 %v5164
  %v5446 = vpop.f32.mrf.mxu0
  %v5447 = vadd.f32 %v5302, %v5446
  %v5448 = vpop.f32.mrf.mxu0
  %5449 = vmatprep.mubr.f32.mxu0 0.0
  %5450 = vmatmul.mubr.f32.gmra.mxu0 %v5167
  %v5451 = vpop.f32.mrf.mxu0
  %v5452 = vadd.f32 %v5307, %v5451
  %v5453 = vpop.f32.mrf.mxu0
  %5454 = vmatprep.mubr.f32.mxu0 0.0
  %5455 = vmatmul.mubr.f32.gmra.mxu0 %v5170
  %v5456 = vpop.f32.mrf.mxu0
  %v5457 = vadd.f32 %v5312, %v5456
  %v5458 = vpop.f32.mrf.mxu0
  %5459 = vmatprep.mubr.f32.mxu0 0.0
  %5460 = vmatmul.mubr.f32.gmra.mxu0 %v5173
  %v5461 = vpop.f32.mrf.mxu0
  %v5462 = vadd.f32 %v5317, %v5461
  %v5463 = vpop.f32.mrf.mxu0
  %5464 = vdwg.mxu0
  %v5465 = vld [vmem:[#allocation2 + $0x48] sm:$0xff]
  %v5466 = vld [vmem:[#allocation2 + $0x50] sm:$0xff]
  %v5467 = vld [vmem:[#allocation2 + $0x58] sm:$0xff]
  %v5468 = vld [vmem:[#allocation2 + $0x60] sm:$0xff]
  %v5469 = vld [vmem:[#allocation2 + $0x68] sm:$0xff]
  %v5470 = vld [vmem:[#allocation2 + $0x70] sm:$0xff]
  %v5471 = vld [vmem:[#allocation2 + $0x78] sm:$0xff]
  %v5472 = vld [vmem:[#allocation2 + $0x80] sm:$0xff]
  %v5473 = vld [vmem:[#allocation2 + $0x88] sm:$0xff]
  %v5474 = vld [vmem:[#allocation2 + $0x90] sm:$0xff]
  %v5475 = vld [vmem:[#allocation2 + $0x98] sm:$0xff]
  %v5476 = vld [vmem:[#allocation2 + $0xa0] sm:$0xff]
  %v5477 = vld [vmem:[#allocation2 + $0xa8] sm:$0xff]
  %v5478 = vld [vmem:[#allocation2 + $0xb0] sm:$0xff]
  %v5479 = vld [vmem:[#allocation2 + $0xb8] sm:$0xff]
  %v5480 = vld [vmem:[#allocation2 + $0xc0] sm:$0xff]
  %v5481 = vld [vmem:[#allocation2 + $0xc8] sm:$0xff]
  %v5482 = vld [vmem:[#allocation2 + $0xd0] sm:$0xff]
  %v5483 = vld [vmem:[#allocation2 + $0xd8] sm:$0xff]
  %v5484 = vld [vmem:[#allocation2 + $0xe0] sm:$0xff]
  %v5485 = vld [vmem:[#allocation2 + $0xe8] sm:$0xff]
  %v5486 = vld [vmem:[#allocation2 + $0xf0] sm:$0xff]
  %v5487 = vld [vmem:[#allocation2 + $0xf8] sm:$0xff]
  %v5488 = vld [vmem:[#allocation2 + $0x100] sm:$0xff]
  %v5489 = vld [vmem:[#allocation2 + $0x108] sm:$0xff]
  %v5490 = vld [vmem:[#allocation2 + $0x110] sm:$0xff]
  %v5491 = vld [vmem:[#allocation2 + $0x118] sm:$0xff]
  %v5492 = vld [vmem:[#allocation2 + $0x120] sm:$0xff]
  %v5493 = vld [vmem:[#allocation2 + $0x128] sm:$0xff]
  %v5494 = vld [vmem:[#allocation2 + $0x130] sm:$0xff]
  %v5495 = vld [vmem:[#allocation2 + $0x138] sm:$0xff]
  %v5496 = vld [vmem:[#allocation2 + $0x140] sm:$0xff]
  %v5497 = vld [vmem:[#allocation2 + $0x148] sm:$0xff]
  %v5498 = vld [vmem:[#allocation2 + $0x150] sm:$0xff]
  %v5499 = vld [vmem:[#allocation2 + $0x158] sm:$0xff]
  %v5500 = vld [vmem:[#allocation2 + $0x160] sm:$0xff]
  %v5501 = vld [vmem:[#allocation2 + $0x168] sm:$0xff]
  %v5502 = vld [vmem:[#allocation2 + $0x170] sm:$0xff]
  %v5503 = vld [vmem:[#allocation2 + $0x178] sm:$0xff]
  %v5504 = vld [vmem:[#allocation2 + $0x180] sm:$0xff]
  %v5505 = vld [vmem:[#allocation2 + $0x188] sm:$0xff]
  %v5506 = vld [vmem:[#allocation2 + $0x190] sm:$0xff]
  %v5507 = vld [vmem:[#allocation2 + $0x198] sm:$0xff]
  %v5508 = vld [vmem:[#allocation2 + $0x1a0] sm:$0xff]
  %v5509 = vld [vmem:[#allocation2 + $0x1a8] sm:$0xff]
  %5510 = vmatprep.subr.mxu0 0.0
  %5511 = vmatpush1.msra.mxu0 %v5480
  %5512 = vmatprep.subr.mxu0 0.0
  %5513 = vmatpush1.msra.mxu0 %v5479
  %5514 = vmatprep.subr.mxu0 0.0
  %5515 = vmatpush1.msra.mxu0 %v5478
  %5516 = vmatprep.subr.mxu0 0.0
  %5517 = vmatpush1.msra.mxu0 %v5477
  %5518 = vmatprep.subr.mxu0 0.0
  %5519 = vmatpush1.msra.mxu0 %v5476
  %5520 = vmatprep.subr.mxu0 0.0
  %5521 = vmatpush1.msra.mxu0 %v5475
  %5522 = vmatprep.subr.mxu0 0.0
  %5523 = vmatpush1.msra.mxu0 %v5474
  %5524 = vmatprep.subr.mxu0 0.0
  %5525 = vmatpush1.msra.mxu0 %v5473
  %5526 = vmatprep.subr.mxu0 0.0
  %5527 = vmatpush1.msra.mxu0 %v5472
  %5528 = vmatprep.subr.mxu0 0.0
  %5529 = vmatpush1.msra.mxu0 %v5471
  %5530 = vmatprep.subr.mxu0 0.0
  %5531 = vmatpush1.msra.mxu0 %v5470
  %5532 = vmatprep.subr.mxu0 0.0
  %5533 = vmatpush1.msra.mxu0 %v5469
  %5534 = vmatprep.subr.mxu0 0.0
  %5535 = vmatpush1.msra.mxu0 %v5468
  %5536 = vmatprep.subr.mxu0 0.0
  %5537 = vmatpush1.msra.mxu0 %v5467
  %5538 = vmatprep.subr.mxu0 0.0
  %5539 = vmatpush1.msra.mxu0 %v5466
  %5540 = vmatprep.subr.mxu0 0.0
  %5541 = vmatpush1.msra.mxu0 %v5465
  %5542 = vmatprep.subr.mxu0 0.0
  %5543 = vmatpush2.msra.mxu0 %v5496
  %5544 = vmatprep.subr.mxu0 0.0
  %5545 = vmatpush2.msra.mxu0 %v5495
  %5546 = vmatprep.subr.mxu0 0.0
  %5547 = vmatpush2.msra.mxu0 %v5494
  %5548 = vmatprep.subr.mxu0 0.0
  %5549 = vmatpush2.msra.mxu0 %v5493
  %5550 = vmatprep.subr.mxu0 0.0
  %5551 = vmatpush2.msra.mxu0 %v5492
  %5552 = vmatprep.subr.mxu0 0.0
  %5553 = vmatpush2.msra.mxu0 %v5491
  %5554 = vmatprep.subr.mxu0 0.0
  %5555 = vmatpush2.msra.mxu0 %v5490
  %5556 = vmatprep.subr.mxu0 0.0
  %5557 = vmatpush2.msra.mxu0 %v5489
  %5558 = vmatprep.subr.mxu0 0.0
  %5559 = vmatpush2.msra.mxu0 %v5488
  %5560 = vmatprep.subr.mxu0 0.0
  %5561 = vmatpush2.msra.mxu0 %v5487
  %5562 = vmatprep.subr.mxu0 0.0
  %5563 = vmatpush2.msra.mxu0 %v5486
  %5564 = vmatprep.subr.mxu0 0.0
  %5565 = vmatpush2.msra.mxu0 %v5485
  %5566 = vmatprep.subr.mxu0 0.0
  %5567 = vmatpush2.msra.mxu0 %v5484
  %5568 = vmatprep.subr.mxu0 0.0
  %5569 = vmatpush2.msra.mxu0 %v5483
  %5570 = vmatprep.subr.mxu0 0.0
  %5571 = vmatpush2.msra.mxu0 %v5482
  %5572 = vmatprep.subr.mxu0 0.0
  %5573 = vmatpush2.msra.mxu0 %v5481
  %5574 = vmatprep.mubr.f32.mxu0 %v5032
  %5575 = vmatmul.mubr.f32.gmra.mxu0 %v5031
  %v5576 = vpop.f32.mrf.mxu0
  %v5577 = vadd.f32 0.0, %v5576
  %v5578 = vpop.f32.mrf.mxu0
  %5579 = vmatprep.mubr.f32.mxu0 %v5035
  %5580 = vmatmul.mubr.f32.gmra.mxu0 %v5034
  %v5581 = vpop.f32.mrf.mxu0
  %v5582 = vadd.f32 0.0, %v5581
  %v5583 = vpop.f32.mrf.mxu0
  %5584 = vmatprep.mubr.f32.mxu0 %v5038
  %5585 = vmatmul.mubr.f32.gmra.mxu0 %v5037
  %v5586 = vpop.f32.mrf.mxu0
  %v5587 = vadd.f32 0.0, %v5586
  %v5588 = vpop.f32.mrf.mxu0
  %5589 = vmatprep.mubr.f32.mxu0 %v5041
  %5590 = vmatmul.mubr.f32.gmra.mxu0 %v5040
  %v5591 = vpop.f32.mrf.mxu0
  %v5592 = vadd.f32 0.0, %v5591
  %v5593 = vpop.f32.mrf.mxu0
  %5594 = vmatprep.mubr.f32.mxu0 %v5044
  %5595 = vmatmul.mubr.f32.gmra.mxu0 %v5043
  %v5596 = vpop.f32.mrf.mxu0
  %v5597 = vadd.f32 0.0, %v5596
  %v5598 = vpop.f32.mrf.mxu0
  %5599 = vmatprep.mubr.f32.mxu0 %v5047
  %5600 = vmatmul.mubr.f32.gmra.mxu0 %v5046
  %v5601 = vpop.f32.mrf.mxu0
  %v5602 = vadd.f32 0.0, %v5601
  %v5603 = vpop.f32.mrf.mxu0
  %5604 = vmatprep.mubr.f32.mxu0 %v5050
  %5605 = vmatmul.mubr.f32.gmra.mxu0 %v5049
  %v5606 = vpop.f32.mrf.mxu0
  %v5607 = vadd.f32 0.0, %v5606
  %v5608 = vpop.f32.mrf.mxu0
  %5609 = vmatprep.mubr.f32.mxu0 %v5053
  %5610 = vmatmul.mubr.f32.gmra.mxu0 %v5052
  %v5611 = vpop.f32.mrf.mxu0
  %v5612 = vadd.f32 0.0, %v5611
  %v5613 = vpop.f32.mrf.mxu0
  %5614 = vmatprep.mubr.f32.mxu0 %v5056
  %5615 = vmatmul.mubr.f32.gmra.mxu0 %v5055
  %v5616 = vpop.f32.mrf.mxu0
  %v5617 = vadd.f32 0.0, %v5616
  %v5618 = vpop.f32.mrf.mxu0
  %5619 = vmatprep.mubr.f32.mxu0 %v5059
  %5620 = vmatmul.mubr.f32.gmra.mxu0 %v5058
  %v5621 = vpop.f32.mrf.mxu0
  %v5622 = vadd.f32 0.0, %v5621
  %v5623 = vpop.f32.mrf.mxu0
  %5624 = vmatprep.mubr.f32.mxu0 %v5062
  %5625 = vmatmul.mubr.f32.gmra.mxu0 %v5061
  %v5626 = vpop.f32.mrf.mxu0
  %v5627 = vadd.f32 0.0, %v5626
  %v5628 = vpop.f32.mrf.mxu0
  %5629 = vmatprep.mubr.f32.mxu0 %v5065
  %5630 = vmatmul.mubr.f32.gmra.mxu0 %v5064
  %v5631 = vpop.f32.mrf.mxu0
  %v5632 = vadd.f32 0.0, %v5631
  %v5633 = vpop.f32.mrf.mxu0
  %5634 = vmatprep.mubr.f32.mxu0 %v5068
  %5635 = vmatmul.mubr.f32.gmra.mxu0 %v5067
  %v5636 = vpop.f32.mrf.mxu0
  %v5637 = vadd.f32 0.0, %v5636
  %v5638 = vpop.f32.mrf.mxu0
  %5639 = vmatprep.mubr.f32.mxu0 %v5071
  %5640 = vmatmul.mubr.f32.gmra.mxu0 %v5070
  %v5641 = vpop.f32.mrf.mxu0
  %v5642 = vadd.f32 0.0, %v5641
  %v5643 = vpop.f32.mrf.mxu0
  %5644 = vmatprep.mubr.f32.mxu0 %v5074
  %5645 = vmatmul.mubr.f32.gmra.mxu0 %v5073
  %v5646 = vpop.f32.mrf.mxu0
  %v5647 = vadd.f32 0.0, %v5646
  %v5648 = vpop.f32.mrf.mxu0
  %5649 = vmatprep.mubr.f32.mxu0 %v5077
  %5650 = vmatmul.mubr.f32.gmra.mxu0 %v5076
  %v5651 = vpop.f32.mrf.mxu0
  %v5652 = vadd.f32 0.0, %v5651
  %v5653 = vpop.f32.mrf.mxu0
  %5654 = vdwg.mxu0
  %5655 = vmatprep.subr.mxu0 0.0
  %5656 = vmatpush1.msra.mxu0 0.0
  %5657 = vmatprep.subr.mxu0 0.0
  %5658 = vmatpush1.msra.mxu0 0.0
  %5659 = vmatprep.subr.mxu0 0.0
  %5660 = vmatpush1.msra.mxu0 0.0
  %5661 = vmatprep.subr.mxu0 0.0
  %5662 = vmatpush1.msra.mxu0 %v5509
  %5663 = vmatprep.subr.mxu0 0.0
  %5664 = vmatpush1.msra.mxu0 %v5508
  %5665 = vmatprep.subr.mxu0 0.0
  %5666 = vmatpush1.msra.mxu0 %v5507
  %5667 = vmatprep.subr.mxu0 0.0
  %5668 = vmatpush1.msra.mxu0 %v5506
  %5669 = vmatprep.subr.mxu0 0.0
  %5670 = vmatpush1.msra.mxu0 %v5505
  %5671 = vmatprep.subr.mxu0 0.0
  %5672 = vmatpush1.msra.mxu0 %v5504
  %5673 = vmatprep.subr.mxu0 0.0
  %5674 = vmatpush1.msra.mxu0 %v5503
  %5675 = vmatprep.subr.mxu0 0.0
  %5676 = vmatpush1.msra.mxu0 %v5502
  %5677 = vmatprep.subr.mxu0 0.0
  %5678 = vmatpush1.msra.mxu0 %v5501
  %5679 = vmatprep.subr.mxu0 0.0
  %5680 = vmatpush1.msra.mxu0 %v5500
  %5681 = vmatprep.subr.mxu0 0.0
  %5682 = vmatpush1.msra.mxu0 %v5499
  %5683 = vmatprep.subr.mxu0 0.0
  %5684 = vmatpush1.msra.mxu0 %v5498
  %5685 = vmatprep.subr.mxu0 0.0
  %5686 = vmatpush1.msra.mxu0 %v5497
  %5687 = vmatprep.subr.mxu0 0.0
  %5688 = vmatpush2.msra.mxu0 0.0
  %5689 = vmatprep.subr.mxu0 0.0
  %5690 = vmatpush2.msra.mxu0 0.0
  %5691 = vmatprep.subr.mxu0 0.0
  %5692 = vmatpush2.msra.mxu0 0.0
  %5693 = vmatprep.subr.mxu0 0.0
  %5694 = vmatpush2.msra.mxu0 0.0
  %5695 = vmatprep.subr.mxu0 0.0
  %5696 = vmatpush2.msra.mxu0 0.0
  %5697 = vmatprep.subr.mxu0 0.0
  %5698 = vmatpush2.msra.mxu0 0.0
  %5699 = vmatprep.subr.mxu0 0.0
  %5700 = vmatpush2.msra.mxu0 0.0
  %5701 = vmatprep.subr.mxu0 0.0
  %5702 = vmatpush2.msra.mxu0 0.0
  %5703 = vmatprep.subr.mxu0 0.0
  %5704 = vmatpush2.msra.mxu0 0.0
  %5705 = vmatprep.subr.mxu0 0.0
  %5706 = vmatpush2.msra.mxu0 0.0
  %5707 = vmatprep.subr.mxu0 0.0
  %5708 = vmatpush2.msra.mxu0 0.0
  %5709 = vmatprep.subr.mxu0 0.0
  %5710 = vmatpush2.msra.mxu0 0.0
  %5711 = vmatprep.subr.mxu0 0.0
  %5712 = vmatpush2.msra.mxu0 0.0
  %5713 = vmatprep.subr.mxu0 0.0
  %5714 = vmatpush2.msra.mxu0 0.0
  %5715 = vmatprep.subr.mxu0 0.0
  %5716 = vmatpush2.msra.mxu0 0.0
  %5717 = vmatprep.subr.mxu0 0.0
  %5718 = vmatpush2.msra.mxu0 0.0
  %5719 = vmatprep.mubr.f32.mxu0 0.0
  %5720 = vmatmul.mubr.f32.gmra.mxu0 %v5128
  %v5721 = vpop.f32.mrf.mxu0
  %v5722 = vadd.f32 %v5577, %v5721
  %v5723 = vpop.f32.mrf.mxu0
  %5724 = vmatprep.mubr.f32.mxu0 0.0
  %5725 = vmatmul.mubr.f32.gmra.mxu0 %v5131
  %v5726 = vpop.f32.mrf.mxu0
  %v5727 = vadd.f32 %v5582, %v5726
  %v5728 = vpop.f32.mrf.mxu0
  %5729 = vmatprep.mubr.f32.mxu0 0.0
  %5730 = vmatmul.mubr.f32.gmra.mxu0 %v5134
  %v5731 = vpop.f32.mrf.mxu0
  %v5732 = vadd.f32 %v5587, %v5731
  %v5733 = vpop.f32.mrf.mxu0
  %5734 = vmatprep.mubr.f32.mxu0 0.0
  %5735 = vmatmul.mubr.f32.gmra.mxu0 %v5137
  %v5736 = vpop.f32.mrf.mxu0
  %v5737 = vadd.f32 %v5592, %v5736
  %v5738 = vpop.f32.mrf.mxu0
  %5739 = vmatprep.mubr.f32.mxu0 0.0
  %5740 = vmatmul.mubr.f32.gmra.mxu0 %v5140
  %v5741 = vpop.f32.mrf.mxu0
  %v5742 = vadd.f32 %v5597, %v5741
  %v5743 = vpop.f32.mrf.mxu0
  %5744 = vmatprep.mubr.f32.mxu0 0.0
  %5745 = vmatmul.mubr.f32.gmra.mxu0 %v5143
  %v5746 = vpop.f32.mrf.mxu0
  %v5747 = vadd.f32 %v5602, %v5746
  %v5748 = vpop.f32.mrf.mxu0
  %5749 = vmatprep.mubr.f32.mxu0 0.0
  %5750 = vmatmul.mubr.f32.gmra.mxu0 %v5146
  %v5751 = vpop.f32.mrf.mxu0
  %v5752 = vadd.f32 %v5607, %v5751
  %v5753 = vpop.f32.mrf.mxu0
  %5754 = vmatprep.mubr.f32.mxu0 0.0
  %5755 = vmatmul.mubr.f32.gmra.mxu0 %v5149
  %v5756 = vpop.f32.mrf.mxu0
  %v5757 = vadd.f32 %v5612, %v5756
  %v5758 = vpop.f32.mrf.mxu0
  %5759 = vmatprep.mubr.f32.mxu0 0.0
  %5760 = vmatmul.mubr.f32.gmra.mxu0 %v5152
  %v5761 = vpop.f32.mrf.mxu0
  %v5762 = vadd.f32 %v5617, %v5761
  %v5763 = vpop.f32.mrf.mxu0
  %5764 = vmatprep.mubr.f32.mxu0 0.0
  %5765 = vmatmul.mubr.f32.gmra.mxu0 %v5155
  %v5766 = vpop.f32.mrf.mxu0
  %v5767 = vadd.f32 %v5622, %v5766
  %v5768 = vpop.f32.mrf.mxu0
  %5769 = vmatprep.mubr.f32.mxu0 0.0
  %5770 = vmatmul.mubr.f32.gmra.mxu0 %v5158
  %v5771 = vpop.f32.mrf.mxu0
  %v5772 = vadd.f32 %v5627, %v5771
  %v5773 = vpop.f32.mrf.mxu0
  %5774 = vmatprep.mubr.f32.mxu0 0.0
  %5775 = vmatmul.mubr.f32.gmra.mxu0 %v5161
  %v5776 = vpop.f32.mrf.mxu0
  %v5777 = vadd.f32 %v5632, %v5776
  %v5778 = vpop.f32.mrf.mxu0
  %5779 = vmatprep.mubr.f32.mxu0 0.0
  %5780 = vmatmul.mubr.f32.gmra.mxu0 %v5164
  %v5781 = vpop.f32.mrf.mxu0
  %v5782 = vadd.f32 %v5637, %v5781
  %v5783 = vpop.f32.mrf.mxu0
  %5784 = vmatprep.mubr.f32.mxu0 0.0
  %5785 = vmatmul.mubr.f32.gmra.mxu0 %v5167
  %v5786 = vpop.f32.mrf.mxu0
  %v5787 = vadd.f32 %v5642, %v5786
  %v5788 = vpop.f32.mrf.mxu0
  %5789 = vmatprep.mubr.f32.mxu0 0.0
  %5790 = vmatmul.mubr.f32.gmra.mxu0 %v5170
  %v5791 = vpop.f32.mrf.mxu0
  %v5792 = vadd.f32 %v5647, %v5791
  %v5793 = vpop.f32.mrf.mxu0
  %5794 = vmatprep.mubr.f32.mxu0 0.0
  %5795 = vmatmul.mubr.f32.gmra.mxu0 %v5173
  %v5796 = vpop.f32.mrf.mxu0
  %v5797 = vadd.f32 %v5652, %v5796
  %v5798 = vpop.f32.mrf.mxu0
  %5799 = vdwg.mxu0
  %v5800 = vmax.f32 %v5387, %v5427
  %v5801 = vmax.f32 %v5392, %v5432
  %v5802 = vmax.f32 %v5722, %v5762
  %v5803 = vmax.f32 %v5727, %v5767
  %v5804 = vmax.f32 %v5800, %v5802
  %v5805 = vmax.f32 %v5801, %v5803
  %5807 = vset.pattern.permute.xlu0 0
  %5808 = vperm.xlu0 %5807, %v5079
  %v5809 = vpop.permute.xlu0 %5808
  %5812 = vset.pattern.permute.xlu0 0
  %5813 = vperm.xlu0 %5812, %v5080
  %v5814 = vpop.permute.xlu0 %5813
  %v5816 = vadd.f32 %v5804, %v5809
  %v5817 = vadd.f32 %v5805, %v5814
  %v5818 = vmax.f32 %v5816, 0.0
  %v5819 = vmax.f32 %v5817, 0.0
  %5820 = vst [vmem:[#allocation3] sm:$0xff] %v5818
  %5821 = vst [vmem:[#allocation3 + $0x8] sm:$0xff] %v5819
  %v5822 = vmax.f32 %v5397, %v5437
  %v5823 = vmax.f32 %v5402, %v5442
  %v5824 = vmax.f32 %v5732, %v5772
  %v5825 = vmax.f32 %v5737, %v5777
  %v5826 = vmax.f32 %v5822, %v5824
  %v5827 = vmax.f32 %v5823, %v5825
  %v5828 = vadd.f32 %v5826, %v5809
  %v5829 = vadd.f32 %v5827, %v5814
  %v5830 = vmax.f32 %v5828, 0.0
  %v5831 = vmax.f32 %v5829, 0.0
  %5832 = vst [vmem:[#allocation3 + $0x10] sm:$0xff] %v5830
  %5833 = vst [vmem:[#allocation3 + $0x18] sm:$0xff] %v5831
  %v5834 = vmax.f32 %v5407, %v5447
  %v5835 = vmax.f32 %v5412, %v5452
  %v5836 = vmax.f32 %v5742, %v5782
  %v5837 = vmax.f32 %v5747, %v5787
  %v5838 = vmax.f32 %v5834, %v5836
  %v5839 = vmax.f32 %v5835, %v5837
  %v5840 = vadd.f32 %v5838, %v5809
  %v5841 = vadd.f32 %v5839, %v5814
  %v5842 = vmax.f32 %v5840, 0.0
  %v5843 = vmax.f32 %v5841, 0.0
  %5844 = vst [vmem:[#allocation3 + $0x20] sm:$0xff] %v5842
  %5845 = vst [vmem:[#allocation3 + $0x28] sm:$0xff] %v5843
  %v5846 = vmax.f32 %v5417, %v5457
  %v5847 = vmax.f32 %v5422, %v5462
  %v5848 = vmax.f32 %v5752, %v5792
  %v5849 = vmax.f32 %v5757, %v5797
  %v5850 = vmax.f32 %v5846, %v5848
  %v5851 = vmax.f32 %v5847, %v5849
  %v5852 = vadd.f32 %v5850, %v5809
  %v5853 = vadd.f32 %v5851, %v5814
  %v5854 = vmax.f32 %v5852, 0.0
  %v5855 = vmax.f32 %v5853, 0.0
  %5856 = vst [vmem:[#allocation3 + $0x30] sm:$0xff] %v5854
  %5857 = vst [vmem:[#allocation3 + $0x38] sm:$0xff] %v5855
  %v5858 = vld [vmem:[#allocation2 + $0x90] sm:$0xff]
  %v5859 = vld [vmem:[#allocation2 + $0x98] sm:$0xff]
  %v5860 = vld [vmem:[#allocation2 + $0xa0] sm:$0xff]
  %v5861 = vld [vmem:[#allocation2 + $0xa8] sm:$0xff]
  %v5862 = vld [vmem:[#allocation2 + $0xb0] sm:$0xff]
  %v5863 = vld [vmem:[#allocation2 + $0xb8] sm:$0xff]
  %v5864 = vld [vmem:[#allocation2 + $0xc0] sm:$0xff]
  %v5865 = vld [vmem:[#allocation2 + $0xc8] sm:$0xff]
  %v5866 = vld [vmem:[#allocation2 + $0xd0] sm:$0xff]
  %v5867 = vld [vmem:[#allocation2 + $0xd8] sm:$0xff]
  %v5868 = vld [vmem:[#allocation2 + $0xe0] sm:$0xff]
  %v5869 = vld [vmem:[#allocation2 + $0xe8] sm:$0xff]
  %v5870 = vld [vmem:[#allocation2 + $0xf0] sm:$0xff]
  %v5871 = vld [vmem:[#allocation2 + $0xf8] sm:$0xff]
  %v5872 = vld [vmem:[#allocation2 + $0x100] sm:$0xff]
  %v5873 = vld [vmem:[#allocation2 + $0x108] sm:$0xff]
  %v5874 = vld [vmem:[#allocation2 + $0x110] sm:$0xff]
  %v5875 = vld [vmem:[#allocation2 + $0x118] sm:$0xff]
  %v5876 = vld [vmem:[#allocation2 + $0x120] sm:$0xff]
  %v5877 = vld [vmem:[#allocation2 + $0x128] sm:$0xff]
  %v5878 = vld [vmem:[#allocation2 + $0x130] sm:$0xff]
  %v5879 = vld [vmem:[#allocation2 + $0x138] sm:$0xff]
  %v5880 = vld [vmem:[#allocation2 + $0x140] sm:$0xff]
  %v5881 = vld [vmem:[#allocation2 + $0x148] sm:$0xff]
  %v5882 = vld [vmem:[#allocation2 + $0x150] sm:$0xff]
  %v5883 = vld [vmem:[#allocation2 + $0x158] sm:$0xff]
  %v5884 = vld [vmem:[#allocation2 + $0x160] sm:$0xff]
  %v5885 = vld [vmem:[#allocation2 + $0x168] sm:$0xff]
  %v5886 = vld [vmem:[#allocation2 + $0x170] sm:$0xff]
  %v5887 = vld [vmem:[#allocation2 + $0x178] sm:$0xff]
  %v5888 = vld [vmem:[#allocation2 + $0x180] sm:$0xff]
  %v5889 = vld [vmem:[#allocation2 + $0x188] sm:$0xff]
  %v5890 = vld [vmem:[#allocation2 + $0x190] sm:$0xff]
  %v5891 = vld [vmem:[#allocation2 + $0x198] sm:$0xff]
  %v5892 = vld [vmem:[#allocation2 + $0x1a0] sm:$0xff]
  %v5893 = vld [vmem:[#allocation2 + $0x1a8] sm:$0xff]
  %v5894 = vld [vmem:[#allocation2 + $0x1b0] sm:$0xff]
  %v5895 = vld [vmem:[#allocation2 + $0x1b8] sm:$0xff]
  %v5896 = vld [vmem:[#allocation2 + $0x1c0] sm:$0xff]
  %v5897 = vld [vmem:[#allocation2 + $0x1c8] sm:$0xff]
  %v5898 = vld [vmem:[#allocation2 + $0x1d0] sm:$0xff]
  %v5899 = vld [vmem:[#allocation2 + $0x1d8] sm:$0xff]
  %v5900 = vld [vmem:[#allocation2 + $0x1e0] sm:$0xff]
  %v5901 = vld [vmem:[#allocation2 + $0x1e8] sm:$0xff]
  %v5902 = vld [vmem:[#allocation2 + $0x1f0] sm:$0xff]
  %5903 = vmatprep.subr.mxu0 0.0
  %5904 = vmatpush1.msra.mxu0 %v5873
  %5905 = vmatprep.subr.mxu0 0.0
  %5906 = vmatpush1.msra.mxu0 %v5872
  %5907 = vmatprep.subr.mxu0 0.0
  %5908 = vmatpush1.msra.mxu0 %v5871
  %5909 = vmatprep.subr.mxu0 0.0
  %5910 = vmatpush1.msra.mxu0 %v5870
  %5911 = vmatprep.subr.mxu0 0.0
  %5912 = vmatpush1.msra.mxu0 %v5869
  %5913 = vmatprep.subr.mxu0 0.0
  %5914 = vmatpush1.msra.mxu0 %v5868
  %5915 = vmatprep.subr.mxu0 0.0
  %5916 = vmatpush1.msra.mxu0 %v5867
  %5917 = vmatprep.subr.mxu0 0.0
  %5918 = vmatpush1.msra.mxu0 %v5866
  %5919 = vmatprep.subr.mxu0 0.0
  %5920 = vmatpush1.msra.mxu0 %v5865
  %5921 = vmatprep.subr.mxu0 0.0
  %5922 = vmatpush1.msra.mxu0 %v5864
  %5923 = vmatprep.subr.mxu0 0.0
  %5924 = vmatpush1.msra.mxu0 %v5863
  %5925 = vmatprep.subr.mxu0 0.0
  %5926 = vmatpush1.msra.mxu0 %v5862
  %5927 = vmatprep.subr.mxu0 0.0
  %5928 = vmatpush1.msra.mxu0 %v5861
  %5929 = vmatprep.subr.mxu0 0.0
  %5930 = vmatpush1.msra.mxu0 %v5860
  %5931 = vmatprep.subr.mxu0 0.0
  %5932 = vmatpush1.msra.mxu0 %v5859
  %5933 = vmatprep.subr.mxu0 0.0
  %5934 = vmatpush1.msra.mxu0 %v5858
  %5935 = vmatprep.subr.mxu0 0.0
  %5936 = vmatpush2.msra.mxu0 %v5889
  %5937 = vmatprep.subr.mxu0 0.0
  %5938 = vmatpush2.msra.mxu0 %v5888
  %5939 = vmatprep.subr.mxu0 0.0
  %5940 = vmatpush2.msra.mxu0 %v5887
  %5941 = vmatprep.subr.mxu0 0.0
  %5942 = vmatpush2.msra.mxu0 %v5886
  %5943 = vmatprep.subr.mxu0 0.0
  %5944 = vmatpush2.msra.mxu0 %v5885
  %5945 = vmatprep.subr.mxu0 0.0
  %5946 = vmatpush2.msra.mxu0 %v5884
  %5947 = vmatprep.subr.mxu0 0.0
  %5948 = vmatpush2.msra.mxu0 %v5883
  %5949 = vmatprep.subr.mxu0 0.0
  %5950 = vmatpush2.msra.mxu0 %v5882
  %5951 = vmatprep.subr.mxu0 0.0
  %5952 = vmatpush2.msra.mxu0 %v5881
  %5953 = vmatprep.subr.mxu0 0.0
  %5954 = vmatpush2.msra.mxu0 %v5880
  %5955 = vmatprep.subr.mxu0 0.0
  %5956 = vmatpush2.msra.mxu0 %v5879
  %5957 = vmatprep.subr.mxu0 0.0
  %5958 = vmatpush2.msra.mxu0 %v5878
  %5959 = vmatprep.subr.mxu0 0.0
  %5960 = vmatpush2.msra.mxu0 %v5877
  %5961 = vmatprep.subr.mxu0 0.0
  %5962 = vmatpush2.msra.mxu0 %v5876
  %5963 = vmatprep.subr.mxu0 0.0
  %5964 = vmatpush2.msra.mxu0 %v5875
  %5965 = vmatprep.subr.mxu0 0.0
  %5966 = vmatpush2.msra.mxu0 %v5874
  %5967 = vmatprep.mubr.f32.mxu0 %v5032
  %5968 = vmatmul.mubr.f32.gmra.mxu0 %v5031
  %v5969 = vpop.f32.mrf.mxu0
  %v5970 = vadd.f32 0.0, %v5969
  %v5971 = vpop.f32.mrf.mxu0
  %5972 = vmatprep.mubr.f32.mxu0 %v5035
  %5973 = vmatmul.mubr.f32.gmra.mxu0 %v5034
  %v5974 = vpop.f32.mrf.mxu0
  %v5975 = vadd.f32 0.0, %v5974
  %v5976 = vpop.f32.mrf.mxu0
  %5977 = vmatprep.mubr.f32.mxu0 %v5038
  %5978 = vmatmul.mubr.f32.gmra.mxu0 %v5037
  %v5979 = vpop.f32.mrf.mxu0
  %v5980 = vadd.f32 0.0, %v5979
  %v5981 = vpop.f32.mrf.mxu0
  %5982 = vmatprep.mubr.f32.mxu0 %v5041
  %5983 = vmatmul.mubr.f32.gmra.mxu0 %v5040
  %v5984 = vpop.f32.mrf.mxu0
  %v5985 = vadd.f32 0.0, %v5984
  %v5986 = vpop.f32.mrf.mxu0
  %5987 = vmatprep.mubr.f32.mxu0 %v5044
  %5988 = vmatmul.mubr.f32.gmra.mxu0 %v5043
  %v5989 = vpop.f32.mrf.mxu0
  %v5990 = vadd.f32 0.0, %v5989
  %v5991 = vpop.f32.mrf.mxu0
  %5992 = vmatprep.mubr.f32.mxu0 %v5047
  %5993 = vmatmul.mubr.f32.gmra.mxu0 %v5046
  %v5994 = vpop.f32.mrf.mxu0
  %v5995 = vadd.f32 0.0, %v5994
  %v5996 = vpop.f32.mrf.mxu0
  %5997 = vmatprep.mubr.f32.mxu0 %v5050
  %5998 = vmatmul.mubr.f32.gmra.mxu0 %v5049
  %v5999 = vpop.f32.mrf.mxu0
  %v6000 = vadd.f32 0.0, %v5999
  %v6001 = vpop.f32.mrf.mxu0
  %6002 = vmatprep.mubr.f32.mxu0 %v5053
  %6003 = vmatmul.mubr.f32.gmra.mxu0 %v5052
  %v6004 = vpop.f32.mrf.mxu0
  %v6005 = vadd.f32 0.0, %v6004
  %v6006 = vpop.f32.mrf.mxu0
  %6007 = vmatprep.mubr.f32.mxu0 %v5056
  %6008 = vmatmul.mubr.f32.gmra.mxu0 %v5055
  %v6009 = vpop.f32.mrf.mxu0
  %v6010 = vadd.f32 0.0, %v6009
  %v6011 = vpop.f32.mrf.mxu0
  %6012 = vmatprep.mubr.f32.mxu0 %v5059
  %6013 = vmatmul.mubr.f32.gmra.mxu0 %v5058
  %v6014 = vpop.f32.mrf.mxu0
  %v6015 = vadd.f32 0.0, %v6014
  %v6016 = vpop.f32.mrf.mxu0
  %6017 = vmatprep.mubr.f32.mxu0 %v5062
  %6018 = vmatmul.mubr.f32.gmra.mxu0 %v5061
  %v6019 = vpop.f32.mrf.mxu0
  %v6020 = vadd.f32 0.0, %v6019
  %v6021 = vpop.f32.mrf.mxu0
  %6022 = vmatprep.mubr.f32.mxu0 %v5065
  %6023 = vmatmul.mubr.f32.gmra.mxu0 %v5064
  %v6024 = vpop.f32.mrf.mxu0
  %v6025 = vadd.f32 0.0, %v6024
  %v6026 = vpop.f32.mrf.mxu0
  %6027 = vmatprep.mubr.f32.mxu0 %v5068
  %6028 = vmatmul.mubr.f32.gmra.mxu0 %v5067
  %v6029 = vpop.f32.mrf.mxu0
  %v6030 = vadd.f32 0.0, %v6029
  %v6031 = vpop.f32.mrf.mxu0
  %6032 = vmatprep.mubr.f32.mxu0 %v5071
  %6033 = vmatmul.mubr.f32.gmra.mxu0 %v5070
  %v6034 = vpop.f32.mrf.mxu0
  %v6035 = vadd.f32 0.0, %v6034
  %v6036 = vpop.f32.mrf.mxu0
  %6037 = vmatprep.mubr.f32.mxu0 %v5074
  %6038 = vmatmul.mubr.f32.gmra.mxu0 %v5073
  %v6039 = vpop.f32.mrf.mxu0
  %v6040 = vadd.f32 0.0, %v6039
  %v6041 = vpop.f32.mrf.mxu0
  %6042 = vmatprep.mubr.f32.mxu0 %v5077
  %6043 = vmatmul.mubr.f32.gmra.mxu0 %v5076
  %v6044 = vpop.f32.mrf.mxu0
  %v6045 = vadd.f32 0.0, %v6044
  %v6046 = vpop.f32.mrf.mxu0
  %6047 = vdwg.mxu0
  %6048 = vmatprep.subr.mxu0 0.0
  %6049 = vmatpush1.msra.mxu0 0.0
  %6050 = vmatprep.subr.mxu0 0.0
  %6051 = vmatpush1.msra.mxu0 0.0
  %6052 = vmatprep.subr.mxu0 0.0
  %6053 = vmatpush1.msra.mxu0 0.0
  %6054 = vmatprep.subr.mxu0 0.0
  %6055 = vmatpush1.msra.mxu0 %v5902
  %6056 = vmatprep.subr.mxu0 0.0
  %6057 = vmatpush1.msra.mxu0 %v5901
  %6058 = vmatprep.subr.mxu0 0.0
  %6059 = vmatpush1.msra.mxu0 %v5900
  %6060 = vmatprep.subr.mxu0 0.0
  %6061 = vmatpush1.msra.mxu0 %v5899
  %6062 = vmatprep.subr.mxu0 0.0
  %6063 = vmatpush1.msra.mxu0 %v5898
  %6064 = vmatprep.subr.mxu0 0.0
  %6065 = vmatpush1.msra.mxu0 %v5897
  %6066 = vmatprep.subr.mxu0 0.0
  %6067 = vmatpush1.msra.mxu0 %v5896
  %6068 = vmatprep.subr.mxu0 0.0
  %6069 = vmatpush1.msra.mxu0 %v5895
  %6070 = vmatprep.subr.mxu0 0.0
  %6071 = vmatpush1.msra.mxu0 %v5894
  %6072 = vmatprep.subr.mxu0 0.0
  %6073 = vmatpush1.msra.mxu0 %v5893
  %6074 = vmatprep.subr.mxu0 0.0
  %6075 = vmatpush1.msra.mxu0 %v5892
  %6076 = vmatprep.subr.mxu0 0.0
  %6077 = vmatpush1.msra.mxu0 %v5891
  %6078 = vmatprep.subr.mxu0 0.0
  %6079 = vmatpush1.msra.mxu0 %v5890
  %6080 = vmatprep.subr.mxu0 0.0
  %6081 = vmatpush2.msra.mxu0 0.0
  %6082 = vmatprep.subr.mxu0 0.0
  %6083 = vmatpush2.msra.mxu0 0.0
  %6084 = vmatprep.subr.mxu0 0.0
  %6085 = vmatpush2.msra.mxu0 0.0
  %6086 = vmatprep.subr.mxu0 0.0
  %6087 = vmatpush2.msra.mxu0 0.0
  %6088 = vmatprep.subr.mxu0 0.0
  %6089 = vmatpush2.msra.mxu0 0.0
  %6090 = vmatprep.subr.mxu0 0.0
  %6091 = vmatpush2.msra.mxu0 0.0
  %6092 = vmatprep.subr.mxu0 0.0
  %6093 = vmatpush2.msra.mxu0 0.0
  %6094 = vmatprep.subr.mxu0 0.0
  %6095 = vmatpush2.msra.mxu0 0.0
  %6096 = vmatprep.subr.mxu0 0.0
  %6097 = vmatpush2.msra.mxu0 0.0
  %6098 = vmatprep.subr.mxu0 0.0
  %6099 = vmatpush2.msra.mxu0 0.0
  %6100 = vmatprep.subr.mxu0 0.0
  %6101 = vmatpush2.msra.mxu0 0.0
  %6102 = vmatprep.subr.mxu0 0.0
  %6103 = vmatpush2.msra.mxu0 0.0
  %6104 = vmatprep.subr.mxu0 0.0
  %6105 = vmatpush2.msra.mxu0 0.0
  %6106 = vmatprep.subr.mxu0 0.0
  %6107 = vmatpush2.msra.mxu0 0.0
  %6108 = vmatprep.subr.mxu0 0.0
  %6109 = vmatpush2.msra.mxu0 0.0
  %6110 = vmatprep.subr.mxu0 0.0
  %6111 = vmatpush2.msra.mxu0 0.0
  %6112 = vmatprep.mubr.f32.mxu0 0.0
  %6113 = vmatmul.mubr.f32.gmra.mxu0 %v5128
  %v6114 = vpop.f32.mrf.mxu0
  %v6115 = vadd.f32 %v5970, %v6114
  %v6116 = vpop.f32.mrf.mxu0
  %6117 = vmatprep.mubr.f32.mxu0 0.0
  %6118 = vmatmul.mubr.f32.gmra.mxu0 %v5131
  %v6119 = vpop.f32.mrf.mxu0
  %v6120 = vadd.f32 %v5975, %v6119
  %v6121 = vpop.f32.mrf.mxu0
  %6122 = vmatprep.mubr.f32.mxu0 0.0
  %6123 = vmatmul.mubr.f32.gmra.mxu0 %v5134
  %v6124 = vpop.f32.mrf.mxu0
  %v6125 = vadd.f32 %v5980, %v6124
  %v6126 = vpop.f32.mrf.mxu0
  %6127 = vmatprep.mubr.f32.mxu0 0.0
  %6128 = vmatmul.mubr.f32.gmra.mxu0 %v5137
  %v6129 = vpop.f32.mrf.mxu0
  %v6130 = vadd.f32 %v5985, %v6129
  %v6131 = vpop.f32.mrf.mxu0
  %6132 = vmatprep.mubr.f32.mxu0 0.0
  %6133 = vmatmul.mubr.f32.gmra.mxu0 %v5140
  %v6134 = vpop.f32.mrf.mxu0
  %v6135 = vadd.f32 %v5990, %v6134
  %v6136 = vpop.f32.mrf.mxu0
  %6137 = vmatprep.mubr.f32.mxu0 0.0
  %6138 = vmatmul.mubr.f32.gmra.mxu0 %v5143
  %v6139 = vpop.f32.mrf.mxu0
  %v6140 = vadd.f32 %v5995, %v6139
  %v6141 = vpop.f32.mrf.mxu0
  %6142 = vmatprep.mubr.f32.mxu0 0.0
  %6143 = vmatmul.mubr.f32.gmra.mxu0 %v5146
  %v6144 = vpop.f32.mrf.mxu0
  %v6145 = vadd.f32 %v6000, %v6144
  %v6146 = vpop.f32.mrf.mxu0
  %6147 = vmatprep.mubr.f32.mxu0 0.0
  %6148 = vmatmul.mubr.f32.gmra.mxu0 %v5149
  %v6149 = vpop.f32.mrf.mxu0
  %v6150 = vadd.f32 %v6005, %v6149
  %v6151 = vpop.f32.mrf.mxu0
  %6152 = vmatprep.mubr.f32.mxu0 0.0
  %6153 = vmatmul.mubr.f32.gmra.mxu0 %v5152
  %v6154 = vpop.f32.mrf.mxu0
  %v6155 = vadd.f32 %v6010, %v6154
  %v6156 = vpop.f32.mrf.mxu0
  %6157 = vmatprep.mubr.f32.mxu0 0.0
  %6158 = vmatmul.mubr.f32.gmra.mxu0 %v5155
  %v6159 = vpop.f32.mrf.mxu0
  %v6160 = vadd.f32 %v6015, %v6159
  %v6161 = vpop.f32.mrf.mxu0
  %6162 = vmatprep.mubr.f32.mxu0 0.0
  %6163 = vmatmul.mubr.f32.gmra.mxu0 %v5158
  %v6164 = vpop.f32.mrf.mxu0
  %v6165 = vadd.f32 %v6020, %v6164
  %v6166 = vpop.f32.mrf.mxu0
  %6167 = vmatprep.mubr.f32.mxu0 0.0
  %6168 = vmatmul.mubr.f32.gmra.mxu0 %v5161
  %v6169 = vpop.f32.mrf.mxu0
  %v6170 = vadd.f32 %v6025, %v6169
  %v6171 = vpop.f32.mrf.mxu0
  %6172 = vmatprep.mubr.f32.mxu0 0.0
  %6173 = vmatmul.mubr.f32.gmra.mxu0 %v5164
  %v6174 = vpop.f32.mrf.mxu0
  %v6175 = vadd.f32 %v6030, %v6174
  %v6176 = vpop.f32.mrf.mxu0
  %6177 = vmatprep.mubr.f32.mxu0 0.0
  %6178 = vmatmul.mubr.f32.gmra.mxu0 %v5167
  %v6179 = vpop.f32.mrf.mxu0
  %v6180 = vadd.f32 %v6035, %v6179
  %v6181 = vpop.f32.mrf.mxu0
  %6182 = vmatprep.mubr.f32.mxu0 0.0
  %6183 = vmatmul.mubr.f32.gmra.mxu0 %v5170
  %v6184 = vpop.f32.mrf.mxu0
  %v6185 = vadd.f32 %v6040, %v6184
  %v6186 = vpop.f32.mrf.mxu0
  %6187 = vmatprep.mubr.f32.mxu0 0.0
  %6188 = vmatmul.mubr.f32.gmra.mxu0 %v5173
  %v6189 = vpop.f32.mrf.mxu0
  %v6190 = vadd.f32 %v6045, %v6189
  %v6191 = vpop.f32.mrf.mxu0
  %6192 = vdwg.mxu0
  %v6193 = vld [vmem:[#allocation2 + $0xd8] sm:$0xff]
  %v6194 = vld [vmem:[#allocation2 + $0xe0] sm:$0xff]
  %v6195 = vld [vmem:[#allocation2 + $0xe8] sm:$0xff]
  %v6196 = vld [vmem:[#allocation2 + $0xf0] sm:$0xff]
  %v6197 = vld [vmem:[#allocation2 + $0xf8] sm:$0xff]
  %v6198 = vld [vmem:[#allocation2 + $0x100] sm:$0xff]
  %v6199 = vld [vmem:[#allocation2 + $0x108] sm:$0xff]
  %v6200 = vld [vmem:[#allocation2 + $0x110] sm:$0xff]
  %v6201 = vld [vmem:[#allocation2 + $0x118] sm:$0xff]
  %v6202 = vld [vmem:[#allocation2 + $0x120] sm:$0xff]
  %v6203 = vld [vmem:[#allocation2 + $0x128] sm:$0xff]
  %v6204 = vld [vmem:[#allocation2 + $0x130] sm:$0xff]
  %v6205 = vld [vmem:[#allocation2 + $0x138] sm:$0xff]
  %v6206 = vld [vmem:[#allocation2 + $0x140] sm:$0xff]
  %v6207 = vld [vmem:[#allocation2 + $0x148] sm:$0xff]
  %v6208 = vld [vmem:[#allocation2 + $0x150] sm:$0xff]
  %v6209 = vld [vmem:[#allocation2 + $0x158] sm:$0xff]
  %v6210 = vld [vmem:[#allocation2 + $0x160] sm:$0xff]
  %v6211 = vld [vmem:[#allocation2 + $0x168] sm:$0xff]
  %v6212 = vld [vmem:[#allocation2 + $0x170] sm:$0xff]
  %v6213 = vld [vmem:[#allocation2 + $0x178] sm:$0xff]
  %v6214 = vld [vmem:[#allocation2 + $0x180] sm:$0xff]
  %v6215 = vld [vmem:[#allocation2 + $0x188] sm:$0xff]
  %v6216 = vld [vmem:[#allocation2 + $0x190] sm:$0xff]
  %v6217 = vld [vmem:[#allocation2 + $0x198] sm:$0xff]
  %v6218 = vld [vmem:[#allocation2 + $0x1a0] sm:$0xff]
  %v6219 = vld [vmem:[#allocation2 + $0x1a8] sm:$0xff]
  %v6220 = vld [vmem:[#allocation2 + $0x1b0] sm:$0xff]
  %v6221 = vld [vmem:[#allocation2 + $0x1b8] sm:$0xff]
  %v6222 = vld [vmem:[#allocation2 + $0x1c0] sm:$0xff]
  %v6223 = vld [vmem:[#allocation2 + $0x1c8] sm:$0xff]
  %v6224 = vld [vmem:[#allocation2 + $0x1d0] sm:$0xff]
  %v6225 = vld [vmem:[#allocation2 + $0x1d8] sm:$0xff]
  %v6226 = vld [vmem:[#allocation2 + $0x1e0] sm:$0xff]
  %v6227 = vld [vmem:[#allocation2 + $0x1e8] sm:$0xff]
  %v6228 = vld [vmem:[#allocation2 + $0x1f0] sm:$0xff]
  %v6229 = vld [vmem:[#allocation2 + $0x1f8] sm:$0xff]
  %v6230 = vld [vmem:[#allocation2 + $0x200] sm:$0xff]
  %v6231 = vld [vmem:[#allocation2 + $0x208] sm:$0xff]
  %v6232 = vld [vmem:[#allocation2 + $0x210] sm:$0xff]
  %v6233 = vld [vmem:[#allocation2 + $0x218] sm:$0xff]
  %v6234 = vld [vmem:[#allocation2 + $0x220] sm:$0xff]
  %v6235 = vld [vmem:[#allocation2 + $0x228] sm:$0xff]
  %v6236 = vld [vmem:[#allocation2 + $0x230] sm:$0xff]
  %v6237 = vld [vmem:[#allocation2 + $0x238] sm:$0xff]
  %6238 = vmatprep.subr.mxu0 0.0
  %6239 = vmatpush1.msra.mxu0 %v6208
  %6240 = vmatprep.subr.mxu0 0.0
  %6241 = vmatpush1.msra.mxu0 %v6207
  %6242 = vmatprep.subr.mxu0 0.0
  %6243 = vmatpush1.msra.mxu0 %v6206
  %6244 = vmatprep.subr.mxu0 0.0
  %6245 = vmatpush1.msra.mxu0 %v6205
  %6246 = vmatprep.subr.mxu0 0.0
  %6247 = vmatpush1.msra.mxu0 %v6204
  %6248 = vmatprep.subr.mxu0 0.0
  %6249 = vmatpush1.msra.mxu0 %v6203
  %6250 = vmatprep.subr.mxu0 0.0
  %6251 = vmatpush1.msra.mxu0 %v6202
  %6252 = vmatprep.subr.mxu0 0.0
  %6253 = vmatpush1.msra.mxu0 %v6201
  %6254 = vmatprep.subr.mxu0 0.0
  %6255 = vmatpush1.msra.mxu0 %v6200
  %6256 = vmatprep.subr.mxu0 0.0
  %6257 = vmatpush1.msra.mxu0 %v6199
  %6258 = vmatprep.subr.mxu0 0.0
  %6259 = vmatpush1.msra.mxu0 %v6198
  %6260 = vmatprep.subr.mxu0 0.0
  %6261 = vmatpush1.msra.mxu0 %v6197
  %6262 = vmatprep.subr.mxu0 0.0
  %6263 = vmatpush1.msra.mxu0 %v6196
  %6264 = vmatprep.subr.mxu0 0.0
  %6265 = vmatpush1.msra.mxu0 %v6195
  %6266 = vmatprep.subr.mxu0 0.0
  %6267 = vmatpush1.msra.mxu0 %v6194
  %6268 = vmatprep.subr.mxu0 0.0
  %6269 = vmatpush1.msra.mxu0 %v6193
  %6270 = vmatprep.subr.mxu0 0.0
  %6271 = vmatpush2.msra.mxu0 %v6224
  %6272 = vmatprep.subr.mxu0 0.0
  %6273 = vmatpush2.msra.mxu0 %v6223
  %6274 = vmatprep.subr.mxu0 0.0
  %6275 = vmatpush2.msra.mxu0 %v6222
  %6276 = vmatprep.subr.mxu0 0.0
  %6277 = vmatpush2.msra.mxu0 %v6221
  %6278 = vmatprep.subr.mxu0 0.0
  %6279 = vmatpush2.msra.mxu0 %v6220
  %6280 = vmatprep.subr.mxu0 0.0
  %6281 = vmatpush2.msra.mxu0 %v6219
  %6282 = vmatprep.subr.mxu0 0.0
  %6283 = vmatpush2.msra.mxu0 %v6218
  %6284 = vmatprep.subr.mxu0 0.0
  %6285 = vmatpush2.msra.mxu0 %v6217
  %6286 = vmatprep.subr.mxu0 0.0
  %6287 = vmatpush2.msra.mxu0 %v6216
  %6288 = vmatprep.subr.mxu0 0.0
  %6289 = vmatpush2.msra.mxu0 %v6215
  %6290 = vmatprep.subr.mxu0 0.0
  %6291 = vmatpush2.msra.mxu0 %v6214
  %6292 = vmatprep.subr.mxu0 0.0
  %6293 = vmatpush2.msra.mxu0 %v6213
  %6294 = vmatprep.subr.mxu0 0.0
  %6295 = vmatpush2.msra.mxu0 %v6212
  %6296 = vmatprep.subr.mxu0 0.0
  %6297 = vmatpush2.msra.mxu0 %v6211
  %6298 = vmatprep.subr.mxu0 0.0
  %6299 = vmatpush2.msra.mxu0 %v6210
  %6300 = vmatprep.subr.mxu0 0.0
  %6301 = vmatpush2.msra.mxu0 %v6209
  %6302 = vmatprep.mubr.f32.mxu0 %v5032
  %6303 = vmatmul.mubr.f32.gmra.mxu0 %v5031
  %v6304 = vpop.f32.mrf.mxu0
  %v6305 = vadd.f32 0.0, %v6304
  %v6306 = vpop.f32.mrf.mxu0
  %6307 = vmatprep.mubr.f32.mxu0 %v5035
  %6308 = vmatmul.mubr.f32.gmra.mxu0 %v5034
  %v6309 = vpop.f32.mrf.mxu0
  %v6310 = vadd.f32 0.0, %v6309
  %v6311 = vpop.f32.mrf.mxu0
  %6312 = vmatprep.mubr.f32.mxu0 %v5038
  %6313 = vmatmul.mubr.f32.gmra.mxu0 %v5037
  %v6314 = vpop.f32.mrf.mxu0
  %v6315 = vadd.f32 0.0, %v6314
  %v6316 = vpop.f32.mrf.mxu0
  %6317 = vmatprep.mubr.f32.mxu0 %v5041
  %6318 = vmatmul.mubr.f32.gmra.mxu0 %v5040
  %v6319 = vpop.f32.mrf.mxu0
  %v6320 = vadd.f32 0.0, %v6319
  %v6321 = vpop.f32.mrf.mxu0
  %6322 = vmatprep.mubr.f32.mxu0 %v5044
  %6323 = vmatmul.mubr.f32.gmra.mxu0 %v5043
  %v6324 = vpop.f32.mrf.mxu0
  %v6325 = vadd.f32 0.0, %v6324
  %v6326 = vpop.f32.mrf.mxu0
  %6327 = vmatprep.mubr.f32.mxu0 %v5047
  %6328 = vmatmul.mubr.f32.gmra.mxu0 %v5046
  %v6329 = vpop.f32.mrf.mxu0
  %v6330 = vadd.f32 0.0, %v6329
  %v6331 = vpop.f32.mrf.mxu0
  %6332 = vmatprep.mubr.f32.mxu0 %v5050
  %6333 = vmatmul.mubr.f32.gmra.mxu0 %v5049
  %v6334 = vpop.f32.mrf.mxu0
  %v6335 = vadd.f32 0.0, %v6334
  %v6336 = vpop.f32.mrf.mxu0
  %6337 = vmatprep.mubr.f32.mxu0 %v5053
  %6338 = vmatmul.mubr.f32.gmra.mxu0 %v5052
  %v6339 = vpop.f32.mrf.mxu0
  %v6340 = vadd.f32 0.0, %v6339
  %v6341 = vpop.f32.mrf.mxu0
  %6342 = vmatprep.mubr.f32.mxu0 %v5056
  %6343 = vmatmul.mubr.f32.gmra.mxu0 %v5055
  %v6344 = vpop.f32.mrf.mxu0
  %v6345 = vadd.f32 0.0, %v6344
  %v6346 = vpop.f32.mrf.mxu0
  %6347 = vmatprep.mubr.f32.mxu0 %v5059
  %6348 = vmatmul.mubr.f32.gmra.mxu0 %v5058
  %v6349 = vpop.f32.mrf.mxu0
  %v6350 = vadd.f32 0.0, %v6349
  %v6351 = vpop.f32.mrf.mxu0
  %6352 = vmatprep.mubr.f32.mxu0 %v5062
  %6353 = vmatmul.mubr.f32.gmra.mxu0 %v5061
  %v6354 = vpop.f32.mrf.mxu0
  %v6355 = vadd.f32 0.0, %v6354
  %v6356 = vpop.f32.mrf.mxu0
  %6357 = vmatprep.mubr.f32.mxu0 %v5065
  %6358 = vmatmul.mubr.f32.gmra.mxu0 %v5064
  %v6359 = vpop.f32.mrf.mxu0
  %v6360 = vadd.f32 0.0, %v6359
  %v6361 = vpop.f32.mrf.mxu0
  %6362 = vmatprep.mubr.f32.mxu0 %v5068
  %6363 = vmatmul.mubr.f32.gmra.mxu0 %v5067
  %v6364 = vpop.f32.mrf.mxu0
  %v6365 = vadd.f32 0.0, %v6364
  %v6366 = vpop.f32.mrf.mxu0
  %6367 = vmatprep.mubr.f32.mxu0 %v5071
  %6368 = vmatmul.mubr.f32.gmra.mxu0 %v5070
  %v6369 = vpop.f32.mrf.mxu0
  %v6370 = vadd.f32 0.0, %v6369
  %v6371 = vpop.f32.mrf.mxu0
  %6372 = vmatprep.mubr.f32.mxu0 %v5074
  %6373 = vmatmul.mubr.f32.gmra.mxu0 %v5073
  %v6374 = vpop.f32.mrf.mxu0
  %v6375 = vadd.f32 0.0, %v6374
  %v6376 = vpop.f32.mrf.mxu0
  %6377 = vmatprep.mubr.f32.mxu0 %v5077
  %6378 = vmatmul.mubr.f32.gmra.mxu0 %v5076
  %v6379 = vpop.f32.mrf.mxu0
  %v6380 = vadd.f32 0.0, %v6379
  %v6381 = vpop.f32.mrf.mxu0
  %6382 = vdwg.mxu0
  %6383 = vmatprep.subr.mxu0 0.0
  %6384 = vmatpush1.msra.mxu0 0.0
  %6385 = vmatprep.subr.mxu0 0.0
  %6386 = vmatpush1.msra.mxu0 0.0
  %6387 = vmatprep.subr.mxu0 0.0
  %6388 = vmatpush1.msra.mxu0 0.0
  %6389 = vmatprep.subr.mxu0 0.0
  %6390 = vmatpush1.msra.mxu0 %v6237
  %6391 = vmatprep.subr.mxu0 0.0
  %6392 = vmatpush1.msra.mxu0 %v6236
  %6393 = vmatprep.subr.mxu0 0.0
  %6394 = vmatpush1.msra.mxu0 %v6235
  %6395 = vmatprep.subr.mxu0 0.0
  %6396 = vmatpush1.msra.mxu0 %v6234
  %6397 = vmatprep.subr.mxu0 0.0
  %6398 = vmatpush1.msra.mxu0 %v6233
  %6399 = vmatprep.subr.mxu0 0.0
  %6400 = vmatpush1.msra.mxu0 %v6232
  %6401 = vmatprep.subr.mxu0 0.0
  %6402 = vmatpush1.msra.mxu0 %v6231
  %6403 = vmatprep.subr.mxu0 0.0
  %6404 = vmatpush1.msra.mxu0 %v6230
  %6405 = vmatprep.subr.mxu0 0.0
  %6406 = vmatpush1.msra.mxu0 %v6229
  %6407 = vmatprep.subr.mxu0 0.0
  %6408 = vmatpush1.msra.mxu0 %v6228
  %6409 = vmatprep.subr.mxu0 0.0
  %6410 = vmatpush1.msra.mxu0 %v6227
  %6411 = vmatprep.subr.mxu0 0.0
  %6412 = vmatpush1.msra.mxu0 %v6226
  %6413 = vmatprep.subr.mxu0 0.0
  %6414 = vmatpush1.msra.mxu0 %v6225
  %6415 = vmatprep.subr.mxu0 0.0
  %6416 = vmatpush2.msra.mxu0 0.0
  %6417 = vmatprep.subr.mxu0 0.0
  %6418 = vmatpush2.msra.mxu0 0.0
  %6419 = vmatprep.subr.mxu0 0.0
  %6420 = vmatpush2.msra.mxu0 0.0
  %6421 = vmatprep.subr.mxu0 0.0
  %6422 = vmatpush2.msra.mxu0 0.0
  %6423 = vmatprep.subr.mxu0 0.0
  %6424 = vmatpush2.msra.mxu0 0.0
  %6425 = vmatprep.subr.mxu0 0.0
  %6426 = vmatpush2.msra.mxu0 0.0
  %6427 = vmatprep.subr.mxu0 0.0
  %6428 = vmatpush2.msra.mxu0 0.0
  %6429 = vmatprep.subr.mxu0 0.0
  %6430 = vmatpush2.msra.mxu0 0.0
  %6431 = vmatprep.subr.mxu0 0.0
  %6432 = vmatpush2.msra.mxu0 0.0
  %6433 = vmatprep.subr.mxu0 0.0
  %6434 = vmatpush2.msra.mxu0 0.0
  %6435 = vmatprep.subr.mxu0 0.0
  %6436 = vmatpush2.msra.mxu0 0.0
  %6437 = vmatprep.subr.mxu0 0.0
  %6438 = vmatpush2.msra.mxu0 0.0
  %6439 = vmatprep.subr.mxu0 0.0
  %6440 = vmatpush2.msra.mxu0 0.0
  %6441 = vmatprep.subr.mxu0 0.0
  %6442 = vmatpush2.msra.mxu0 0.0
  %6443 = vmatprep.subr.mxu0 0.0
  %6444 = vmatpush2.msra.mxu0 0.0
  %6445 = vmatprep.subr.mxu0 0.0
  %6446 = vmatpush2.msra.mxu0 0.0
  %6447 = vmatprep.mubr.f32.mxu0 0.0
  %6448 = vmatmul.mubr.f32.gmra.mxu0 %v5128
  %v6449 = vpop.f32.mrf.mxu0
  %v6450 = vadd.f32 %v6305, %v6449
  %v6451 = vpop.f32.mrf.mxu0
  %6452 = vmatprep.mubr.f32.mxu0 0.0
  %6453 = vmatmul.mubr.f32.gmra.mxu0 %v5131
  %v6454 = vpop.f32.mrf.mxu0
  %v6455 = vadd.f32 %v6310, %v6454
  %v6456 = vpop.f32.mrf.mxu0
  %6457 = vmatprep.mubr.f32.mxu0 0.0
  %6458 = vmatmul.mubr.f32.gmra.mxu0 %v5134
  %v6459 = vpop.f32.mrf.mxu0
  %v6460 = vadd.f32 %v6315, %v6459
  %v6461 = vpop.f32.mrf.mxu0
  %6462 = vmatprep.mubr.f32.mxu0 0.0
  %6463 = vmatmul.mubr.f32.gmra.mxu0 %v5137
  %v6464 = vpop.f32.mrf.mxu0
  %v6465 = vadd.f32 %v6320, %v6464
  %v6466 = vpop.f32.mrf.mxu0
  %6467 = vmatprep.mubr.f32.mxu0 0.0
  %6468 = vmatmul.mubr.f32.gmra.mxu0 %v5140
  %v6469 = vpop.f32.mrf.mxu0
  %v6470 = vadd.f32 %v6325, %v6469
  %v6471 = vpop.f32.mrf.mxu0
  %6472 = vmatprep.mubr.f32.mxu0 0.0
  %6473 = vmatmul.mubr.f32.gmra.mxu0 %v5143
  %v6474 = vpop.f32.mrf.mxu0
  %v6475 = vadd.f32 %v6330, %v6474
  %v6476 = vpop.f32.mrf.mxu0
  %6477 = vmatprep.mubr.f32.mxu0 0.0
  %6478 = vmatmul.mubr.f32.gmra.mxu0 %v5146
  %v6479 = vpop.f32.mrf.mxu0
  %v6480 = vadd.f32 %v6335, %v6479
  %v6481 = vpop.f32.mrf.mxu0
  %6482 = vmatprep.mubr.f32.mxu0 0.0
  %6483 = vmatmul.mubr.f32.gmra.mxu0 %v5149
  %v6484 = vpop.f32.mrf.mxu0
  %v6485 = vadd.f32 %v6340, %v6484
  %v6486 = vpop.f32.mrf.mxu0
  %6487 = vmatprep.mubr.f32.mxu0 0.0
  %6488 = vmatmul.mubr.f32.gmra.mxu0 %v5152
  %v6489 = vpop.f32.mrf.mxu0
  %v6490 = vadd.f32 %v6345, %v6489
  %v6491 = vpop.f32.mrf.mxu0
  %6492 = vmatprep.mubr.f32.mxu0 0.0
  %6493 = vmatmul.mubr.f32.gmra.mxu0 %v5155
  %v6494 = vpop.f32.mrf.mxu0
  %v6495 = vadd.f32 %v6350, %v6494
  %v6496 = vpop.f32.mrf.mxu0
  %6497 = vmatprep.mubr.f32.mxu0 0.0
  %6498 = vmatmul.mubr.f32.gmra.mxu0 %v5158
  %v6499 = vpop.f32.mrf.mxu0
  %v6500 = vadd.f32 %v6355, %v6499
  %v6501 = vpop.f32.mrf.mxu0
  %6502 = vmatprep.mubr.f32.mxu0 0.0
  %6503 = vmatmul.mubr.f32.gmra.mxu0 %v5161
  %v6504 = vpop.f32.mrf.mxu0
  %v6505 = vadd.f32 %v6360, %v6504
  %v6506 = vpop.f32.mrf.mxu0
  %6507 = vmatprep.mubr.f32.mxu0 0.0
  %6508 = vmatmul.mubr.f32.gmra.mxu0 %v5164
  %v6509 = vpop.f32.mrf.mxu0
  %v6510 = vadd.f32 %v6365, %v6509
  %v6511 = vpop.f32.mrf.mxu0
  %6512 = vmatprep.mubr.f32.mxu0 0.0
  %6513 = vmatmul.mubr.f32.gmra.mxu0 %v5167
  %v6514 = vpop.f32.mrf.mxu0
  %v6515 = vadd.f32 %v6370, %v6514
  %v6516 = vpop.f32.mrf.mxu0
  %6517 = vmatprep.mubr.f32.mxu0 0.0
  %6518 = vmatmul.mubr.f32.gmra.mxu0 %v5170
  %v6519 = vpop.f32.mrf.mxu0
  %v6520 = vadd.f32 %v6375, %v6519
  %v6521 = vpop.f32.mrf.mxu0
  %6522 = vmatprep.mubr.f32.mxu0 0.0
  %6523 = vmatmul.mubr.f32.gmra.mxu0 %v5173
  %v6524 = vpop.f32.mrf.mxu0
  %v6525 = vadd.f32 %v6380, %v6524
  %v6526 = vpop.f32.mrf.mxu0
  %6527 = vdwg.mxu0
  %v6528 = vmax.f32 %v6115, %v6155
  %v6529 = vmax.f32 %v6120, %v6160
  %v6530 = vmax.f32 %v6450, %v6490
  %v6531 = vmax.f32 %v6455, %v6495
  %v6532 = vmax.f32 %v6528, %v6530
  %v6533 = vmax.f32 %v6529, %v6531
  %v6534 = vadd.f32 %v6532, %v5809
  %v6535 = vadd.f32 %v6533, %v5814
  %v6536 = vmax.f32 %v6534, 0.0
  %v6537 = vmax.f32 %v6535, 0.0
  %6538 = vst [vmem:[#allocation3 + $0x40] sm:$0xff] %v6536
  %6539 = vst [vmem:[#allocation3 + $0x48] sm:$0xff] %v6537
  %v6540 = vmax.f32 %v6125, %v6165
  %v6541 = vmax.f32 %v6130, %v6170
  %v6542 = vmax.f32 %v6460, %v6500
  %v6543 = vmax.f32 %v6465, %v6505
  %v6544 = vmax.f32 %v6540, %v6542
  %v6545 = vmax.f32 %v6541, %v6543
  %v6546 = vadd.f32 %v6544, %v5809
  %v6547 = vadd.f32 %v6545, %v5814
  %v6548 = vmax.f32 %v6546, 0.0
  %v6549 = vmax.f32 %v6547, 0.0
  %6550 = vst [vmem:[#allocation3 + $0x50] sm:$0xff] %v6548
  %6551 = vst [vmem:[#allocation3 + $0x58] sm:$0xff] %v6549
  %v6552 = vmax.f32 %v6135, %v6175
  %v6553 = vmax.f32 %v6140, %v6180
  %v6554 = vmax.f32 %v6470, %v6510
  %v6555 = vmax.f32 %v6475, %v6515
  %v6556 = vmax.f32 %v6552, %v6554
  %v6557 = vmax.f32 %v6553, %v6555
  %v6558 = vadd.f32 %v6556, %v5809
  %v6559 = vadd.f32 %v6557, %v5814
  %v6560 = vmax.f32 %v6558, 0.0
  %v6561 = vmax.f32 %v6559, 0.0
  %6562 = vst [vmem:[#allocation3 + $0x60] sm:$0xff] %v6560
  %6563 = vst [vmem:[#allocation3 + $0x68] sm:$0xff] %v6561
  %v6564 = vmax.f32 %v6145, %v6185
  %v6565 = vmax.f32 %v6150, %v6190
  %v6566 = vmax.f32 %v6480, %v6520
  %v6567 = vmax.f32 %v6485, %v6525
  %v6568 = vmax.f32 %v6564, %v6566
  %v6569 = vmax.f32 %v6565, %v6567
  %v6570 = vadd.f32 %v6568, %v5809
  %v6571 = vadd.f32 %v6569, %v5814
  %v6572 = vmax.f32 %v6570, 0.0
  %v6573 = vmax.f32 %v6571, 0.0
  %6574 = vst [vmem:[#allocation3 + $0x70] sm:$0xff] %v6572
  %6575 = vst [vmem:[#allocation3 + $0x78] sm:$0xff] %v6573
  %v6576 = vld [vmem:[#allocation2 + $0x120] sm:$0xff]
  %v6577 = vld [vmem:[#allocation2 + $0x128] sm:$0xff]
  %v6578 = vld [vmem:[#allocation2 + $0x130] sm:$0xff]
  %v6579 = vld [vmem:[#allocation2 + $0x138] sm:$0xff]
  %v6580 = vld [vmem:[#allocation2 + $0x140] sm:$0xff]
  %v6581 = vld [vmem:[#allocation2 + $0x148] sm:$0xff]
  %v6582 = vld [vmem:[#allocation2 + $0x150] sm:$0xff]
  %v6583 = vld [vmem:[#allocation2 + $0x158] sm:$0xff]
  %v6584 = vld [vmem:[#allocation2 + $0x160] sm:$0xff]
  %v6585 = vld [vmem:[#allocation2 + $0x168] sm:$0xff]
  %v6586 = vld [vmem:[#allocation2 + $0x170] sm:$0xff]
  %v6587 = vld [vmem:[#allocation2 + $0x178] sm:$0xff]
  %v6588 = vld [vmem:[#allocation2 + $0x180] sm:$0xff]
  %v6589 = vld [vmem:[#allocation2 + $0x188] sm:$0xff]
  %v6590 = vld [vmem:[#allocation2 + $0x190] sm:$0xff]
  %v6591 = vld [vmem:[#allocation2 + $0x198] sm:$0xff]
  %v6592 = vld [vmem:[#allocation2 + $0x1a0] sm:$0xff]
  %v6593 = vld [vmem:[#allocation2 + $0x1a8] sm:$0xff]
  %v6594 = vld [vmem:[#allocation2 + $0x1b0] sm:$0xff]
  %v6595 = vld [vmem:[#allocation2 + $0x1b8] sm:$0xff]
  %v6596 = vld [vmem:[#allocation2 + $0x1c0] sm:$0xff]
  %v6597 = vld [vmem:[#allocation2 + $0x1c8] sm:$0xff]
  %v6598 = vld [vmem:[#allocation2 + $0x1d0] sm:$0xff]
  %v6599 = vld [vmem:[#allocation2 + $0x1d8] sm:$0xff]
  %v6600 = vld [vmem:[#allocation2 + $0x1e0] sm:$0xff]
  %v6601 = vld [vmem:[#allocation2 + $0x1e8] sm:$0xff]
  %v6602 = vld [vmem:[#allocation2 + $0x1f0] sm:$0xff]
  %v6603 = vld [vmem:[#allocation2 + $0x1f8] sm:$0xff]
  %v6604 = vld [vmem:[#allocation2 + $0x200] sm:$0xff]
  %v6605 = vld [vmem:[#allocation2 + $0x208] sm:$0xff]
  %v6606 = vld [vmem:[#allocation2 + $0x210] sm:$0xff]
  %v6607 = vld [vmem:[#allocation2 + $0x218] sm:$0xff]
  %v6608 = vld [vmem:[#allocation2 + $0x220] sm:$0xff]
  %v6609 = vld [vmem:[#allocation2 + $0x228] sm:$0xff]
  %v6610 = vld [vmem:[#allocation2 + $0x230] sm:$0xff]
  %v6611 = vld [vmem:[#allocation2 + $0x238] sm:$0xff]
  %v6612 = vld [vmem:[#allocation2 + $0x240] sm:$0xff]
  %v6613 = vld [vmem:[#allocation2 + $0x248] sm:$0xff]
  %v6614 = vld [vmem:[#allocation2 + $0x250] sm:$0xff]
  %v6615 = vld [vmem:[#allocation2 + $0x258] sm:$0xff]
  %v6616 = vld [vmem:[#allocation2 + $0x260] sm:$0xff]
  %v6617 = vld [vmem:[#allocation2 + $0x268] sm:$0xff]
  %v6618 = vld [vmem:[#allocation2 + $0x270] sm:$0xff]
  %v6619 = vld [vmem:[#allocation2 + $0x278] sm:$0xff]
  %v6620 = vld [vmem:[#allocation2 + $0x280] sm:$0xff]
  %6621 = vmatprep.subr.mxu0 0.0
  %6622 = vmatpush1.msra.mxu0 %v6591
  %6623 = vmatprep.subr.mxu0 0.0
  %6624 = vmatpush1.msra.mxu0 %v6590
  %6625 = vmatprep.subr.mxu0 0.0
  %6626 = vmatpush1.msra.mxu0 %v6589
  %6627 = vmatprep.subr.mxu0 0.0
  %6628 = vmatpush1.msra.mxu0 %v6588
  %6629 = vmatprep.subr.mxu0 0.0
  %6630 = vmatpush1.msra.mxu0 %v6587
  %6631 = vmatprep.subr.mxu0 0.0
  %6632 = vmatpush1.msra.mxu0 %v6586
  %6633 = vmatprep.subr.mxu0 0.0
  %6634 = vmatpush1.msra.mxu0 %v6585
  %6635 = vmatprep.subr.mxu0 0.0
  %6636 = vmatpush1.msra.mxu0 %v6584
  %6637 = vmatprep.subr.mxu0 0.0
  %6638 = vmatpush1.msra.mxu0 %v6583
  %6639 = vmatprep.subr.mxu0 0.0
  %6640 = vmatpush1.msra.mxu0 %v6582
  %6641 = vmatprep.subr.mxu0 0.0
  %6642 = vmatpush1.msra.mxu0 %v6581
  %6643 = vmatprep.subr.mxu0 0.0
  %6644 = vmatpush1.msra.mxu0 %v6580
  %6645 = vmatprep.subr.mxu0 0.0
  %6646 = vmatpush1.msra.mxu0 %v6579
  %6647 = vmatprep.subr.mxu0 0.0
  %6648 = vmatpush1.msra.mxu0 %v6578
  %6649 = vmatprep.subr.mxu0 0.0
  %6650 = vmatpush1.msra.mxu0 %v6577
  %6651 = vmatprep.subr.mxu0 0.0
  %6652 = vmatpush1.msra.mxu0 %v6576
  %6653 = vmatprep.subr.mxu0 0.0
  %6654 = vmatpush2.msra.mxu0 %v6607
  %6655 = vmatprep.subr.mxu0 0.0
  %6656 = vmatpush2.msra.mxu0 %v6606
  %6657 = vmatprep.subr.mxu0 0.0
  %6658 = vmatpush2.msra.mxu0 %v6605
  %6659 = vmatprep.subr.mxu0 0.0
  %6660 = vmatpush2.msra.mxu0 %v6604
  %6661 = vmatprep.subr.mxu0 0.0
  %6662 = vmatpush2.msra.mxu0 %v6603
  %6663 = vmatprep.subr.mxu0 0.0
  %6664 = vmatpush2.msra.mxu0 %v6602
  %6665 = vmatprep.subr.mxu0 0.0
  %6666 = vmatpush2.msra.mxu0 %v6601
  %6667 = vmatprep.subr.mxu0 0.0
  %6668 = vmatpush2.msra.mxu0 %v6600
  %6669 = vmatprep.subr.mxu0 0.0
  %6670 = vmatpush2.msra.mxu0 %v6599
  %6671 = vmatprep.subr.mxu0 0.0
  %6672 = vmatpush2.msra.mxu0 %v6598
  %6673 = vmatprep.subr.mxu0 0.0
  %6674 = vmatpush2.msra.mxu0 %v6597
  %6675 = vmatprep.subr.mxu0 0.0
  %6676 = vmatpush2.msra.mxu0 %v6596
  %6677 = vmatprep.subr.mxu0 0.0
  %6678 = vmatpush2.msra.mxu0 %v6595
  %6679 = vmatprep.subr.mxu0 0.0
  %6680 = vmatpush2.msra.mxu0 %v6594
  %6681 = vmatprep.subr.mxu0 0.0
  %6682 = vmatpush2.msra.mxu0 %v6593
  %6683 = vmatprep.subr.mxu0 0.0
  %6684 = vmatpush2.msra.mxu0 %v6592
  %6685 = vmatprep.mubr.f32.mxu0 %v5032
  %6686 = vmatmul.mubr.f32.gmra.mxu0 %v5031
  %v6687 = vpop.f32.mrf.mxu0
  %v6688 = vadd.f32 0.0, %v6687
  %v6689 = vpop.f32.mrf.mxu0
  %6690 = vmatprep.mubr.f32.mxu0 %v5035
  %6691 = vmatmul.mubr.f32.gmra.mxu0 %v5034
  %v6692 = vpop.f32.mrf.mxu0
  %v6693 = vadd.f32 0.0, %v6692
  %v6694 = vpop.f32.mrf.mxu0
  %6695 = vmatprep.mubr.f32.mxu0 %v5038
  %6696 = vmatmul.mubr.f32.gmra.mxu0 %v5037
  %v6697 = vpop.f32.mrf.mxu0
  %v6698 = vadd.f32 0.0, %v6697
  %v6699 = vpop.f32.mrf.mxu0
  %6700 = vmatprep.mubr.f32.mxu0 %v5041
  %6701 = vmatmul.mubr.f32.gmra.mxu0 %v5040
  %v6702 = vpop.f32.mrf.mxu0
  %v6703 = vadd.f32 0.0, %v6702
  %v6704 = vpop.f32.mrf.mxu0
  %6705 = vmatprep.mubr.f32.mxu0 %v5044
  %6706 = vmatmul.mubr.f32.gmra.mxu0 %v5043
  %v6707 = vpop.f32.mrf.mxu0
  %v6708 = vadd.f32 0.0, %v6707
  %v6709 = vpop.f32.mrf.mxu0
  %6710 = vmatprep.mubr.f32.mxu0 %v5047
  %6711 = vmatmul.mubr.f32.gmra.mxu0 %v5046
  %v6712 = vpop.f32.mrf.mxu0
  %v6713 = vadd.f32 0.0, %v6712
  %v6714 = vpop.f32.mrf.mxu0
  %6715 = vmatprep.mubr.f32.mxu0 %v5050
  %6716 = vmatmul.mubr.f32.gmra.mxu0 %v5049
  %v6717 = vpop.f32.mrf.mxu0
  %v6718 = vadd.f32 0.0, %v6717
  %v6719 = vpop.f32.mrf.mxu0
  %6720 = vmatprep.mubr.f32.mxu0 %v5053
  %6721 = vmatmul.mubr.f32.gmra.mxu0 %v5052
  %v6722 = vpop.f32.mrf.mxu0
  %v6723 = vadd.f32 0.0, %v6722
  %v6724 = vpop.f32.mrf.mxu0
  %6725 = vmatprep.mubr.f32.mxu0 %v5056
  %6726 = vmatmul.mubr.f32.gmra.mxu0 %v5055
  %v6727 = vpop.f32.mrf.mxu0
  %v6728 = vadd.f32 0.0, %v6727
  %v6729 = vpop.f32.mrf.mxu0
  %6730 = vmatprep.mubr.f32.mxu0 %v5059
  %6731 = vmatmul.mubr.f32.gmra.mxu0 %v5058
  %v6732 = vpop.f32.mrf.mxu0
  %v6733 = vadd.f32 0.0, %v6732
  %v6734 = vpop.f32.mrf.mxu0
  %6735 = vmatprep.mubr.f32.mxu0 %v5062
  %6736 = vmatmul.mubr.f32.gmra.mxu0 %v5061
  %v6737 = vpop.f32.mrf.mxu0
  %v6738 = vadd.f32 0.0, %v6737
  %v6739 = vpop.f32.mrf.mxu0
  %6740 = vmatprep.mubr.f32.mxu0 %v5065
  %6741 = vmatmul.mubr.f32.gmra.mxu0 %v5064
  %v6742 = vpop.f32.mrf.mxu0
  %v6743 = vadd.f32 0.0, %v6742
  %v6744 = vpop.f32.mrf.mxu0
  %6745 = vmatprep.mubr.f32.mxu0 %v5068
  %6746 = vmatmul.mubr.f32.gmra.mxu0 %v5067
  %v6747 = vpop.f32.mrf.mxu0
  %v6748 = vadd.f32 0.0, %v6747
  %v6749 = vpop.f32.mrf.mxu0
  %6750 = vmatprep.mubr.f32.mxu0 %v5071
  %6751 = vmatmul.mubr.f32.gmra.mxu0 %v5070
  %v6752 = vpop.f32.mrf.mxu0
  %v6753 = vadd.f32 0.0, %v6752
  %v6754 = vpop.f32.mrf.mxu0
  %6755 = vmatprep.mubr.f32.mxu0 %v5074
  %6756 = vmatmul.mubr.f32.gmra.mxu0 %v5073
  %v6757 = vpop.f32.mrf.mxu0
  %v6758 = vadd.f32 0.0, %v6757
  %v6759 = vpop.f32.mrf.mxu0
  %6760 = vmatprep.mubr.f32.mxu0 %v5077
  %6761 = vmatmul.mubr.f32.gmra.mxu0 %v5076
  %v6762 = vpop.f32.mrf.mxu0
  %v6763 = vadd.f32 0.0, %v6762
  %v6764 = vpop.f32.mrf.mxu0
  %6765 = vdwg.mxu0
  %6766 = vmatprep.subr.mxu0 0.0
  %6767 = vmatpush1.msra.mxu0 0.0
  %6768 = vmatprep.subr.mxu0 0.0
  %6769 = vmatpush1.msra.mxu0 0.0
  %6770 = vmatprep.subr.mxu0 0.0
  %6771 = vmatpush1.msra.mxu0 0.0
  %6772 = vmatprep.subr.mxu0 0.0
  %6773 = vmatpush1.msra.mxu0 %v6620
  %6774 = vmatprep.subr.mxu0 0.0
  %6775 = vmatpush1.msra.mxu0 %v6619
  %6776 = vmatprep.subr.mxu0 0.0
  %6777 = vmatpush1.msra.mxu0 %v6618
  %6778 = vmatprep.subr.mxu0 0.0
  %6779 = vmatpush1.msra.mxu0 %v6617
  %6780 = vmatprep.subr.mxu0 0.0
  %6781 = vmatpush1.msra.mxu0 %v6616
  %6782 = vmatprep.subr.mxu0 0.0
  %6783 = vmatpush1.msra.mxu0 %v6615
  %6784 = vmatprep.subr.mxu0 0.0
  %6785 = vmatpush1.msra.mxu0 %v6614
  %6786 = vmatprep.subr.mxu0 0.0
  %6787 = vmatpush1.msra.mxu0 %v6613
  %6788 = vmatprep.subr.mxu0 0.0
  %6789 = vmatpush1.msra.mxu0 %v6612
  %6790 = vmatprep.subr.mxu0 0.0
  %6791 = vmatpush1.msra.mxu0 %v6611
  %6792 = vmatprep.subr.mxu0 0.0
  %6793 = vmatpush1.msra.mxu0 %v6610
  %6794 = vmatprep.subr.mxu0 0.0
  %6795 = vmatpush1.msra.mxu0 %v6609
  %6796 = vmatprep.subr.mxu0 0.0
  %6797 = vmatpush1.msra.mxu0 %v6608
  %6798 = vmatprep.subr.mxu0 0.0
  %6799 = vmatpush2.msra.mxu0 0.0
  %6800 = vmatprep.subr.mxu0 0.0
  %6801 = vmatpush2.msra.mxu0 0.0
  %6802 = vmatprep.subr.mxu0 0.0
  %6803 = vmatpush2.msra.mxu0 0.0
  %6804 = vmatprep.subr.mxu0 0.0
  %6805 = vmatpush2.msra.mxu0 0.0
  %6806 = vmatprep.subr.mxu0 0.0
  %6807 = vmatpush2.msra.mxu0 0.0
  %6808 = vmatprep.subr.mxu0 0.0
  %6809 = vmatpush2.msra.mxu0 0.0
  %6810 = vmatprep.subr.mxu0 0.0
  %6811 = vmatpush2.msra.mxu0 0.0
  %6812 = vmatprep.subr.mxu0 0.0
  %6813 = vmatpush2.msra.mxu0 0.0
  %6814 = vmatprep.subr.mxu0 0.0
  %6815 = vmatpush2.msra.mxu0 0.0
  %6816 = vmatprep.subr.mxu0 0.0
  %6817 = vmatpush2.msra.mxu0 0.0
  %6818 = vmatprep.subr.mxu0 0.0
  %6819 = vmatpush2.msra.mxu0 0.0
  %6820 = vmatprep.subr.mxu0 0.0
  %6821 = vmatpush2.msra.mxu0 0.0
  %6822 = vmatprep.subr.mxu0 0.0
  %6823 = vmatpush2.msra.mxu0 0.0
  %6824 = vmatprep.subr.mxu0 0.0
  %6825 = vmatpush2.msra.mxu0 0.0
  %6826 = vmatprep.subr.mxu0 0.0
  %6827 = vmatpush2.msra.mxu0 0.0
  %6828 = vmatprep.subr.mxu0 0.0
  %6829 = vmatpush2.msra.mxu0 0.0
  %6830 = vmatprep.mubr.f32.mxu0 0.0
  %6831 = vmatmul.mubr.f32.gmra.mxu0 %v5128
  %v6832 = vpop.f32.mrf.mxu0
  %v6833 = vadd.f32 %v6688, %v6832
  %v6834 = vpop.f32.mrf.mxu0
  %6835 = vmatprep.mubr.f32.mxu0 0.0
  %6836 = vmatmul.mubr.f32.gmra.mxu0 %v5131
  %v6837 = vpop.f32.mrf.mxu0
  %v6838 = vadd.f32 %v6693, %v6837
  %v6839 = vpop.f32.mrf.mxu0
  %6840 = vmatprep.mubr.f32.mxu0 0.0
  %6841 = vmatmul.mubr.f32.gmra.mxu0 %v5134
  %v6842 = vpop.f32.mrf.mxu0
  %v6843 = vadd.f32 %v6698, %v6842
  %v6844 = vpop.f32.mrf.mxu0
  %6845 = vmatprep.mubr.f32.mxu0 0.0
  %6846 = vmatmul.mubr.f32.gmra.mxu0 %v5137
  %v6847 = vpop.f32.mrf.mxu0
  %v6848 = vadd.f32 %v6703, %v6847
  %v6849 = vpop.f32.mrf.mxu0
  %6850 = vmatprep.mubr.f32.mxu0 0.0
  %6851 = vmatmul.mubr.f32.gmra.mxu0 %v5140
  %v6852 = vpop.f32.mrf.mxu0
  %v6853 = vadd.f32 %v6708, %v6852
  %v6854 = vpop.f32.mrf.mxu0
  %6855 = vmatprep.mubr.f32.mxu0 0.0
  %6856 = vmatmul.mubr.f32.gmra.mxu0 %v5143
  %v6857 = vpop.f32.mrf.mxu0
  %v6858 = vadd.f32 %v6713, %v6857
  %v6859 = vpop.f32.mrf.mxu0
  %6860 = vmatprep.mubr.f32.mxu0 0.0
  %6861 = vmatmul.mubr.f32.gmra.mxu0 %v5146
  %v6862 = vpop.f32.mrf.mxu0
  %v6863 = vadd.f32 %v6718, %v6862
  %v6864 = vpop.f32.mrf.mxu0
  %6865 = vmatprep.mubr.f32.mxu0 0.0
  %6866 = vmatmul.mubr.f32.gmra.mxu0 %v5149
  %v6867 = vpop.f32.mrf.mxu0
  %v6868 = vadd.f32 %v6723, %v6867
  %v6869 = vpop.f32.mrf.mxu0
  %6870 = vmatprep.mubr.f32.mxu0 0.0
  %6871 = vmatmul.mubr.f32.gmra.mxu0 %v5152
  %v6872 = vpop.f32.mrf.mxu0
  %v6873 = vadd.f32 %v6728, %v6872
  %v6874 = vpop.f32.mrf.mxu0
  %6875 = vmatprep.mubr.f32.mxu0 0.0
  %6876 = vmatmul.mubr.f32.gmra.mxu0 %v5155
  %v6877 = vpop.f32.mrf.mxu0
  %v6878 = vadd.f32 %v6733, %v6877
  %v6879 = vpop.f32.mrf.mxu0
  %6880 = vmatprep.mubr.f32.mxu0 0.0
  %6881 = vmatmul.mubr.f32.gmra.mxu0 %v5158
  %v6882 = vpop.f32.mrf.mxu0
  %v6883 = vadd.f32 %v6738, %v6882
  %v6884 = vpop.f32.mrf.mxu0
  %6885 = vmatprep.mubr.f32.mxu0 0.0
  %6886 = vmatmul.mubr.f32.gmra.mxu0 %v5161
  %v6887 = vpop.f32.mrf.mxu0
  %v6888 = vadd.f32 %v6743, %v6887
  %v6889 = vpop.f32.mrf.mxu0
  %6890 = vmatprep.mubr.f32.mxu0 0.0
  %6891 = vmatmul.mubr.f32.gmra.mxu0 %v5164
  %v6892 = vpop.f32.mrf.mxu0
  %v6893 = vadd.f32 %v6748, %v6892
  %v6894 = vpop.f32.mrf.mxu0
  %6895 = vmatprep.mubr.f32.mxu0 0.0
  %6896 = vmatmul.mubr.f32.gmra.mxu0 %v5167
  %v6897 = vpop.f32.mrf.mxu0
  %v6898 = vadd.f32 %v6753, %v6897
  %v6899 = vpop.f32.mrf.mxu0
  %6900 = vmatprep.mubr.f32.mxu0 0.0
  %6901 = vmatmul.mubr.f32.gmra.mxu0 %v5170
  %v6902 = vpop.f32.mrf.mxu0
  %v6903 = vadd.f32 %v6758, %v6902
  %v6904 = vpop.f32.mrf.mxu0
  %6905 = vmatprep.mubr.f32.mxu0 0.0
  %6906 = vmatmul.mubr.f32.gmra.mxu0 %v5173
  %v6907 = vpop.f32.mrf.mxu0
  %v6908 = vadd.f32 %v6763, %v6907
  %v6909 = vpop.f32.mrf.mxu0
  %6910 = vdwg.mxu0
  %v6911 = vld [vmem:[#allocation2 + $0x168] sm:$0xff]
  %v6912 = vld [vmem:[#allocation2 + $0x170] sm:$0xff]
  %v6913 = vld [vmem:[#allocation2 + $0x178] sm:$0xff]
  %v6914 = vld [vmem:[#allocation2 + $0x180] sm:$0xff]
  %v6915 = vld [vmem:[#allocation2 + $0x188] sm:$0xff]
  %v6916 = vld [vmem:[#allocation2 + $0x190] sm:$0xff]
  %v6917 = vld [vmem:[#allocation2 + $0x198] sm:$0xff]
  %v6918 = vld [vmem:[#allocation2 + $0x1a0] sm:$0xff]
  %v6919 = vld [vmem:[#allocation2 + $0x1a8] sm:$0xff]
  %v6920 = vld [vmem:[#allocation2 + $0x1b0] sm:$0xff]
  %v6921 = vld [vmem:[#allocation2 + $0x1b8] sm:$0xff]
  %v6922 = vld [vmem:[#allocation2 + $0x1c0] sm:$0xff]
  %v6923 = vld [vmem:[#allocation2 + $0x1c8] sm:$0xff]
  %v6924 = vld [vmem:[#allocation2 + $0x1d0] sm:$0xff]
  %v6925 = vld [vmem:[#allocation2 + $0x1d8] sm:$0xff]
  %v6926 = vld [vmem:[#allocation2 + $0x1e0] sm:$0xff]
  %v6927 = vld [vmem:[#allocation2 + $0x1e8] sm:$0xff]
  %v6928 = vld [vmem:[#allocation2 + $0x1f0] sm:$0xff]
  %v6929 = vld [vmem:[#allocation2 + $0x1f8] sm:$0xff]
  %v6930 = vld [vmem:[#allocation2 + $0x200] sm:$0xff]
  %v6931 = vld [vmem:[#allocation2 + $0x208] sm:$0xff]
  %v6932 = vld [vmem:[#allocation2 + $0x210] sm:$0xff]
  %v6933 = vld [vmem:[#allocation2 + $0x218] sm:$0xff]
  %v6934 = vld [vmem:[#allocation2 + $0x220] sm:$0xff]
  %v6935 = vld [vmem:[#allocation2 + $0x228] sm:$0xff]
  %v6936 = vld [vmem:[#allocation2 + $0x230] sm:$0xff]
  %v6937 = vld [vmem:[#allocation2 + $0x238] sm:$0xff]
  %v6938 = vld [vmem:[#allocation2 + $0x240] sm:$0xff]
  %v6939 = vld [vmem:[#allocation2 + $0x248] sm:$0xff]
  %v6940 = vld [vmem:[#allocation2 + $0x250] sm:$0xff]
  %v6941 = vld [vmem:[#allocation2 + $0x258] sm:$0xff]
  %v6942 = vld [vmem:[#allocation2 + $0x260] sm:$0xff]
  %v6943 = vld [vmem:[#allocation2 + $0x268] sm:$0xff]
  %v6944 = vld [vmem:[#allocation2 + $0x270] sm:$0xff]
  %v6945 = vld [vmem:[#allocation2 + $0x278] sm:$0xff]
  %v6946 = vld [vmem:[#allocation2 + $0x280] sm:$0xff]
  %v6947 = vld [vmem:[#allocation2 + $0x288] sm:$0xff]
  %v6948 = vld [vmem:[#allocation2 + $0x290] sm:$0xff]
  %v6949 = vld [vmem:[#allocation2 + $0x298] sm:$0xff]
  %v6950 = vld [vmem:[#allocation2 + $0x2a0] sm:$0xff]
  %v6951 = vld [vmem:[#allocation2 + $0x2a8] sm:$0xff]
  %v6952 = vld [vmem:[#allocation2 + $0x2b0] sm:$0xff]
  %v6953 = vld [vmem:[#allocation2 + $0x2b8] sm:$0xff]
  %v6954 = vld [vmem:[#allocation2 + $0x2c0] sm:$0xff]
  %v6955 = vld [vmem:[#allocation2 + $0x2c8] sm:$0xff]
  %6956 = vmatprep.subr.mxu0 0.0
  %6957 = vmatpush1.msra.mxu0 %v6926
  %6958 = vmatprep.subr.mxu0 0.0
  %6959 = vmatpush1.msra.mxu0 %v6925
  %6960 = vmatprep.subr.mxu0 0.0
  %6961 = vmatpush1.msra.mxu0 %v6924
  %6962 = vmatprep.subr.mxu0 0.0
  %6963 = vmatpush1.msra.mxu0 %v6923
  %6964 = vmatprep.subr.mxu0 0.0
  %6965 = vmatpush1.msra.mxu0 %v6922
  %6966 = vmatprep.subr.mxu0 0.0
  %6967 = vmatpush1.msra.mxu0 %v6921
  %6968 = vmatprep.subr.mxu0 0.0
  %6969 = vmatpush1.msra.mxu0 %v6920
  %6970 = vmatprep.subr.mxu0 0.0
  %6971 = vmatpush1.msra.mxu0 %v6919
  %6972 = vmatprep.subr.mxu0 0.0
  %6973 = vmatpush1.msra.mxu0 %v6918
  %6974 = vmatprep.subr.mxu0 0.0
  %6975 = vmatpush1.msra.mxu0 %v6917
  %6976 = vmatprep.subr.mxu0 0.0
  %6977 = vmatpush1.msra.mxu0 %v6916
  %6978 = vmatprep.subr.mxu0 0.0
  %6979 = vmatpush1.msra.mxu0 %v6915
  %6980 = vmatprep.subr.mxu0 0.0
  %6981 = vmatpush1.msra.mxu0 %v6914
  %6982 = vmatprep.subr.mxu0 0.0
  %6983 = vmatpush1.msra.mxu0 %v6913
  %6984 = vmatprep.subr.mxu0 0.0
  %6985 = vmatpush1.msra.mxu0 %v6912
  %6986 = vmatprep.subr.mxu0 0.0
  %6987 = vmatpush1.msra.mxu0 %v6911
  %6988 = vmatprep.subr.mxu0 0.0
  %6989 = vmatpush2.msra.mxu0 %v6942
  %6990 = vmatprep.subr.mxu0 0.0
  %6991 = vmatpush2.msra.mxu0 %v6941
  %6992 = vmatprep.subr.mxu0 0.0
  %6993 = vmatpush2.msra.mxu0 %v6940
  %6994 = vmatprep.subr.mxu0 0.0
  %6995 = vmatpush2.msra.mxu0 %v6939
  %6996 = vmatprep.subr.mxu0 0.0
  %6997 = vmatpush2.msra.mxu0 %v6938
  %6998 = vmatprep.subr.mxu0 0.0
  %6999 = vmatpush2.msra.mxu0 %v6937
  %7000 = vmatprep.subr.mxu0 0.0
  %7001 = vmatpush2.msra.mxu0 %v6936
  %7002 = vmatprep.subr.mxu0 0.0
  %7003 = vmatpush2.msra.mxu0 %v6935
  %7004 = vmatprep.subr.mxu0 0.0
  %7005 = vmatpush2.msra.mxu0 %v6934
  %7006 = vmatprep.subr.mxu0 0.0
  %7007 = vmatpush2.msra.mxu0 %v6933
  %7008 = vmatprep.subr.mxu0 0.0
  %7009 = vmatpush2.msra.mxu0 %v6932
  %7010 = vmatprep.subr.mxu0 0.0
  %7011 = vmatpush2.msra.mxu0 %v6931
  %7012 = vmatprep.subr.mxu0 0.0
  %7013 = vmatpush2.msra.mxu0 %v6930
  %7014 = vmatprep.subr.mxu0 0.0
  %7015 = vmatpush2.msra.mxu0 %v6929
  %7016 = vmatprep.subr.mxu0 0.0
  %7017 = vmatpush2.msra.mxu0 %v6928
  %7018 = vmatprep.subr.mxu0 0.0
  %7019 = vmatpush2.msra.mxu0 %v6927
  %7020 = vmatprep.mubr.f32.mxu0 %v5032
  %7021 = vmatmul.mubr.f32.gmra.mxu0 %v5031
  %v7022 = vpop.f32.mrf.mxu0
  %v7023 = vadd.f32 0.0, %v7022
  %v7024 = vpop.f32.mrf.mxu0
  %7025 = vmatprep.mubr.f32.mxu0 %v5035
  %7026 = vmatmul.mubr.f32.gmra.mxu0 %v5034
  %v7027 = vpop.f32.mrf.mxu0
  %v7028 = vadd.f32 0.0, %v7027
  %v7029 = vpop.f32.mrf.mxu0
  %7030 = vmatprep.mubr.f32.mxu0 %v5038
  %7031 = vmatmul.mubr.f32.gmra.mxu0 %v5037
  %v7032 = vpop.f32.mrf.mxu0
  %v7033 = vadd.f32 0.0, %v7032
  %v7034 = vpop.f32.mrf.mxu0
  %7035 = vmatprep.mubr.f32.mxu0 %v5041
  %7036 = vmatmul.mubr.f32.gmra.mxu0 %v5040
  %v7037 = vpop.f32.mrf.mxu0
  %v7038 = vadd.f32 0.0, %v7037
  %v7039 = vpop.f32.mrf.mxu0
  %7040 = vmatprep.mubr.f32.mxu0 %v5044
  %7041 = vmatmul.mubr.f32.gmra.mxu0 %v5043
  %v7042 = vpop.f32.mrf.mxu0
  %v7043 = vadd.f32 0.0, %v7042
  %v7044 = vpop.f32.mrf.mxu0
  %7045 = vmatprep.mubr.f32.mxu0 %v5047
  %7046 = vmatmul.mubr.f32.gmra.mxu0 %v5046
  %v7047 = vpop.f32.mrf.mxu0
  %v7048 = vadd.f32 0.0, %v7047
  %v7049 = vpop.f32.mrf.mxu0
  %7050 = vmatprep.mubr.f32.mxu0 %v5050
  %7051 = vmatmul.mubr.f32.gmra.mxu0 %v5049
  %v7052 = vpop.f32.mrf.mxu0
  %v7053 = vadd.f32 0.0, %v7052
  %v7054 = vpop.f32.mrf.mxu0
  %7055 = vmatprep.mubr.f32.mxu0 %v5053
  %7056 = vmatmul.mubr.f32.gmra.mxu0 %v5052
  %v7057 = vpop.f32.mrf.mxu0
  %v7058 = vadd.f32 0.0, %v7057
  %v7059 = vpop.f32.mrf.mxu0
  %7060 = vmatprep.mubr.f32.mxu0 %v5056
  %7061 = vmatmul.mubr.f32.gmra.mxu0 %v5055
  %v7062 = vpop.f32.mrf.mxu0
  %v7063 = vadd.f32 0.0, %v7062
  %v7064 = vpop.f32.mrf.mxu0
  %7065 = vmatprep.mubr.f32.mxu0 %v5059
  %7066 = vmatmul.mubr.f32.gmra.mxu0 %v5058
  %v7067 = vpop.f32.mrf.mxu0
  %v7068 = vadd.f32 0.0, %v7067
  %v7069 = vpop.f32.mrf.mxu0
  %7070 = vmatprep.mubr.f32.mxu0 %v5062
  %7071 = vmatmul.mubr.f32.gmra.mxu0 %v5061
  %v7072 = vpop.f32.mrf.mxu0
  %v7073 = vadd.f32 0.0, %v7072
  %v7074 = vpop.f32.mrf.mxu0
  %7075 = vmatprep.mubr.f32.mxu0 %v5065
  %7076 = vmatmul.mubr.f32.gmra.mxu0 %v5064
  %v7077 = vpop.f32.mrf.mxu0
  %v7078 = vadd.f32 0.0, %v7077
  %v7079 = vpop.f32.mrf.mxu0
  %7080 = vmatprep.mubr.f32.mxu0 %v5068
  %7081 = vmatmul.mubr.f32.gmra.mxu0 %v5067
  %v7082 = vpop.f32.mrf.mxu0
  %v7083 = vadd.f32 0.0, %v7082
  %v7084 = vpop.f32.mrf.mxu0
  %7085 = vmatprep.mubr.f32.mxu0 %v5071
  %7086 = vmatmul.mubr.f32.gmra.mxu0 %v5070
  %v7087 = vpop.f32.mrf.mxu0
  %v7088 = vadd.f32 0.0, %v7087
  %v7089 = vpop.f32.mrf.mxu0
  %7090 = vmatprep.mubr.f32.mxu0 %v5074
  %7091 = vmatmul.mubr.f32.gmra.mxu0 %v5073
  %v7092 = vpop.f32.mrf.mxu0
  %v7093 = vadd.f32 0.0, %v7092
  %v7094 = vpop.f32.mrf.mxu0
  %7095 = vmatprep.mubr.f32.mxu0 %v5077
  %7096 = vmatmul.mubr.f32.gmra.mxu0 %v5076
  %v7097 = vpop.f32.mrf.mxu0
  %v7098 = vadd.f32 0.0, %v7097
  %v7099 = vpop.f32.mrf.mxu0
  %7100 = vdwg.mxu0
  %7101 = vmatprep.subr.mxu0 0.0
  %7102 = vmatpush1.msra.mxu0 0.0
  %7103 = vmatprep.subr.mxu0 0.0
  %7104 = vmatpush1.msra.mxu0 0.0
  %7105 = vmatprep.subr.mxu0 0.0
  %7106 = vmatpush1.msra.mxu0 0.0
  %7107 = vmatprep.subr.mxu0 0.0
  %7108 = vmatpush1.msra.mxu0 %v6955
  %7109 = vmatprep.subr.mxu0 0.0
  %7110 = vmatpush1.msra.mxu0 %v6954
  %7111 = vmatprep.subr.mxu0 0.0
  %7112 = vmatpush1.msra.mxu0 %v6953
  %7113 = vmatprep.subr.mxu0 0.0
  %7114 = vmatpush1.msra.mxu0 %v6952
  %7115 = vmatprep.subr.mxu0 0.0
  %7116 = vmatpush1.msra.mxu0 %v6951
  %7117 = vmatprep.subr.mxu0 0.0
  %7118 = vmatpush1.msra.mxu0 %v6950
  %7119 = vmatprep.subr.mxu0 0.0
  %7120 = vmatpush1.msra.mxu0 %v6949
  %7121 = vmatprep.subr.mxu0 0.0
  %7122 = vmatpush1.msra.mxu0 %v6948
  %7123 = vmatprep.subr.mxu0 0.0
  %7124 = vmatpush1.msra.mxu0 %v6947
  %7125 = vmatprep.subr.mxu0 0.0
  %7126 = vmatpush1.msra.mxu0 %v6946
  %7127 = vmatprep.subr.mxu0 0.0
  %7128 = vmatpush1.msra.mxu0 %v6945
  %7129 = vmatprep.subr.mxu0 0.0
  %7130 = vmatpush1.msra.mxu0 %v6944
  %7131 = vmatprep.subr.mxu0 0.0
  %7132 = vmatpush1.msra.mxu0 %v6943
  %7133 = vmatprep.subr.mxu0 0.0
  %7134 = vmatpush2.msra.mxu0 0.0
  %7135 = vmatprep.subr.mxu0 0.0
  %7136 = vmatpush2.msra.mxu0 0.0
  %7137 = vmatprep.subr.mxu0 0.0
  %7138 = vmatpush2.msra.mxu0 0.0
  %7139 = vmatprep.subr.mxu0 0.0
  %7140 = vmatpush2.msra.mxu0 0.0
  %7141 = vmatprep.subr.mxu0 0.0
  %7142 = vmatpush2.msra.mxu0 0.0
  %7143 = vmatprep.subr.mxu0 0.0
  %7144 = vmatpush2.msra.mxu0 0.0
  %7145 = vmatprep.subr.mxu0 0.0
  %7146 = vmatpush2.msra.mxu0 0.0
  %7147 = vmatprep.subr.mxu0 0.0
  %7148 = vmatpush2.msra.mxu0 0.0
  %7149 = vmatprep.subr.mxu0 0.0
  %7150 = vmatpush2.msra.mxu0 0.0
  %7151 = vmatprep.subr.mxu0 0.0
  %7152 = vmatpush2.msra.mxu0 0.0
  %7153 = vmatprep.subr.mxu0 0.0
  %7154 = vmatpush2.msra.mxu0 0.0
  %7155 = vmatprep.subr.mxu0 0.0
  %7156 = vmatpush2.msra.mxu0 0.0
  %7157 = vmatprep.subr.mxu0 0.0
  %7158 = vmatpush2.msra.mxu0 0.0
  %7159 = vmatprep.subr.mxu0 0.0
  %7160 = vmatpush2.msra.mxu0 0.0
  %7161 = vmatprep.subr.mxu0 0.0
  %7162 = vmatpush2.msra.mxu0 0.0
  %7163 = vmatprep.subr.mxu0 0.0
  %7164 = vmatpush2.msra.mxu0 0.0
  %7165 = vmatprep.mubr.f32.mxu0 0.0
  %7166 = vmatmul.mubr.f32.gmra.mxu0 %v5128
  %v7167 = vpop.f32.mrf.mxu0
  %v7168 = vadd.f32 %v7023, %v7167
  %v7169 = vpop.f32.mrf.mxu0
  %7170 = vmatprep.mubr.f32.mxu0 0.0
  %7171 = vmatmul.mubr.f32.gmra.mxu0 %v5131
  %v7172 = vpop.f32.mrf.mxu0
  %v7173 = vadd.f32 %v7028, %v7172
  %v7174 = vpop.f32.mrf.mxu0
  %7175 = vmatprep.mubr.f32.mxu0 0.0
  %7176 = vmatmul.mubr.f32.gmra.mxu0 %v5134
  %v7177 = vpop.f32.mrf.mxu0
  %v7178 = vadd.f32 %v7033, %v7177
  %v7179 = vpop.f32.mrf.mxu0
  %7180 = vmatprep.mubr.f32.mxu0 0.0
  %7181 = vmatmul.mubr.f32.gmra.mxu0 %v5137
  %v7182 = vpop.f32.mrf.mxu0
  %v7183 = vadd.f32 %v7038, %v7182
  %v7184 = vpop.f32.mrf.mxu0
  %7185 = vmatprep.mubr.f32.mxu0 0.0
  %7186 = vmatmul.mubr.f32.gmra.mxu0 %v5140
  %v7187 = vpop.f32.mrf.mxu0
  %v7188 = vadd.f32 %v7043, %v7187
  %v7189 = vpop.f32.mrf.mxu0
  %7190 = vmatprep.mubr.f32.mxu0 0.0
  %7191 = vmatmul.mubr.f32.gmra.mxu0 %v5143
  %v7192 = vpop.f32.mrf.mxu0
  %v7193 = vadd.f32 %v7048, %v7192
  %v7194 = vpop.f32.mrf.mxu0
  %7195 = vmatprep.mubr.f32.mxu0 0.0
  %7196 = vmatmul.mubr.f32.gmra.mxu0 %v5146
  %v7197 = vpop.f32.mrf.mxu0
  %v7198 = vadd.f32 %v7053, %v7197
  %v7199 = vpop.f32.mrf.mxu0
  %7200 = vmatprep.mubr.f32.mxu0 0.0
  %7201 = vmatmul.mubr.f32.gmra.mxu0 %v5149
  %v7202 = vpop.f32.mrf.mxu0
  %v7203 = vadd.f32 %v7058, %v7202
  %v7204 = vpop.f32.mrf.mxu0
  %7205 = vmatprep.mubr.f32.mxu0 0.0
  %7206 = vmatmul.mubr.f32.gmra.mxu0 %v5152
  %v7207 = vpop.f32.mrf.mxu0
  %v7208 = vadd.f32 %v7063, %v7207
  %v7209 = vpop.f32.mrf.mxu0
  %7210 = vmatprep.mubr.f32.mxu0 0.0
  %7211 = vmatmul.mubr.f32.gmra.mxu0 %v5155
  %v7212 = vpop.f32.mrf.mxu0
  %v7213 = vadd.f32 %v7068, %v7212
  %v7214 = vpop.f32.mrf.mxu0
  %7215 = vmatprep.mubr.f32.mxu0 0.0
  %7216 = vmatmul.mubr.f32.gmra.mxu0 %v5158
  %v7217 = vpop.f32.mrf.mxu0
  %v7218 = vadd.f32 %v7073, %v7217
  %v7219 = vpop.f32.mrf.mxu0
  %7220 = vmatprep.mubr.f32.mxu0 0.0
  %7221 = vmatmul.mubr.f32.gmra.mxu0 %v5161
  %v7222 = vpop.f32.mrf.mxu0
  %v7223 = vadd.f32 %v7078, %v7222
  %v7224 = vpop.f32.mrf.mxu0
  %7225 = vmatprep.mubr.f32.mxu0 0.0
  %7226 = vmatmul.mubr.f32.gmra.mxu0 %v5164
  %v7227 = vpop.f32.mrf.mxu0
  %v7228 = vadd.f32 %v7083, %v7227
  %v7229 = vpop.f32.mrf.mxu0
  %7230 = vmatprep.mubr.f32.mxu0 0.0
  %7231 = vmatmul.mubr.f32.gmra.mxu0 %v5167
  %v7232 = vpop.f32.mrf.mxu0
  %v7233 = vadd.f32 %v7088, %v7232
  %v7234 = vpop.f32.mrf.mxu0
  %7235 = vmatprep.mubr.f32.mxu0 0.0
  %7236 = vmatmul.mubr.f32.gmra.mxu0 %v5170
  %v7237 = vpop.f32.mrf.mxu0
  %v7238 = vadd.f32 %v7093, %v7237
  %v7239 = vpop.f32.mrf.mxu0
  %7240 = vmatprep.mubr.f32.mxu0 0.0
  %7241 = vmatmul.mubr.f32.gmra.mxu0 %v5173
  %v7242 = vpop.f32.mrf.mxu0
  %v7243 = vadd.f32 %v7098, %v7242
  %v7244 = vpop.f32.mrf.mxu0
  %7245 = vdwg.mxu0
  %v7246 = vmax.f32 %v6833, %v6873
  %v7247 = vmax.f32 %v6838, %v6878
  %v7248 = vmax.f32 %v7168, %v7208
  %v7249 = vmax.f32 %v7173, %v7213
  %v7250 = vmax.f32 %v7246, %v7248
  %v7251 = vmax.f32 %v7247, %v7249
  %v7252 = vadd.f32 %v7250, %v5809
  %v7253 = vadd.f32 %v7251, %v5814
  %v7254 = vmax.f32 %v7252, 0.0
  %v7255 = vmax.f32 %v7253, 0.0
  %7256 = vst [vmem:[#allocation3 + $0x80] sm:$0xff] %v7254
  %7257 = vst [vmem:[#allocation3 + $0x88] sm:$0xff] %v7255
  %v7258 = vmax.f32 %v6843, %v6883
  %v7259 = vmax.f32 %v6848, %v6888
  %v7260 = vmax.f32 %v7178, %v7218
  %v7261 = vmax.f32 %v7183, %v7223
  %v7262 = vmax.f32 %v7258, %v7260
  %v7263 = vmax.f32 %v7259, %v7261
  %v7264 = vadd.f32 %v7262, %v5809
  %v7265 = vadd.f32 %v7263, %v5814
  %v7266 = vmax.f32 %v7264, 0.0
  %v7267 = vmax.f32 %v7265, 0.0
  %7268 = vst [vmem:[#allocation3 + $0x90] sm:$0xff] %v7266
  %7269 = vst [vmem:[#allocation3 + $0x98] sm:$0xff] %v7267
  %v7270 = vmax.f32 %v6853, %v6893
  %v7271 = vmax.f32 %v6858, %v6898
  %v7272 = vmax.f32 %v7188, %v7228
  %v7273 = vmax.f32 %v7193, %v7233
  %v7274 = vmax.f32 %v7270, %v7272
  %v7275 = vmax.f32 %v7271, %v7273
  %v7276 = vadd.f32 %v7274, %v5809
  %v7277 = vadd.f32 %v7275, %v5814
  %v7278 = vmax.f32 %v7276, 0.0
  %v7279 = vmax.f32 %v7277, 0.0
  %7280 = vst [vmem:[#allocation3 + $0xa0] sm:$0xff] %v7278
  %7281 = vst [vmem:[#allocation3 + $0xa8] sm:$0xff] %v7279
  %v7282 = vmax.f32 %v6863, %v6903
  %v7283 = vmax.f32 %v6868, %v6908
  %v7284 = vmax.f32 %v7198, %v7238
  %v7285 = vmax.f32 %v7203, %v7243
  %v7286 = vmax.f32 %v7282, %v7284
  %v7287 = vmax.f32 %v7283, %v7285
  %v7288 = vadd.f32 %v7286, %v5809
  %v7289 = vadd.f32 %v7287, %v5814
  %v7290 = vmax.f32 %v7288, 0.0
  %v7291 = vmax.f32 %v7289, 0.0
  %7292 = vst [vmem:[#allocation3 + $0xb0] sm:$0xff] %v7290
  %7293 = vst [vmem:[#allocation3 + $0xb8] sm:$0xff] %v7291
  %v7294 = vld [vmem:[#allocation2 + $0x1b0] sm:$0xff]
  %v7295 = vld [vmem:[#allocation2 + $0x1b8] sm:$0xff]
  %v7296 = vld [vmem:[#allocation2 + $0x1c0] sm:$0xff]
  %v7297 = vld [vmem:[#allocation2 + $0x1c8] sm:$0xff]
  %v7298 = vld [vmem:[#allocation2 + $0x1d0] sm:$0xff]
  %v7299 = vld [vmem:[#allocation2 + $0x1d8] sm:$0xff]
  %v7300 = vld [vmem:[#allocation2 + $0x1e0] sm:$0xff]
  %v7301 = vld [vmem:[#allocation2 + $0x1e8] sm:$0xff]
  %v7302 = vld [vmem:[#allocation2 + $0x1f0] sm:$0xff]
  %v7303 = vld [vmem:[#allocation2 + $0x1f8] sm:$0xff]
  %v7304 = vld [vmem:[#allocation2 + $0x200] sm:$0xff]
  %v7305 = vld [vmem:[#allocation2 + $0x208] sm:$0xff]
  %v7306 = vld [vmem:[#allocation2 + $0x210] sm:$0xff]
  %v7307 = vld [vmem:[#allocation2 + $0x218] sm:$0xff]
  %v7308 = vld [vmem:[#allocation2 + $0x220] sm:$0xff]
  %v7309 = vld [vmem:[#allocation2 + $0x228] sm:$0xff]
  %v7310 = vld [vmem:[#allocation2 + $0x230] sm:$0xff]
  %v7311 = vld [vmem:[#allocation2 + $0x238] sm:$0xff]
  %v7312 = vld [vmem:[#allocation2 + $0x240] sm:$0xff]
  %v7313 = vld [vmem:[#allocation2 + $0x248] sm:$0xff]
  %v7314 = vld [vmem:[#allocation2 + $0x250] sm:$0xff]
  %v7315 = vld [vmem:[#allocation2 + $0x258] sm:$0xff]
  %v7316 = vld [vmem:[#allocation2 + $0x260] sm:$0xff]
  %v7317 = vld [vmem:[#allocation2 + $0x268] sm:$0xff]
  %v7318 = vld [vmem:[#allocation2 + $0x270] sm:$0xff]
  %v7319 = vld [vmem:[#allocation2 + $0x278] sm:$0xff]
  %v7320 = vld [vmem:[#allocation2 + $0x280] sm:$0xff]
  %v7321 = vld [vmem:[#allocation2 + $0x288] sm:$0xff]
  %v7322 = vld [vmem:[#allocation2 + $0x290] sm:$0xff]
  %v7323 = vld [vmem:[#allocation2 + $0x298] sm:$0xff]
  %v7324 = vld [vmem:[#allocation2 + $0x2a0] sm:$0xff]
  %v7325 = vld [vmem:[#allocation2 + $0x2a8] sm:$0xff]
  %v7326 = vld [vmem:[#allocation2 + $0x2b0] sm:$0xff]
  %v7327 = vld [vmem:[#allocation2 + $0x2b8] sm:$0xff]
  %v7328 = vld [vmem:[#allocation2 + $0x2c0] sm:$0xff]
  %v7329 = vld [vmem:[#allocation2 + $0x2c8] sm:$0xff]
  %v7330 = vld [vmem:[#allocation2 + $0x2d0] sm:$0xff]
  %v7331 = vld [vmem:[#allocation2 + $0x2d8] sm:$0xff]
  %v7332 = vld [vmem:[#allocation2 + $0x2e0] sm:$0xff]
  %v7333 = vld [vmem:[#allocation2 + $0x2e8] sm:$0xff]
  %v7334 = vld [vmem:[#allocation2 + $0x2f0] sm:$0xff]
  %v7335 = vld [vmem:[#allocation2 + $0x2f8] sm:$0xff]
  %v7336 = vld [vmem:[#allocation2 + $0x300] sm:$0xff]
  %v7337 = vld [vmem:[#allocation2 + $0x308] sm:$0xff]
  %v7338 = vld [vmem:[#allocation2 + $0x310] sm:$0xff]
  %7339 = vmatprep.subr.mxu0 0.0
  %7340 = vmatpush1.msra.mxu0 %v7309
  %7341 = vmatprep.subr.mxu0 0.0
  %7342 = vmatpush1.msra.mxu0 %v7308
  %7343 = vmatprep.subr.mxu0 0.0
  %7344 = vmatpush1.msra.mxu0 %v7307
  %7345 = vmatprep.subr.mxu0 0.0
  %7346 = vmatpush1.msra.mxu0 %v7306
  %7347 = vmatprep.subr.mxu0 0.0
  %7348 = vmatpush1.msra.mxu0 %v7305
  %7349 = vmatprep.subr.mxu0 0.0
  %7350 = vmatpush1.msra.mxu0 %v7304
  %7351 = vmatprep.subr.mxu0 0.0
  %7352 = vmatpush1.msra.mxu0 %v7303
  %7353 = vmatprep.subr.mxu0 0.0
  %7354 = vmatpush1.msra.mxu0 %v7302
  %7355 = vmatprep.subr.mxu0 0.0
  %7356 = vmatpush1.msra.mxu0 %v7301
  %7357 = vmatprep.subr.mxu0 0.0
  %7358 = vmatpush1.msra.mxu0 %v7300
  %7359 = vmatprep.subr.mxu0 0.0
  %7360 = vmatpush1.msra.mxu0 %v7299
  %7361 = vmatprep.subr.mxu0 0.0
  %7362 = vmatpush1.msra.mxu0 %v7298
  %7363 = vmatprep.subr.mxu0 0.0
  %7364 = vmatpush1.msra.mxu0 %v7297
  %7365 = vmatprep.subr.mxu0 0.0
  %7366 = vmatpush1.msra.mxu0 %v7296
  %7367 = vmatprep.subr.mxu0 0.0
  %7368 = vmatpush1.msra.mxu0 %v7295
  %7369 = vmatprep.subr.mxu0 0.0
  %7370 = vmatpush1.msra.mxu0 %v7294
  %7371 = vmatprep.subr.mxu0 0.0
  %7372 = vmatpush2.msra.mxu0 %v7325
  %7373 = vmatprep.subr.mxu0 0.0
  %7374 = vmatpush2.msra.mxu0 %v7324
  %7375 = vmatprep.subr.mxu0 0.0
  %7376 = vmatpush2.msra.mxu0 %v7323
  %7377 = vmatprep.subr.mxu0 0.0
  %7378 = vmatpush2.msra.mxu0 %v7322
  %7379 = vmatprep.subr.mxu0 0.0
  %7380 = vmatpush2.msra.mxu0 %v7321
  %7381 = vmatprep.subr.mxu0 0.0
  %7382 = vmatpush2.msra.mxu0 %v7320
  %7383 = vmatprep.subr.mxu0 0.0
  %7384 = vmatpush2.msra.mxu0 %v7319
  %7385 = vmatprep.subr.mxu0 0.0
  %7386 = vmatpush2.msra.mxu0 %v7318
  %7387 = vmatprep.subr.mxu0 0.0
  %7388 = vmatpush2.msra.mxu0 %v7317
  %7389 = vmatprep.subr.mxu0 0.0
  %7390 = vmatpush2.msra.mxu0 %v7316
  %7391 = vmatprep.subr.mxu0 0.0
  %7392 = vmatpush2.msra.mxu0 %v7315
  %7393 = vmatprep.subr.mxu0 0.0
  %7394 = vmatpush2.msra.mxu0 %v7314
  %7395 = vmatprep.subr.mxu0 0.0
  %7396 = vmatpush2.msra.mxu0 %v7313
  %7397 = vmatprep.subr.mxu0 0.0
  %7398 = vmatpush2.msra.mxu0 %v7312
  %7399 = vmatprep.subr.mxu0 0.0
  %7400 = vmatpush2.msra.mxu0 %v7311
  %7401 = vmatprep.subr.mxu0 0.0
  %7402 = vmatpush2.msra.mxu0 %v7310
  %7403 = vmatprep.mubr.f32.mxu0 %v5032
  %7404 = vmatmul.mubr.f32.gmra.mxu0 %v5031
  %v7405 = vpop.f32.mrf.mxu0
  %v7406 = vadd.f32 0.0, %v7405
  %v7407 = vpop.f32.mrf.mxu0
  %7408 = vmatprep.mubr.f32.mxu0 %v5035
  %7409 = vmatmul.mubr.f32.gmra.mxu0 %v5034
  %v7410 = vpop.f32.mrf.mxu0
  %v7411 = vadd.f32 0.0, %v7410
  %v7412 = vpop.f32.mrf.mxu0
  %7413 = vmatprep.mubr.f32.mxu0 %v5038
  %7414 = vmatmul.mubr.f32.gmra.mxu0 %v5037
  %v7415 = vpop.f32.mrf.mxu0
  %v7416 = vadd.f32 0.0, %v7415
  %v7417 = vpop.f32.mrf.mxu0
  %7418 = vmatprep.mubr.f32.mxu0 %v5041
  %7419 = vmatmul.mubr.f32.gmra.mxu0 %v5040
  %v7420 = vpop.f32.mrf.mxu0
  %v7421 = vadd.f32 0.0, %v7420
  %v7422 = vpop.f32.mrf.mxu0
  %7423 = vmatprep.mubr.f32.mxu0 %v5044
  %7424 = vmatmul.mubr.f32.gmra.mxu0 %v5043
  %v7425 = vpop.f32.mrf.mxu0
  %v7426 = vadd.f32 0.0, %v7425
  %v7427 = vpop.f32.mrf.mxu0
  %7428 = vmatprep.mubr.f32.mxu0 %v5047
  %7429 = vmatmul.mubr.f32.gmra.mxu0 %v5046
  %v7430 = vpop.f32.mrf.mxu0
  %v7431 = vadd.f32 0.0, %v7430
  %v7432 = vpop.f32.mrf.mxu0
  %7433 = vmatprep.mubr.f32.mxu0 %v5050
  %7434 = vmatmul.mubr.f32.gmra.mxu0 %v5049
  %v7435 = vpop.f32.mrf.mxu0
  %v7436 = vadd.f32 0.0, %v7435
  %v7437 = vpop.f32.mrf.mxu0
  %7438 = vmatprep.mubr.f32.mxu0 %v5053
  %7439 = vmatmul.mubr.f32.gmra.mxu0 %v5052
  %v7440 = vpop.f32.mrf.mxu0
  %v7441 = vadd.f32 0.0, %v7440
  %v7442 = vpop.f32.mrf.mxu0
  %7443 = vmatprep.mubr.f32.mxu0 %v5056
  %7444 = vmatmul.mubr.f32.gmra.mxu0 %v5055
  %v7445 = vpop.f32.mrf.mxu0
  %v7446 = vadd.f32 0.0, %v7445
  %v7447 = vpop.f32.mrf.mxu0
  %7448 = vmatprep.mubr.f32.mxu0 %v5059
  %7449 = vmatmul.mubr.f32.gmra.mxu0 %v5058
  %v7450 = vpop.f32.mrf.mxu0
  %v7451 = vadd.f32 0.0, %v7450
  %v7452 = vpop.f32.mrf.mxu0
  %7453 = vmatprep.mubr.f32.mxu0 %v5062
  %7454 = vmatmul.mubr.f32.gmra.mxu0 %v5061
  %v7455 = vpop.f32.mrf.mxu0
  %v7456 = vadd.f32 0.0, %v7455
  %v7457 = vpop.f32.mrf.mxu0
  %7458 = vmatprep.mubr.f32.mxu0 %v5065
  %7459 = vmatmul.mubr.f32.gmra.mxu0 %v5064
  %v7460 = vpop.f32.mrf.mxu0
  %v7461 = vadd.f32 0.0, %v7460
  %v7462 = vpop.f32.mrf.mxu0
  %7463 = vmatprep.mubr.f32.mxu0 %v5068
  %7464 = vmatmul.mubr.f32.gmra.mxu0 %v5067
  %v7465 = vpop.f32.mrf.mxu0
  %v7466 = vadd.f32 0.0, %v7465
  %v7467 = vpop.f32.mrf.mxu0
  %7468 = vmatprep.mubr.f32.mxu0 %v5071
  %7469 = vmatmul.mubr.f32.gmra.mxu0 %v5070
  %v7470 = vpop.f32.mrf.mxu0
  %v7471 = vadd.f32 0.0, %v7470
  %v7472 = vpop.f32.mrf.mxu0
  %7473 = vmatprep.mubr.f32.mxu0 %v5074
  %7474 = vmatmul.mubr.f32.gmra.mxu0 %v5073
  %v7475 = vpop.f32.mrf.mxu0
  %v7476 = vadd.f32 0.0, %v7475
  %v7477 = vpop.f32.mrf.mxu0
  %7478 = vmatprep.mubr.f32.mxu0 %v5077
  %7479 = vmatmul.mubr.f32.gmra.mxu0 %v5076
  %v7480 = vpop.f32.mrf.mxu0
  %v7481 = vadd.f32 0.0, %v7480
  %v7482 = vpop.f32.mrf.mxu0
  %7483 = vdwg.mxu0
  %7484 = vmatprep.subr.mxu0 0.0
  %7485 = vmatpush1.msra.mxu0 0.0
  %7486 = vmatprep.subr.mxu0 0.0
  %7487 = vmatpush1.msra.mxu0 0.0
  %7488 = vmatprep.subr.mxu0 0.0
  %7489 = vmatpush1.msra.mxu0 0.0
  %7490 = vmatprep.subr.mxu0 0.0
  %7491 = vmatpush1.msra.mxu0 %v7338
  %7492 = vmatprep.subr.mxu0 0.0
  %7493 = vmatpush1.msra.mxu0 %v7337
  %7494 = vmatprep.subr.mxu0 0.0
  %7495 = vmatpush1.msra.mxu0 %v7336
  %7496 = vmatprep.subr.mxu0 0.0
  %7497 = vmatpush1.msra.mxu0 %v7335
  %7498 = vmatprep.subr.mxu0 0.0
  %7499 = vmatpush1.msra.mxu0 %v7334
  %7500 = vmatprep.subr.mxu0 0.0
  %7501 = vmatpush1.msra.mxu0 %v7333
  %7502 = vmatprep.subr.mxu0 0.0
  %7503 = vmatpush1.msra.mxu0 %v7332
  %7504 = vmatprep.subr.mxu0 0.0
  %7505 = vmatpush1.msra.mxu0 %v7331
  %7506 = vmatprep.subr.mxu0 0.0
  %7507 = vmatpush1.msra.mxu0 %v7330
  %7508 = vmatprep.subr.mxu0 0.0
  %7509 = vmatpush1.msra.mxu0 %v7329
  %7510 = vmatprep.subr.mxu0 0.0
  %7511 = vmatpush1.msra.mxu0 %v7328
  %7512 = vmatprep.subr.mxu0 0.0
  %7513 = vmatpush1.msra.mxu0 %v7327
  %7514 = vmatprep.subr.mxu0 0.0
  %7515 = vmatpush1.msra.mxu0 %v7326
  %7516 = vmatprep.subr.mxu0 0.0
  %7517 = vmatpush2.msra.mxu0 0.0
  %7518 = vmatprep.subr.mxu0 0.0
  %7519 = vmatpush2.msra.mxu0 0.0
  %7520 = vmatprep.subr.mxu0 0.0
  %7521 = vmatpush2.msra.mxu0 0.0
  %7522 = vmatprep.subr.mxu0 0.0
  %7523 = vmatpush2.msra.mxu0 0.0
  %7524 = vmatprep.subr.mxu0 0.0
  %7525 = vmatpush2.msra.mxu0 0.0
  %7526 = vmatprep.subr.mxu0 0.0
  %7527 = vmatpush2.msra.mxu0 0.0
  %7528 = vmatprep.subr.mxu0 0.0
  %7529 = vmatpush2.msra.mxu0 0.0
  %7530 = vmatprep.subr.mxu0 0.0
  %7531 = vmatpush2.msra.mxu0 0.0
  %7532 = vmatprep.subr.mxu0 0.0
  %7533 = vmatpush2.msra.mxu0 0.0
  %7534 = vmatprep.subr.mxu0 0.0
  %7535 = vmatpush2.msra.mxu0 0.0
  %7536 = vmatprep.subr.mxu0 0.0
  %7537 = vmatpush2.msra.mxu0 0.0
  %7538 = vmatprep.subr.mxu0 0.0
  %7539 = vmatpush2.msra.mxu0 0.0
  %7540 = vmatprep.subr.mxu0 0.0
  %7541 = vmatpush2.msra.mxu0 0.0
  %7542 = vmatprep.subr.mxu0 0.0
  %7543 = vmatpush2.msra.mxu0 0.0
  %7544 = vmatprep.subr.mxu0 0.0
  %7545 = vmatpush2.msra.mxu0 0.0
  %7546 = vmatprep.subr.mxu0 0.0
  %7547 = vmatpush2.msra.mxu0 0.0
  %7548 = vmatprep.mubr.f32.mxu0 0.0
  %7549 = vmatmul.mubr.f32.gmra.mxu0 %v5128
  %v7550 = vpop.f32.mrf.mxu0
  %v7551 = vadd.f32 %v7406, %v7550
  %v7552 = vpop.f32.mrf.mxu0
  %7553 = vmatprep.mubr.f32.mxu0 0.0
  %7554 = vmatmul.mubr.f32.gmra.mxu0 %v5131
  %v7555 = vpop.f32.mrf.mxu0
  %v7556 = vadd.f32 %v7411, %v7555
  %v7557 = vpop.f32.mrf.mxu0
  %7558 = vmatprep.mubr.f32.mxu0 0.0
  %7559 = vmatmul.mubr.f32.gmra.mxu0 %v5134
  %v7560 = vpop.f32.mrf.mxu0
  %v7561 = vadd.f32 %v7416, %v7560
  %v7562 = vpop.f32.mrf.mxu0
  %7563 = vmatprep.mubr.f32.mxu0 0.0
  %7564 = vmatmul.mubr.f32.gmra.mxu0 %v5137
  %v7565 = vpop.f32.mrf.mxu0
  %v7566 = vadd.f32 %v7421, %v7565
  %v7567 = vpop.f32.mrf.mxu0
  %7568 = vmatprep.mubr.f32.mxu0 0.0
  %7569 = vmatmul.mubr.f32.gmra.mxu0 %v5140
  %v7570 = vpop.f32.mrf.mxu0
  %v7571 = vadd.f32 %v7426, %v7570
  %v7572 = vpop.f32.mrf.mxu0
  %7573 = vmatprep.mubr.f32.mxu0 0.0
  %7574 = vmatmul.mubr.f32.gmra.mxu0 %v5143
  %v7575 = vpop.f32.mrf.mxu0
  %v7576 = vadd.f32 %v7431, %v7575
  %v7577 = vpop.f32.mrf.mxu0
  %7578 = vmatprep.mubr.f32.mxu0 0.0
  %7579 = vmatmul.mubr.f32.gmra.mxu0 %v5146
  %v7580 = vpop.f32.mrf.mxu0
  %v7581 = vadd.f32 %v7436, %v7580
  %v7582 = vpop.f32.mrf.mxu0
  %7583 = vmatprep.mubr.f32.mxu0 0.0
  %7584 = vmatmul.mubr.f32.gmra.mxu0 %v5149
  %v7585 = vpop.f32.mrf.mxu0
  %v7586 = vadd.f32 %v7441, %v7585
  %v7587 = vpop.f32.mrf.mxu0
  %7588 = vmatprep.mubr.f32.mxu0 0.0
  %7589 = vmatmul.mubr.f32.gmra.mxu0 %v5152
  %v7590 = vpop.f32.mrf.mxu0
  %v7591 = vadd.f32 %v7446, %v7590
  %v7592 = vpop.f32.mrf.mxu0
  %7593 = vmatprep.mubr.f32.mxu0 0.0
  %7594 = vmatmul.mubr.f32.gmra.mxu0 %v5155
  %v7595 = vpop.f32.mrf.mxu0
  %v7596 = vadd.f32 %v7451, %v7595
  %v7597 = vpop.f32.mrf.mxu0
  %7598 = vmatprep.mubr.f32.mxu0 0.0
  %7599 = vmatmul.mubr.f32.gmra.mxu0 %v5158
  %v7600 = vpop.f32.mrf.mxu0
  %v7601 = vadd.f32 %v7456, %v7600
  %v7602 = vpop.f32.mrf.mxu0
  %7603 = vmatprep.mubr.f32.mxu0 0.0
  %7604 = vmatmul.mubr.f32.gmra.mxu0 %v5161
  %v7605 = vpop.f32.mrf.mxu0
  %v7606 = vadd.f32 %v7461, %v7605
  %v7607 = vpop.f32.mrf.mxu0
  %7608 = vmatprep.mubr.f32.mxu0 0.0
  %7609 = vmatmul.mubr.f32.gmra.mxu0 %v5164
  %v7610 = vpop.f32.mrf.mxu0
  %v7611 = vadd.f32 %v7466, %v7610
  %v7612 = vpop.f32.mrf.mxu0
  %7613 = vmatprep.mubr.f32.mxu0 0.0
  %7614 = vmatmul.mubr.f32.gmra.mxu0 %v5167
  %v7615 = vpop.f32.mrf.mxu0
  %v7616 = vadd.f32 %v7471, %v7615
  %v7617 = vpop.f32.mrf.mxu0
  %7618 = vmatprep.mubr.f32.mxu0 0.0
  %7619 = vmatmul.mubr.f32.gmra.mxu0 %v5170
  %v7620 = vpop.f32.mrf.mxu0
  %v7621 = vadd.f32 %v7476, %v7620
  %v7622 = vpop.f32.mrf.mxu0
  %7623 = vmatprep.mubr.f32.mxu0 0.0
  %7624 = vmatmul.mubr.f32.gmra.mxu0 %v5173
  %v7625 = vpop.f32.mrf.mxu0
  %v7626 = vadd.f32 %v7481, %v7625
  %v7627 = vpop.f32.mrf.mxu0
  %7628 = vdwg.mxu0
  %v7629 = vld [vmem:[#allocation2 + $0x1f8] sm:$0xff]
  %v7630 = vld [vmem:[#allocation2 + $0x200] sm:$0xff]
  %v7631 = vld [vmem:[#allocation2 + $0x208] sm:$0xff]
  %v7632 = vld [vmem:[#allocation2 + $0x210] sm:$0xff]
  %v7633 = vld [vmem:[#allocation2 + $0x218] sm:$0xff]
  %v7634 = vld [vmem:[#allocation2 + $0x220] sm:$0xff]
  %v7635 = vld [vmem:[#allocation2 + $0x228] sm:$0xff]
  %v7636 = vld [vmem:[#allocation2 + $0x230] sm:$0xff]
  %v7637 = vld [vmem:[#allocation2 + $0x238] sm:$0xff]
  %v7638 = vld [vmem:[#allocation2 + $0x240] sm:$0xff]
  %v7639 = vld [vmem:[#allocation2 + $0x248] sm:$0xff]
  %v7640 = vld [vmem:[#allocation2 + $0x250] sm:$0xff]
  %v7641 = vld [vmem:[#allocation2 + $0x258] sm:$0xff]
  %v7642 = vld [vmem:[#allocation2 + $0x260] sm:$0xff]
  %v7643 = vld [vmem:[#allocation2 + $0x268] sm:$0xff]
  %v7644 = vld [vmem:[#allocation2 + $0x270] sm:$0xff]
  %v7645 = vld [vmem:[#allocation2 + $0x278] sm:$0xff]
  %v7646 = vld [vmem:[#allocation2 + $0x280] sm:$0xff]
  %v7647 = vld [vmem:[#allocation2 + $0x288] sm:$0xff]
  %v7648 = vld [vmem:[#allocation2 + $0x290] sm:$0xff]
  %v7649 = vld [vmem:[#allocation2 + $0x298] sm:$0xff]
  %v7650 = vld [vmem:[#allocation2 + $0x2a0] sm:$0xff]
  %v7651 = vld [vmem:[#allocation2 + $0x2a8] sm:$0xff]
  %v7652 = vld [vmem:[#allocation2 + $0x2b0] sm:$0xff]
  %v7653 = vld [vmem:[#allocation2 + $0x2b8] sm:$0xff]
  %v7654 = vld [vmem:[#allocation2 + $0x2c0] sm:$0xff]
  %v7655 = vld [vmem:[#allocation2 + $0x2c8] sm:$0xff]
  %v7656 = vld [vmem:[#allocation2 + $0x2d0] sm:$0xff]
  %v7657 = vld [vmem:[#allocation2 + $0x2d8] sm:$0xff]
  %v7658 = vld [vmem:[#allocation2 + $0x2e0] sm:$0xff]
  %v7659 = vld [vmem:[#allocation2 + $0x2e8] sm:$0xff]
  %v7660 = vld [vmem:[#allocation2 + $0x2f0] sm:$0xff]
  %v7661 = vld [vmem:[#allocation2 + $0x2f8] sm:$0xff]
  %v7662 = vld [vmem:[#allocation2 + $0x300] sm:$0xff]
  %v7663 = vld [vmem:[#allocation2 + $0x308] sm:$0xff]
  %v7664 = vld [vmem:[#allocation2 + $0x310] sm:$0xff]
  %v7665 = vld [vmem:[#allocation2 + $0x318] sm:$0xff]
  %v7666 = vld [vmem:[#allocation2 + $0x320] sm:$0xff]
  %v7667 = vld [vmem:[#allocation2 + $0x328] sm:$0xff]
  %v7668 = vld [vmem:[#allocation2 + $0x330] sm:$0xff]
  %v7669 = vld [vmem:[#allocation2 + $0x338] sm:$0xff]
  %v7670 = vld [vmem:[#allocation2 + $0x340] sm:$0xff]
  %v7671 = vld [vmem:[#allocation2 + $0x348] sm:$0xff]
  %v7672 = vld [vmem:[#allocation2 + $0x350] sm:$0xff]
  %v7673 = vld [vmem:[#allocation2 + $0x358] sm:$0xff]
  %7674 = vmatprep.subr.mxu0 0.0
  %7675 = vmatpush1.msra.mxu0 %v7644
  %7676 = vmatprep.subr.mxu0 0.0
  %7677 = vmatpush1.msra.mxu0 %v7643
  %7678 = vmatprep.subr.mxu0 0.0
  %7679 = vmatpush1.msra.mxu0 %v7642
  %7680 = vmatprep.subr.mxu0 0.0
  %7681 = vmatpush1.msra.mxu0 %v7641
  %7682 = vmatprep.subr.mxu0 0.0
  %7683 = vmatpush1.msra.mxu0 %v7640
  %7684 = vmatprep.subr.mxu0 0.0
  %7685 = vmatpush1.msra.mxu0 %v7639
  %7686 = vmatprep.subr.mxu0 0.0
  %7687 = vmatpush1.msra.mxu0 %v7638
  %7688 = vmatprep.subr.mxu0 0.0
  %7689 = vmatpush1.msra.mxu0 %v7637
  %7690 = vmatprep.subr.mxu0 0.0
  %7691 = vmatpush1.msra.mxu0 %v7636
  %7692 = vmatprep.subr.mxu0 0.0
  %7693 = vmatpush1.msra.mxu0 %v7635
  %7694 = vmatprep.subr.mxu0 0.0
  %7695 = vmatpush1.msra.mxu0 %v7634
  %7696 = vmatprep.subr.mxu0 0.0
  %7697 = vmatpush1.msra.mxu0 %v7633
  %7698 = vmatprep.subr.mxu0 0.0
  %7699 = vmatpush1.msra.mxu0 %v7632
  %7700 = vmatprep.subr.mxu0 0.0
  %7701 = vmatpush1.msra.mxu0 %v7631
  %7702 = vmatprep.subr.mxu0 0.0
  %7703 = vmatpush1.msra.mxu0 %v7630
  %7704 = vmatprep.subr.mxu0 0.0
  %7705 = vmatpush1.msra.mxu0 %v7629
  %7706 = vmatprep.subr.mxu0 0.0
  %7707 = vmatpush2.msra.mxu0 %v7660
  %7708 = vmatprep.subr.mxu0 0.0
  %7709 = vmatpush2.msra.mxu0 %v7659
  %7710 = vmatprep.subr.mxu0 0.0
  %7711 = vmatpush2.msra.mxu0 %v7658
  %7712 = vmatprep.subr.mxu0 0.0
  %7713 = vmatpush2.msra.mxu0 %v7657
  %7714 = vmatprep.subr.mxu0 0.0
  %7715 = vmatpush2.msra.mxu0 %v7656
  %7716 = vmatprep.subr.mxu0 0.0
  %7717 = vmatpush2.msra.mxu0 %v7655
  %7718 = vmatprep.subr.mxu0 0.0
  %7719 = vmatpush2.msra.mxu0 %v7654
  %7720 = vmatprep.subr.mxu0 0.0
  %7721 = vmatpush2.msra.mxu0 %v7653
  %7722 = vmatprep.subr.mxu0 0.0
  %7723 = vmatpush2.msra.mxu0 %v7652
  %7724 = vmatprep.subr.mxu0 0.0
  %7725 = vmatpush2.msra.mxu0 %v7651
  %7726 = vmatprep.subr.mxu0 0.0
  %7727 = vmatpush2.msra.mxu0 %v7650
  %7728 = vmatprep.subr.mxu0 0.0
  %7729 = vmatpush2.msra.mxu0 %v7649
  %7730 = vmatprep.subr.mxu0 0.0
  %7731 = vmatpush2.msra.mxu0 %v7648
  %7732 = vmatprep.subr.mxu0 0.0
  %7733 = vmatpush2.msra.mxu0 %v7647
  %7734 = vmatprep.subr.mxu0 0.0
  %7735 = vmatpush2.msra.mxu0 %v7646
  %7736 = vmatprep.subr.mxu0 0.0
  %7737 = vmatpush2.msra.mxu0 %v7645
  %7738 = vmatprep.mubr.f32.mxu0 %v5032
  %7739 = vmatmul.mubr.f32.gmra.mxu0 %v5031
  %v7740 = vpop.f32.mrf.mxu0
  %v7741 = vadd.f32 0.0, %v7740
  %v7742 = vpop.f32.mrf.mxu0
  %7743 = vmatprep.mubr.f32.mxu0 %v5035
  %7744 = vmatmul.mubr.f32.gmra.mxu0 %v5034
  %v7745 = vpop.f32.mrf.mxu0
  %v7746 = vadd.f32 0.0, %v7745
  %v7747 = vpop.f32.mrf.mxu0
  %7748 = vmatprep.mubr.f32.mxu0 %v5038
  %7749 = vmatmul.mubr.f32.gmra.mxu0 %v5037
  %v7750 = vpop.f32.mrf.mxu0
  %v7751 = vadd.f32 0.0, %v7750
  %v7752 = vpop.f32.mrf.mxu0
  %7753 = vmatprep.mubr.f32.mxu0 %v5041
  %7754 = vmatmul.mubr.f32.gmra.mxu0 %v5040
  %v7755 = vpop.f32.mrf.mxu0
  %v7756 = vadd.f32 0.0, %v7755
  %v7757 = vpop.f32.mrf.mxu0
  %7758 = vmatprep.mubr.f32.mxu0 %v5044
  %7759 = vmatmul.mubr.f32.gmra.mxu0 %v5043
  %v7760 = vpop.f32.mrf.mxu0
  %v7761 = vadd.f32 0.0, %v7760
  %v7762 = vpop.f32.mrf.mxu0
  %7763 = vmatprep.mubr.f32.mxu0 %v5047
  %7764 = vmatmul.mubr.f32.gmra.mxu0 %v5046
  %v7765 = vpop.f32.mrf.mxu0
  %v7766 = vadd.f32 0.0, %v7765
  %v7767 = vpop.f32.mrf.mxu0
  %7768 = vmatprep.mubr.f32.mxu0 %v5050
  %7769 = vmatmul.mubr.f32.gmra.mxu0 %v5049
  %v7770 = vpop.f32.mrf.mxu0
  %v7771 = vadd.f32 0.0, %v7770
  %v7772 = vpop.f32.mrf.mxu0
  %7773 = vmatprep.mubr.f32.mxu0 %v5053
  %7774 = vmatmul.mubr.f32.gmra.mxu0 %v5052
  %v7775 = vpop.f32.mrf.mxu0
  %v7776 = vadd.f32 0.0, %v7775
  %v7777 = vpop.f32.mrf.mxu0
  %7778 = vmatprep.mubr.f32.mxu0 %v5056
  %7779 = vmatmul.mubr.f32.gmra.mxu0 %v5055
  %v7780 = vpop.f32.mrf.mxu0
  %v7781 = vadd.f32 0.0, %v7780
  %v7782 = vpop.f32.mrf.mxu0
  %7783 = vmatprep.mubr.f32.mxu0 %v5059
  %7784 = vmatmul.mubr.f32.gmra.mxu0 %v5058
  %v7785 = vpop.f32.mrf.mxu0
  %v7786 = vadd.f32 0.0, %v7785
  %v7787 = vpop.f32.mrf.mxu0
  %7788 = vmatprep.mubr.f32.mxu0 %v5062
  %7789 = vmatmul.mubr.f32.gmra.mxu0 %v5061
  %v7790 = vpop.f32.mrf.mxu0
  %v7791 = vadd.f32 0.0, %v7790
  %v7792 = vpop.f32.mrf.mxu0
  %7793 = vmatprep.mubr.f32.mxu0 %v5065
  %7794 = vmatmul.mubr.f32.gmra.mxu0 %v5064
  %v7795 = vpop.f32.mrf.mxu0
  %v7796 = vadd.f32 0.0, %v7795
  %v7797 = vpop.f32.mrf.mxu0
  %7798 = vmatprep.mubr.f32.mxu0 %v5068
  %7799 = vmatmul.mubr.f32.gmra.mxu0 %v5067
  %v7800 = vpop.f32.mrf.mxu0
  %v7801 = vadd.f32 0.0, %v7800
  %v7802 = vpop.f32.mrf.mxu0
  %7803 = vmatprep.mubr.f32.mxu0 %v5071
  %7804 = vmatmul.mubr.f32.gmra.mxu0 %v5070
  %v7805 = vpop.f32.mrf.mxu0
  %v7806 = vadd.f32 0.0, %v7805
  %v7807 = vpop.f32.mrf.mxu0
  %7808 = vmatprep.mubr.f32.mxu0 %v5074
  %7809 = vmatmul.mubr.f32.gmra.mxu0 %v5073
  %v7810 = vpop.f32.mrf.mxu0
  %v7811 = vadd.f32 0.0, %v7810
  %v7812 = vpop.f32.mrf.mxu0
  %7813 = vmatprep.mubr.f32.mxu0 %v5077
  %7814 = vmatmul.mubr.f32.gmra.mxu0 %v5076
  %v7815 = vpop.f32.mrf.mxu0
  %v7816 = vadd.f32 0.0, %v7815
  %v7817 = vpop.f32.mrf.mxu0
  %7818 = vdwg.mxu0
  %7819 = vmatprep.subr.mxu0 0.0
  %7820 = vmatpush1.msra.mxu0 0.0
  %7821 = vmatprep.subr.mxu0 0.0
  %7822 = vmatpush1.msra.mxu0 0.0
  %7823 = vmatprep.subr.mxu0 0.0
  %7824 = vmatpush1.msra.mxu0 0.0
  %7825 = vmatprep.subr.mxu0 0.0
  %7826 = vmatpush1.msra.mxu0 %v7673
  %7827 = vmatprep.subr.mxu0 0.0
  %7828 = vmatpush1.msra.mxu0 %v7672
  %7829 = vmatprep.subr.mxu0 0.0
  %7830 = vmatpush1.msra.mxu0 %v7671
  %7831 = vmatprep.subr.mxu0 0.0
  %7832 = vmatpush1.msra.mxu0 %v7670
  %7833 = vmatprep.subr.mxu0 0.0
  %7834 = vmatpush1.msra.mxu0 %v7669
  %7835 = vmatprep.subr.mxu0 0.0
  %7836 = vmatpush1.msra.mxu0 %v7668
  %7837 = vmatprep.subr.mxu0 0.0
  %7838 = vmatpush1.msra.mxu0 %v7667
  %7839 = vmatprep.subr.mxu0 0.0
  %7840 = vmatpush1.msra.mxu0 %v7666
  %7841 = vmatprep.subr.mxu0 0.0
  %7842 = vmatpush1.msra.mxu0 %v7665
  %7843 = vmatprep.subr.mxu0 0.0
  %7844 = vmatpush1.msra.mxu0 %v7664
  %7845 = vmatprep.subr.mxu0 0.0
  %7846 = vmatpush1.msra.mxu0 %v7663
  %7847 = vmatprep.subr.mxu0 0.0
  %7848 = vmatpush1.msra.mxu0 %v7662
  %7849 = vmatprep.subr.mxu0 0.0
  %7850 = vmatpush1.msra.mxu0 %v7661
  %7851 = vmatprep.subr.mxu0 0.0
  %7852 = vmatpush2.msra.mxu0 0.0
  %7853 = vmatprep.subr.mxu0 0.0
  %7854 = vmatpush2.msra.mxu0 0.0
  %7855 = vmatprep.subr.mxu0 0.0
  %7856 = vmatpush2.msra.mxu0 0.0
  %7857 = vmatprep.subr.mxu0 0.0
  %7858 = vmatpush2.msra.mxu0 0.0
  %7859 = vmatprep.subr.mxu0 0.0
  %7860 = vmatpush2.msra.mxu0 0.0
  %7861 = vmatprep.subr.mxu0 0.0
  %7862 = vmatpush2.msra.mxu0 0.0
  %7863 = vmatprep.subr.mxu0 0.0
  %7864 = vmatpush2.msra.mxu0 0.0
  %7865 = vmatprep.subr.mxu0 0.0
  %7866 = vmatpush2.msra.mxu0 0.0
  %7867 = vmatprep.subr.mxu0 0.0
  %7868 = vmatpush2.msra.mxu0 0.0
  %7869 = vmatprep.subr.mxu0 0.0
  %7870 = vmatpush2.msra.mxu0 0.0
  %7871 = vmatprep.subr.mxu0 0.0
  %7872 = vmatpush2.msra.mxu0 0.0
  %7873 = vmatprep.subr.mxu0 0.0
  %7874 = vmatpush2.msra.mxu0 0.0
  %7875 = vmatprep.subr.mxu0 0.0
  %7876 = vmatpush2.msra.mxu0 0.0
  %7877 = vmatprep.subr.mxu0 0.0
  %7878 = vmatpush2.msra.mxu0 0.0
  %7879 = vmatprep.subr.mxu0 0.0
  %7880 = vmatpush2.msra.mxu0 0.0
  %7881 = vmatprep.subr.mxu0 0.0
  %7882 = vmatpush2.msra.mxu0 0.0
  %7883 = vmatprep.mubr.f32.mxu0 0.0
  %7884 = vmatmul.mubr.f32.gmra.mxu0 %v5128
  %v7885 = vpop.f32.mrf.mxu0
  %v7886 = vadd.f32 %v7741, %v7885
  %v7887 = vpop.f32.mrf.mxu0
  %7888 = vmatprep.mubr.f32.mxu0 0.0
  %7889 = vmatmul.mubr.f32.gmra.mxu0 %v5131
  %v7890 = vpop.f32.mrf.mxu0
  %v7891 = vadd.f32 %v7746, %v7890
  %v7892 = vpop.f32.mrf.mxu0
  %7893 = vmatprep.mubr.f32.mxu0 0.0
  %7894 = vmatmul.mubr.f32.gmra.mxu0 %v5134
  %v7895 = vpop.f32.mrf.mxu0
  %v7896 = vadd.f32 %v7751, %v7895
  %v7897 = vpop.f32.mrf.mxu0
  %7898 = vmatprep.mubr.f32.mxu0 0.0
  %7899 = vmatmul.mubr.f32.gmra.mxu0 %v5137
  %v7900 = vpop.f32.mrf.mxu0
  %v7901 = vadd.f32 %v7756, %v7900
  %v7902 = vpop.f32.mrf.mxu0
  %7903 = vmatprep.mubr.f32.mxu0 0.0
  %7904 = vmatmul.mubr.f32.gmra.mxu0 %v5140
  %v7905 = vpop.f32.mrf.mxu0
  %v7906 = vadd.f32 %v7761, %v7905
  %v7907 = vpop.f32.mrf.mxu0
  %7908 = vmatprep.mubr.f32.mxu0 0.0
  %7909 = vmatmul.mubr.f32.gmra.mxu0 %v5143
  %v7910 = vpop.f32.mrf.mxu0
  %v7911 = vadd.f32 %v7766, %v7910
  %v7912 = vpop.f32.mrf.mxu0
  %7913 = vmatprep.mubr.f32.mxu0 0.0
  %7914 = vmatmul.mubr.f32.gmra.mxu0 %v5146
  %v7915 = vpop.f32.mrf.mxu0
  %v7916 = vadd.f32 %v7771, %v7915
  %v7917 = vpop.f32.mrf.mxu0
  %7918 = vmatprep.mubr.f32.mxu0 0.0
  %7919 = vmatmul.mubr.f32.gmra.mxu0 %v5149
  %v7920 = vpop.f32.mrf.mxu0
  %v7921 = vadd.f32 %v7776, %v7920
  %v7922 = vpop.f32.mrf.mxu0
  %7923 = vmatprep.mubr.f32.mxu0 0.0
  %7924 = vmatmul.mubr.f32.gmra.mxu0 %v5152
  %v7925 = vpop.f32.mrf.mxu0
  %v7926 = vadd.f32 %v7781, %v7925
  %v7927 = vpop.f32.mrf.mxu0
  %7928 = vmatprep.mubr.f32.mxu0 0.0
  %7929 = vmatmul.mubr.f32.gmra.mxu0 %v5155
  %v7930 = vpop.f32.mrf.mxu0
  %v7931 = vadd.f32 %v7786, %v7930
  %v7932 = vpop.f32.mrf.mxu0
  %7933 = vmatprep.mubr.f32.mxu0 0.0
  %7934 = vmatmul.mubr.f32.gmra.mxu0 %v5158
  %v7935 = vpop.f32.mrf.mxu0
  %v7936 = vadd.f32 %v7791, %v7935
  %v7937 = vpop.f32.mrf.mxu0
  %7938 = vmatprep.mubr.f32.mxu0 0.0
  %7939 = vmatmul.mubr.f32.gmra.mxu0 %v5161
  %v7940 = vpop.f32.mrf.mxu0
  %v7941 = vadd.f32 %v7796, %v7940
  %v7942 = vpop.f32.mrf.mxu0
  %7943 = vmatprep.mubr.f32.mxu0 0.0
  %7944 = vmatmul.mubr.f32.gmra.mxu0 %v5164
  %v7945 = vpop.f32.mrf.mxu0
  %v7946 = vadd.f32 %v7801, %v7945
  %v7947 = vpop.f32.mrf.mxu0
  %7948 = vmatprep.mubr.f32.mxu0 0.0
  %7949 = vmatmul.mubr.f32.gmra.mxu0 %v5167
  %v7950 = vpop.f32.mrf.mxu0
  %v7951 = vadd.f32 %v7806, %v7950
  %v7952 = vpop.f32.mrf.mxu0
  %7953 = vmatprep.mubr.f32.mxu0 0.0
  %7954 = vmatmul.mubr.f32.gmra.mxu0 %v5170
  %v7955 = vpop.f32.mrf.mxu0
  %v7956 = vadd.f32 %v7811, %v7955
  %v7957 = vpop.f32.mrf.mxu0
  %7958 = vmatprep.mubr.f32.mxu0 0.0
  %7959 = vmatmul.mubr.f32.gmra.mxu0 %v5173
  %v7960 = vpop.f32.mrf.mxu0
  %v7961 = vadd.f32 %v7816, %v7960
  %v7962 = vpop.f32.mrf.mxu0
  %7963 = vdwg.mxu0
  %v7964 = vmax.f32 %v7551, %v7591
  %v7965 = vmax.f32 %v7556, %v7596
  %v7966 = vmax.f32 %v7886, %v7926
  %v7967 = vmax.f32 %v7891, %v7931
  %v7968 = vmax.f32 %v7964, %v7966
  %v7969 = vmax.f32 %v7965, %v7967
  %v7970 = vadd.f32 %v7968, %v5809
  %v7971 = vadd.f32 %v7969, %v5814
  %v7972 = vmax.f32 %v7970, 0.0
  %v7973 = vmax.f32 %v7971, 0.0
  %7974 = vst [vmem:[#allocation3 + $0xc0] sm:$0xff] %v7972
  %7975 = vst [vmem:[#allocation3 + $0xc8] sm:$0xff] %v7973
  %v7976 = vmax.f32 %v7561, %v7601
  %v7977 = vmax.f32 %v7566, %v7606
  %v7978 = vmax.f32 %v7896, %v7936
  %v7979 = vmax.f32 %v7901, %v7941
  %v7980 = vmax.f32 %v7976, %v7978
  %v7981 = vmax.f32 %v7977, %v7979
  %v7982 = vadd.f32 %v7980, %v5809
  %v7983 = vadd.f32 %v7981, %v5814
  %v7984 = vmax.f32 %v7982, 0.0
  %v7985 = vmax.f32 %v7983, 0.0
  %7986 = vst [vmem:[#allocation3 + $0xd0] sm:$0xff] %v7984
  %7987 = vst [vmem:[#allocation3 + $0xd8] sm:$0xff] %v7985
  %v7988 = vmax.f32 %v7571, %v7611
  %v7989 = vmax.f32 %v7576, %v7616
  %v7990 = vmax.f32 %v7906, %v7946
  %v7991 = vmax.f32 %v7911, %v7951
  %v7992 = vmax.f32 %v7988, %v7990
  %v7993 = vmax.f32 %v7989, %v7991
  %v7994 = vadd.f32 %v7992, %v5809
  %v7995 = vadd.f32 %v7993, %v5814
  %v7996 = vmax.f32 %v7994, 0.0
  %v7997 = vmax.f32 %v7995, 0.0
  %7998 = vst [vmem:[#allocation3 + $0xe0] sm:$0xff] %v7996
  %7999 = vst [vmem:[#allocation3 + $0xe8] sm:$0xff] %v7997
  %v8000 = vmax.f32 %v7581, %v7621
  %v8001 = vmax.f32 %v7586, %v7626
  %v8002 = vmax.f32 %v7916, %v7956
  %v8003 = vmax.f32 %v7921, %v7961
  %v8004 = vmax.f32 %v8000, %v8002
  %v8005 = vmax.f32 %v8001, %v8003
  %v8006 = vadd.f32 %v8004, %v5809
  %v8007 = vadd.f32 %v8005, %v5814
  %v8008 = vmax.f32 %v8006, 0.0
  %v8009 = vmax.f32 %v8007, 0.0
  %8010 = vst [vmem:[#allocation3 + $0xf0] sm:$0xff] %v8008
  %8011 = vst [vmem:[#allocation3 + $0xf8] sm:$0xff] %v8009
  %v8012 = vld [vmem:[%s5] sm:$0xff]
  %v8013 = vld [vmem:[%s5 + $0x8] sm:$0xff]
  %v8014 = vld [vmem:[%s5 + $0x10] sm:$0xff]
  %v8015 = vld [vmem:[%s5 + $0x18] sm:$0xff]
  %v8016 = vld [vmem:[%s5 + $0x20] sm:$0xff]
  %v8017 = vld [vmem:[%s5 + $0x28] sm:$0xff]
  %v8018 = vld [vmem:[%s5 + $0x30] sm:$0xff]
  %v8019 = vld [vmem:[%s5 + $0x38] sm:$0xff]
  %v8020 = vld [vmem:[%s5 + $0x40] sm:$0xff]
  %v8021 = vld [vmem:[%s5 + $0x48] sm:$0xff]
  %v8022 = vld [vmem:[%s5 + $0x50] sm:$0xff]
  %v8023 = vld [vmem:[%s5 + $0x58] sm:$0xff]
  %v8024 = vld [vmem:[%s5 + $0x60] sm:$0xff]
  %v8025 = vld [vmem:[%s5 + $0x68] sm:$0xff]
  %v8026 = vld [vmem:[%s5 + $0x70] sm:$0xff]
  %v8027 = vld [vmem:[%s5 + $0x78] sm:$0xff]
  %v8028 = vld [vmem:[%s5 + $0x80] sm:$0xff]
  %v8029 = vld [vmem:[%s5 + $0x88] sm:$0xff]
  %v8030 = vld [vmem:[%s5 + $0x90] sm:$0xff]
  %v8031 = vld [vmem:[%s5 + $0x98] sm:$0xff]
  %v8032 = vld [vmem:[%s5 + $0xa0] sm:$0xff]
  %v8033 = vld [vmem:[%s5 + $0xa8] sm:$0xff]
  %v8034 = vld [vmem:[%s5 + $0xb0] sm:$0xff]
  %v8035 = vld [vmem:[%s5 + $0xb8] sm:$0xff]
  %v8036 = vld [vmem:[%s5 + $0xc0] sm:$0xff]
  %v8037 = vld [vmem:[%s5 + $0xc8] sm:$0xff]
  %v8038 = vld [vmem:[%s5 + $0xd0] sm:$0xff]
  %v8039 = vld [vmem:[%s5 + $0xd8] sm:$0xff]
  %v8040 = vld [vmem:[%s5 + $0xe0] sm:$0xff]
  %v8041 = vld [vmem:[%s5 + $0xe8] sm:$0xff]
  %v8042 = vld [vmem:[#allocation3] sm:$0xff]
  %v8043 = vld [vmem:[#allocation3 + $0x8] sm:$0xff]
  %v8044 = vld [vmem:[#allocation3 + $0x10] sm:$0xff]
  %v8045 = vld [vmem:[#allocation3 + $0x18] sm:$0xff]
  %v8046 = vld [vmem:[#allocation3 + $0x20] sm:$0xff]
  %v8047 = vld [vmem:[#allocation3 + $0x28] sm:$0xff]
  %v8048 = vld [vmem:[#allocation3 + $0x30] sm:$0xff]
  %v8049 = vld [vmem:[#allocation3 + $0x38] sm:$0xff]
  %v8050 = vld [vmem:[#allocation3 + $0x40] sm:$0xff]
  %v8051 = vld [vmem:[#allocation3 + $0x48] sm:$0xff]
  %v8052 = vld [vmem:[#allocation3 + $0x50] sm:$0xff]
  %v8053 = vld [vmem:[#allocation3 + $0x58] sm:$0xff]
  %v8054 = vld [vmem:[#allocation3 + $0x60] sm:$0xff]
  %v8055 = vld [vmem:[#allocation3 + $0x68] sm:$0xff]
  %v8056 = vld [vmem:[#allocation3 + $0x70] sm:$0xff]
  %v8057 = vld [vmem:[#allocation3 + $0x78] sm:$0xff]
  %v8058 = vld [vmem:[#allocation3 + $0x80] sm:$0xff]
  %v8059 = vld [vmem:[#allocation3 + $0x88] sm:$0xff]
  %v8060 = vld [vmem:[#allocation3 + $0x90] sm:$0xff]
  %v8061 = vld [vmem:[#allocation3 + $0x98] sm:$0xff]
  %v8062 = vld [vmem:[#allocation3 + $0xa0] sm:$0xff]
  %v8063 = vld [vmem:[#allocation3 + $0xa8] sm:$0xff]
  %v8064 = vld [vmem:[#allocation3 + $0xb0] sm:$0xff]
  %v8065 = vld [vmem:[#allocation3 + $0xb8] sm:$0xff]
  %v8066 = vld [vmem:[#allocation3 + $0xc0] sm:$0xff]
  %v8067 = vld [vmem:[#allocation3 + $0xc8] sm:$0xff]
  %v8068 = vld [vmem:[#allocation3 + $0xd0] sm:$0xff]
  %v8069 = vld [vmem:[#allocation3 + $0xd8] sm:$0xff]
  %v8070 = vld [vmem:[#allocation3 + $0xe0] sm:$0xff]
  %v8071 = vld [vmem:[#allocation3 + $0xe8] sm:$0xff]
  %v8072 = vld [vmem:[#allocation3 + $0xf0] sm:$0xff]
  %v8073 = vld [vmem:[#allocation3 + $0xf8] sm:$0xff]
  %v8074 = vld [vmem:[%s6] sm:$0xff]
  %v8075 = vld [vmem:[%s6 + $0x8] sm:$0xff]
  %v8076 = vld [vmem:[%s6 + $0x10] sm:$0xff]
  %v8077 = vld [vmem:[%s6 + $0x18] sm:$0xff]
  %v8078 = vld [vmem:[%s6 + $0x20] sm:$0xff]
  %v8079 = vld [vmem:[%s6 + $0x28] sm:$0xff]
  %v8080 = vld [vmem:[%s6 + $0x30] sm:$0xff]
  %v8081 = vld [vmem:[%s6 + $0x38] sm:$0xff]
  %v8082 = vld [vmem:[%s6 + $0x40] sm:$0xff]
  %v8083 = vld [vmem:[%s6 + $0x48] sm:$0xff]
  %v8084 = vld [vmem:[%s6 + $0x50] sm:$0xff]
  %v8085 = vld [vmem:[%s6 + $0x58] sm:$0xff]
  %v8086 = vld [vmem:[%s6 + $0x60] sm:$0xff]
  %v8087 = vld [vmem:[%s6 + $0x68] sm:$0xff]
  %v8088 = vld [vmem:[%s6 + $0x70] sm:$0xff]
  %8090 = vset.pattern.permute.xlu0 0
  %8091 = vperm.xlu0 %8090, %v8074
  %v8092 = vpop.permute.xlu0 %8091
  %8095 = vset.pattern.permute.xlu0 0
  %8096 = vperm.xlu0 %8095, %v8075
  %v8097 = vpop.permute.xlu0 %8096
  %8100 = vset.pattern.permute.xlu0 0
  %8101 = vperm.xlu0 %8100, %v8076
  %v8102 = vpop.permute.xlu0 %8101
  %8105 = vset.pattern.permute.xlu0 0
  %8106 = vperm.xlu0 %8105, %v8077
  %v8107 = vpop.permute.xlu0 %8106
  %8110 = vset.pattern.permute.xlu0 0
  %8111 = vperm.xlu0 %8110, %v8078
  %v8112 = vpop.permute.xlu0 %8111
  %8115 = vset.pattern.permute.xlu0 0
  %8116 = vperm.xlu0 %8115, %v8079
  %v8117 = vpop.permute.xlu0 %8116
  %8120 = vset.pattern.permute.xlu0 0
  %8121 = vperm.xlu0 %8120, %v8080
  %v8122 = vpop.permute.xlu0 %8121
  %8125 = vset.pattern.permute.xlu0 0
  %8126 = vperm.xlu0 %8125, %v8081
  %v8127 = vpop.permute.xlu0 %8126
  %8130 = vset.pattern.permute.xlu0 0
  %8131 = vperm.xlu0 %8130, %v8082
  %v8132 = vpop.permute.xlu0 %8131
  %8135 = vset.pattern.permute.xlu0 0
  %8136 = vperm.xlu0 %8135, %v8083
  %v8137 = vpop.permute.xlu0 %8136
  %8140 = vset.pattern.permute.xlu0 0
  %8141 = vperm.xlu0 %8140, %v8084
  %v8142 = vpop.permute.xlu0 %8141
  %8145 = vset.pattern.permute.xlu0 0
  %8146 = vperm.xlu0 %8145, %v8085
  %v8147 = vpop.permute.xlu0 %8146
  %8150 = vset.pattern.permute.xlu0 0
  %8151 = vperm.xlu0 %8150, %v8086
  %v8152 = vpop.permute.xlu0 %8151
  %8155 = vset.pattern.permute.xlu0 0
  %8156 = vperm.xlu0 %8155, %v8087
  %v8157 = vpop.permute.xlu0 %8156
  %8160 = vset.pattern.permute.xlu0 0
  %8161 = vperm.xlu0 %8160, %v8088
  %v8162 = vpop.permute.xlu0 %8161
  %8164 = vmatprep.subr.mxu0 0.0
  %8165 = vmatpush1.msra.mxu0 %v8057
  %8166 = vmatprep.subr.mxu0 0.0
  %8167 = vmatpush1.msra.mxu0 %v8056
  %8168 = vmatprep.subr.mxu0 0.0
  %8169 = vmatpush1.msra.mxu0 %v8055
  %8170 = vmatprep.subr.mxu0 0.0
  %8171 = vmatpush1.msra.mxu0 %v8054
  %8172 = vmatprep.subr.mxu0 0.0
  %8173 = vmatpush1.msra.mxu0 %v8053
  %8174 = vmatprep.subr.mxu0 0.0
  %8175 = vmatpush1.msra.mxu0 %v8052
  %8176 = vmatprep.subr.mxu0 0.0
  %8177 = vmatpush1.msra.mxu0 %v8051
  %8178 = vmatprep.subr.mxu0 0.0
  %8179 = vmatpush1.msra.mxu0 %v8050
  %8180 = vmatprep.subr.mxu0 0.0
  %8181 = vmatpush1.msra.mxu0 %v8049
  %8182 = vmatprep.subr.mxu0 0.0
  %8183 = vmatpush1.msra.mxu0 %v8048
  %8184 = vmatprep.subr.mxu0 0.0
  %8185 = vmatpush1.msra.mxu0 %v8047
  %8186 = vmatprep.subr.mxu0 0.0
  %8187 = vmatpush1.msra.mxu0 %v8046
  %8188 = vmatprep.subr.mxu0 0.0
  %8189 = vmatpush1.msra.mxu0 %v8045
  %8190 = vmatprep.subr.mxu0 0.0
  %8191 = vmatpush1.msra.mxu0 %v8044
  %8192 = vmatprep.subr.mxu0 0.0
  %8193 = vmatpush1.msra.mxu0 %v8043
  %8194 = vmatprep.subr.mxu0 0.0
  %8195 = vmatpush1.msra.mxu0 %v8042
  %8196 = vmatprep.subr.mxu0 0.0
  %8197 = vmatpush2.msra.mxu0 %v8073
  %8198 = vmatprep.subr.mxu0 0.0
  %8199 = vmatpush2.msra.mxu0 %v8072
  %8200 = vmatprep.subr.mxu0 0.0
  %8201 = vmatpush2.msra.mxu0 %v8071
  %8202 = vmatprep.subr.mxu0 0.0
  %8203 = vmatpush2.msra.mxu0 %v8070
  %8204 = vmatprep.subr.mxu0 0.0
  %8205 = vmatpush2.msra.mxu0 %v8069
  %8206 = vmatprep.subr.mxu0 0.0
  %8207 = vmatpush2.msra.mxu0 %v8068
  %8208 = vmatprep.subr.mxu0 0.0
  %8209 = vmatpush2.msra.mxu0 %v8067
  %8210 = vmatprep.subr.mxu0 0.0
  %8211 = vmatpush2.msra.mxu0 %v8066
  %8212 = vmatprep.subr.mxu0 0.0
  %8213 = vmatpush2.msra.mxu0 %v8065
  %8214 = vmatprep.subr.mxu0 0.0
  %8215 = vmatpush2.msra.mxu0 %v8064
  %8216 = vmatprep.subr.mxu0 0.0
  %8217 = vmatpush2.msra.mxu0 %v8063
  %8218 = vmatprep.subr.mxu0 0.0
  %8219 = vmatpush2.msra.mxu0 %v8062
  %8220 = vmatprep.subr.mxu0 0.0
  %8221 = vmatpush2.msra.mxu0 %v8061
  %8222 = vmatprep.subr.mxu0 0.0
  %8223 = vmatpush2.msra.mxu0 %v8060
  %8224 = vmatprep.subr.mxu0 0.0
  %8225 = vmatpush2.msra.mxu0 %v8059
  %8226 = vmatprep.subr.mxu0 0.0
  %8227 = vmatpush2.msra.mxu0 %v8058
  %8228 = vmatprep.mubr.f32.mxu0 %v8013
  %8229 = vmatmul.mubr.f32.gmra.mxu0 %v8012
  %v8230 = vpop.f32.mrf.mxu0
  %v8231 = vadd.f32 %v8092, %v8230
  %v8232 = vpop.f32.mrf.mxu0
  %8233 = vmatprep.mubr.f32.mxu0 %v8015
  %8234 = vmatmul.mubr.f32.gmra.mxu0 %v8014
  %v8235 = vpop.f32.mrf.mxu0
  %v8236 = vadd.f32 %v8097, %v8235
  %v8237 = vpop.f32.mrf.mxu0
  %8238 = vmatprep.mubr.f32.mxu0 %v8017
  %8239 = vmatmul.mubr.f32.gmra.mxu0 %v8016
  %v8240 = vpop.f32.mrf.mxu0
  %v8241 = vadd.f32 %v8102, %v8240
  %v8242 = vpop.f32.mrf.mxu0
  %8243 = vmatprep.mubr.f32.mxu0 %v8019
  %8244 = vmatmul.mubr.f32.gmra.mxu0 %v8018
  %v8245 = vpop.f32.mrf.mxu0
  %v8246 = vadd.f32 %v8107, %v8245
  %v8247 = vpop.f32.mrf.mxu0
  %8248 = vmatprep.mubr.f32.mxu0 %v8021
  %8249 = vmatmul.mubr.f32.gmra.mxu0 %v8020
  %v8250 = vpop.f32.mrf.mxu0
  %v8251 = vadd.f32 %v8112, %v8250
  %v8252 = vpop.f32.mrf.mxu0
  %8253 = vmatprep.mubr.f32.mxu0 %v8023
  %8254 = vmatmul.mubr.f32.gmra.mxu0 %v8022
  %v8255 = vpop.f32.mrf.mxu0
  %v8256 = vadd.f32 %v8117, %v8255
  %v8257 = vpop.f32.mrf.mxu0
  %8258 = vmatprep.mubr.f32.mxu0 %v8025
  %8259 = vmatmul.mubr.f32.gmra.mxu0 %v8024
  %v8260 = vpop.f32.mrf.mxu0
  %v8261 = vadd.f32 %v8122, %v8260
  %v8262 = vpop.f32.mrf.mxu0
  %8263 = vmatprep.mubr.f32.mxu0 %v8027
  %8264 = vmatmul.mubr.f32.gmra.mxu0 %v8026
  %v8265 = vpop.f32.mrf.mxu0
  %v8266 = vadd.f32 %v8127, %v8265
  %v8267 = vpop.f32.mrf.mxu0
  %8268 = vmatprep.mubr.f32.mxu0 %v8029
  %8269 = vmatmul.mubr.f32.gmra.mxu0 %v8028
  %v8270 = vpop.f32.mrf.mxu0
  %v8271 = vadd.f32 %v8132, %v8270
  %v8272 = vpop.f32.mrf.mxu0
  %8273 = vmatprep.mubr.f32.mxu0 %v8031
  %8274 = vmatmul.mubr.f32.gmra.mxu0 %v8030
  %v8275 = vpop.f32.mrf.mxu0
  %v8276 = vadd.f32 %v8137, %v8275
  %v8277 = vpop.f32.mrf.mxu0
  %8278 = vmatprep.mubr.f32.mxu0 %v8033
  %8279 = vmatmul.mubr.f32.gmra.mxu0 %v8032
  %v8280 = vpop.f32.mrf.mxu0
  %v8281 = vadd.f32 %v8142, %v8280
  %v8282 = vpop.f32.mrf.mxu0
  %8283 = vmatprep.mubr.f32.mxu0 %v8035
  %8284 = vmatmul.mubr.f32.gmra.mxu0 %v8034
  %v8285 = vpop.f32.mrf.mxu0
  %v8286 = vadd.f32 %v8147, %v8285
  %v8287 = vpop.f32.mrf.mxu0
  %8288 = vmatprep.mubr.f32.mxu0 %v8037
  %8289 = vmatmul.mubr.f32.gmra.mxu0 %v8036
  %v8290 = vpop.f32.mrf.mxu0
  %v8291 = vadd.f32 %v8152, %v8290
  %v8292 = vpop.f32.mrf.mxu0
  %8293 = vmatprep.mubr.f32.mxu0 %v8039
  %8294 = vmatmul.mubr.f32.gmra.mxu0 %v8038
  %v8295 = vpop.f32.mrf.mxu0
  %v8296 = vadd.f32 %v8157, %v8295
  %v8297 = vpop.f32.mrf.mxu0
  %8298 = vmatprep.mubr.f32.mxu0 %v8041
  %8299 = vmatmul.mubr.f32.gmra.mxu0 %v8040
  %v8300 = vpop.f32.mrf.mxu0
  %v8301 = vadd.f32 %v8162, %v8300
  %v8302 = vpop.f32.mrf.mxu0
  %8303 = vdwg.mxu0
  %v8304 = vmax.f32 %v8231, 0.0
  %v8305 = vmax.f32 %v8236, 0.0
  %v8306 = vmax.f32 %v8241, 0.0
  %v8307 = vmax.f32 %v8246, 0.0
  %v8308 = vmax.f32 %v8251, 0.0
  %v8309 = vmax.f32 %v8256, 0.0
  %v8310 = vmax.f32 %v8261, 0.0
  %v8311 = vmax.f32 %v8266, 0.0
  %v8312 = vmax.f32 %v8271, 0.0
  %v8313 = vmax.f32 %v8276, 0.0
  %v8314 = vmax.f32 %v8281, 0.0
  %v8315 = vmax.f32 %v8286, 0.0
  %v8316 = vmax.f32 %v8291, 0.0
  %v8317 = vmax.f32 %v8296, 0.0
  %v8318 = vmax.f32 %v8301, 0.0
  %v8319 = vld [vmem:[%s7] sm:$0xff]
  %v8320 = vld [vmem:[%s7 + $0x8] sm:$0xff]
  %v8321 = vld [vmem:[%s7 + $0x10] sm:$0xff]
  %v8322 = vld [vmem:[%s7 + $0x18] sm:$0xff]
  %v8323 = vld [vmem:[%s7 + $0x20] sm:$0xff]
  %v8324 = vld [vmem:[%s7 + $0x28] sm:$0xff]
  %v8325 = vld [vmem:[%s7 + $0x30] sm:$0xff]
  %v8326 = vld [vmem:[%s7 + $0x38] sm:$0xff]
  %v8327 = vld [vmem:[%s7 + $0x40] sm:$0xff]
  %v8328 = vld [vmem:[%s7 + $0x48] sm:$0xff]
  %v8329 = vld [vmem:[%s7 + $0x50] sm:$0xf]
  %v8330 = vld [vmem:[%s8] sm:$0xff]
  %v8331 = vld [vmem:[%s8 + $0x8] sm:$0xff]
  %v8332 = vld [vmem:[%s8 + $0x10] sm:$0xff]
  %v8333 = vld [vmem:[%s8 + $0x18] sm:$0xff]
  %v8334 = vld [vmem:[%s8 + $0x20] sm:$0xff]
  %v8335 = vld [vmem:[%s8 + $0x28] sm:$0xff]
  %v8336 = vld [vmem:[%s8 + $0x30] sm:$0xff]
  %v8337 = vld [vmem:[%s8 + $0x38] sm:$0xff]
  %v8338 = vld [vmem:[%s8 + $0x40] sm:$0xff]
  %v8339 = vld [vmem:[%s8 + $0x48] sm:$0xff]
  %v8340 = vld [vmem:[%s8 + $0x50] sm:$0xf]
  %8342 = vset.pattern.permute.xlu0 0
  %8343 = vperm.xlu0 %8342, %v8330
  %v8344 = vpop.permute.xlu0 %8343
  %8347 = vset.pattern.permute.xlu0 0
  %8348 = vperm.xlu0 %8347, %v8331
  %v8349 = vpop.permute.xlu0 %8348
  %8352 = vset.pattern.permute.xlu0 0
  %8353 = vperm.xlu0 %8352, %v8332
  %v8354 = vpop.permute.xlu0 %8353
  %8357 = vset.pattern.permute.xlu0 0
  %8358 = vperm.xlu0 %8357, %v8333
  %v8359 = vpop.permute.xlu0 %8358
  %8362 = vset.pattern.permute.xlu0 0
  %8363 = vperm.xlu0 %8362, %v8334
  %v8364 = vpop.permute.xlu0 %8363
  %8367 = vset.pattern.permute.xlu0 0
  %8368 = vperm.xlu0 %8367, %v8335
  %v8369 = vpop.permute.xlu0 %8368
  %8372 = vset.pattern.permute.xlu0 0
  %8373 = vperm.xlu0 %8372, %v8336
  %v8374 = vpop.permute.xlu0 %8373
  %8377 = vset.pattern.permute.xlu0 0
  %8378 = vperm.xlu0 %8377, %v8337
  %v8379 = vpop.permute.xlu0 %8378
  %8382 = vset.pattern.permute.xlu0 0
  %8383 = vperm.xlu0 %8382, %v8338
  %v8384 = vpop.permute.xlu0 %8383
  %8387 = vset.pattern.permute.xlu0 0
  %8388 = vperm.xlu0 %8387, %v8339
  %v8389 = vpop.permute.xlu0 %8388
  %8392 = vset.pattern.permute.xlu0 0
  %8393 = vperm.xlu0 %8392, %v8340
  %v8394 = vpop.permute.xlu0 %8393
  %vm8396 = vcmask 982016
  %v8398 = vsel %vm8396, %v8319, 0
  %v8401 = vsel %vm8396, %v8320, 0
  %v8404 = vsel %vm8396, %v8321, 0
  %v8407 = vsel %vm8396, %v8322, 0
  %v8410 = vsel %vm8396, %v8323, 0
  %v8413 = vsel %vm8396, %v8324, 0
  %v8416 = vsel %vm8396, %v8325, 0
  %v8419 = vsel %vm8396, %v8326, 0
  %v8422 = vsel %vm8396, %v8327, 0
  %v8425 = vsel %vm8396, %v8328, 0
  %v8428 = vsel %vm8396, %v8329, 0
  %8430 = vmatprep.subr.mxu0 0.0
  %8431 = vmatpush1.msra.mxu0 0.0
  %8432 = vmatprep.subr.mxu0 0.0
  %8433 = vmatpush1.msra.mxu0 %v8318
  %8434 = vmatprep.subr.mxu0 0.0
  %8435 = vmatpush1.msra.mxu0 %v8317
  %8436 = vmatprep.subr.mxu0 0.0
  %8437 = vmatpush1.msra.mxu0 %v8316
  %8438 = vmatprep.subr.mxu0 0.0
  %8439 = vmatpush1.msra.mxu0 %v8315
  %8440 = vmatprep.subr.mxu0 0.0
  %8441 = vmatpush1.msra.mxu0 %v8314
  %8442 = vmatprep.subr.mxu0 0.0
  %8443 = vmatpush1.msra.mxu0 %v8313
  %8444 = vmatprep.subr.mxu0 0.0
  %8445 = vmatpush1.msra.mxu0 %v8312
  %8446 = vmatprep.subr.mxu0 0.0
  %8447 = vmatpush1.msra.mxu0 %v8311
  %8448 = vmatprep.subr.mxu0 0.0
  %8449 = vmatpush1.msra.mxu0 %v8310
  %8450 = vmatprep.subr.mxu0 0.0
  %8451 = vmatpush1.msra.mxu0 %v8309
  %8452 = vmatprep.subr.mxu0 0.0
  %8453 = vmatpush1.msra.mxu0 %v8308
  %8454 = vmatprep.subr.mxu0 0.0
  %8455 = vmatpush1.msra.mxu0 %v8307
  %8456 = vmatprep.subr.mxu0 0.0
  %8457 = vmatpush1.msra.mxu0 %v8306
  %8458 = vmatprep.subr.mxu0 0.0
  %8459 = vmatpush1.msra.mxu0 %v8305
  %8460 = vmatprep.subr.mxu0 0.0
  %8461 = vmatpush1.msra.mxu0 %v8304
  %8462 = vmatprep.subr.mxu0 0.0
  %8463 = vmatpush2.msra.mxu0 0.0
  %8464 = vmatprep.subr.mxu0 0.0
  %8465 = vmatpush2.msra.mxu0 0.0
  %8466 = vmatprep.subr.mxu0 0.0
  %8467 = vmatpush2.msra.mxu0 0.0
  %8468 = vmatprep.subr.mxu0 0.0
  %8469 = vmatpush2.msra.mxu0 0.0
  %8470 = vmatprep.subr.mxu0 0.0
  %8471 = vmatpush2.msra.mxu0 0.0
  %8472 = vmatprep.subr.mxu0 0.0
  %8473 = vmatpush2.msra.mxu0 0.0
  %8474 = vmatprep.subr.mxu0 0.0
  %8475 = vmatpush2.msra.mxu0 0.0
  %8476 = vmatprep.subr.mxu0 0.0
  %8477 = vmatpush2.msra.mxu0 0.0
  %8478 = vmatprep.subr.mxu0 0.0
  %8479 = vmatpush2.msra.mxu0 0.0
  %8480 = vmatprep.subr.mxu0 0.0
  %8481 = vmatpush2.msra.mxu0 0.0
  %8482 = vmatprep.subr.mxu0 0.0
  %8483 = vmatpush2.msra.mxu0 0.0
  %8484 = vmatprep.subr.mxu0 0.0
  %8485 = vmatpush2.msra.mxu0 0.0
  %8486 = vmatprep.subr.mxu0 0.0
  %8487 = vmatpush2.msra.mxu0 0.0
  %8488 = vmatprep.subr.mxu0 0.0
  %8489 = vmatpush2.msra.mxu0 0.0
  %8490 = vmatprep.subr.mxu0 0.0
  %8491 = vmatpush2.msra.mxu0 0.0
  %8492 = vmatprep.subr.mxu0 0.0
  %8493 = vmatpush2.msra.mxu0 0.0
  %8494 = vmatprep.mubr.f32.mxu0 0.0
  %8495 = vmatmul.mubr.f32.gmra.mxu0 %v8398
  %v8496 = vpop.f32.mrf.mxu0
  %v8497 = vadd.f32 %v8344, %v8496
  %v8498 = vpop.f32.mrf.mxu0
  %8499 = vmatprep.mubr.f32.mxu0 0.0
  %8500 = vmatmul.mubr.f32.gmra.mxu0 %v8401
  %v8501 = vpop.f32.mrf.mxu0
  %v8502 = vadd.f32 %v8349, %v8501
  %v8503 = vpop.f32.mrf.mxu0
  %8504 = vmatprep.mubr.f32.mxu0 0.0
  %8505 = vmatmul.mubr.f32.gmra.mxu0 %v8404
  %v8506 = vpop.f32.mrf.mxu0
  %v8507 = vadd.f32 %v8354, %v8506
  %v8508 = vpop.f32.mrf.mxu0
  %8509 = vmatprep.mubr.f32.mxu0 0.0
  %8510 = vmatmul.mubr.f32.gmra.mxu0 %v8407
  %v8511 = vpop.f32.mrf.mxu0
  %v8512 = vadd.f32 %v8359, %v8511
  %v8513 = vpop.f32.mrf.mxu0
  %8514 = vmatprep.mubr.f32.mxu0 0.0
  %8515 = vmatmul.mubr.f32.gmra.mxu0 %v8410
  %v8516 = vpop.f32.mrf.mxu0
  %v8517 = vadd.f32 %v8364, %v8516
  %v8518 = vpop.f32.mrf.mxu0
  %8519 = vmatprep.mubr.f32.mxu0 0.0
  %8520 = vmatmul.mubr.f32.gmra.mxu0 %v8413
  %v8521 = vpop.f32.mrf.mxu0
  %v8522 = vadd.f32 %v8369, %v8521
  %v8523 = vpop.f32.mrf.mxu0
  %8524 = vmatprep.mubr.f32.mxu0 0.0
  %8525 = vmatmul.mubr.f32.gmra.mxu0 %v8416
  %v8526 = vpop.f32.mrf.mxu0
  %v8527 = vadd.f32 %v8374, %v8526
  %v8528 = vpop.f32.mrf.mxu0
  %8529 = vmatprep.mubr.f32.mxu0 0.0
  %8530 = vmatmul.mubr.f32.gmra.mxu0 %v8419
  %v8531 = vpop.f32.mrf.mxu0
  %v8532 = vadd.f32 %v8379, %v8531
  %v8533 = vpop.f32.mrf.mxu0
  %8534 = vmatprep.mubr.f32.mxu0 0.0
  %8535 = vmatmul.mubr.f32.gmra.mxu0 %v8422
  %v8536 = vpop.f32.mrf.mxu0
  %v8537 = vadd.f32 %v8384, %v8536
  %v8538 = vpop.f32.mrf.mxu0
  %8539 = vmatprep.mubr.f32.mxu0 0.0
  %8540 = vmatmul.mubr.f32.gmra.mxu0 %v8425
  %v8541 = vpop.f32.mrf.mxu0
  %v8542 = vadd.f32 %v8389, %v8541
  %v8543 = vpop.f32.mrf.mxu0
  %8544 = vmatprep.mubr.f32.mxu0 0.0
  %8545 = vmatmul.mubr.f32.gmra.mxu0 %v8428
  %v8546 = vpop.f32.mrf.mxu0
  %v8547 = vadd.f32 %v8394, %v8546
  %v8548 = vpop.f32.mrf.mxu0
  %8549 = vdwg.mxu0
  %v8550 = vmax.f32 %v8497, 0.0
  %v8551 = vmax.f32 %v8502, 0.0
  %v8552 = vmax.f32 %v8507, 0.0
  %v8553 = vmax.f32 %v8512, 0.0
  %v8554 = vmax.f32 %v8517, 0.0
  %v8555 = vmax.f32 %v8522, 0.0
  %v8556 = vmax.f32 %v8527, 0.0
  %v8557 = vmax.f32 %v8532, 0.0
  %v8558 = vmax.f32 %v8537, 0.0
  %v8559 = vmax.f32 %v8542, 0.0
  %v8560 = vmax.f32 %v8547, 0.0
  %v8561 = vld [vmem:[%s9] sm:$0xff]
  %v8562 = vld [vmem:[%s9 + $0x8] sm:$0x3]
  %v8563 = vld [vmem:[%s10] sm:$0xff]
  %v8564 = vld [vmem:[%s10 + $0x8] sm:$0x3]
  %8566 = vset.pattern.permute.xlu0 0
  %8567 = vperm.xlu0 %8566, %v8563
  %v8568 = vpop.permute.xlu0 %8567
  %8571 = vset.pattern.permute.xlu0 0
  %8572 = vperm.xlu0 %8571, %v8564
  %v8573 = vpop.permute.xlu0 %8572
  %vm8575 = vcmask 687104
  %v8577 = vsel %vm8575, %v8561, 0
  %v8580 = vsel %vm8575, %v8562, 0
  %vm8582 = vcmask 1043456
  %v8584 = vsel %vm8582, %v8560, 0
  %8586 = vmatprep.subr.mxu0 0.0
  %8587 = vmatpush1.msra.mxu0 0.0
  %8588 = vmatprep.subr.mxu0 0.0
  %8589 = vmatpush1.msra.mxu0 0.0
  %8590 = vmatprep.subr.mxu0 0.0
  %8591 = vmatpush1.msra.mxu0 0.0
  %8592 = vmatprep.subr.mxu0 0.0
  %8593 = vmatpush1.msra.mxu0 0.0
  %8594 = vmatprep.subr.mxu0 0.0
  %8595 = vmatpush1.msra.mxu0 0.0
  %8596 = vmatprep.subr.mxu0 0.0
  %8597 = vmatpush1.msra.mxu0 %v8584
  %8598 = vmatprep.subr.mxu0 0.0
  %8599 = vmatpush1.msra.mxu0 %v8559
  %8600 = vmatprep.subr.mxu0 0.0
  %8601 = vmatpush1.msra.mxu0 %v8558
  %8602 = vmatprep.subr.mxu0 0.0
  %8603 = vmatpush1.msra.mxu0 %v8557
  %8604 = vmatprep.subr.mxu0 0.0
  %8605 = vmatpush1.msra.mxu0 %v8556
  %8606 = vmatprep.subr.mxu0 0.0
  %8607 = vmatpush1.msra.mxu0 %v8555
  %8608 = vmatprep.subr.mxu0 0.0
  %8609 = vmatpush1.msra.mxu0 %v8554
  %8610 = vmatprep.subr.mxu0 0.0
  %8611 = vmatpush1.msra.mxu0 %v8553
  %8612 = vmatprep.subr.mxu0 0.0
  %8613 = vmatpush1.msra.mxu0 %v8552
  %8614 = vmatprep.subr.mxu0 0.0
  %8615 = vmatpush1.msra.mxu0 %v8551
  %8616 = vmatprep.subr.mxu0 0.0
  %8617 = vmatpush1.msra.mxu0 %v8550
  %8618 = vmatprep.subr.mxu0 0.0
  %8619 = vmatpush2.msra.mxu0 0.0
  %8620 = vmatprep.subr.mxu0 0.0
  %8621 = vmatpush2.msra.mxu0 0.0
  %8622 = vmatprep.subr.mxu0 0.0
  %8623 = vmatpush2.msra.mxu0 0.0
  %8624 = vmatprep.subr.mxu0 0.0
  %8625 = vmatpush2.msra.mxu0 0.0
  %8626 = vmatprep.subr.mxu0 0.0
  %8627 = vmatpush2.msra.mxu0 0.0
  %8628 = vmatprep.subr.mxu0 0.0
  %8629 = vmatpush2.msra.mxu0 0.0
  %8630 = vmatprep.subr.mxu0 0.0
  %8631 = vmatpush2.msra.mxu0 0.0
  %8632 = vmatprep.subr.mxu0 0.0
  %8633 = vmatpush2.msra.mxu0 0.0
  %8634 = vmatprep.subr.mxu0 0.0
  %8635 = vmatpush2.msra.mxu0 0.0
  %8636 = vmatprep.subr.mxu0 0.0
  %8637 = vmatpush2.msra.mxu0 0.0
  %8638 = vmatprep.subr.mxu0 0.0
  %8639 = vmatpush2.msra.mxu0 0.0
  %8640 = vmatprep.subr.mxu0 0.0
  %8641 = vmatpush2.msra.mxu0 0.0
  %8642 = vmatprep.subr.mxu0 0.0
  %8643 = vmatpush2.msra.mxu0 0.0
  %8644 = vmatprep.subr.mxu0 0.0
  %8645 = vmatpush2.msra.mxu0 0.0
  %8646 = vmatprep.subr.mxu0 0.0
  %8647 = vmatpush2.msra.mxu0 0.0
  %8648 = vmatprep.subr.mxu0 0.0
  %8649 = vmatpush2.msra.mxu0 0.0
  %8650 = vmatprep.mubr.f32.mxu0 0.0
  %8651 = vmatmul.mubr.f32.gmra.mxu0 %v8577
  %v8652 = vpop.f32.mrf.mxu0
  %v8653 = vadd.f32 %v8568, %v8652
  %v8654 = vpop.f32.mrf.mxu0
  %8655 = vmatprep.mubr.f32.mxu0 0.0
  %8656 = vmatmul.mubr.f32.gmra.mxu0 %v8580
  %v8657 = vpop.f32.mrf.mxu0
  %v8658 = vadd.f32 %v8573, %v8657
  %v8659 = vpop.f32.mrf.mxu0
  %8660 = vdwg.mxu0
  %vm8661 = vcmask 1041408
  %v8662 = vsel %vm8661, %v8658, -inf
  %v8663 = vmax.f32 %v8653, %v8662
  %v8664 = vrot.slane %v8663, 4
  %v8665 = vmax.f32 %v8663, %v8664
  %v8666 = vrot.slane %v8665, 2
  %v8667 = vmax.f32 %v8665, %v8666
  %v8668 = vrot.slane %v8667, 1
  %v8669 = vmax.f32 %v8667, %v8668
  %v8670 = vsub.f32 %v8653, %v8669
  %v8671 = vsub.f32 %v8658, %v8669
  %v8672 = vmul.f32 %v8670, 1.442695
  %v8673 = vpow.pop %v8672
  %v8674 = vmul.f32 %v8671, 1.442695
  %v8675 = vpow.pop %v8674
  %v8676 = vsel %vm8661, %v8675, 0.0
  %v8677 = vadd.f32 %v8673, %v8676
  %v8678 = vrot.slane %v8677, 4
  %v8679 = vadd.f32 %v8677, %v8678
  %v8680 = vrot.slane %v8679, 2
  %v8681 = vadd.f32 %v8679, %v8680
  %v8682 = vrot.slane %v8681, 1
  %v8683 = vadd.f32 %v8681, %v8682
  %v8684 = vlog2.pop %v8683
  %v8685 = vmul.f32 %v8684, 0.6931472
  %v8686 = vsub.f32 %v8670, %v8685
  %v8687 = vsub.f32 %v8671, %v8685
  %8688 = vst [vmem:[%s11] sm:$0xff] %v8686
  %8689 = vst [vmem:[%s11 + $0x8] sm:$0x3] %v8687
  // Predicated region
  $region46: #{img2num_forward.1} parent=0 // pred_check
    _
  $region47: #{img2num_forward.1} parent=0 // pred_check_branch
    %8691 = sbr.rel (0) target = $region49
  $region48: #{img2num_forward.1} parent=0 // pred_region
    _
  $region49: #{img2num_forward.1} parent=0 // pred_fallthru
    _
  // Predicated region
  $region50: #{img2num_forward.1} parent=0 // pred_check
    _
  $region51: #{img2num_forward.1} parent=0 // pred_check_branch
    %8693 = sbr.rel (0) target = $region53
  $region52: #{img2num_forward.1} parent=0 // pred_region
    _
  $region53: #{img2num_forward.1} parent=0 // pred_fallthru
    _

</llo_original>
